<compile_context>
chip_gen: v5e
topology: v5e:2x2
jax: 0.10.0
libtpu: 0.0.40
codegen_flags: <defaults>
</compile_context>

<pallas_src>
import functools

import jax
import jax.numpy as jnp
from jax.experimental import pallas as pl
from jax.experimental.pallas import tpu as pltpu


# Conv stages 2..4: (H, W, Cin, Cout) of each stage's conv input.
_CONV_STAGES = ((8, 8, 64, 128), (4, 4, 128, 256), (2, 2, 256, 512))
_FEATS = 512        # flattened features after the conv tower (1 x 1 x 512)
_CLASSES = 62       # logits width of the PyTorch module
_CLASSES_PAD = 128  # lane-dense padded logits width (sliced back to 62 outside)
_MAX_BLOCK_B = 64   # batch samples per grid step (cap)


# -----------------------------------------------------------------------------
# Kernel helpers
# -----------------------------------------------------------------------------
def _stage1(x1_ref, w1_ref, b1_ref, *, B):
    """Conv1(1->64) + ReLU + MaxPool2x2, expressed as one patch matmul.

    x1_ref: (B, 64, 16) bf16  -- per pooled output pixel, its 4x4 input patch
    w1_ref: (16, 256)   bf16  -- columns ordered (pool position p)*64 + channel
    b1_ref: (1, 64)     f32
    returns (B, 8, 8, 64) f32 pooled activations.
    """
    x = x1_ref[...].reshape(B * 64, 16)
    z = jnp.dot(x, w1_ref[...], preferred_element_type=jnp.float32)  # (B*64, 256)
    # Max over the 4 pre-pool positions (lane groups of 64), then bias + ReLU.
    m = jnp.maximum(jnp.maximum(z[:, 0:64], z[:, 64:128]),
                    jnp.maximum(z[:, 128:192], z[:, 192:256]))
    a = jnp.maximum(m + b1_ref[...], 0.0)
    return a.reshape(B, 8, 8, 64)


def _conv_stage(a, pad_ref, col_ref, w_ref, b_ref, *, B, H, W, Cin, Cout):
    """Conv3x3 SAME + bias + ReLU + MaxPool2x2 via im2col + one MXU matmul.

    a:       (B, H, W, Cin)        f32 input activations (NHWC)
    pad_ref: (B, H+2, W+2, Cin)    bf16 VMEM scratch (zero-padded input)
    col_ref: (B*H*W, 9*Cin)        bf16 VMEM im2col scratch
    w_ref:   (9*Cin, Cout)         bf16 conv weight (row = tap*Cin + cin)
    b_ref:   (1, Cout)             f32 bias
    returns  (B, H//2, W//2, Cout) f32
    """
    # SAME padding: the border is always zero; rewrite only the thin border
    # each step (cheap) and the interior from the previous stage's output.
    pad_ref[:, 0:1, :, :] = jnp.zeros((B, 1, W + 2, Cin), jnp.bfloat16)
    pad_ref[:, H + 1:H + 2, :, :] = jnp.zeros((B, 1, W + 2, Cin), jnp.bfloat16)
    pad_ref[:, 1:H + 1, 0:1, :] = jnp.zeros((B, H, 1, Cin), jnp.bfloat16)
    pad_ref[:, 1:H + 1, W + 1:W + 2, :] = jnp.zeros((B, H, 1, Cin), jnp.bfloat16)
    pad_ref[:, 1:H + 1, 1:W + 1, :] = a.astype(jnp.bfloat16)

    # im2col: pack the 9 shifted bf16 windows along the lane axis.
    for k in range(9):
        dy, dx = k // 3, k % 3
        win = pad_ref[:, dy:dy + H, dx:dx + W, :].reshape(B * H * W, Cin)
        col_ref[:, k * Cin:(k + 1) * Cin] = win

    # Single matmul with K = 9*Cin, f32 MXU accumulation; bias + ReLU in f32.
    z = jnp.dot(col_ref[...], w_ref[...], preferred_element_type=jnp.float32)
    z = jnp.maximum(z + b_ref[...], 0.0)

    # 2x2 max-pool, stride 2 (channels stay on the lane dim).
    z = z.reshape(B * H, W // 2, 2, Cout)
    z = jnp.max(z, axis=2)                      # pool along W
    z = z.reshape(B * (H // 2), 2, W // 2, Cout)
    z = jnp.max(z, axis=1)                      # pool along H
    return z.reshape(B, H // 2, W // 2, Cout)


def _fused_cnn_kernel(x1_ref, w1_ref, b1_ref, w2_ref, b2_ref, w3_ref, b3_ref,
                      w4_ref, b4_ref, wl_ref, bl_ref, o_ref,
                      pad2, col2, pad3, col3, pad4, col4, *, B):
    """Whole-network forward for one block of B samples, entirely in VMEM."""
    a = _stage1(x1_ref, w1_ref, b1_ref, B=B)

    conv_ws = (w2_ref, w3_ref, w4_ref)
    conv_bs = (b2_ref, b3_ref, b4_ref)
    pads = (pad2, pad3, pad4)
    cols = (col2, col3, col4)
    for (h, w, cin, cout), wr, br, pr, cr in zip(_CONV_STAGES, conv_ws, conv_bs,
                                                 pads, cols):
        a = _conv_stage(a, pr, cr, wr, br, B=B, H=h, W=w, Cin=cin, Cout=cout)

    # (B, 1, 1, 512) -> (B, 512), matching torch's x.view(-1, 512), then the
    # folded Linear(512->256)->Linear(256->62) as one matmul (128-lane padded).
    feats = a.reshape(B, _FEATS).astype(jnp.bfloat16)
    o_ref[...] = (jnp.dot(feats, wl_ref[...], preferred_element_type=jnp.float32)
                  + bl_ref[...])


# -----------------------------------------------------------------------------
# pallas_call wrapper
# -----------------------------------------------------------------------------
def _const_index_map(ndim):
    return lambda nb: (0,) * ndim


def _choose_block_b(n):
    """Batch block size: big enough to fill the MXU M dimension, but keep the
    grid >= 2 blocks for larger batches so both v7x TensorCores get work."""
    if n <= 16:
        return n
    if n <= 2 * _MAX_BLOCK_B:
        half = -(-n // 2)
        return -(-half // 8) * 8
    return _MAX_BLOCK_B


def _fused_cnn_call(x1, kparams, *, block_b):
    npad = x1.shape[0]
    b = block_b
    assert npad % b == 0, (npad, b)

    in_specs = [pl.BlockSpec((b, 64, 16), lambda nb: (nb, 0, 0))]
    for p in kparams:
        # Weights/biases: whole array resident in VMEM, constant index map.
        in_specs.append(pl.BlockSpec(p.shape, _const_index_map(p.ndim)))

    scratch_shapes = []
    for (h, w, cin, _) in _CONV_STAGES:
        scratch_shapes.append(pltpu.VMEM((b, h + 2, w + 2, cin), jnp.bfloat16))
        scratch_shapes.append(pltpu.VMEM((b * h * w, 9 * cin), jnp.bfloat16))

    return pl.pallas_call(
        functools.partial(_fused_cnn_kernel, B=b),
        out_shape=jax.ShapeDtypeStruct((npad, _CLASSES_PAD), jnp.float32),
        grid_spec=pltpu.PrefetchScalarGridSpec(
            num_scalar_prefetch=0,
            grid=(npad // b,),
            in_specs=in_specs,
            out_specs=pl.BlockSpec((b, _CLASSES_PAD), lambda nb: (nb, 0)),
            scratch_shapes=scratch_shapes,
        ),
        compiler_params=pltpu.CompilerParams(
            # Independent batch blocks -> shard across TensorCores on v7x.
            dimension_semantics=("parallel",),
            # bf16 weights (~3.2 MB, double-buffered) + bf16 pad/im2col scratch
            # + f32 spill headroom at block_b=64 is ~33 MB; stay well under the
            # 64 MB per-core VMEM of v7x.
            vmem_limit_bytes=48 * 1024 * 1024,
        ),
    )(x1, *kparams)


def prepare_kernel_params(params):
    """One-time param prep (call OUTSIDE the jitted forward): bf16 matmul
    weights, f32 biases, stage-1 conv folded into a 4x4-patch matmul, fc1.fc2
    folded and zero-padded to 128 output lanes."""
    # Stage 1: conv1 (3x3, 1->64) + 2x2 maxpool receptive field = 4x4 patch.
    # W1p[iy*4+ix, (py*2+px)*64 + c] = w1[ky=iy-py, kx=ix-px, c] (else 0).
    w1 = params["conv"][0][0]          # (9, 1, 64), tap k = ky*3 + kx
    b1 = params["conv"][0][1]          # (1, 64)
    w1p = jnp.zeros((16, 256), jnp.float32)
    for py in range(2):
        for px in range(2):
            for ky in range(3):
                for kx in range(3):
                    iy, ix = py + ky, px + kx
                    col0 = (py * 2 + px) * 64
                    w1p = w1p.at[iy * 4 + ix, col0:col0 + 64].set(
                        w1[ky * 3 + kx, 0, :])
    out = [w1p.astype(jnp.bfloat16), b1.astype(jnp.float32)]

    # Stages 2..4: (9, Cin, Cout) -> (9*Cin, Cout), row = tap*Cin + cin.
    for (w, bias) in params["conv"][1:]:
        cin, cout = w.shape[1], w.shape[2]
        out.append(w.reshape(9 * cin, cout).astype(jnp.bfloat16))
        out.append(bias.astype(jnp.float32))

    # Fold fc1 @ fc2 (no nonlinearity between them in the PyTorch module),
    # in f32 first, then cast; zero-pad logits width to 128 lanes.
    w1l, b1l = params["w1"], params["b1"]
    w2l, b2l = params["w2"], params["b2"]
    w2p = jnp.zeros((w2l.shape[0], _CLASSES_PAD), jnp.float32).at[:, :_CLASSES].set(w2l)
    b2p = jnp.zeros((1, _CLASSES_PAD), jnp.float32).at[:, :_CLASSES].set(b2l)
    out.append((w1l @ w2p).astype(jnp.bfloat16))          # (512, 128)
    out.append((b1l @ w2p + b2p).astype(jnp.float32))     # (1, 128)
    return tuple(out)


@jax.jit
def cnn_forward(x_nchw, kernel_params):
    """Full CNN forward.  x_nchw: (N, 1, 16, 16) -> logits (N, 62)."""
    n = x_nchw.shape[0]
    x = x_nchw.astype(jnp.float32).reshape(n, 16, 16)     # drop singleton C
    # Stage-1 patch extraction: per pooled output pixel, its 4x4 input patch
    # from the zero-padded image (padded coord of patch row iy is 2*oy + iy).
    xp = jnp.pad(x, ((0, 0), (1, 1), (1, 1)))             # (N, 18, 18)
    pieces = [xp[:, iy:iy + 16:2, ix:ix + 16:2]
              for iy in range(4) for ix in range(4)]       # each (N, 8, 8)
    x1 = jnp.stack(pieces, axis=-1).reshape(n, 64, 16).astype(jnp.bfloat16)

    block_b = _choose_block_b(n)
    npad = -(-n // block_b) * block_b
    if npad != n:
        x1 = jnp.pad(x1, ((0, npad - n), (0, 0), (0, 0)))
    logits = _fused_cnn_call(x1, kernel_params, block_b=block_b)
    return logits[:n, :_CLASSES]


# -----------------------------------------------------------------------------
# Deterministic parameter init (synthetic; shapes from CNN.__init__)
# -----------------------------------------------------------------------------
def init_params(key):
    params = {"conv": []}
    cins = [1, 64, 128, 256]
    couts = [64, 128, 256, 512]
    for ci, co in zip(cins, couts):
        key, kw, kb = jax.random.split(key, 3)
        scale = (2.0 / (9 * ci)) ** 0.5
        w = jax.random.normal(kw, (9, ci, co), jnp.float32) * scale  # (dy*3+dx, Cin, Cout)
        b = jax.random.normal(kb, (1, co), jnp.float32) * 0.01
        params["conv"].append((w, b))
    key, k1, k2, k3, k4 = jax.random.split(key, 5)
    params["w1"] = jax.random.normal(k1, (512, 256), jnp.float32) * (1.0 / 512) ** 0.5
    params["b1"] = jax.random.normal(k2, (1, 256), jnp.float32) * 0.01
    params["w2"] = jax.random.normal(k3, (256, 62), jnp.float32) * (1.0 / 256) ** 0.5
    params["b2"] = jax.random.normal(k4, (1, 62), jnp.float32) * 0.01
    return params


# -----------------------------------------------------------------------------
# Pure-JAX reference (torch-faithful; correctness check only)
# -----------------------------------------------------------------------------
def ref_forward(x_nchw, params):
    """Reference forward with matmul/conv inputs rounded to bf16 (accumulation
    in f32), mirroring the kernel's precision.  The MLP is left UNFUSED here
    (two separate Linears) so it stays faithful to the PyTorch module; the
    kernel's exact fc1.fc2 fold differs only by bf16 rounding."""
    q = lambda t: t.astype(jnp.bfloat16).astype(jnp.float32)
    x = jnp.transpose(x_nchw, (0, 2, 3, 1)).astype(jnp.float32)
    for (w, b) in params["conv"]:
        w4 = q(w).reshape(3, 3, w.shape[1], w.shape[2])  # HWIO
        x = jax.lax.conv_general_dilated(
            q(x), w4, window_strides=(1, 1), padding="SAME",
            dimension_numbers=("NHWC", "HWIO", "NHWC"),
            precision=jax.lax.Precision.HIGHEST,
        ) + b.reshape(1, 1, 1, -1)
        x = jnp.maximum(x, 0.0)
        x = jax.lax.reduce_window(
            x, -jnp.inf, jax.lax.max, (1, 2, 2, 1), (1, 2, 2, 1), "VALID")
    x = x.reshape(x.shape[0], -1)
    x = jnp.dot(q(x), q(params["w1"]),
                precision=jax.lax.Precision.HIGHEST) + params["b1"]
    x = jnp.dot(x, q(params["w2"]),
                precision=jax.lax.Precision.HIGHEST) + params["b2"]
    return x


# -----------------------------------------------------------------------------
if __name__ == "__main__":
    key = jax.random.PRNGKey(0)
    k_x, k_p = jax.random.split(key)

    # Input: batch=2, 1 channel, 16x16 spatial (four 2x2 pools -> 1x1x512).
    x = jax.random.normal(k_x, (2, 1, 16, 16), jnp.float32)
    params = init_params(k_p)
    kparams = prepare_kernel_params(params)   # hoisted out of the jitted path

    out = jax.block_until_ready(cnn_forward(x, kparams))
    assert out.shape == (2, 62), out.shape

    ref = jax.block_until_ready(ref_forward(x, params))
    err = jnp.max(jnp.abs(out - ref)) / (jnp.max(jnp.abs(ref)) + 1e-6)
    assert float(err) < 2e-2, f"mismatch vs reference: rel err {float(err)}"

    print("KERNEL_OK")
</pallas_src>

<mosaic_0001>
module attributes {stable_mosaic.version = 11 : i64} {
  func.func @_fused_cnn_kernel(%arg0: i32, %arg1: memref<2x64x16xbf16, #tpu.memory_space<vmem>>, %arg2: memref<16x256xbf16, #tpu.memory_space<vmem>>, %arg3: memref<1x64xf32, #tpu.memory_space<vmem>>, %arg4: memref<576x128xbf16, #tpu.memory_space<vmem>>, %arg5: memref<1x128xf32, #tpu.memory_space<vmem>>, %arg6: memref<1152x256xbf16, #tpu.memory_space<vmem>>, %arg7: memref<1x256xf32, #tpu.memory_space<vmem>>, %arg8: memref<2304x512xbf16, #tpu.memory_space<vmem>>, %arg9: memref<1x512xf32, #tpu.memory_space<vmem>>, %arg10: memref<512x128xbf16, #tpu.memory_space<vmem>>, %arg11: memref<1x128xf32, #tpu.memory_space<vmem>>, %arg12: memref<2x128xf32, #tpu.memory_space<vmem>>, %arg13: memref<2x10x10x64xbf16, #tpu.memory_space<vmem>>, %arg14: memref<128x576xbf16, #tpu.memory_space<vmem>>, %arg15: memref<2x6x6x128xbf16, #tpu.memory_space<vmem>>, %arg16: memref<32x1152xbf16, #tpu.memory_space<vmem>>, %arg17: memref<2x4x4x256xbf16, #tpu.memory_space<vmem>>, %arg18: memref<8x2304xbf16, #tpu.memory_space<vmem>>) attributes {dimension_semantics = [#tpu.dimension_semantics<parallel>], iteration_bounds = array<i64: 1>, scalar_prefetch = 0 : i64, scratch_operands = 6 : i64, tpu.core_type = #tpu.core_type<tc>, window_params = [{transform_indices = @transform_0, window_bounds = array<i64: 2, 64, 16>}, {pipeline_mode = #tpu.pipeline_mode<synchronous>, transform_indices = @transform_1, window_bounds = array<i64: 16, 256>}, {pipeline_mode = #tpu.pipeline_mode<synchronous>, transform_indices = @transform_2, window_bounds = array<i64: 1, 64>}, {pipeline_mode = #tpu.pipeline_mode<synchronous>, transform_indices = @transform_3, window_bounds = array<i64: 576, 128>}, {pipeline_mode = #tpu.pipeline_mode<synchronous>, transform_indices = @transform_4, window_bounds = array<i64: 1, 128>}, {pipeline_mode = #tpu.pipeline_mode<synchronous>, transform_indices = @transform_5, window_bounds = array<i64: 1152, 256>}, {pipeline_mode = #tpu.pipeline_mode<synchronous>, transform_indices = @transform_6, window_bounds = array<i64: 1, 256>}, {pipeline_mode = #tpu.pipeline_mode<synchronous>, transform_indices = @transform_7, window_bounds = array<i64: 2304, 512>}, {pipeline_mode = #tpu.pipeline_mode<synchronous>, transform_indices = @transform_8, window_bounds = array<i64: 1, 512>}, {pipeline_mode = #tpu.pipeline_mode<synchronous>, transform_indices = @transform_9, window_bounds = array<i64: 512, 128>}, {pipeline_mode = #tpu.pipeline_mode<synchronous>, transform_indices = @transform_10, window_bounds = array<i64: 1, 128>}, {transform_indices = @transform_11, window_bounds = array<i64: 2, 128>}]} {
    %c0 = arith.constant 0 : index
    %c0_0 = arith.constant 0 : index
    %c0_1 = arith.constant 0 : index
    %0 = vector.load %arg1[%c0, %c0_0, %c0_1] : memref<2x64x16xbf16, #tpu.memory_space<vmem>>, vector<2x64x16xbf16>
    %1 = vector.shape_cast %0 : vector<2x64x16xbf16> to vector<128x16xbf16>
    %c0_2 = arith.constant 0 : index
    %c0_3 = arith.constant 0 : index
    %2 = vector.load %arg2[%c0_2, %c0_3] : memref<16x256xbf16, #tpu.memory_space<vmem>>, vector<16x256xbf16>
    %cst = arith.constant dense<0.000000e+00> : vector<128x256xf32>
    %3 = tpu.matmul %1, %2, %cst {dimension_numbers = #tpu.dot_dimension_numbers<[1], [0], [0], [1], [0, 0, 1, 1], [], []>} : vector<128x16xbf16>, vector<16x256xbf16>, vector<128x256xf32> -> vector<128x256xf32>
    %4 = vector.extract_strided_slice %3 {offsets = [0, 0], sizes = [128, 64], strides = [1, 1]} : vector<128x256xf32> to vector<128x64xf32>
    %5 = vector.extract_strided_slice %3 {offsets = [0, 64], sizes = [128, 64], strides = [1, 1]} : vector<128x256xf32> to vector<128x64xf32>
    %6 = arith.maximumf %4, %5 : vector<128x64xf32>
    %7 = vector.extract_strided_slice %3 {offsets = [0, 128], sizes = [128, 64], strides = [1, 1]} : vector<128x256xf32> to vector<128x64xf32>
    %8 = vector.extract_strided_slice %3 {offsets = [0, 192], sizes = [128, 64], strides = [1, 1]} : vector<128x256xf32> to vector<128x64xf32>
    %9 = arith.maximumf %7, %8 : vector<128x64xf32>
    %10 = arith.maximumf %6, %9 : vector<128x64xf32>
    %c0_4 = arith.constant 0 : index
    %c0_5 = arith.constant 0 : index
    %11 = vector.load %arg3[%c0_4, %c0_5] : memref<1x64xf32, #tpu.memory_space<vmem>>, vector<1x64xf32>
    %12 = vector.broadcast %11 : vector<1x64xf32> to vector<128x64xf32>
    %13 = arith.addf %10, %12 : vector<128x64xf32>
    %cst_6 = arith.constant 0.000000e+00 : f32
    %14 = vector.broadcast %cst_6 : f32 to vector<128x64xf32>
    %15 = arith.maximumf %13, %14 : vector<128x64xf32>
    %16 = vector.shape_cast %15 : vector<128x64xf32> to vector<2x8x8x64xf32>
    %cst_7 = arith.constant 0.000000e+00 : bf16
    %17 = vector.broadcast %cst_7 : bf16 to vector<2x1x10x64xbf16>
    %c0_8 = arith.constant 0 : index
    %c0_9 = arith.constant 0 : index
    %c0_10 = arith.constant 0 : index
    %c0_11 = arith.constant 0 : index
    %18 = vector.load %arg13[%c0_8, %c0_9, %c0_10, %c0_11] : memref<2x10x10x64xbf16, #tpu.memory_space<vmem>>, vector<2x1x10x64xbf16>
    tpu.vector_store %arg13[%c0_8, %c0_9, %c0_10, %c0_11], %17 {strides = array<i32>} : memref<2x10x10x64xbf16, #tpu.memory_space<vmem>>, vector<2x1x10x64xbf16>,
    %cst_12 = arith.constant 0.000000e+00 : bf16
    %19 = vector.broadcast %cst_12 : bf16 to vector<2x1x10x64xbf16>
    %c0_13 = arith.constant 0 : index
    %c9 = arith.constant 9 : index
    %c0_14 = arith.constant 0 : index
    %c0_15 = arith.constant 0 : index
    %20 = vector.load %arg13[%c0_13, %c9, %c0_14, %c0_15] : memref<2x10x10x64xbf16, #tpu.memory_space<vmem>>, vector<2x1x10x64xbf16>
    tpu.vector_store %arg13[%c0_13, %c9, %c0_14, %c0_15], %19 {strides = array<i32>} : memref<2x10x10x64xbf16, #tpu.memory_space<vmem>>, vector<2x1x10x64xbf16>,
    %cst_16 = arith.constant 0.000000e+00 : bf16
    %21 = vector.broadcast %cst_16 : bf16 to vector<2x8x1x64xbf16>
    %c0_17 = arith.constant 0 : index
    %c1 = arith.constant 1 : index
    %c0_18 = arith.constant 0 : index
    %c0_19 = arith.constant 0 : index
    %22 = vector.load %arg13[%c0_17, %c1, %c0_18, %c0_19] : memref<2x10x10x64xbf16, #tpu.memory_space<vmem>>, vector<2x8x1x64xbf16>
    tpu.vector_store %arg13[%c0_17, %c1, %c0_18, %c0_19], %21 {strides = array<i32>} : memref<2x10x10x64xbf16, #tpu.memory_space<vmem>>, vector<2x8x1x64xbf16>,
    %cst_20 = arith.constant 0.000000e+00 : bf16
    %23 = vector.broadcast %cst_20 : bf16 to vector<2x8x1x64xbf16>
    %c0_21 = arith.constant 0 : index
    %c1_22 = arith.constant 1 : index
    %c9_23 = arith.constant 9 : index
    %c0_24 = arith.constant 0 : index
    %24 = vector.load %arg13[%c0_21, %c1_22, %c9_23, %c0_24] : memref<2x10x10x64xbf16, #tpu.memory_space<vmem>>, vector<2x8x1x64xbf16>
    tpu.vector_store %arg13[%c0_21, %c1_22, %c9_23, %c0_24], %23 {strides = array<i32>} : memref<2x10x10x64xbf16, #tpu.memory_space<vmem>>, vector<2x8x1x64xbf16>,
    %25 = arith.truncf %16 : vector<2x8x8x64xf32> to vector<2x8x8x64xbf16>
    %c0_25 = arith.constant 0 : index
    %c1_26 = arith.constant 1 : index
    %c1_27 = arith.constant 1 : index
    %c0_28 = arith.constant 0 : index
    %26 = vector.load %arg13[%c0_25, %c1_26, %c1_27, %c0_28] : memref<2x10x10x64xbf16, #tpu.memory_space<vmem>>, vector<2x8x8x64xbf16>
    tpu.vector_store %arg13[%c0_25, %c1_26, %c1_27, %c0_28], %25 {strides = array<i32>} : memref<2x10x10x64xbf16, #tpu.memory_space<vmem>>, vector<2x8x8x64xbf16>,
    %c0_29 = arith.constant 0 : index
    %c0_30 = arith.constant 0 : index
    %c0_31 = arith.constant 0 : index
    %c0_32 = arith.constant 0 : index
    %27 = vector.load %arg13[%c0_29, %c0_30, %c0_31, %c0_32] : memref<2x10x10x64xbf16, #tpu.memory_space<vmem>>, vector<2x8x8x64xbf16>
    %28 = vector.shape_cast %27 : vector<2x8x8x64xbf16> to vector<128x64xbf16>
    %c0_33 = arith.constant 0 : index
    %c0_34 = arith.constant 0 : index
    %29 = vector.load %arg14[%c0_33, %c0_34] : memref<128x576xbf16, #tpu.memory_space<vmem>>, vector<128x64xbf16>
    tpu.vector_store %arg14[%c0_33, %c0_34], %28 {strides = array<i32>} : memref<128x576xbf16, #tpu.memory_space<vmem>>, vector<128x64xbf16>,
    %c0_35 = arith.constant 0 : index
    %c0_36 = arith.constant 0 : index
    %c1_37 = arith.constant 1 : index
    %c0_38 = arith.constant 0 : index
    %30 = vector.load %arg13[%c0_35, %c0_36, %c1_37, %c0_38] : memref<2x10x10x64xbf16, #tpu.memory_space<vmem>>, vector<2x8x8x64xbf16>
    %31 = vector.shape_cast %30 : vector<2x8x8x64xbf16> to vector<128x64xbf16>
    %c0_39 = arith.constant 0 : index
    %c64 = arith.constant 64 : index
    %32 = vector.load %arg14[%c0_39, %c64] : memref<128x576xbf16, #tpu.memory_space<vmem>>, vector<128x64xbf16>
    tpu.vector_store %arg14[%c0_39, %c64], %31 {strides = array<i32>} : memref<128x576xbf16, #tpu.memory_space<vmem>>, vector<128x64xbf16>,
    %c0_40 = arith.constant 0 : index
    %c0_41 = arith.constant 0 : index
    %c2 = arith.constant 2 : index
    %c0_42 = arith.constant 0 : index
    %33 = vector.load %arg13[%c0_40, %c0_41, %c2, %c0_42] : memref<2x10x10x64xbf16, #tpu.memory_space<vmem>>, vector<2x8x8x64xbf16>
    %34 = vector.shape_cast %33 : vector<2x8x8x64xbf16> to vector<128x64xbf16>
    %c0_43 = arith.constant 0 : index
    %c128 = arith.constant 128 : index
    %35 = vector.load %arg14[%c0_43, %c128] : memref<128x576xbf16, #tpu.memory_space<vmem>>, vector<128x64xbf16>
    tpu.vector_store %arg14[%c0_43, %c128], %34 {strides = array<i32>} : memref<128x576xbf16, #tpu.memory_space<vmem>>, vector<128x64xbf16>,
    %c0_44 = arith.constant 0 : index
    %c1_45 = arith.constant 1 : index
    %c0_46 = arith.constant 0 : index
    %c0_47 = arith.constant 0 : index
    %36 = vector.load %arg13[%c0_44, %c1_45, %c0_46, %c0_47] : memref<2x10x10x64xbf16, #tpu.memory_space<vmem>>, vector<2x8x8x64xbf16>
    %37 = vector.shape_cast %36 : vector<2x8x8x64xbf16> to vector<128x64xbf16>
    %c0_48 = arith.constant 0 : index
    %c192 = arith.constant 192 : index
    %38 = vector.load %arg14[%c0_48, %c192] : memref<128x576xbf16, #tpu.memory_space<vmem>>, vector<128x64xbf16>
    tpu.vector_store %arg14[%c0_48, %c192], %37 {strides = array<i32>} : memref<128x576xbf16, #tpu.memory_space<vmem>>, vector<128x64xbf16>,
    %c0_49 = arith.constant 0 : index
    %c1_50 = arith.constant 1 : index
    %c1_51 = arith.constant 1 : index
    %c0_52 = arith.constant 0 : index
    %39 = vector.load %arg13[%c0_49, %c1_50, %c1_51, %c0_52] : memref<2x10x10x64xbf16, #tpu.memory_space<vmem>>, vector<2x8x8x64xbf16>
    %40 = vector.shape_cast %39 : vector<2x8x8x64xbf16> to vector<128x64xbf16>
    %c0_53 = arith.constant 0 : index
    %c256 = arith.constant 256 : index
    %41 = vector.load %arg14[%c0_53, %c256] : memref<128x576xbf16, #tpu.memory_space<vmem>>, vector<128x64xbf16>
    tpu.vector_store %arg14[%c0_53, %c256], %40 {strides = array<i32>} : memref<128x576xbf16, #tpu.memory_space<vmem>>, vector<128x64xbf16>,
    %c0_54 = arith.constant 0 : index
    %c1_55 = arith.constant 1 : index
    %c2_56 = arith.constant 2 : index
    %c0_57 = arith.constant 0 : index
    %42 = vector.load %arg13[%c0_54, %c1_55, %c2_56, %c0_57] : memref<2x10x10x64xbf16, #tpu.memory_space<vmem>>, vector<2x8x8x64xbf16>
    %43 = vector.shape_cast %42 : vector<2x8x8x64xbf16> to vector<128x64xbf16>
    %c0_58 = arith.constant 0 : index
    %c320 = arith.constant 320 : index
    %44 = vector.load %arg14[%c0_58, %c320] : memref<128x576xbf16, #tpu.memory_space<vmem>>, vector<128x64xbf16>
    tpu.vector_store %arg14[%c0_58, %c320], %43 {strides = array<i32>} : memref<128x576xbf16, #tpu.memory_space<vmem>>, vector<128x64xbf16>,
    %c0_59 = arith.constant 0 : index
    %c2_60 = arith.constant 2 : index
    %c0_61 = arith.constant 0 : index
    %c0_62 = arith.constant 0 : index
    %45 = vector.load %arg13[%c0_59, %c2_60, %c0_61, %c0_62] : memref<2x10x10x64xbf16, #tpu.memory_space<vmem>>, vector<2x8x8x64xbf16>
    %46 = vector.shape_cast %45 : vector<2x8x8x64xbf16> to vector<128x64xbf16>
    %c0_63 = arith.constant 0 : index
    %c384 = arith.constant 384 : index
    %47 = vector.load %arg14[%c0_63, %c384] : memref<128x576xbf16, #tpu.memory_space<vmem>>, vector<128x64xbf16>
    tpu.vector_store %arg14[%c0_63, %c384], %46 {strides = array<i32>} : memref<128x576xbf16, #tpu.memory_space<vmem>>, vector<128x64xbf16>,
    %c0_64 = arith.constant 0 : index
    %c2_65 = arith.constant 2 : index
    %c1_66 = arith.constant 1 : index
    %c0_67 = arith.constant 0 : index
    %48 = vector.load %arg13[%c0_64, %c2_65, %c1_66, %c0_67] : memref<2x10x10x64xbf16, #tpu.memory_space<vmem>>, vector<2x8x8x64xbf16>
    %49 = vector.shape_cast %48 : vector<2x8x8x64xbf16> to vector<128x64xbf16>
    %c0_68 = arith.constant 0 : index
    %c448 = arith.constant 448 : index
    %50 = vector.load %arg14[%c0_68, %c448] : memref<128x576xbf16, #tpu.memory_space<vmem>>, vector<128x64xbf16>
    tpu.vector_store %arg14[%c0_68, %c448], %49 {strides = array<i32>} : memref<128x576xbf16, #tpu.memory_space<vmem>>, vector<128x64xbf16>,
    %c0_69 = arith.constant 0 : index
    %c2_70 = arith.constant 2 : index
    %c2_71 = arith.constant 2 : index
    %c0_72 = arith.constant 0 : index
    %51 = vector.load %arg13[%c0_69, %c2_70, %c2_71, %c0_72] : memref<2x10x10x64xbf16, #tpu.memory_space<vmem>>, vector<2x8x8x64xbf16>
    %52 = vector.shape_cast %51 : vector<2x8x8x64xbf16> to vector<128x64xbf16>
    %c0_73 = arith.constant 0 : index
    %c512 = arith.constant 512 : index
    %53 = vector.load %arg14[%c0_73, %c512] : memref<128x576xbf16, #tpu.memory_space<vmem>>, vector<128x64xbf16>
    tpu.vector_store %arg14[%c0_73, %c512], %52 {strides = array<i32>} : memref<128x576xbf16, #tpu.memory_space<vmem>>, vector<128x64xbf16>,
    %c0_74 = arith.constant 0 : index
    %c0_75 = arith.constant 0 : index
    %54 = vector.load %arg14[%c0_74, %c0_75] : memref<128x576xbf16, #tpu.memory_space<vmem>>, vector<128x576xbf16>
    %c0_76 = arith.constant 0 : index
    %c0_77 = arith.constant 0 : index
    %55 = vector.load %arg4[%c0_76, %c0_77] : memref<576x128xbf16, #tpu.memory_space<vmem>>, vector<576x128xbf16>
    %cst_78 = arith.constant dense<0.000000e+00> : vector<128x128xf32>
    %56 = tpu.matmul %54, %55, %cst_78 {dimension_numbers = #tpu.dot_dimension_numbers<[1], [0], [0], [1], [0, 0, 1, 1], [], []>} : vector<128x576xbf16>, vector<576x128xbf16>, vector<128x128xf32> -> vector<128x128xf32>
    %c0_79 = arith.constant 0 : index
    %c0_80 = arith.constant 0 : index
    %57 = vector.load %arg5[%c0_79, %c0_80] : memref<1x128xf32, #tpu.memory_space<vmem>>, vector<1x128xf32>
    %58 = vector.broadcast %57 : vector<1x128xf32> to vector<128x128xf32>
    %59 = arith.addf %56, %58 : vector<128x128xf32>
    %cst_81 = arith.constant 0.000000e+00 : f32
    %60 = vector.broadcast %cst_81 : f32 to vector<128x128xf32>
    %61 = arith.maximumf %59, %60 : vector<128x128xf32>
    %62 = vector.shape_cast %61 : vector<128x128xf32> to vector<16x4x2x128xf32>
    %cst_82 = arith.constant dense<0xFF800000> : vector<16x4x128xf32>
    %63 = vector.multi_reduction <maximumf>, %62, %cst_82 [2] : vector<16x4x2x128xf32> to vector<16x4x128xf32>
    %64 = vector.shape_cast %63 : vector<16x4x128xf32> to vector<8x2x4x128xf32>
    %cst_83 = arith.constant dense<0xFF800000> : vector<8x4x128xf32>
    %65 = vector.multi_reduction <maximumf>, %64, %cst_83 [1] : vector<8x2x4x128xf32> to vector<8x4x128xf32>
    %66 = vector.shape_cast %65 : vector<8x4x128xf32> to vector<2x4x4x128xf32>
    %cst_84 = arith.constant 0.000000e+00 : bf16
    %67 = vector.broadcast %cst_84 : bf16 to vector<2x1x6x128xbf16>
    %c0_85 = arith.constant 0 : index
    %c0_86 = arith.constant 0 : index
    %c0_87 = arith.constant 0 : index
    %c0_88 = arith.constant 0 : index
    %68 = vector.load %arg15[%c0_85, %c0_86, %c0_87, %c0_88] : memref<2x6x6x128xbf16, #tpu.memory_space<vmem>>, vector<2x1x6x128xbf16>
    tpu.vector_store %arg15[%c0_85, %c0_86, %c0_87, %c0_88], %67 {strides = array<i32>} : memref<2x6x6x128xbf16, #tpu.memory_space<vmem>>, vector<2x1x6x128xbf16>,
    %cst_89 = arith.constant 0.000000e+00 : bf16
    %69 = vector.broadcast %cst_89 : bf16 to vector<2x1x6x128xbf16>
    %c0_90 = arith.constant 0 : index
    %c5 = arith.constant 5 : index
    %c0_91 = arith.constant 0 : index
    %c0_92 = arith.constant 0 : index
    %70 = vector.load %arg15[%c0_90, %c5, %c0_91, %c0_92] : memref<2x6x6x128xbf16, #tpu.memory_space<vmem>>, vector<2x1x6x128xbf16>
    tpu.vector_store %arg15[%c0_90, %c5, %c0_91, %c0_92], %69 {strides = array<i32>} : memref<2x6x6x128xbf16, #tpu.memory_space<vmem>>, vector<2x1x6x128xbf16>,
    %cst_93 = arith.constant 0.000000e+00 : bf16
    %71 = vector.broadcast %cst_93 : bf16 to vector<2x4x1x128xbf16>
    %c0_94 = arith.constant 0 : index
    %c1_95 = arith.constant 1 : index
    %c0_96 = arith.constant 0 : index
    %c0_97 = arith.constant 0 : index
    %72 = vector.load %arg15[%c0_94, %c1_95, %c0_96, %c0_97] : memref<2x6x6x128xbf16, #tpu.memory_space<vmem>>, vector<2x4x1x128xbf16>
    tpu.vector_store %arg15[%c0_94, %c1_95, %c0_96, %c0_97], %71 {strides = array<i32>} : memref<2x6x6x128xbf16, #tpu.memory_space<vmem>>, vector<2x4x1x128xbf16>,
    %cst_98 = arith.constant 0.000000e+00 : bf16
    %73 = vector.broadcast %cst_98 : bf16 to vector<2x4x1x128xbf16>
    %c0_99 = arith.constant 0 : index
    %c1_100 = arith.constant 1 : index
    %c5_101 = arith.constant 5 : index
    %c0_102 = arith.constant 0 : index
    %74 = vector.load %arg15[%c0_99, %c1_100, %c5_101, %c0_102] : memref<2x6x6x128xbf16, #tpu.memory_space<vmem>>, vector<2x4x1x128xbf16>
    tpu.vector_store %arg15[%c0_99, %c1_100, %c5_101, %c0_102], %73 {strides = array<i32>} : memref<2x6x6x128xbf16, #tpu.memory_space<vmem>>, vector<2x4x1x128xbf16>,
    %75 = arith.truncf %66 : vector<2x4x4x128xf32> to vector<2x4x4x128xbf16>
    %c0_103 = arith.constant 0 : index
    %c1_104 = arith.constant 1 : index
    %c1_105 = arith.constant 1 : index
    %c0_106 = arith.constant 0 : index
    %76 = vector.load %arg15[%c0_103, %c1_104, %c1_105, %c0_106] : memref<2x6x6x128xbf16, #tpu.memory_space<vmem>>, vector<2x4x4x128xbf16>
    tpu.vector_store %arg15[%c0_103, %c1_104, %c1_105, %c0_106], %75 {strides = array<i32>} : memref<2x6x6x128xbf16, #tpu.memory_space<vmem>>, vector<2x4x4x128xbf16>,
    %c0_107 = arith.constant 0 : index
    %c0_108 = arith.constant 0 : index
    %c0_109 = arith.constant 0 : index
    %c0_110 = arith.constant 0 : index
    %77 = vector.load %arg15[%c0_107, %c0_108, %c0_109, %c0_110] : memref<2x6x6x128xbf16, #tpu.memory_space<vmem>>, vector<2x4x4x128xbf16>
    %78 = vector.shape_cast %77 : vector<2x4x4x128xbf16> to vector<32x128xbf16>
    %c0_111 = arith.constant 0 : index
    %c0_112 = arith.constant 0 : index
    %79 = vector.load %arg16[%c0_111, %c0_112] : memref<32x1152xbf16, #tpu.memory_space<vmem>>, vector<32x128xbf16>
    tpu.vector_store %arg16[%c0_111, %c0_112], %78 {strides = array<i32>} : memref<32x1152xbf16, #tpu.memory_space<vmem>>, vector<32x128xbf16>,
    %c0_113 = arith.constant 0 : index
    %c0_114 = arith.constant 0 : index
    %c1_115 = arith.constant 1 : index
    %c0_116 = arith.constant 0 : index
    %80 = vector.load %arg15[%c0_113, %c0_114, %c1_115, %c0_116] : memref<2x6x6x128xbf16, #tpu.memory_space<vmem>>, vector<2x4x4x128xbf16>
    %81 = vector.shape_cast %80 : vector<2x4x4x128xbf16> to vector<32x128xbf16>
    %c0_117 = arith.constant 0 : index
    %c128_118 = arith.constant 128 : index
    %82 = vector.load %arg16[%c0_117, %c128_118] : memref<32x1152xbf16, #tpu.memory_space<vmem>>, vector<32x128xbf16>
    tpu.vector_store %arg16[%c0_117, %c128_118], %81 {strides = array<i32>} : memref<32x1152xbf16, #tpu.memory_space<vmem>>, vector<32x128xbf16>,
    %c0_119 = arith.constant 0 : index
    %c0_120 = arith.constant 0 : index
    %c2_121 = arith.constant 2 : index
    %c0_122 = arith.constant 0 : index
    %83 = vector.load %arg15[%c0_119, %c0_120, %c2_121, %c0_122] : memref<2x6x6x128xbf16, #tpu.memory_space<vmem>>, vector<2x4x4x128xbf16>
    %84 = vector.shape_cast %83 : vector<2x4x4x128xbf16> to vector<32x128xbf16>
    %c0_123 = arith.constant 0 : index
    %c256_124 = arith.constant 256 : index
    %85 = vector.load %arg16[%c0_123, %c256_124] : memref<32x1152xbf16, #tpu.memory_space<vmem>>, vector<32x128xbf16>
    tpu.vector_store %arg16[%c0_123, %c256_124], %84 {strides = array<i32>} : memref<32x1152xbf16, #tpu.memory_space<vmem>>, vector<32x128xbf16>,
    %c0_125 = arith.constant 0 : index
    %c1_126 = arith.constant 1 : index
    %c0_127 = arith.constant 0 : index
    %c0_128 = arith.constant 0 : index
    %86 = vector.load %arg15[%c0_125, %c1_126, %c0_127, %c0_128] : memref<2x6x6x128xbf16, #tpu.memory_space<vmem>>, vector<2x4x4x128xbf16>
    %87 = vector.shape_cast %86 : vector<2x4x4x128xbf16> to vector<32x128xbf16>
    %c0_129 = arith.constant 0 : index
    %c384_130 = arith.constant 384 : index
    %88 = vector.load %arg16[%c0_129, %c384_130] : memref<32x1152xbf16, #tpu.memory_space<vmem>>, vector<32x128xbf16>
    tpu.vector_store %arg16[%c0_129, %c384_130], %87 {strides = array<i32>} : memref<32x1152xbf16, #tpu.memory_space<vmem>>, vector<32x128xbf16>,
    %c0_131 = arith.constant 0 : index
    %c1_132 = arith.constant 1 : index
    %c1_133 = arith.constant 1 : index
    %c0_134 = arith.constant 0 : index
    %89 = vector.load %arg15[%c0_131, %c1_132, %c1_133, %c0_134] : memref<2x6x6x128xbf16, #tpu.memory_space<vmem>>, vector<2x4x4x128xbf16>
    %90 = vector.shape_cast %89 : vector<2x4x4x128xbf16> to vector<32x128xbf16>
    %c0_135 = arith.constant 0 : index
    %c512_136 = arith.constant 512 : index
    %91 = vector.load %arg16[%c0_135, %c512_136] : memref<32x1152xbf16, #tpu.memory_space<vmem>>, vector<32x128xbf16>
    tpu.vector_store %arg16[%c0_135, %c512_136], %90 {strides = array<i32>} : memref<32x1152xbf16, #tpu.memory_space<vmem>>, vector<32x128xbf16>,
    %c0_137 = arith.constant 0 : index
    %c1_138 = arith.constant 1 : index
    %c2_139 = arith.constant 2 : index
    %c0_140 = arith.constant 0 : index
    %92 = vector.load %arg15[%c0_137, %c1_138, %c2_139, %c0_140] : memref<2x6x6x128xbf16, #tpu.memory_space<vmem>>, vector<2x4x4x128xbf16>
    %93 = vector.shape_cast %92 : vector<2x4x4x128xbf16> to vector<32x128xbf16>
    %c0_141 = arith.constant 0 : index
    %c640 = arith.constant 640 : index
    %94 = vector.load %arg16[%c0_141, %c640] : memref<32x1152xbf16, #tpu.memory_space<vmem>>, vector<32x128xbf16>
    tpu.vector_store %arg16[%c0_141, %c640], %93 {strides = array<i32>} : memref<32x1152xbf16, #tpu.memory_space<vmem>>, vector<32x128xbf16>,
    %c0_142 = arith.constant 0 : index
    %c2_143 = arith.constant 2 : index
    %c0_144 = arith.constant 0 : index
    %c0_145 = arith.constant 0 : index
    %95 = vector.load %arg15[%c0_142, %c2_143, %c0_144, %c0_145] : memref<2x6x6x128xbf16, #tpu.memory_space<vmem>>, vector<2x4x4x128xbf16>
    %96 = vector.shape_cast %95 : vector<2x4x4x128xbf16> to vector<32x128xbf16>
    %c0_146 = arith.constant 0 : index
    %c768 = arith.constant 768 : index
    %97 = vector.load %arg16[%c0_146, %c768] : memref<32x1152xbf16, #tpu.memory_space<vmem>>, vector<32x128xbf16>
    tpu.vector_store %arg16[%c0_146, %c768], %96 {strides = array<i32>} : memref<32x1152xbf16, #tpu.memory_space<vmem>>, vector<32x128xbf16>,
    %c0_147 = arith.constant 0 : index
    %c2_148 = arith.constant 2 : index
    %c1_149 = arith.constant 1 : index
    %c0_150 = arith.constant 0 : index
    %98 = vector.load %arg15[%c0_147, %c2_148, %c1_149, %c0_150] : memref<2x6x6x128xbf16, #tpu.memory_space<vmem>>, vector<2x4x4x128xbf16>
    %99 = vector.shape_cast %98 : vector<2x4x4x128xbf16> to vector<32x128xbf16>
    %c0_151 = arith.constant 0 : index
    %c896 = arith.constant 896 : index
    %100 = vector.load %arg16[%c0_151, %c896] : memref<32x1152xbf16, #tpu.memory_space<vmem>>, vector<32x128xbf16>
    tpu.vector_store %arg16[%c0_151, %c896], %99 {strides = array<i32>} : memref<32x1152xbf16, #tpu.memory_space<vmem>>, vector<32x128xbf16>,
    %c0_152 = arith.constant 0 : index
    %c2_153 = arith.constant 2 : index
    %c2_154 = arith.constant 2 : index
    %c0_155 = arith.constant 0 : index
    %101 = vector.load %arg15[%c0_152, %c2_153, %c2_154, %c0_155] : memref<2x6x6x128xbf16, #tpu.memory_space<vmem>>, vector<2x4x4x128xbf16>
    %102 = vector.shape_cast %101 : vector<2x4x4x128xbf16> to vector<32x128xbf16>
    %c0_156 = arith.constant 0 : index
    %c1024 = arith.constant 1024 : index
    %103 = vector.load %arg16[%c0_156, %c1024] : memref<32x1152xbf16, #tpu.memory_space<vmem>>, vector<32x128xbf16>
    tpu.vector_store %arg16[%c0_156, %c1024], %102 {strides = array<i32>} : memref<32x1152xbf16, #tpu.memory_space<vmem>>, vector<32x128xbf16>,
    %c0_157 = arith.constant 0 : index
    %c0_158 = arith.constant 0 : index
    %104 = vector.load %arg16[%c0_157, %c0_158] : memref<32x1152xbf16, #tpu.memory_space<vmem>>, vector<32x1152xbf16>
    %c0_159 = arith.constant 0 : index
    %c0_160 = arith.constant 0 : index
    %105 = vector.load %arg6[%c0_159, %c0_160] : memref<1152x256xbf16, #tpu.memory_space<vmem>>, vector<1152x256xbf16>
    %cst_161 = arith.constant dense<0.000000e+00> : vector<32x256xf32>
    %106 = tpu.matmul %104, %105, %cst_161 {dimension_numbers = #tpu.dot_dimension_numbers<[1], [0], [0], [1], [0, 0, 1, 1], [], []>} : vector<32x1152xbf16>, vector<1152x256xbf16>, vector<32x256xf32> -> vector<32x256xf32>
    %c0_162 = arith.constant 0 : index
    %c0_163 = arith.constant 0 : index
    %107 = vector.load %arg7[%c0_162, %c0_163] : memref<1x256xf32, #tpu.memory_space<vmem>>, vector<1x256xf32>
    %108 = vector.broadcast %107 : vector<1x256xf32> to vector<32x256xf32>
    %109 = arith.addf %106, %108 : vector<32x256xf32>
    %cst_164 = arith.constant 0.000000e+00 : f32
    %110 = vector.broadcast %cst_164 : f32 to vector<32x256xf32>
    %111 = arith.maximumf %109, %110 : vector<32x256xf32>
    %112 = vector.shape_cast %111 : vector<32x256xf32> to vector<8x2x2x256xf32>
    %cst_165 = arith.constant dense<0xFF800000> : vector<8x2x256xf32>
    %113 = vector.multi_reduction <maximumf>, %112, %cst_165 [2] : vector<8x2x2x256xf32> to vector<8x2x256xf32>
    %114 = vector.shape_cast %113 : vector<8x2x256xf32> to vector<4x2x2x256xf32>
    %cst_166 = arith.constant dense<0xFF800000> : vector<4x2x256xf32>
    %115 = vector.multi_reduction <maximumf>, %114, %cst_166 [1] : vector<4x2x2x256xf32> to vector<4x2x256xf32>
    %116 = vector.shape_cast %115 : vector<4x2x256xf32> to vector<2x2x2x256xf32>
    %cst_167 = arith.constant 0.000000e+00 : bf16
    %117 = vector.broadcast %cst_167 : bf16 to vector<2x1x4x256xbf16>
    %c0_168 = arith.constant 0 : index
    %c0_169 = arith.constant 0 : index
    %c0_170 = arith.constant 0 : index
    %c0_171 = arith.constant 0 : index
    %118 = vector.load %arg17[%c0_168, %c0_169, %c0_170, %c0_171] : memref<2x4x4x256xbf16, #tpu.memory_space<vmem>>, vector<2x1x4x256xbf16>
    tpu.vector_store %arg17[%c0_168, %c0_169, %c0_170, %c0_171], %117 {strides = array<i32>} : memref<2x4x4x256xbf16, #tpu.memory_space<vmem>>, vector<2x1x4x256xbf16>,
    %cst_172 = arith.constant 0.000000e+00 : bf16
    %119 = vector.broadcast %cst_172 : bf16 to vector<2x1x4x256xbf16>
    %c0_173 = arith.constant 0 : index
    %c3 = arith.constant 3 : index
    %c0_174 = arith.constant 0 : index
    %c0_175 = arith.constant 0 : index
    %120 = vector.load %arg17[%c0_173, %c3, %c0_174, %c0_175] : memref<2x4x4x256xbf16, #tpu.memory_space<vmem>>, vector<2x1x4x256xbf16>
    tpu.vector_store %arg17[%c0_173, %c3, %c0_174, %c0_175], %119 {strides = array<i32>} : memref<2x4x4x256xbf16, #tpu.memory_space<vmem>>, vector<2x1x4x256xbf16>,
    %cst_176 = arith.constant 0.000000e+00 : bf16
    %121 = vector.broadcast %cst_176 : bf16 to vector<2x2x1x256xbf16>
    %c0_177 = arith.constant 0 : index
    %c1_178 = arith.constant 1 : index
    %c0_179 = arith.constant 0 : index
    %c0_180 = arith.constant 0 : index
    %122 = vector.load %arg17[%c0_177, %c1_178, %c0_179, %c0_180] : memref<2x4x4x256xbf16, #tpu.memory_space<vmem>>, vector<2x2x1x256xbf16>
    tpu.vector_store %arg17[%c0_177, %c1_178, %c0_179, %c0_180], %121 {strides = array<i32>} : memref<2x4x4x256xbf16, #tpu.memory_space<vmem>>, vector<2x2x1x256xbf16>,
    %cst_181 = arith.constant 0.000000e+00 : bf16
    %123 = vector.broadcast %cst_181 : bf16 to vector<2x2x1x256xbf16>
    %c0_182 = arith.constant 0 : index
    %c1_183 = arith.constant 1 : index
    %c3_184 = arith.constant 3 : index
    %c0_185 = arith.constant 0 : index
    %124 = vector.load %arg17[%c0_182, %c1_183, %c3_184, %c0_185] : memref<2x4x4x256xbf16, #tpu.memory_space<vmem>>, vector<2x2x1x256xbf16>
    tpu.vector_store %arg17[%c0_182, %c1_183, %c3_184, %c0_185], %123 {strides = array<i32>} : memref<2x4x4x256xbf16, #tpu.memory_space<vmem>>, vector<2x2x1x256xbf16>,
    %125 = arith.truncf %116 : vector<2x2x2x256xf32> to vector<2x2x2x256xbf16>
    %c0_186 = arith.constant 0 : index
    %c1_187 = arith.constant 1 : index
    %c1_188 = arith.constant 1 : index
    %c0_189 = arith.constant 0 : index
    %126 = vector.load %arg17[%c0_186, %c1_187, %c1_188, %c0_189] : memref<2x4x4x256xbf16, #tpu.memory_space<vmem>>, vector<2x2x2x256xbf16>
    tpu.vector_store %arg17[%c0_186, %c1_187, %c1_188, %c0_189], %125 {strides = array<i32>} : memref<2x4x4x256xbf16, #tpu.memory_space<vmem>>, vector<2x2x2x256xbf16>,
    %c0_190 = arith.constant 0 : index
    %c0_191 = arith.constant 0 : index
    %c0_192 = arith.constant 0 : index
    %c0_193 = arith.constant 0 : index
    %127 = vector.load %arg17[%c0_190, %c0_191, %c0_192, %c0_193] : memref<2x4x4x256xbf16, #tpu.memory_space<vmem>>, vector<2x2x2x256xbf16>
    %128 = vector.shape_cast %127 : vector<2x2x2x256xbf16> to vector<8x256xbf16>
    %c0_194 = arith.constant 0 : index
    %c0_195 = arith.constant 0 : index
    %129 = vector.load %arg18[%c0_194, %c0_195] : memref<8x2304xbf16, #tpu.memory_space<vmem>>, vector<8x256xbf16>
    tpu.vector_store %arg18[%c0_194, %c0_195], %128 {strides = array<i32>} : memref<8x2304xbf16, #tpu.memory_space<vmem>>, vector<8x256xbf16>,
    %c0_196 = arith.constant 0 : index
    %c0_197 = arith.constant 0 : index
    %c1_198 = arith.constant 1 : index
    %c0_199 = arith.constant 0 : index
    %130 = vector.load %arg17[%c0_196, %c0_197, %c1_198, %c0_199] : memref<2x4x4x256xbf16, #tpu.memory_space<vmem>>, vector<2x2x2x256xbf16>
    %131 = vector.shape_cast %130 : vector<2x2x2x256xbf16> to vector<8x256xbf16>
    %c0_200 = arith.constant 0 : index
    %c256_201 = arith.constant 256 : index
    %132 = vector.load %arg18[%c0_200, %c256_201] : memref<8x2304xbf16, #tpu.memory_space<vmem>>, vector<8x256xbf16>
    tpu.vector_store %arg18[%c0_200, %c256_201], %131 {strides = array<i32>} : memref<8x2304xbf16, #tpu.memory_space<vmem>>, vector<8x256xbf16>,
    %c0_202 = arith.constant 0 : index
    %c0_203 = arith.constant 0 : index
    %c2_204 = arith.constant 2 : index
    %c0_205 = arith.constant 0 : index
    %133 = vector.load %arg17[%c0_202, %c0_203, %c2_204, %c0_205] : memref<2x4x4x256xbf16, #tpu.memory_space<vmem>>, vector<2x2x2x256xbf16>
    %134 = vector.shape_cast %133 : vector<2x2x2x256xbf16> to vector<8x256xbf16>
    %c0_206 = arith.constant 0 : index
    %c512_207 = arith.constant 512 : index
    %135 = vector.load %arg18[%c0_206, %c512_207] : memref<8x2304xbf16, #tpu.memory_space<vmem>>, vector<8x256xbf16>
    tpu.vector_store %arg18[%c0_206, %c512_207], %134 {strides = array<i32>} : memref<8x2304xbf16, #tpu.memory_space<vmem>>, vector<8x256xbf16>,
    %c0_208 = arith.constant 0 : index
    %c1_209 = arith.constant 1 : index
    %c0_210 = arith.constant 0 : index
    %c0_211 = arith.constant 0 : index
    %136 = vector.load %arg17[%c0_208, %c1_209, %c0_210, %c0_211] : memref<2x4x4x256xbf16, #tpu.memory_space<vmem>>, vector<2x2x2x256xbf16>
    %137 = vector.shape_cast %136 : vector<2x2x2x256xbf16> to vector<8x256xbf16>
    %c0_212 = arith.constant 0 : index
    %c768_213 = arith.constant 768 : index
    %138 = vector.load %arg18[%c0_212, %c768_213] : memref<8x2304xbf16, #tpu.memory_space<vmem>>, vector<8x256xbf16>
    tpu.vector_store %arg18[%c0_212, %c768_213], %137 {strides = array<i32>} : memref<8x2304xbf16, #tpu.memory_space<vmem>>, vector<8x256xbf16>,
    %c0_214 = arith.constant 0 : index
    %c1_215 = arith.constant 1 : index
    %c1_216 = arith.constant 1 : index
    %c0_217 = arith.constant 0 : index
    %139 = vector.load %arg17[%c0_214, %c1_215, %c1_216, %c0_217] : memref<2x4x4x256xbf16, #tpu.memory_space<vmem>>, vector<2x2x2x256xbf16>
    %140 = vector.shape_cast %139 : vector<2x2x2x256xbf16> to vector<8x256xbf16>
    %c0_218 = arith.constant 0 : index
    %c1024_219 = arith.constant 1024 : index
    %141 = vector.load %arg18[%c0_218, %c1024_219] : memref<8x2304xbf16, #tpu.memory_space<vmem>>, vector<8x256xbf16>
    tpu.vector_store %arg18[%c0_218, %c1024_219], %140 {strides = array<i32>} : memref<8x2304xbf16, #tpu.memory_space<vmem>>, vector<8x256xbf16>,
    %c0_220 = arith.constant 0 : index
    %c1_221 = arith.constant 1 : index
    %c2_222 = arith.constant 2 : index
    %c0_223 = arith.constant 0 : index
    %142 = vector.load %arg17[%c0_220, %c1_221, %c2_222, %c0_223] : memref<2x4x4x256xbf16, #tpu.memory_space<vmem>>, vector<2x2x2x256xbf16>
    %143 = vector.shape_cast %142 : vector<2x2x2x256xbf16> to vector<8x256xbf16>
    %c0_224 = arith.constant 0 : index
    %c1280 = arith.constant 1280 : index
    %144 = vector.load %arg18[%c0_224, %c1280] : memref<8x2304xbf16, #tpu.memory_space<vmem>>, vector<8x256xbf16>
    tpu.vector_store %arg18[%c0_224, %c1280], %143 {strides = array<i32>} : memref<8x2304xbf16, #tpu.memory_space<vmem>>, vector<8x256xbf16>,
    %c0_225 = arith.constant 0 : index
    %c2_226 = arith.constant 2 : index
    %c0_227 = arith.constant 0 : index
    %c0_228 = arith.constant 0 : index
    %145 = vector.load %arg17[%c0_225, %c2_226, %c0_227, %c0_228] : memref<2x4x4x256xbf16, #tpu.memory_space<vmem>>, vector<2x2x2x256xbf16>
    %146 = vector.shape_cast %145 : vector<2x2x2x256xbf16> to vector<8x256xbf16>
    %c0_229 = arith.constant 0 : index
    %c1536 = arith.constant 1536 : index
    %147 = vector.load %arg18[%c0_229, %c1536] : memref<8x2304xbf16, #tpu.memory_space<vmem>>, vector<8x256xbf16>
    tpu.vector_store %arg18[%c0_229, %c1536], %146 {strides = array<i32>} : memref<8x2304xbf16, #tpu.memory_space<vmem>>, vector<8x256xbf16>,
    %c0_230 = arith.constant 0 : index
    %c2_231 = arith.constant 2 : index
    %c1_232 = arith.constant 1 : index
    %c0_233 = arith.constant 0 : index
    %148 = vector.load %arg17[%c0_230, %c2_231, %c1_232, %c0_233] : memref<2x4x4x256xbf16, #tpu.memory_space<vmem>>, vector<2x2x2x256xbf16>
    %149 = vector.shape_cast %148 : vector<2x2x2x256xbf16> to vector<8x256xbf16>
    %c0_234 = arith.constant 0 : index
    %c1792 = arith.constant 1792 : index
    %150 = vector.load %arg18[%c0_234, %c1792] : memref<8x2304xbf16, #tpu.memory_space<vmem>>, vector<8x256xbf16>
    tpu.vector_store %arg18[%c0_234, %c1792], %149 {strides = array<i32>} : memref<8x2304xbf16, #tpu.memory_space<vmem>>, vector<8x256xbf16>,
    %c0_235 = arith.constant 0 : index
    %c2_236 = arith.constant 2 : index
    %c2_237 = arith.constant 2 : index
    %c0_238 = arith.constant 0 : index
    %151 = vector.load %arg17[%c0_235, %c2_236, %c2_237, %c0_238] : memref<2x4x4x256xbf16, #tpu.memory_space<vmem>>, vector<2x2x2x256xbf16>
    %152 = vector.shape_cast %151 : vector<2x2x2x256xbf16> to vector<8x256xbf16>
    %c0_239 = arith.constant 0 : index
    %c2048 = arith.constant 2048 : index
    %153 = vector.load %arg18[%c0_239, %c2048] : memref<8x2304xbf16, #tpu.memory_space<vmem>>, vector<8x256xbf16>
    tpu.vector_store %arg18[%c0_239, %c2048], %152 {strides = array<i32>} : memref<8x2304xbf16, #tpu.memory_space<vmem>>, vector<8x256xbf16>,
    %c0_240 = arith.constant 0 : index
    %c0_241 = arith.constant 0 : index
    %154 = vector.load %arg18[%c0_240, %c0_241] : memref<8x2304xbf16, #tpu.memory_space<vmem>>, vector<8x2304xbf16>
    %c0_242 = arith.constant 0 : index
    %c0_243 = arith.constant 0 : index
    %155 = vector.load %arg8[%c0_242, %c0_243] : memref<2304x512xbf16, #tpu.memory_space<vmem>>, vector<2304x512xbf16>
    %cst_244 = arith.constant dense<0.000000e+00> : vector<8x512xf32>
    %156 = tpu.matmul %154, %155, %cst_244 {dimension_numbers = #tpu.dot_dimension_numbers<[1], [0], [0], [1], [0, 0, 1, 1], [], []>} : vector<8x2304xbf16>, vector<2304x512xbf16>, vector<8x512xf32> -> vector<8x512xf32>
    %c0_245 = arith.constant 0 : index
    %c0_246 = arith.constant 0 : index
    %157 = vector.load %arg9[%c0_245, %c0_246] : memref<1x512xf32, #tpu.memory_space<vmem>>, vector<1x512xf32>
    %158 = vector.broadcast %157 : vector<1x512xf32> to vector<8x512xf32>
    %159 = arith.addf %156, %158 : vector<8x512xf32>
    %cst_247 = arith.constant 0.000000e+00 : f32
    %160 = vector.broadcast %cst_247 : f32 to vector<8x512xf32>
    %161 = arith.maximumf %159, %160 : vector<8x512xf32>
    %162 = vector.shape_cast %161 : vector<8x512xf32> to vector<4x1x2x512xf32>
    %cst_248 = arith.constant dense<0xFF800000> : vector<4x1x512xf32>
    %163 = vector.multi_reduction <maximumf>, %162, %cst_248 [2] : vector<4x1x2x512xf32> to vector<4x1x512xf32>
    %164 = vector.shape_cast %163 : vector<4x1x512xf32> to vector<2x2x1x512xf32>
    %cst_249 = arith.constant dense<0xFF800000> : vector<2x1x512xf32>
    %165 = vector.multi_reduction <maximumf>, %164, %cst_249 [1] : vector<2x2x1x512xf32> to vector<2x1x512xf32>
    %166 = vector.shape_cast %165 : vector<2x1x512xf32> to vector<2x1x1x512xf32>
    %167 = vector.shape_cast %166 : vector<2x1x1x512xf32> to vector<2x512xf32>
    %168 = arith.truncf %167 : vector<2x512xf32> to vector<2x512xbf16>
    %c0_250 = arith.constant 0 : index
    %c0_251 = arith.constant 0 : index
    %169 = vector.load %arg10[%c0_250, %c0_251] : memref<512x128xbf16, #tpu.memory_space<vmem>>, vector<512x128xbf16>
    %cst_252 = arith.constant dense<0.000000e+00> : vector<2x128xf32>
    %170 = tpu.matmul %168, %169, %cst_252 {dimension_numbers = #tpu.dot_dimension_numbers<[1], [0], [0], [1], [0, 0, 1, 1], [], []>} : vector<2x512xbf16>, vector<512x128xbf16>, vector<2x128xf32> -> vector<2x128xf32>
    %c0_253 = arith.constant 0 : index
    %c0_254 = arith.constant 0 : index
    %171 = vector.load %arg11[%c0_253, %c0_254] : memref<1x128xf32, #tpu.memory_space<vmem>>, vector<1x128xf32>
    %172 = vector.broadcast %171 : vector<1x128xf32> to vector<2x128xf32>
    %173 = arith.addf %170, %172 : vector<2x128xf32>
    %c0_255 = arith.constant 0 : index
    %c0_256 = arith.constant 0 : index
    %174 = vector.load %arg12[%c0_255, %c0_256] : memref<2x128xf32, #tpu.memory_space<vmem>>, vector<2x128xf32>
    tpu.vector_store %arg12[%c0_255, %c0_256], %173 {strides = array<i32>} : memref<2x128xf32, #tpu.memory_space<vmem>>, vector<2x128xf32>,
    return
  }
  func.func @transform_0(%arg0: i32) -> (i32, i32, i32) {
    %c0_i32 = arith.constant 0 : i32
    %c0_i32_0 = arith.constant 0 : i32
    %c0_i32_1 = arith.constant 0 : i32
    return %arg0, %c0_i32, %c0_i32_0 : i32, i32, i32
  }
  func.func @transform_1(%arg0: i32) -> (i32, i32) {
    %c0_i32 = arith.constant 0 : i32
    %c0_i32_0 = arith.constant 0 : i32
    %c0_i32_1 = arith.constant 0 : i32
    return %c0_i32, %c0_i32_0 : i32, i32
  }
  func.func @transform_2(%arg0: i32) -> (i32, i32) {
    %c0_i32 = arith.constant 0 : i32
    %c0_i32_0 = arith.constant 0 : i32
    %c0_i32_1 = arith.constant 0 : i32
    return %c0_i32, %c0_i32_0 : i32, i32
  }
  func.func @transform_3(%arg0: i32) -> (i32, i32) {
    %c0_i32 = arith.constant 0 : i32
    %c0_i32_0 = arith.constant 0 : i32
    %c0_i32_1 = arith.constant 0 : i32
    return %c0_i32, %c0_i32_0 : i32, i32
  }
  func.func @transform_4(%arg0: i32) -> (i32, i32) {
    %c0_i32 = arith.constant 0 : i32
    %c0_i32_0 = arith.constant 0 : i32
    %c0_i32_1 = arith.constant 0 : i32
    return %c0_i32, %c0_i32_0 : i32, i32
  }
  func.func @transform_5(%arg0: i32) -> (i32, i32) {
    %c0_i32 = arith.constant 0 : i32
    %c0_i32_0 = arith.constant 0 : i32
    %c0_i32_1 = arith.constant 0 : i32
    return %c0_i32, %c0_i32_0 : i32, i32
  }
  func.func @transform_6(%arg0: i32) -> (i32, i32) {
    %c0_i32 = arith.constant 0 : i32
    %c0_i32_0 = arith.constant 0 : i32
    %c0_i32_1 = arith.constant 0 : i32
    return %c0_i32, %c0_i32_0 : i32, i32
  }
  func.func @transform_7(%arg0: i32) -> (i32, i32) {
    %c0_i32 = arith.constant 0 : i32
    %c0_i32_0 = arith.constant 0 : i32
    %c0_i32_1 = arith.constant 0 : i32
    return %c0_i32, %c0_i32_0 : i32, i32
  }
  func.func @transform_8(%arg0: i32) -> (i32, i32) {
    %c0_i32 = arith.constant 0 : i32
    %c0_i32_0 = arith.constant 0 : i32
    %c0_i32_1 = arith.constant 0 : i32
    return %c0_i32, %c0_i32_0 : i32, i32
  }
  func.func @transform_9(%arg0: i32) -> (i32, i32) {
    %c0_i32 = arith.constant 0 : i32
    %c0_i32_0 = arith.constant 0 : i32
    %c0_i32_1 = arith.constant 0 : i32
    return %c0_i32, %c0_i32_0 : i32, i32
  }
  func.func @transform_10(%arg0: i32) -> (i32, i32) {
    %c0_i32 = arith.constant 0 : i32
    %c0_i32_0 = arith.constant 0 : i32
    %c0_i32_1 = arith.constant 0 : i32
    return %c0_i32, %c0_i32_0 : i32, i32
  }
  func.func @transform_11(%arg0: i32) -> (i32, i32) {
    %c0_i32 = arith.constant 0 : i32
    %c0_i32_0 = arith.constant 0 : i32
    return %arg0, %c0_i32 : i32, i32
  }
}

</mosaic_0001>

<llo_original>
// kernel: cnn_forward.1
$region0: #{cnn_forward.1}
  #allocation0 [shape = 'u32[]', space=smem, size = 0x4, offset = 0x4, fixed_abs, tag = 'smem constant byte address 0x4 - core index']
  #allocation1 [shape = 'u32[72,128]{1,0:T(1,128)}', space=vmem, size = 0x9000, scoped, tag = 'internal scratch']
  #allocation2 [shape = 'bf16[2,10,10,64]{3,2,1,0:T(8,128)(2,1)}', space=vmem, size = 0x14000, scoped, tag = 'scratch operand']
  #allocation3 [shape = 'bf16[128,576]{1,0:T(8,128)(2,1)}', space=vmem, size = 0x28000, scoped, tag = 'scratch operand']
  #allocation4 [shape = 'bf16[2,6,6,128]{3,2,1,0:T(8,128)(2,1)}', space=vmem, size = 0x6000, scoped, tag = 'scratch operand']
  #allocation5 [shape = 'bf16[32,1152]{1,0:T(8,128)(2,1)}', space=vmem, size = 0x12000, scoped, tag = 'scratch operand']
  #allocation6 [shape = 'bf16[2,4,4,256]{3,2,1,0:T(4,128)(2,1)}', space=vmem, size = 0x4000, scoped, tag = 'scratch operand']
  #allocation7 [shape = 'bf16[8,2304]{1,0:T(8,128)(2,1)}', space=vmem, size = 0x9000, scoped, tag = 'scratch operand']
  %s0 = inlined_call_operand.vmem [shape: bf16[2,64,16], index: 0, kind: input, shape index: {}]
  %s1 = inlined_call_operand.hbm [shape: bf16[16,256], index: 1, kind: input, shape index: {}]
  %s2 = inlined_call_operand.hbm [shape: f32[1,64], index: 2, kind: input, shape index: {}]
  %s3 = inlined_call_operand.hbm [shape: bf16[576,128], index: 3, kind: input, shape index: {}]
  %s4 = inlined_call_operand.hbm [shape: f32[1,128], index: 4, kind: input, shape index: {}]
  %s5 = inlined_call_operand.hbm [shape: bf16[1152,256], index: 5, kind: input, shape index: {}]
  %s6 = inlined_call_operand.hbm [shape: f32[1,256], index: 6, kind: input, shape index: {}]
  %s7 = inlined_call_operand.hbm [shape: bf16[2304,512], index: 7, kind: input, shape index: {}]
  %s8 = inlined_call_operand.hbm [shape: f32[1,512], index: 8, kind: input, shape index: {}]
  %s9 = inlined_call_operand.hbm [shape: bf16[512,128], index: 9, kind: input, shape index: {}]
  %s10 = inlined_call_operand.hbm [shape: f32[1,128], index: 10, kind: input, shape index: {}]
  %s11 = inlined_call_operand.hbm [shape: f32[2,128], index: 11, kind: output, shape index: {}]
  %s12 = sld [smem:[#allocation0]]
  $region94: #{cnn_forward.1} parent=0
    _
  %s14 = ssub.s32 1, %s12
  %s15 = scalar_select 0, %s14, %s12
  $region1: #{cnn_forward.1} parent=0
    #allocation8 [shape = 'u8[8192]{0}', space=vmem, size = 0x2000, scoped, tag = 'input window, operand 1, single buffered']
    #allocation9 [shape = 's32[1]{0}', space=sflag, size = 0x4, scoped, tag = 'scoped memory for cnn_forward.1']
    #allocation10 [shape = 's32[1]{0}', space=sflag, size = 0x4, scoped, tag = 'scoped memory for cnn_forward.1']
    #allocation11 [shape = 'u8[512]{0}', space=vmem, size = 0x400, scoped, tag = 'input window, operand 2, single buffered']
    #allocation12 [shape = 's32[1]{0}', space=sflag, size = 0x4, scoped, tag = 'scoped memory for cnn_forward.1']
    #allocation13 [shape = 'u8[147456]{0}', space=vmem, size = 0x24000, scoped, tag = 'input window, operand 3, single buffered']
    #allocation14 [shape = 'u8[512]{0}', space=vmem, size = 0x400, scoped, tag = 'input window, operand 4, single buffered']
    #allocation15 [shape = 's32[1]{0}', space=sflag, size = 0x4, scoped, tag = 'scoped memory for cnn_forward.1']
    #allocation16 [shape = 'u8[589824]{0}', space=vmem, size = 0x90000, scoped, tag = 'input window, operand 5, single buffered']
    #allocation17 [shape = 'u8[1024]{0}', space=vmem, size = 0x400, scoped, tag = 'input window, operand 6, single buffered']
    #allocation18 [shape = 's32[1]{0}', space=sflag, size = 0x4, scoped, tag = 'scoped memory for cnn_forward.1']
    #allocation19 [shape = 'u8[2359296]{0}', space=vmem, size = 0x240000, scoped, tag = 'input window, operand 7, single buffered']
    #allocation20 [shape = 'u8[2048]{0}', space=vmem, size = 0x800, scoped, tag = 'input window, operand 8, single buffered']
    #allocation21 [shape = 's32[1]{0}', space=sflag, size = 0x4, scoped, tag = 'scoped memory for cnn_forward.1']
    #allocation22 [shape = 'u8[131072]{0}', space=vmem, size = 0x20000, scoped, tag = 'input window, operand 9, single buffered']
    #allocation23 [shape = 'u8[512]{0}', space=vmem, size = 0x400, scoped, tag = 'input window, operand 10, single buffered']
    #allocation24 [shape = 's32[1]{0}', space=sflag, size = 0x4, scoped, tag = 'scoped memory for cnn_forward.1']
    #allocation25 [shape = 'u8[1024]{0}', space=vmem, size = 0x400, scoped, tag = 'output window, operand 0, single buffered']
    %16 = vsyncpa [#allocation9], 0
    %17 = vsyncpa [#allocation12], 0
    %18 = vsyncpa [#allocation15], 0
    %19 = vsyncpa [#allocation18], 0
    %20 = vsyncpa [#allocation21], 0
    %21 = vsyncpa [#allocation24], 0
    %22 = vsyncpa [#allocation10], 0
    // Predicated region
    $region2: #{cnn_forward.1} parent=1 // pred_check
      _
    $region3: #{cnn_forward.1} parent=1 // pred_check_branch
      %24 = sbr.rel (0) target = $region5
    $region4: #{cnn_forward.1} parent=1 // pred_region
      _
    $region5: #{cnn_forward.1} parent=1 // pred_fallthru
      _
    // Predicated region
    $region6: #{cnn_forward.1} parent=1 // pred_check
      _
    $region7: #{cnn_forward.1} parent=1 // pred_check_branch
      %26 = sbr.rel (0) target = $region9
    $region8: #{cnn_forward.1} parent=1 // pred_region
      %28 = vsyncadd [#allocation9], 0
      %s29 = sshll.u32 %s1, 4
      %s30 = int_to_ptr.hbm [resolvable:$true] %s29
      %s31 = sshll.u32 [#allocation8], 4
      %s32 = int_to_ptr.vmem [resolvable:$true] %s31
      %37 = dma.hbm_to_vmem [thread:$0]  %s30, 256, %s32, [#allocation9], 128, 128, 8
    $region9: #{cnn_forward.1} parent=1 // pred_fallthru
      _
    // Predicated region
    $region10: #{cnn_forward.1} parent=1 // pred_check
      _
    $region11: #{cnn_forward.1} parent=1 // pred_check_branch
      %39 = sbr.rel (0) target = $region13
    $region12: #{cnn_forward.1} parent=1 // pred_region
      %41 = vsyncadd [#allocation12], 0
      %s43 = sshll.u32 %s2, 4
      %s44 = int_to_ptr.hbm [resolvable:$true] %s43
      %s45 = sshll.u32 [#allocation11], 4
      %s46 = int_to_ptr.vmem [resolvable:$true] %s45
      %48 = dma.hbm_to_vmem [thread:$0]  %s44, 16, %s46, [#allocation12]
    $region13: #{cnn_forward.1} parent=1 // pred_fallthru
      _
    // Predicated region
    $region14: #{cnn_forward.1} parent=1 // pred_check
      _
    $region15: #{cnn_forward.1} parent=1 // pred_check_branch
      %50 = sbr.rel (0) target = $region17
    $region16: #{cnn_forward.1} parent=1 // pred_region
      %52 = vsyncadd [#allocation12], 0
      %s53 = sshll.u32 %s3, 4
      %s54 = int_to_ptr.hbm [resolvable:$true] %s53
      %s55 = sshll.u32 [#allocation13], 4
      %s56 = int_to_ptr.vmem [resolvable:$true] %s55
      %61 = dma.hbm_to_vmem [thread:$0]  %s54, 4608, %s56, [#allocation12], 64, 64, 4
    $region17: #{cnn_forward.1} parent=1 // pred_fallthru
      _
    // Predicated region
    $region18: #{cnn_forward.1} parent=1 // pred_check
      _
    $region19: #{cnn_forward.1} parent=1 // pred_check_branch
      %63 = sbr.rel (0) target = $region21
    $region20: #{cnn_forward.1} parent=1 // pred_region
      %65 = vsyncadd [#allocation15], 0
      %s67 = sshll.u32 %s4, 4
      %s68 = int_to_ptr.hbm [resolvable:$true] %s67
      %s69 = sshll.u32 [#allocation14], 4
      %s70 = int_to_ptr.vmem [resolvable:$true] %s69
      %72 = dma.hbm_to_vmem [thread:$0]  %s68, 16, %s70, [#allocation15]
    $region21: #{cnn_forward.1} parent=1 // pred_fallthru
      _
    // Predicated region
    $region22: #{cnn_forward.1} parent=1 // pred_check
      _
    $region23: #{cnn_forward.1} parent=1 // pred_check_branch
      %74 = sbr.rel (0) target = $region25
    $region24: #{cnn_forward.1} parent=1 // pred_region
      %76 = vsyncadd [#allocation15], 0
      %s77 = sshll.u32 %s5, 4
      %s78 = int_to_ptr.hbm [resolvable:$true] %s77
      %s79 = sshll.u32 [#allocation16], 4
      %s80 = int_to_ptr.vmem [resolvable:$true] %s79
      %85 = dma.hbm_to_vmem [thread:$0]  %s78, 18432, %s80, [#allocation15], 128, 128, 8
    $region25: #{cnn_forward.1} parent=1 // pred_fallthru
      _
    // Predicated region
    $region26: #{cnn_forward.1} parent=1 // pred_check
      _
    $region27: #{cnn_forward.1} parent=1 // pred_check_branch
      %87 = sbr.rel (0) target = $region29
    $region28: #{cnn_forward.1} parent=1 // pred_region
      %89 = vsyncadd [#allocation18], 0
      %s91 = sshll.u32 %s6, 4
      %s92 = int_to_ptr.hbm [resolvable:$true] %s91
      %s93 = sshll.u32 [#allocation17], 4
      %s94 = int_to_ptr.vmem [resolvable:$true] %s93
      %96 = dma.hbm_to_vmem [thread:$0]  %s92, 32, %s94, [#allocation18]
    $region29: #{cnn_forward.1} parent=1 // pred_fallthru
      _
    // Predicated region
    $region30: #{cnn_forward.1} parent=1 // pred_check
      _
    $region31: #{cnn_forward.1} parent=1 // pred_check_branch
      %98 = sbr.rel (0) target = $region33
    $region32: #{cnn_forward.1} parent=1 // pred_region
      %100 = vsyncadd [#allocation18], 0
      %s101 = sshll.u32 %s7, 4
      %s102 = int_to_ptr.hbm [resolvable:$true] %s101
      %s103 = sshll.u32 [#allocation19], 4
      %s104 = int_to_ptr.vmem [resolvable:$true] %s103
      %109 = dma.hbm_to_vmem [thread:$0]  %s102, 73728, %s104, [#allocation18], 256, 256, 16
    $region33: #{cnn_forward.1} parent=1 // pred_fallthru
      _
    // Predicated region
    $region34: #{cnn_forward.1} parent=1 // pred_check
      _
    $region35: #{cnn_forward.1} parent=1 // pred_check_branch
      %111 = sbr.rel (0) target = $region37
    $region36: #{cnn_forward.1} parent=1 // pred_region
      %113 = vsyncadd [#allocation21], 0
      %s115 = sshll.u32 %s8, 4
      %s116 = int_to_ptr.hbm [resolvable:$true] %s115
      %s117 = sshll.u32 [#allocation20], 4
      %s118 = int_to_ptr.vmem [resolvable:$true] %s117
      %120 = dma.hbm_to_vmem [thread:$0]  %s116, 64, %s118, [#allocation21]
    $region37: #{cnn_forward.1} parent=1 // pred_fallthru
      _
    // Predicated region
    $region38: #{cnn_forward.1} parent=1 // pred_check
      _
    $region39: #{cnn_forward.1} parent=1 // pred_check_branch
      %122 = sbr.rel (0) target = $region41
    $region40: #{cnn_forward.1} parent=1 // pred_region
      %124 = vsyncadd [#allocation21], 0
      %s125 = sshll.u32 %s9, 4
      %s126 = int_to_ptr.hbm [resolvable:$true] %s125
      %s127 = sshll.u32 [#allocation22], 4
      %s128 = int_to_ptr.vmem [resolvable:$true] %s127
      %133 = dma.hbm_to_vmem [thread:$0]  %s126, 4096, %s128, [#allocation21], 64, 64, 4
    $region41: #{cnn_forward.1} parent=1 // pred_fallthru
      _
    // Predicated region
    $region42: #{cnn_forward.1} parent=1 // pred_check
      _
    $region43: #{cnn_forward.1} parent=1 // pred_check_branch
      %135 = sbr.rel (0) target = $region45
    $region44: #{cnn_forward.1} parent=1 // pred_region
      %137 = vsyncadd [#allocation24], 0
      %s139 = sshll.u32 %s10, 4
      %s140 = int_to_ptr.hbm [resolvable:$true] %s139
      %s141 = sshll.u32 [#allocation23], 4
      %s142 = int_to_ptr.vmem [resolvable:$true] %s141
      %144 = dma.hbm_to_vmem [thread:$0]  %s140, 16, %s142, [#allocation24]
    $region45: #{cnn_forward.1} parent=1 // pred_fallthru
      _
    // Predicated region
    $region46: #{cnn_forward.1} parent=1 // pred_check
      _
    $region47: #{cnn_forward.1} parent=1 // pred_check_branch
      %146 = sbr.rel (0) target = $region49
    $region48: #{cnn_forward.1} parent=1 // pred_region
      %148 = dma.done [#allocation9], 256
    $region49: #{cnn_forward.1} parent=1 // pred_fallthru
      _
    // Predicated region
    $region50: #{cnn_forward.1} parent=1 // pred_check
      _
    $region51: #{cnn_forward.1} parent=1 // pred_check_branch
      %150 = sbr.rel (0) target = $region53
    $region52: #{cnn_forward.1} parent=1 // pred_region
      %152 = dma.done [#allocation12], 16
    $region53: #{cnn_forward.1} parent=1 // pred_fallthru
      _
    // Predicated region
    $region54: #{cnn_forward.1} parent=1 // pred_check
      _
    $region55: #{cnn_forward.1} parent=1 // pred_check_branch
      %154 = sbr.rel (0) target = $region57
    $region56: #{cnn_forward.1} parent=1 // pred_region
      %156 = dma.done [#allocation12], 4608
    $region57: #{cnn_forward.1} parent=1 // pred_fallthru
      _
    // Predicated region
    $region58: #{cnn_forward.1} parent=1 // pred_check
      _
    $region59: #{cnn_forward.1} parent=1 // pred_check_branch
      %158 = sbr.rel (0) target = $region61
    $region60: #{cnn_forward.1} parent=1 // pred_region
      %160 = dma.done [#allocation15], 16
    $region61: #{cnn_forward.1} parent=1 // pred_fallthru
      _
    // Predicated region
    $region62: #{cnn_forward.1} parent=1 // pred_check
      _
    $region63: #{cnn_forward.1} parent=1 // pred_check_branch
      %162 = sbr.rel (0) target = $region65
    $region64: #{cnn_forward.1} parent=1 // pred_region
      %164 = dma.done [#allocation15], 18432
    $region65: #{cnn_forward.1} parent=1 // pred_fallthru
      _
    // Predicated region
    $region66: #{cnn_forward.1} parent=1 // pred_check
      _
    $region67: #{cnn_forward.1} parent=1 // pred_check_branch
      %166 = sbr.rel (0) target = $region69
    $region68: #{cnn_forward.1} parent=1 // pred_region
      %168 = dma.done [#allocation18], 32
    $region69: #{cnn_forward.1} parent=1 // pred_fallthru
      _
    // Predicated region
    $region70: #{cnn_forward.1} parent=1 // pred_check
      _
    $region71: #{cnn_forward.1} parent=1 // pred_check_branch
      %170 = sbr.rel (0) target = $region73
    $region72: #{cnn_forward.1} parent=1 // pred_region
      %172 = dma.done [#allocation18], 73728
    $region73: #{cnn_forward.1} parent=1 // pred_fallthru
      _
    // Predicated region
    $region74: #{cnn_forward.1} parent=1 // pred_check
      _
    $region75: #{cnn_forward.1} parent=1 // pred_check_branch
      %174 = sbr.rel (0) target = $region77
    $region76: #{cnn_forward.1} parent=1 // pred_region
      %176 = dma.done [#allocation21], 64
    $region77: #{cnn_forward.1} parent=1 // pred_fallthru
      _
    // Predicated region
    $region78: #{cnn_forward.1} parent=1 // pred_check
      _
    $region79: #{cnn_forward.1} parent=1 // pred_check_branch
      %178 = sbr.rel (0) target = $region81
    $region80: #{cnn_forward.1} parent=1 // pred_region
      %180 = dma.done [#allocation21], 4096
    $region81: #{cnn_forward.1} parent=1 // pred_fallthru
      _
    // Predicated region
    $region82: #{cnn_forward.1} parent=1 // pred_check
      _
    $region83: #{cnn_forward.1} parent=1 // pred_check_branch
      %182 = sbr.rel (0) target = $region85
    $region84: #{cnn_forward.1} parent=1 // pred_region
      %184 = dma.done [#allocation24], 16
    $region85: #{cnn_forward.1} parent=1 // pred_fallthru
      _
    %v186 = vld [vmem:[%s0] sm:$0xf]
    %v187 = vld [vmem:[%s0 + $0x4] sm:$0xf]
    %v188 = vld [vmem:[%s0 + $0x8] sm:$0xf]
    %v189 = vld [vmem:[%s0 + $0xc] sm:$0xf]
    %v190 = vld [vmem:[%s0 + $0x10] sm:$0xf]
    %v191 = vld [vmem:[%s0 + $0x14] sm:$0xf]
    %v192 = vld [vmem:[%s0 + $0x18] sm:$0xf]
    %v193 = vld [vmem:[%s0 + $0x1c] sm:$0xf]
    %v194 = vld [vmem:[%s0 + $0x20] sm:$0xf]
    %v195 = vld [vmem:[%s0 + $0x24] sm:$0xf]
    %v196 = vld [vmem:[%s0 + $0x28] sm:$0xf]
    %v197 = vld [vmem:[%s0 + $0x2c] sm:$0xf]
    %v198 = vld [vmem:[%s0 + $0x30] sm:$0xf]
    %v199 = vld [vmem:[%s0 + $0x34] sm:$0xf]
    %v200 = vld [vmem:[%s0 + $0x38] sm:$0xf]
    %v201 = vld [vmem:[%s0 + $0x3c] sm:$0xf]
    %v202 = vld [vmem:[#allocation8] sm:$0xff]
    %v203 = vld [vmem:[#allocation8 + $0x8] sm:$0xff]
    %v220 = vunpack.c.l.b16 %v186
    %v221 = vunpack.c.l.b16 %v187
    %v222 = vunpack.c.l.b16 %v188
    %v223 = vunpack.c.l.b16 %v189
    %v224 = vunpack.c.l.b16 %v190
    %v225 = vunpack.c.l.b16 %v191
    %v226 = vunpack.c.l.b16 %v192
    %v227 = vunpack.c.l.b16 %v193
    %v228 = vunpack.c.l.b16 %v194
    %v229 = vunpack.c.l.b16 %v195
    %v230 = vunpack.c.l.b16 %v196
    %v231 = vunpack.c.l.b16 %v197
    %v232 = vunpack.c.l.b16 %v198
    %v233 = vunpack.c.l.b16 %v199
    %v234 = vunpack.c.l.b16 %v200
    %v235 = vunpack.c.l.b16 %v201
    %v236 = vpack.c.b16 %v221, %v220
    %v237 = vpack.c.b16 %v223, %v222
    %v238 = vpack.c.b16 %v225, %v224
    %v239 = vpack.c.b16 %v227, %v226
    %v240 = vpack.c.b16 %v229, %v228
    %v241 = vpack.c.b16 %v231, %v230
    %v242 = vpack.c.b16 %v233, %v232
    %v243 = vpack.c.b16 %v235, %v234
    %v246 = vunpack.c.l.b16 %v202
    %v247 = vunpack.c.h.b16 %v202
    %v248 = vunpack.c.l.b16 %v203
    %v249 = vunpack.c.h.b16 %v203
    %v250 = vpack.c.b16 %v248, %v246
    %v251 = vpack.c.b16 %v249, %v247
    %vm254 = vcmask 130048
    %v256 = vsel %vm254, %v236, 0
    %v259 = vsel %vm254, %v237, 0
    %v262 = vsel %vm254, %v238, 0
    %v265 = vsel %vm254, %v239, 0
    %v268 = vsel %vm254, %v240, 0
    %v271 = vsel %vm254, %v241, 0
    %v274 = vsel %vm254, %v242, 0
    %v277 = vsel %vm254, %v243, 0
    %279 = vmatpush.bf16.msra.mxu0 0
    %280 = vmatpush.bf16.msra.mxu0 0
    %281 = vmatpush.bf16.msra.mxu0 0
    %282 = vmatpush.bf16.msra.mxu0 0
    %283 = vmatpush.bf16.msra.mxu0 0
    %284 = vmatpush.bf16.msra.mxu0 0
    %285 = vmatpush.bf16.msra.mxu0 0
    %286 = vmatpush.bf16.msra.mxu0 %v250
    %287 = vmatmul.bf16.gmra.mxu0 %v256
    %v288 = vpop.f32.mrf.mxu0
    %v289 = vadd.f32 0.0, %v288
    %v290 = vpop.f32.mrf.mxu0
    %v291 = vadd.f32 0.0, %v290
    %292 = vmatmul.bf16.gmra.mxu0 %v259
    %v293 = vpop.f32.mrf.mxu0
    %v294 = vadd.f32 0.0, %v293
    %v295 = vpop.f32.mrf.mxu0
    %v296 = vadd.f32 0.0, %v295
    %297 = vmatmul.bf16.gmra.mxu0 %v262
    %v298 = vpop.f32.mrf.mxu0
    %v299 = vadd.f32 0.0, %v298
    %v300 = vpop.f32.mrf.mxu0
    %v301 = vadd.f32 0.0, %v300
    %302 = vmatmul.bf16.gmra.mxu0 %v265
    %v303 = vpop.f32.mrf.mxu0
    %v304 = vadd.f32 0.0, %v303
    %v305 = vpop.f32.mrf.mxu0
    %v306 = vadd.f32 0.0, %v305
    %307 = vmatmul.bf16.gmra.mxu0 %v268
    %v308 = vpop.f32.mrf.mxu0
    %v309 = vadd.f32 0.0, %v308
    %v310 = vpop.f32.mrf.mxu0
    %v311 = vadd.f32 0.0, %v310
    %312 = vmatmul.bf16.gmra.mxu0 %v271
    %v313 = vpop.f32.mrf.mxu0
    %v314 = vadd.f32 0.0, %v313
    %v315 = vpop.f32.mrf.mxu0
    %v316 = vadd.f32 0.0, %v315
    %317 = vmatmul.bf16.gmra.mxu0 %v274
    %v318 = vpop.f32.mrf.mxu0
    %v319 = vadd.f32 0.0, %v318
    %v320 = vpop.f32.mrf.mxu0
    %v321 = vadd.f32 0.0, %v320
    %322 = vmatmul.bf16.gmra.mxu0 %v277
    %v323 = vpop.f32.mrf.mxu0
    %v324 = vadd.f32 0.0, %v323
    %v325 = vpop.f32.mrf.mxu0
    %v326 = vadd.f32 0.0, %v325
    %327 = vdwg.mxu0
    %328 = vmatpush.bf16.msra.mxu0 0
    %329 = vmatpush.bf16.msra.mxu0 0
    %330 = vmatpush.bf16.msra.mxu0 0
    %331 = vmatpush.bf16.msra.mxu0 0
    %332 = vmatpush.bf16.msra.mxu0 0
    %333 = vmatpush.bf16.msra.mxu0 0
    %334 = vmatpush.bf16.msra.mxu0 0
    %335 = vmatpush.bf16.msra.mxu0 %v251
    %336 = vmatmul.bf16.gmra.mxu0 %v256
    %v337 = vpop.f32.mrf.mxu0
    %v338 = vadd.f32 0.0, %v337
    %v339 = vpop.f32.mrf.mxu0
    %v340 = vadd.f32 0.0, %v339
    %341 = vmatmul.bf16.gmra.mxu0 %v259
    %v342 = vpop.f32.mrf.mxu0
    %v343 = vadd.f32 0.0, %v342
    %v344 = vpop.f32.mrf.mxu0
    %v345 = vadd.f32 0.0, %v344
    %346 = vmatmul.bf16.gmra.mxu0 %v262
    %v347 = vpop.f32.mrf.mxu0
    %v348 = vadd.f32 0.0, %v347
    %v349 = vpop.f32.mrf.mxu0
    %v350 = vadd.f32 0.0, %v349
    %351 = vmatmul.bf16.gmra.mxu0 %v265
    %v352 = vpop.f32.mrf.mxu0
    %v353 = vadd.f32 0.0, %v352
    %v354 = vpop.f32.mrf.mxu0
    %v355 = vadd.f32 0.0, %v354
    %356 = vmatmul.bf16.gmra.mxu0 %v268
    %v357 = vpop.f32.mrf.mxu0
    %v358 = vadd.f32 0.0, %v357
    %v359 = vpop.f32.mrf.mxu0
    %v360 = vadd.f32 0.0, %v359
    %361 = vmatmul.bf16.gmra.mxu0 %v271
    %v362 = vpop.f32.mrf.mxu0
    %v363 = vadd.f32 0.0, %v362
    %v364 = vpop.f32.mrf.mxu0
    %v365 = vadd.f32 0.0, %v364
    %366 = vmatmul.bf16.gmra.mxu0 %v274
    %v367 = vpop.f32.mrf.mxu0
    %v368 = vadd.f32 0.0, %v367
    %v369 = vpop.f32.mrf.mxu0
    %v370 = vadd.f32 0.0, %v369
    %371 = vmatmul.bf16.gmra.mxu0 %v277
    %v372 = vpop.f32.mrf.mxu0
    %v373 = vadd.f32 0.0, %v372
    %v374 = vpop.f32.mrf.mxu0
    %v375 = vadd.f32 0.0, %v374
    %376 = vdwg.mxu0
    %393 = vrot.lane.b32.xlu0 %v289, 64
    %v394 = vpop.permute.xlu0 %393
    %395 = vrot.lane.b32.xlu0 %v291, 64
    %v396 = vpop.permute.xlu0 %395
    %397 = vrot.lane.b32.xlu0 %v294, 64
    %v398 = vpop.permute.xlu0 %397
    %399 = vrot.lane.b32.xlu0 %v296, 64
    %v400 = vpop.permute.xlu0 %399
    %401 = vrot.lane.b32.xlu0 %v299, 64
    %v402 = vpop.permute.xlu0 %401
    %403 = vrot.lane.b32.xlu0 %v301, 64
    %v404 = vpop.permute.xlu0 %403
    %405 = vrot.lane.b32.xlu0 %v304, 64
    %v406 = vpop.permute.xlu0 %405
    %407 = vrot.lane.b32.xlu0 %v306, 64
    %v408 = vpop.permute.xlu0 %407
    %409 = vrot.lane.b32.xlu0 %v309, 64
    %v410 = vpop.permute.xlu0 %409
    %411 = vrot.lane.b32.xlu0 %v311, 64
    %v412 = vpop.permute.xlu0 %411
    %413 = vrot.lane.b32.xlu0 %v314, 64
    %v414 = vpop.permute.xlu0 %413
    %415 = vrot.lane.b32.xlu0 %v316, 64
    %v416 = vpop.permute.xlu0 %415
    %417 = vrot.lane.b32.xlu0 %v319, 64
    %v418 = vpop.permute.xlu0 %417
    %419 = vrot.lane.b32.xlu0 %v321, 64
    %v420 = vpop.permute.xlu0 %419
    %421 = vrot.lane.b32.xlu0 %v324, 64
    %v422 = vpop.permute.xlu0 %421
    %423 = vrot.lane.b32.xlu0 %v326, 64
    %v424 = vpop.permute.xlu0 %423
    %v441 = vmax.f32 %v289, %v394
    %v442 = vmax.f32 %v291, %v396
    %v443 = vmax.f32 %v294, %v398
    %v444 = vmax.f32 %v296, %v400
    %v445 = vmax.f32 %v299, %v402
    %v446 = vmax.f32 %v301, %v404
    %v447 = vmax.f32 %v304, %v406
    %v448 = vmax.f32 %v306, %v408
    %v449 = vmax.f32 %v309, %v410
    %v450 = vmax.f32 %v311, %v412
    %v451 = vmax.f32 %v314, %v414
    %v452 = vmax.f32 %v316, %v416
    %v453 = vmax.f32 %v319, %v418
    %v454 = vmax.f32 %v321, %v420
    %v455 = vmax.f32 %v324, %v422
    %v456 = vmax.f32 %v326, %v424
    %473 = vrot.lane.b32.xlu0 %v338, 64
    %v474 = vpop.permute.xlu0 %473
    %475 = vrot.lane.b32.xlu0 %v340, 64
    %v476 = vpop.permute.xlu0 %475
    %477 = vrot.lane.b32.xlu0 %v343, 64
    %v478 = vpop.permute.xlu0 %477
    %479 = vrot.lane.b32.xlu0 %v345, 64
    %v480 = vpop.permute.xlu0 %479
    %481 = vrot.lane.b32.xlu0 %v348, 64
    %v482 = vpop.permute.xlu0 %481
    %483 = vrot.lane.b32.xlu0 %v350, 64
    %v484 = vpop.permute.xlu0 %483
    %485 = vrot.lane.b32.xlu0 %v353, 64
    %v486 = vpop.permute.xlu0 %485
    %487 = vrot.lane.b32.xlu0 %v355, 64
    %v488 = vpop.permute.xlu0 %487
    %489 = vrot.lane.b32.xlu0 %v358, 64
    %v490 = vpop.permute.xlu0 %489
    %491 = vrot.lane.b32.xlu0 %v360, 64
    %v492 = vpop.permute.xlu0 %491
    %493 = vrot.lane.b32.xlu0 %v363, 64
    %v494 = vpop.permute.xlu0 %493
    %495 = vrot.lane.b32.xlu0 %v365, 64
    %v496 = vpop.permute.xlu0 %495
    %497 = vrot.lane.b32.xlu0 %v368, 64
    %v498 = vpop.permute.xlu0 %497
    %499 = vrot.lane.b32.xlu0 %v370, 64
    %v500 = vpop.permute.xlu0 %499
    %501 = vrot.lane.b32.xlu0 %v373, 64
    %v502 = vpop.permute.xlu0 %501
    %503 = vrot.lane.b32.xlu0 %v375, 64
    %v504 = vpop.permute.xlu0 %503
    %v521 = vmax.f32 %v338, %v474
    %v522 = vmax.f32 %v340, %v476
    %v523 = vmax.f32 %v343, %v478
    %v524 = vmax.f32 %v345, %v480
    %v525 = vmax.f32 %v348, %v482
    %v526 = vmax.f32 %v350, %v484
    %v527 = vmax.f32 %v353, %v486
    %v528 = vmax.f32 %v355, %v488
    %v529 = vmax.f32 %v358, %v490
    %v530 = vmax.f32 %v360, %v492
    %v531 = vmax.f32 %v363, %v494
    %v532 = vmax.f32 %v365, %v496
    %v533 = vmax.f32 %v368, %v498
    %v534 = vmax.f32 %v370, %v500
    %v535 = vmax.f32 %v373, %v502
    %v536 = vmax.f32 %v375, %v504
    %v537 = vmax.f32 %v441, %v521
    %v538 = vmax.f32 %v442, %v522
    %v539 = vmax.f32 %v443, %v523
    %v540 = vmax.f32 %v444, %v524
    %v541 = vmax.f32 %v445, %v525
    %v542 = vmax.f32 %v446, %v526
    %v543 = vmax.f32 %v447, %v527
    %v544 = vmax.f32 %v448, %v528
    %v545 = vmax.f32 %v449, %v529
    %v546 = vmax.f32 %v450, %v530
    %v547 = vmax.f32 %v451, %v531
    %v548 = vmax.f32 %v452, %v532
    %v549 = vmax.f32 %v453, %v533
    %v550 = vmax.f32 %v454, %v534
    %v551 = vmax.f32 %v455, %v535
    %v552 = vmax.f32 %v456, %v536
    %v553 = vld [vmem:[#allocation11] sm:$0x1]
    %v555 = vperm.slane %v553, 0
    %v557 = vadd.f32 %v537, %v555
    %v558 = vadd.f32 %v538, %v555
    %v559 = vadd.f32 %v539, %v555
    %v560 = vadd.f32 %v540, %v555
    %v561 = vadd.f32 %v541, %v555
    %v562 = vadd.f32 %v542, %v555
    %v563 = vadd.f32 %v543, %v555
    %v564 = vadd.f32 %v544, %v555
    %v565 = vadd.f32 %v545, %v555
    %v566 = vadd.f32 %v546, %v555
    %v567 = vadd.f32 %v547, %v555
    %v568 = vadd.f32 %v548, %v555
    %v569 = vadd.f32 %v549, %v555
    %v570 = vadd.f32 %v550, %v555
    %v571 = vadd.f32 %v551, %v555
    %v572 = vadd.f32 %v552, %v555
    %v573 = vmax.f32 %v557, 0.0
    %v574 = vmax.f32 %v558, 0.0
    %v575 = vmax.f32 %v559, 0.0
    %v576 = vmax.f32 %v560, 0.0
    %v577 = vmax.f32 %v561, 0.0
    %v578 = vmax.f32 %v562, 0.0
    %v579 = vmax.f32 %v563, 0.0
    %v580 = vmax.f32 %v564, 0.0
    %v581 = vmax.f32 %v565, 0.0
    %v582 = vmax.f32 %v566, 0.0
    %v583 = vmax.f32 %v567, 0.0
    %v584 = vmax.f32 %v568, 0.0
    %v585 = vmax.f32 %v569, 0.0
    %v586 = vmax.f32 %v570, 0.0
    %v587 = vmax.f32 %v571, 0.0
    %v588 = vmax.f32 %v572, 0.0
    %vm589 = vcmask 519168
    %590 = vst.msk [vmem:[#allocation2] sm:$0xf] %vm589, 0
    %vm591 = vcmask 516096
    %592 = vst.msk [vmem:[#allocation2 + $0x4] sm:$0x1] %vm591, 0
    %593 = vst.msk [vmem:[#allocation2 + $0x50] sm:$0xf] %vm589, 0
    %594 = vst.msk [vmem:[#allocation2 + $0x54] sm:$0x1] %vm591, 0
    %s595 = scalar_lea.vmem [#allocation2], 72
    %596 = vst.msk [vmem:[%s595] sm:$0xf] %vm589, 0
    %597 = vst.msk [vmem:[%s595 + $0x4] sm:$0x1] %vm591, 0
    %598 = vst.msk [vmem:[%s595 + $0x50] sm:$0xf] %vm589, 0
    %599 = vst.msk [vmem:[%s595 + $0x54] sm:$0x1] %vm591, 0
    %s600 = scalar_lea.vmem [#allocation2], 8
    %vm601 = vcmask 516096
    %vm602 = vsmask.f32 256
    %vm603 = vmand %vm601, %vm602
    %v604 = vld [vmem:[%s600] sm:$0x1]
    %v605 = vsel %vm603, 0, %v604
    %606 = vst [vmem:[%s600] sm:$0x1] %v605
    %v607 = vld [vmem:[%s600 + $0x8] sm:$0x1]
    %v608 = vsel %vm603, 0, %v607
    %609 = vst [vmem:[%s600 + $0x8] sm:$0x1] %v608
    %v610 = vld [vmem:[%s600 + $0x10] sm:$0x1]
    %v611 = vsel %vm603, 0, %v610
    %612 = vst [vmem:[%s600 + $0x10] sm:$0x1] %v611
    %v613 = vld [vmem:[%s600 + $0x18] sm:$0x1]
    %v614 = vsel %vm603, 0, %v613
    %615 = vst [vmem:[%s600 + $0x18] sm:$0x1] %v614
    %v616 = vld [vmem:[%s600 + $0x20] sm:$0x1]
    %v617 = vsel %vm603, 0, %v616
    %618 = vst [vmem:[%s600 + $0x20] sm:$0x1] %v617
    %v619 = vld [vmem:[%s600 + $0x28] sm:$0x1]
    %v620 = vsel %vm603, 0, %v619
    %621 = vst [vmem:[%s600 + $0x28] sm:$0x1] %v620
    %v622 = vld [vmem:[%s600 + $0x30] sm:$0x1]
    %v623 = vsel %vm603, 0, %v622
    %624 = vst [vmem:[%s600 + $0x30] sm:$0x1] %v623
    %v625 = vld [vmem:[%s600 + $0x38] sm:$0x1]
    %v626 = vsel %vm603, 0, %v625
    %627 = vst [vmem:[%s600 + $0x38] sm:$0x1] %v626
    %v628 = vld [vmem:[%s600 + $0x50] sm:$0x1]
    %v629 = vsel %vm603, 0, %v628
    %630 = vst [vmem:[%s600 + $0x50] sm:$0x1] %v629
    %v631 = vld [vmem:[%s600 + $0x58] sm:$0x1]
    %v632 = vsel %vm603, 0, %v631
    %633 = vst [vmem:[%s600 + $0x58] sm:$0x1] %v632
    %v634 = vld [vmem:[%s600 + $0x60] sm:$0x1]
    %v635 = vsel %vm603, 0, %v634
    %636 = vst [vmem:[%s600 + $0x60] sm:$0x1] %v635
    %v637 = vld [vmem:[%s600 + $0x68] sm:$0x1]
    %v638 = vsel %vm603, 0, %v637
    %639 = vst [vmem:[%s600 + $0x68] sm:$0x1] %v638
    %v640 = vld [vmem:[%s600 + $0x70] sm:$0x1]
    %v641 = vsel %vm603, 0, %v640
    %642 = vst [vmem:[%s600 + $0x70] sm:$0x1] %v641
    %v643 = vld [vmem:[%s600 + $0x78] sm:$0x1]
    %v644 = vsel %vm603, 0, %v643
    %645 = vst [vmem:[%s600 + $0x78] sm:$0x1] %v644
    %v646 = vld [vmem:[%s600 + $0x80] sm:$0x1]
    %v647 = vsel %vm603, 0, %v646
    %648 = vst [vmem:[%s600 + $0x80] sm:$0x1] %v647
    %v649 = vld [vmem:[%s600 + $0x88] sm:$0x1]
    %v650 = vsel %vm603, 0, %v649
    %651 = vst [vmem:[%s600 + $0x88] sm:$0x1] %v650
    %vm652 = vsmask.f32 7938
    %vm653 = vmand %vm601, %vm652
    %v654 = vld [vmem:[%s600 + $0x4] sm:$0x1]
    %v655 = vsel %vm653, 0, %v654
    %656 = vst [vmem:[%s600 + $0x4] sm:$0x1] %v655
    %v657 = vld [vmem:[%s600 + $0xc] sm:$0x1]
    %v658 = vsel %vm653, 0, %v657
    %659 = vst [vmem:[%s600 + $0xc] sm:$0x1] %v658
    %v660 = vld [vmem:[%s600 + $0x14] sm:$0x1]
    %v661 = vsel %vm653, 0, %v660
    %662 = vst [vmem:[%s600 + $0x14] sm:$0x1] %v661
    %v663 = vld [vmem:[%s600 + $0x1c] sm:$0x1]
    %v664 = vsel %vm653, 0, %v663
    %665 = vst [vmem:[%s600 + $0x1c] sm:$0x1] %v664
    %v666 = vld [vmem:[%s600 + $0x24] sm:$0x1]
    %v667 = vsel %vm653, 0, %v666
    %668 = vst [vmem:[%s600 + $0x24] sm:$0x1] %v667
    %v669 = vld [vmem:[%s600 + $0x2c] sm:$0x1]
    %v670 = vsel %vm653, 0, %v669
    %671 = vst [vmem:[%s600 + $0x2c] sm:$0x1] %v670
    %v672 = vld [vmem:[%s600 + $0x34] sm:$0x1]
    %v673 = vsel %vm653, 0, %v672
    %674 = vst [vmem:[%s600 + $0x34] sm:$0x1] %v673
    %v675 = vld [vmem:[%s600 + $0x3c] sm:$0x1]
    %v676 = vsel %vm653, 0, %v675
    %677 = vst [vmem:[%s600 + $0x3c] sm:$0x1] %v676
    %v678 = vld [vmem:[%s600 + $0x54] sm:$0x1]
    %v679 = vsel %vm653, 0, %v678
    %680 = vst [vmem:[%s600 + $0x54] sm:$0x1] %v679
    %v681 = vld [vmem:[%s600 + $0x5c] sm:$0x1]
    %v682 = vsel %vm653, 0, %v681
    %683 = vst [vmem:[%s600 + $0x5c] sm:$0x1] %v682
    %v684 = vld [vmem:[%s600 + $0x64] sm:$0x1]
    %v685 = vsel %vm653, 0, %v684
    %686 = vst [vmem:[%s600 + $0x64] sm:$0x1] %v685
    %v687 = vld [vmem:[%s600 + $0x6c] sm:$0x1]
    %v688 = vsel %vm653, 0, %v687
    %689 = vst [vmem:[%s600 + $0x6c] sm:$0x1] %v688
    %v690 = vld [vmem:[%s600 + $0x74] sm:$0x1]
    %v691 = vsel %vm653, 0, %v690
    %692 = vst [vmem:[%s600 + $0x74] sm:$0x1] %v691
    %v693 = vld [vmem:[%s600 + $0x7c] sm:$0x1]
    %v694 = vsel %vm653, 0, %v693
    %695 = vst [vmem:[%s600 + $0x7c] sm:$0x1] %v694
    %v696 = vld [vmem:[%s600 + $0x84] sm:$0x1]
    %v697 = vsel %vm653, 0, %v696
    %698 = vst [vmem:[%s600 + $0x84] sm:$0x1] %v697
    %v699 = vld [vmem:[%s600 + $0x8c] sm:$0x1]
    %v700 = vsel %vm653, 0, %v699
    %701 = vst [vmem:[%s600 + $0x8c] sm:$0x1] %v700
    %v702 = vpack.c.bf16 %v573, %v573
    %v703 = vpack.c.bf16 %v574, %v574
    %v704 = vpack.c.bf16 %v575, %v575
    %v705 = vpack.c.bf16 %v576, %v576
    %v706 = vpack.c.bf16 %v577, %v577
    %v707 = vpack.c.bf16 %v578, %v578
    %v708 = vpack.c.bf16 %v579, %v579
    %v709 = vpack.c.bf16 %v580, %v580
    %v710 = vpack.c.bf16 %v581, %v581
    %v711 = vpack.c.bf16 %v582, %v582
    %v712 = vpack.c.bf16 %v583, %v583
    %v713 = vpack.c.bf16 %v584, %v584
    %v714 = vpack.c.bf16 %v585, %v585
    %v715 = vpack.c.bf16 %v586, %v586
    %v716 = vpack.c.bf16 %v587, %v587
    %v717 = vpack.c.bf16 %v588, %v588
    %v719 = vshrl.u32 %v702, 16
    %v721 = vrot.slane %v719, 7
    %v722 = vshll.u32 %v702, 16
    %v724 = vor.u32 %v721, %v722
    %v725 = vrot.slane %v721, 4
    %v727 = vshrl.u32 %v703, 16
    %v729 = vrot.slane %v727, 7
    %v730 = vshll.u32 %v703, 16
    %v732 = vor.u32 %v729, %v730
    %v733 = vrot.slane %v729, 4
    %v735 = vshrl.u32 %v704, 16
    %v737 = vrot.slane %v735, 7
    %v738 = vshll.u32 %v704, 16
    %v740 = vor.u32 %v737, %v738
    %v741 = vrot.slane %v737, 4
    %v743 = vshrl.u32 %v705, 16
    %v745 = vrot.slane %v743, 7
    %v746 = vshll.u32 %v705, 16
    %v748 = vor.u32 %v745, %v746
    %v749 = vrot.slane %v745, 4
    %v751 = vshrl.u32 %v706, 16
    %v753 = vrot.slane %v751, 7
    %v754 = vshll.u32 %v706, 16
    %v756 = vor.u32 %v753, %v754
    %v757 = vrot.slane %v753, 4
    %v759 = vshrl.u32 %v707, 16
    %v761 = vrot.slane %v759, 7
    %v762 = vshll.u32 %v707, 16
    %v764 = vor.u32 %v761, %v762
    %v765 = vrot.slane %v761, 4
    %v767 = vshrl.u32 %v708, 16
    %v769 = vrot.slane %v767, 7
    %v770 = vshll.u32 %v708, 16
    %v772 = vor.u32 %v769, %v770
    %v773 = vrot.slane %v769, 4
    %v775 = vshrl.u32 %v709, 16
    %v777 = vrot.slane %v775, 7
    %v778 = vshll.u32 %v709, 16
    %v780 = vor.u32 %v777, %v778
    %v781 = vrot.slane %v777, 4
    %v783 = vshrl.u32 %v710, 16
    %v785 = vrot.slane %v783, 7
    %v786 = vshll.u32 %v710, 16
    %v788 = vor.u32 %v785, %v786
    %v789 = vrot.slane %v785, 4
    %v791 = vshrl.u32 %v711, 16
    %v793 = vrot.slane %v791, 7
    %v794 = vshll.u32 %v711, 16
    %v796 = vor.u32 %v793, %v794
    %v797 = vrot.slane %v793, 4
    %v799 = vshrl.u32 %v712, 16
    %v801 = vrot.slane %v799, 7
    %v802 = vshll.u32 %v712, 16
    %v804 = vor.u32 %v801, %v802
    %v805 = vrot.slane %v801, 4
    %v807 = vshrl.u32 %v713, 16
    %v809 = vrot.slane %v807, 7
    %v810 = vshll.u32 %v713, 16
    %v812 = vor.u32 %v809, %v810
    %v813 = vrot.slane %v809, 4
    %v815 = vshrl.u32 %v714, 16
    %v817 = vrot.slane %v815, 7
    %v818 = vshll.u32 %v714, 16
    %v820 = vor.u32 %v817, %v818
    %v821 = vrot.slane %v817, 4
    %v823 = vshrl.u32 %v715, 16
    %v825 = vrot.slane %v823, 7
    %v826 = vshll.u32 %v715, 16
    %v828 = vor.u32 %v825, %v826
    %v829 = vrot.slane %v825, 4
    %v831 = vshrl.u32 %v716, 16
    %v833 = vrot.slane %v831, 7
    %v834 = vshll.u32 %v716, 16
    %v836 = vor.u32 %v833, %v834
    %v837 = vrot.slane %v833, 4
    %v839 = vshrl.u32 %v717, 16
    %v841 = vrot.slane %v839, 7
    %v842 = vshll.u32 %v717, 16
    %v844 = vor.u32 %v841, %v842
    %v845 = vrot.slane %v841, 4
    %vm878 = vcmask 519168
    %vm879 = vmand %vm878, %vm652
    %v880 = vld [vmem:[%s600] sm:$0xf]
    %v881 = vsel %vm879, %v724, %v880
    %882 = vst [vmem:[%s600] sm:$0xf] %v881
    %v883 = vld [vmem:[%s600 + $0x4] sm:$0x1]
    %v884 = vsel %vm603, %v725, %v883
    %885 = vst [vmem:[%s600 + $0x4] sm:$0x1] %v884
    %v886 = vld [vmem:[%s600 + $0x8] sm:$0xf]
    %v887 = vsel %vm879, %v732, %v886
    %888 = vst [vmem:[%s600 + $0x8] sm:$0xf] %v887
    %v889 = vld [vmem:[%s600 + $0xc] sm:$0x1]
    %v890 = vsel %vm603, %v733, %v889
    %891 = vst [vmem:[%s600 + $0xc] sm:$0x1] %v890
    %v892 = vld [vmem:[%s600 + $0x10] sm:$0xf]
    %v893 = vsel %vm879, %v740, %v892
    %894 = vst [vmem:[%s600 + $0x10] sm:$0xf] %v893
    %v895 = vld [vmem:[%s600 + $0x14] sm:$0x1]
    %v896 = vsel %vm603, %v741, %v895
    %897 = vst [vmem:[%s600 + $0x14] sm:$0x1] %v896
    %v898 = vld [vmem:[%s600 + $0x18] sm:$0xf]
    %v899 = vsel %vm879, %v748, %v898
    %900 = vst [vmem:[%s600 + $0x18] sm:$0xf] %v899
    %v901 = vld [vmem:[%s600 + $0x1c] sm:$0x1]
    %v902 = vsel %vm603, %v749, %v901
    %903 = vst [vmem:[%s600 + $0x1c] sm:$0x1] %v902
    %v904 = vld [vmem:[%s600 + $0x20] sm:$0xf]
    %v905 = vsel %vm879, %v756, %v904
    %906 = vst [vmem:[%s600 + $0x20] sm:$0xf] %v905
    %v907 = vld [vmem:[%s600 + $0x24] sm:$0x1]
    %v908 = vsel %vm603, %v757, %v907
    %909 = vst [vmem:[%s600 + $0x24] sm:$0x1] %v908
    %v910 = vld [vmem:[%s600 + $0x28] sm:$0xf]
    %v911 = vsel %vm879, %v764, %v910
    %912 = vst [vmem:[%s600 + $0x28] sm:$0xf] %v911
    %v913 = vld [vmem:[%s600 + $0x2c] sm:$0x1]
    %v914 = vsel %vm603, %v765, %v913
    %915 = vst [vmem:[%s600 + $0x2c] sm:$0x1] %v914
    %v916 = vld [vmem:[%s600 + $0x30] sm:$0xf]
    %v917 = vsel %vm879, %v772, %v916
    %918 = vst [vmem:[%s600 + $0x30] sm:$0xf] %v917
    %v919 = vld [vmem:[%s600 + $0x34] sm:$0x1]
    %v920 = vsel %vm603, %v773, %v919
    %921 = vst [vmem:[%s600 + $0x34] sm:$0x1] %v920
    %v922 = vld [vmem:[%s600 + $0x38] sm:$0xf]
    %v923 = vsel %vm879, %v780, %v922
    %924 = vst [vmem:[%s600 + $0x38] sm:$0xf] %v923
    %v925 = vld [vmem:[%s600 + $0x3c] sm:$0x1]
    %v926 = vsel %vm603, %v781, %v925
    %927 = vst [vmem:[%s600 + $0x3c] sm:$0x1] %v926
    %v928 = vld [vmem:[%s600 + $0x50] sm:$0xf]
    %v929 = vsel %vm879, %v788, %v928
    %930 = vst [vmem:[%s600 + $0x50] sm:$0xf] %v929
    %v931 = vld [vmem:[%s600 + $0x54] sm:$0x1]
    %v932 = vsel %vm603, %v789, %v931
    %933 = vst [vmem:[%s600 + $0x54] sm:$0x1] %v932
    %v934 = vld [vmem:[%s600 + $0x58] sm:$0xf]
    %v935 = vsel %vm879, %v796, %v934
    %936 = vst [vmem:[%s600 + $0x58] sm:$0xf] %v935
    %v937 = vld [vmem:[%s600 + $0x5c] sm:$0x1]
    %v938 = vsel %vm603, %v797, %v937
    %939 = vst [vmem:[%s600 + $0x5c] sm:$0x1] %v938
    %v940 = vld [vmem:[%s600 + $0x60] sm:$0xf]
    %v941 = vsel %vm879, %v804, %v940
    %942 = vst [vmem:[%s600 + $0x60] sm:$0xf] %v941
    %v943 = vld [vmem:[%s600 + $0x64] sm:$0x1]
    %v944 = vsel %vm603, %v805, %v943
    %945 = vst [vmem:[%s600 + $0x64] sm:$0x1] %v944
    %v946 = vld [vmem:[%s600 + $0x68] sm:$0xf]
    %v947 = vsel %vm879, %v812, %v946
    %948 = vst [vmem:[%s600 + $0x68] sm:$0xf] %v947
    %v949 = vld [vmem:[%s600 + $0x6c] sm:$0x1]
    %v950 = vsel %vm603, %v813, %v949
    %951 = vst [vmem:[%s600 + $0x6c] sm:$0x1] %v950
    %v952 = vld [vmem:[%s600 + $0x70] sm:$0xf]
    %v953 = vsel %vm879, %v820, %v952
    %954 = vst [vmem:[%s600 + $0x70] sm:$0xf] %v953
    %v955 = vld [vmem:[%s600 + $0x74] sm:$0x1]
    %v956 = vsel %vm603, %v821, %v955
    %957 = vst [vmem:[%s600 + $0x74] sm:$0x1] %v956
    %v958 = vld [vmem:[%s600 + $0x78] sm:$0xf]
    %v959 = vsel %vm879, %v828, %v958
    %960 = vst [vmem:[%s600 + $0x78] sm:$0xf] %v959
    %v961 = vld [vmem:[%s600 + $0x7c] sm:$0x1]
    %v962 = vsel %vm603, %v829, %v961
    %963 = vst [vmem:[%s600 + $0x7c] sm:$0x1] %v962
    %v964 = vld [vmem:[%s600 + $0x80] sm:$0xf]
    %v965 = vsel %vm879, %v836, %v964
    %966 = vst [vmem:[%s600 + $0x80] sm:$0xf] %v965
    %v967 = vld [vmem:[%s600 + $0x84] sm:$0x1]
    %v968 = vsel %vm603, %v837, %v967
    %969 = vst [vmem:[%s600 + $0x84] sm:$0x1] %v968
    %v970 = vld [vmem:[%s600 + $0x88] sm:$0xf]
    %v971 = vsel %vm879, %v844, %v970
    %972 = vst [vmem:[%s600 + $0x88] sm:$0xf] %v971
    %v973 = vld [vmem:[%s600 + $0x8c] sm:$0x1]
    %v974 = vsel %vm603, %v845, %v973
    %975 = vst [vmem:[%s600 + $0x8c] sm:$0x1] %v974
    %v976 = vld [vmem:[#allocation2] sm:$0xf]
    %v977 = vld [vmem:[#allocation2 + $0x8] sm:$0xf]
    %v978 = vld [vmem:[#allocation2 + $0x10] sm:$0xf]
    %v979 = vld [vmem:[#allocation2 + $0x18] sm:$0xf]
    %v980 = vld [vmem:[#allocation2 + $0x20] sm:$0xf]
    %v981 = vld [vmem:[#allocation2 + $0x28] sm:$0xf]
    %v982 = vld [vmem:[#allocation2 + $0x30] sm:$0xf]
    %v983 = vld [vmem:[#allocation2 + $0x38] sm:$0xf]
    %v984 = vld [vmem:[#allocation2 + $0x50] sm:$0xf]
    %v985 = vld [vmem:[#allocation2 + $0x58] sm:$0xf]
    %v986 = vld [vmem:[#allocation2 + $0x60] sm:$0xf]
    %v987 = vld [vmem:[#allocation2 + $0x68] sm:$0xf]
    %v988 = vld [vmem:[#allocation2 + $0x70] sm:$0xf]
    %v989 = vld [vmem:[#allocation2 + $0x78] sm:$0xf]
    %v990 = vld [vmem:[#allocation2 + $0x80] sm:$0xf]
    %v991 = vld [vmem:[#allocation2 + $0x88] sm:$0xf]
    %992 = vst.msk [vmem:[#allocation3] sm:$0xf] %vm589, %v976
    %993 = vst.msk [vmem:[#allocation3 + $0x14] sm:$0xf] %vm589, %v977
    %994 = vst.msk [vmem:[#allocation3 + $0x28] sm:$0xf] %vm589, %v978
    %995 = vst.msk [vmem:[#allocation3 + $0x3c] sm:$0xf] %vm589, %v979
    %996 = vst.msk [vmem:[#allocation3 + $0x50] sm:$0xf] %vm589, %v980
    %997 = vst.msk [vmem:[#allocation3 + $0x64] sm:$0xf] %vm589, %v981
    %998 = vst.msk [vmem:[#allocation3 + $0x78] sm:$0xf] %vm589, %v982
    %999 = vst.msk [vmem:[#allocation3 + $0x8c] sm:$0xf] %vm589, %v983
    %1000 = vst.msk [vmem:[#allocation3 + $0xa0] sm:$0xf] %vm589, %v984
    %1001 = vst.msk [vmem:[#allocation3 + $0xb4] sm:$0xf] %vm589, %v985
    %1002 = vst.msk [vmem:[#allocation3 + $0xc8] sm:$0xf] %vm589, %v986
    %1003 = vst.msk [vmem:[#allocation3 + $0xdc] sm:$0xf] %vm589, %v987
    %1004 = vst.msk [vmem:[#allocation3 + $0xf0] sm:$0xf] %vm589, %v988
    %1005 = vst.msk [vmem:[#allocation3 + $0x104] sm:$0xf] %vm589, %v989
    %1006 = vst.msk [vmem:[#allocation3 + $0x118] sm:$0xf] %vm589, %v990
    %1007 = vst.msk [vmem:[#allocation3 + $0x12c] sm:$0xf] %vm589, %v991
    %v1008 = vld [vmem:[#allocation2] sm:$0xf]
    %v1009 = vld [vmem:[#allocation2 + $0x4] sm:$0x1]
    %v1010 = vld [vmem:[#allocation2 + $0x8] sm:$0xf]
    %v1011 = vld [vmem:[#allocation2 + $0xc] sm:$0x1]
    %v1012 = vld [vmem:[#allocation2 + $0x10] sm:$0xf]
    %v1013 = vld [vmem:[#allocation2 + $0x14] sm:$0x1]
    %v1014 = vld [vmem:[#allocation2 + $0x18] sm:$0xf]
    %v1015 = vld [vmem:[#allocation2 + $0x1c] sm:$0x1]
    %v1016 = vld [vmem:[#allocation2 + $0x20] sm:$0xf]
    %v1017 = vld [vmem:[#allocation2 + $0x24] sm:$0x1]
    %v1018 = vld [vmem:[#allocation2 + $0x28] sm:$0xf]
    %v1019 = vld [vmem:[#allocation2 + $0x2c] sm:$0x1]
    %v1020 = vld [vmem:[#allocation2 + $0x30] sm:$0xf]
    %v1021 = vld [vmem:[#allocation2 + $0x34] sm:$0x1]
    %v1022 = vld [vmem:[#allocation2 + $0x38] sm:$0xf]
    %v1023 = vld [vmem:[#allocation2 + $0x3c] sm:$0x1]
    %v1024 = vld [vmem:[#allocation2 + $0x50] sm:$0xf]
    %v1025 = vld [vmem:[#allocation2 + $0x54] sm:$0x1]
    %v1026 = vld [vmem:[#allocation2 + $0x58] sm:$0xf]
    %v1027 = vld [vmem:[#allocation2 + $0x5c] sm:$0x1]
    %v1028 = vld [vmem:[#allocation2 + $0x60] sm:$0xf]
    %v1029 = vld [vmem:[#allocation2 + $0x64] sm:$0x1]
    %v1030 = vld [vmem:[#allocation2 + $0x68] sm:$0xf]
    %v1031 = vld [vmem:[#allocation2 + $0x6c] sm:$0x1]
    %v1032 = vld [vmem:[#allocation2 + $0x70] sm:$0xf]
    %v1033 = vld [vmem:[#allocation2 + $0x74] sm:$0x1]
    %v1034 = vld [vmem:[#allocation2 + $0x78] sm:$0xf]
    %v1035 = vld [vmem:[#allocation2 + $0x7c] sm:$0x1]
    %v1036 = vld [vmem:[#allocation2 + $0x80] sm:$0xf]
    %v1037 = vld [vmem:[#allocation2 + $0x84] sm:$0x1]
    %v1038 = vld [vmem:[#allocation2 + $0x88] sm:$0xf]
    %v1039 = vld [vmem:[#allocation2 + $0x8c] sm:$0x1]
    %vm1040 = vsmask.f32 3328
    %vm1041 = vsmask.f32 7440
    %vm1042 = vmor %vm1040, %vm1041
    %v1044 = vshrl.u32 %v1008, 16
    %v1046 = vrot.slane %v1044, 4
    %v1047 = vshll.u32 %v1008, 16
    %v1049 = vrot.slane %v1047, 5
    %v1050 = vor.u32 %v1046, %v1049
    %v1051 = vrot.slane %v1050, 4
    %v1053 = vshll.u32 %v1009, 16
    %v1055 = vrot.slane %v1053, 5
    %v1056 = vsel %vm1042, %v1051, %v1055
    %v1058 = vshrl.u32 %v1010, 16
    %v1060 = vrot.slane %v1058, 4
    %v1061 = vshll.u32 %v1010, 16
    %v1063 = vrot.slane %v1061, 5
    %v1064 = vor.u32 %v1060, %v1063
    %v1065 = vrot.slane %v1064, 4
    %v1067 = vshll.u32 %v1011, 16
    %v1069 = vrot.slane %v1067, 5
    %v1070 = vsel %vm1042, %v1065, %v1069
    %v1072 = vshrl.u32 %v1012, 16
    %v1074 = vrot.slane %v1072, 4
    %v1075 = vshll.u32 %v1012, 16
    %v1077 = vrot.slane %v1075, 5
    %v1078 = vor.u32 %v1074, %v1077
    %v1079 = vrot.slane %v1078, 4
    %v1081 = vshll.u32 %v1013, 16
    %v1083 = vrot.slane %v1081, 5
    %v1084 = vsel %vm1042, %v1079, %v1083
    %v1086 = vshrl.u32 %v1014, 16
    %v1088 = vrot.slane %v1086, 4
    %v1089 = vshll.u32 %v1014, 16
    %v1091 = vrot.slane %v1089, 5
    %v1092 = vor.u32 %v1088, %v1091
    %v1093 = vrot.slane %v1092, 4
    %v1095 = vshll.u32 %v1015, 16
    %v1097 = vrot.slane %v1095, 5
    %v1098 = vsel %vm1042, %v1093, %v1097
    %v1100 = vshrl.u32 %v1016, 16
    %v1102 = vrot.slane %v1100, 4
    %v1103 = vshll.u32 %v1016, 16
    %v1105 = vrot.slane %v1103, 5
    %v1106 = vor.u32 %v1102, %v1105
    %v1107 = vrot.slane %v1106, 4
    %v1109 = vshll.u32 %v1017, 16
    %v1111 = vrot.slane %v1109, 5
    %v1112 = vsel %vm1042, %v1107, %v1111
    %v1114 = vshrl.u32 %v1018, 16
    %v1116 = vrot.slane %v1114, 4
    %v1117 = vshll.u32 %v1018, 16
    %v1119 = vrot.slane %v1117, 5
    %v1120 = vor.u32 %v1116, %v1119
    %v1121 = vrot.slane %v1120, 4
    %v1123 = vshll.u32 %v1019, 16
    %v1125 = vrot.slane %v1123, 5
    %v1126 = vsel %vm1042, %v1121, %v1125
    %v1128 = vshrl.u32 %v1020, 16
    %v1130 = vrot.slane %v1128, 4
    %v1131 = vshll.u32 %v1020, 16
    %v1133 = vrot.slane %v1131, 5
    %v1134 = vor.u32 %v1130, %v1133
    %v1135 = vrot.slane %v1134, 4
    %v1137 = vshll.u32 %v1021, 16
    %v1139 = vrot.slane %v1137, 5
    %v1140 = vsel %vm1042, %v1135, %v1139
    %v1142 = vshrl.u32 %v1022, 16
    %v1144 = vrot.slane %v1142, 4
    %v1145 = vshll.u32 %v1022, 16
    %v1147 = vrot.slane %v1145, 5
    %v1148 = vor.u32 %v1144, %v1147
    %v1149 = vrot.slane %v1148, 4
    %v1151 = vshll.u32 %v1023, 16
    %v1153 = vrot.slane %v1151, 5
    %v1154 = vsel %vm1042, %v1149, %v1153
    %v1156 = vshrl.u32 %v1024, 16
    %v1158 = vrot.slane %v1156, 4
    %v1159 = vshll.u32 %v1024, 16
    %v1161 = vrot.slane %v1159, 5
    %v1162 = vor.u32 %v1158, %v1161
    %v1163 = vrot.slane %v1162, 4
    %v1165 = vshll.u32 %v1025, 16
    %v1167 = vrot.slane %v1165, 5
    %v1168 = vsel %vm1042, %v1163, %v1167
    %v1170 = vshrl.u32 %v1026, 16
    %v1172 = vrot.slane %v1170, 4
    %v1173 = vshll.u32 %v1026, 16
    %v1175 = vrot.slane %v1173, 5
    %v1176 = vor.u32 %v1172, %v1175
    %v1177 = vrot.slane %v1176, 4
    %v1179 = vshll.u32 %v1027, 16
    %v1181 = vrot.slane %v1179, 5
    %v1182 = vsel %vm1042, %v1177, %v1181
    %v1184 = vshrl.u32 %v1028, 16
    %v1186 = vrot.slane %v1184, 4
    %v1187 = vshll.u32 %v1028, 16
    %v1189 = vrot.slane %v1187, 5
    %v1190 = vor.u32 %v1186, %v1189
    %v1191 = vrot.slane %v1190, 4
    %v1193 = vshll.u32 %v1029, 16
    %v1195 = vrot.slane %v1193, 5
    %v1196 = vsel %vm1042, %v1191, %v1195
    %v1198 = vshrl.u32 %v1030, 16
    %v1200 = vrot.slane %v1198, 4
    %v1201 = vshll.u32 %v1030, 16
    %v1203 = vrot.slane %v1201, 5
    %v1204 = vor.u32 %v1200, %v1203
    %v1205 = vrot.slane %v1204, 4
    %v1207 = vshll.u32 %v1031, 16
    %v1209 = vrot.slane %v1207, 5
    %v1210 = vsel %vm1042, %v1205, %v1209
    %v1212 = vshrl.u32 %v1032, 16
    %v1214 = vrot.slane %v1212, 4
    %v1215 = vshll.u32 %v1032, 16
    %v1217 = vrot.slane %v1215, 5
    %v1218 = vor.u32 %v1214, %v1217
    %v1219 = vrot.slane %v1218, 4
    %v1221 = vshll.u32 %v1033, 16
    %v1223 = vrot.slane %v1221, 5
    %v1224 = vsel %vm1042, %v1219, %v1223
    %v1226 = vshrl.u32 %v1034, 16
    %v1228 = vrot.slane %v1226, 4
    %v1229 = vshll.u32 %v1034, 16
    %v1231 = vrot.slane %v1229, 5
    %v1232 = vor.u32 %v1228, %v1231
    %v1233 = vrot.slane %v1232, 4
    %v1235 = vshll.u32 %v1035, 16
    %v1237 = vrot.slane %v1235, 5
    %v1238 = vsel %vm1042, %v1233, %v1237
    %v1240 = vshrl.u32 %v1036, 16
    %v1242 = vrot.slane %v1240, 4
    %v1243 = vshll.u32 %v1036, 16
    %v1245 = vrot.slane %v1243, 5
    %v1246 = vor.u32 %v1242, %v1245
    %v1247 = vrot.slane %v1246, 4
    %v1249 = vshll.u32 %v1037, 16
    %v1251 = vrot.slane %v1249, 5
    %v1252 = vsel %vm1042, %v1247, %v1251
    %v1254 = vshrl.u32 %v1038, 16
    %v1256 = vrot.slane %v1254, 4
    %v1257 = vshll.u32 %v1038, 16
    %v1259 = vrot.slane %v1257, 5
    %v1260 = vor.u32 %v1256, %v1259
    %v1261 = vrot.slane %v1260, 4
    %v1263 = vshll.u32 %v1039, 16
    %v1265 = vrot.slane %v1263, 5
    %v1266 = vsel %vm1042, %v1261, %v1265
    %1267 = vrot.lane.b32.xlu0 %v1056, 64
    %v1268 = vpop.permute.xlu0 %1267
    %1269 = vrot.lane.b32.xlu0 %v1070, 64
    %v1270 = vpop.permute.xlu0 %1269
    %1271 = vrot.lane.b32.xlu0 %v1084, 64
    %v1272 = vpop.permute.xlu0 %1271
    %1273 = vrot.lane.b32.xlu0 %v1098, 64
    %v1274 = vpop.permute.xlu0 %1273
    %1275 = vrot.lane.b32.xlu0 %v1112, 64
    %v1276 = vpop.permute.xlu0 %1275
    %1277 = vrot.lane.b32.xlu0 %v1126, 64
    %v1278 = vpop.permute.xlu0 %1277
    %1279 = vrot.lane.b32.xlu0 %v1140, 64
    %v1280 = vpop.permute.xlu0 %1279
    %1281 = vrot.lane.b32.xlu0 %v1154, 64
    %v1282 = vpop.permute.xlu0 %1281
    %1283 = vrot.lane.b32.xlu0 %v1168, 64
    %v1284 = vpop.permute.xlu0 %1283
    %1285 = vrot.lane.b32.xlu0 %v1182, 64
    %v1286 = vpop.permute.xlu0 %1285
    %1287 = vrot.lane.b32.xlu0 %v1196, 64
    %v1288 = vpop.permute.xlu0 %1287
    %1289 = vrot.lane.b32.xlu0 %v1210, 64
    %v1290 = vpop.permute.xlu0 %1289
    %1291 = vrot.lane.b32.xlu0 %v1224, 64
    %v1292 = vpop.permute.xlu0 %1291
    %1293 = vrot.lane.b32.xlu0 %v1238, 64
    %v1294 = vpop.permute.xlu0 %1293
    %1295 = vrot.lane.b32.xlu0 %v1252, 64
    %v1296 = vpop.permute.xlu0 %1295
    %1297 = vrot.lane.b32.xlu0 %v1266, 64
    %v1298 = vpop.permute.xlu0 %1297
    %vm1315 = vcmask 1043968
    %1316 = vst.msk [vmem:[#allocation3] sm:$0xf] %vm1315, %v1268
    %1317 = vst.msk [vmem:[#allocation3 + $0x14] sm:$0xf] %vm1315, %v1270
    %1318 = vst.msk [vmem:[#allocation3 + $0x28] sm:$0xf] %vm1315, %v1272
    %1319 = vst.msk [vmem:[#allocation3 + $0x3c] sm:$0xf] %vm1315, %v1274
    %1320 = vst.msk [vmem:[#allocation3 + $0x50] sm:$0xf] %vm1315, %v1276
    %1321 = vst.msk [vmem:[#allocation3 + $0x64] sm:$0xf] %vm1315, %v1278
    %1322 = vst.msk [vmem:[#allocation3 + $0x78] sm:$0xf] %vm1315, %v1280
    %1323 = vst.msk [vmem:[#allocation3 + $0x8c] sm:$0xf] %vm1315, %v1282
    %1324 = vst.msk [vmem:[#allocation3 + $0xa0] sm:$0xf] %vm1315, %v1284
    %1325 = vst.msk [vmem:[#allocation3 + $0xb4] sm:$0xf] %vm1315, %v1286
    %1326 = vst.msk [vmem:[#allocation3 + $0xc8] sm:$0xf] %vm1315, %v1288
    %1327 = vst.msk [vmem:[#allocation3 + $0xdc] sm:$0xf] %vm1315, %v1290
    %1328 = vst.msk [vmem:[#allocation3 + $0xf0] sm:$0xf] %vm1315, %v1292
    %1329 = vst.msk [vmem:[#allocation3 + $0x104] sm:$0xf] %vm1315, %v1294
    %1330 = vst.msk [vmem:[#allocation3 + $0x118] sm:$0xf] %vm1315, %v1296
    %1331 = vst.msk [vmem:[#allocation3 + $0x12c] sm:$0xf] %vm1315, %v1298
    %v1332 = vld [vmem:[#allocation2] sm:$0xe]
    %v1333 = vld [vmem:[#allocation2 + $0x4] sm:$0x1]
    %v1334 = vld [vmem:[#allocation2 + $0x8] sm:$0xe]
    %v1335 = vld [vmem:[#allocation2 + $0xc] sm:$0x1]
    %v1336 = vld [vmem:[#allocation2 + $0x10] sm:$0xe]
    %v1337 = vld [vmem:[#allocation2 + $0x14] sm:$0x1]
    %v1338 = vld [vmem:[#allocation2 + $0x18] sm:$0xe]
    %v1339 = vld [vmem:[#allocation2 + $0x1c] sm:$0x1]
    %v1340 = vld [vmem:[#allocation2 + $0x20] sm:$0xe]
    %v1341 = vld [vmem:[#allocation2 + $0x24] sm:$0x1]
    %v1342 = vld [vmem:[#allocation2 + $0x28] sm:$0xe]
    %v1343 = vld [vmem:[#allocation2 + $0x2c] sm:$0x1]
    %v1344 = vld [vmem:[#allocation2 + $0x30] sm:$0xe]
    %v1345 = vld [vmem:[#allocation2 + $0x34] sm:$0x1]
    %v1346 = vld [vmem:[#allocation2 + $0x38] sm:$0xe]
    %v1347 = vld [vmem:[#allocation2 + $0x3c] sm:$0x1]
    %v1348 = vld [vmem:[#allocation2 + $0x50] sm:$0xe]
    %v1349 = vld [vmem:[#allocation2 + $0x54] sm:$0x1]
    %v1350 = vld [vmem:[#allocation2 + $0x58] sm:$0xe]
    %v1351 = vld [vmem:[#allocation2 + $0x5c] sm:$0x1]
    %v1352 = vld [vmem:[#allocation2 + $0x60] sm:$0xe]
    %v1353 = vld [vmem:[#allocation2 + $0x64] sm:$0x1]
    %v1354 = vld [vmem:[#allocation2 + $0x68] sm:$0xe]
    %v1355 = vld [vmem:[#allocation2 + $0x6c] sm:$0x1]
    %v1356 = vld [vmem:[#allocation2 + $0x70] sm:$0xe]
    %v1357 = vld [vmem:[#allocation2 + $0x74] sm:$0x1]
    %v1358 = vld [vmem:[#allocation2 + $0x78] sm:$0xe]
    %v1359 = vld [vmem:[#allocation2 + $0x7c] sm:$0x1]
    %v1360 = vld [vmem:[#allocation2 + $0x80] sm:$0xe]
    %v1361 = vld [vmem:[#allocation2 + $0x84] sm:$0x1]
    %v1362 = vld [vmem:[#allocation2 + $0x88] sm:$0xe]
    %v1363 = vld [vmem:[#allocation2 + $0x8c] sm:$0x1]
    %vm1396 = vcmask 1042432
    %vm1397 = vcmask 1046532
    %vm1398 = vmor %vm1396, %vm1397
    %v1399 = vrot.slane %v1332, 5
    %v1400 = vrot.slane %v1399, 4
    %v1401 = vrot.slane %v1333, 5
    %v1402 = vsel %vm1398, %v1400, %v1401
    %v1403 = vrot.slane %v1334, 5
    %v1404 = vrot.slane %v1403, 4
    %v1405 = vrot.slane %v1335, 5
    %v1406 = vsel %vm1398, %v1404, %v1405
    %v1407 = vrot.slane %v1336, 5
    %v1408 = vrot.slane %v1407, 4
    %v1409 = vrot.slane %v1337, 5
    %v1410 = vsel %vm1398, %v1408, %v1409
    %v1411 = vrot.slane %v1338, 5
    %v1412 = vrot.slane %v1411, 4
    %v1413 = vrot.slane %v1339, 5
    %v1414 = vsel %vm1398, %v1412, %v1413
    %v1415 = vrot.slane %v1340, 5
    %v1416 = vrot.slane %v1415, 4
    %v1417 = vrot.slane %v1341, 5
    %v1418 = vsel %vm1398, %v1416, %v1417
    %v1419 = vrot.slane %v1342, 5
    %v1420 = vrot.slane %v1419, 4
    %v1421 = vrot.slane %v1343, 5
    %v1422 = vsel %vm1398, %v1420, %v1421
    %v1423 = vrot.slane %v1344, 5
    %v1424 = vrot.slane %v1423, 4
    %v1425 = vrot.slane %v1345, 5
    %v1426 = vsel %vm1398, %v1424, %v1425
    %v1427 = vrot.slane %v1346, 5
    %v1428 = vrot.slane %v1427, 4
    %v1429 = vrot.slane %v1347, 5
    %v1430 = vsel %vm1398, %v1428, %v1429
    %v1431 = vrot.slane %v1348, 5
    %v1432 = vrot.slane %v1431, 4
    %v1433 = vrot.slane %v1349, 5
    %v1434 = vsel %vm1398, %v1432, %v1433
    %v1435 = vrot.slane %v1350, 5
    %v1436 = vrot.slane %v1435, 4
    %v1437 = vrot.slane %v1351, 5
    %v1438 = vsel %vm1398, %v1436, %v1437
    %v1439 = vrot.slane %v1352, 5
    %v1440 = vrot.slane %v1439, 4
    %v1441 = vrot.slane %v1353, 5
    %v1442 = vsel %vm1398, %v1440, %v1441
    %v1443 = vrot.slane %v1354, 5
    %v1444 = vrot.slane %v1443, 4
    %v1445 = vrot.slane %v1355, 5
    %v1446 = vsel %vm1398, %v1444, %v1445
    %v1447 = vrot.slane %v1356, 5
    %v1448 = vrot.slane %v1447, 4
    %v1449 = vrot.slane %v1357, 5
    %v1450 = vsel %vm1398, %v1448, %v1449
    %v1451 = vrot.slane %v1358, 5
    %v1452 = vrot.slane %v1451, 4
    %v1453 = vrot.slane %v1359, 5
    %v1454 = vsel %vm1398, %v1452, %v1453
    %v1455 = vrot.slane %v1360, 5
    %v1456 = vrot.slane %v1455, 4
    %v1457 = vrot.slane %v1361, 5
    %v1458 = vsel %vm1398, %v1456, %v1457
    %v1459 = vrot.slane %v1362, 5
    %v1460 = vrot.slane %v1459, 4
    %v1461 = vrot.slane %v1363, 5
    %v1462 = vsel %vm1398, %v1460, %v1461
    %1479 = vst.msk [vmem:[#allocation3 + $0x4] sm:$0xf] %vm589, %v1402
    %1480 = vst.msk [vmem:[#allocation3 + $0x18] sm:$0xf] %vm589, %v1406
    %1481 = vst.msk [vmem:[#allocation3 + $0x2c] sm:$0xf] %vm589, %v1410
    %1482 = vst.msk [vmem:[#allocation3 + $0x40] sm:$0xf] %vm589, %v1414
    %1483 = vst.msk [vmem:[#allocation3 + $0x54] sm:$0xf] %vm589, %v1418
    %1484 = vst.msk [vmem:[#allocation3 + $0x68] sm:$0xf] %vm589, %v1422
    %1485 = vst.msk [vmem:[#allocation3 + $0x7c] sm:$0xf] %vm589, %v1426
    %1486 = vst.msk [vmem:[#allocation3 + $0x90] sm:$0xf] %vm589, %v1430
    %1487 = vst.msk [vmem:[#allocation3 + $0xa4] sm:$0xf] %vm589, %v1434
    %1488 = vst.msk [vmem:[#allocation3 + $0xb8] sm:$0xf] %vm589, %v1438
    %1489 = vst.msk [vmem:[#allocation3 + $0xcc] sm:$0xf] %vm589, %v1442
    %1490 = vst.msk [vmem:[#allocation3 + $0xe0] sm:$0xf] %vm589, %v1446
    %1491 = vst.msk [vmem:[#allocation3 + $0xf4] sm:$0xf] %vm589, %v1450
    %1492 = vst.msk [vmem:[#allocation3 + $0x108] sm:$0xf] %vm589, %v1454
    %1493 = vst.msk [vmem:[#allocation3 + $0x11c] sm:$0xf] %vm589, %v1458
    %1494 = vst.msk [vmem:[#allocation3 + $0x130] sm:$0xf] %vm589, %v1462
    %v1495 = vld [vmem:[%s600] sm:$0xf]
    %v1496 = vld [vmem:[%s600 + $0x8] sm:$0xf]
    %v1497 = vld [vmem:[%s600 + $0x10] sm:$0xf]
    %v1498 = vld [vmem:[%s600 + $0x18] sm:$0xf]
    %v1499 = vld [vmem:[%s600 + $0x20] sm:$0xf]
    %v1500 = vld [vmem:[%s600 + $0x28] sm:$0xf]
    %v1501 = vld [vmem:[%s600 + $0x30] sm:$0xf]
    %v1502 = vld [vmem:[%s600 + $0x38] sm:$0xf]
    %v1503 = vld [vmem:[%s600 + $0x50] sm:$0xf]
    %v1504 = vld [vmem:[%s600 + $0x58] sm:$0xf]
    %v1505 = vld [vmem:[%s600 + $0x60] sm:$0xf]
    %v1506 = vld [vmem:[%s600 + $0x68] sm:$0xf]
    %v1507 = vld [vmem:[%s600 + $0x70] sm:$0xf]
    %v1508 = vld [vmem:[%s600 + $0x78] sm:$0xf]
    %v1509 = vld [vmem:[%s600 + $0x80] sm:$0xf]
    %v1510 = vld [vmem:[%s600 + $0x88] sm:$0xf]
    %1527 = vrot.lane.b32.xlu0 %v1495, 64
    %v1528 = vpop.permute.xlu0 %1527
    %1529 = vrot.lane.b32.xlu0 %v1496, 64
    %v1530 = vpop.permute.xlu0 %1529
    %1531 = vrot.lane.b32.xlu0 %v1497, 64
    %v1532 = vpop.permute.xlu0 %1531
    %1533 = vrot.lane.b32.xlu0 %v1498, 64
    %v1534 = vpop.permute.xlu0 %1533
    %1535 = vrot.lane.b32.xlu0 %v1499, 64
    %v1536 = vpop.permute.xlu0 %1535
    %1537 = vrot.lane.b32.xlu0 %v1500, 64
    %v1538 = vpop.permute.xlu0 %1537
    %1539 = vrot.lane.b32.xlu0 %v1501, 64
    %v1540 = vpop.permute.xlu0 %1539
    %1541 = vrot.lane.b32.xlu0 %v1502, 64
    %v1542 = vpop.permute.xlu0 %1541
    %1543 = vrot.lane.b32.xlu0 %v1503, 64
    %v1544 = vpop.permute.xlu0 %1543
    %1545 = vrot.lane.b32.xlu0 %v1504, 64
    %v1546 = vpop.permute.xlu0 %1545
    %1547 = vrot.lane.b32.xlu0 %v1505, 64
    %v1548 = vpop.permute.xlu0 %1547
    %1549 = vrot.lane.b32.xlu0 %v1506, 64
    %v1550 = vpop.permute.xlu0 %1549
    %1551 = vrot.lane.b32.xlu0 %v1507, 64
    %v1552 = vpop.permute.xlu0 %1551
    %1553 = vrot.lane.b32.xlu0 %v1508, 64
    %v1554 = vpop.permute.xlu0 %1553
    %1555 = vrot.lane.b32.xlu0 %v1509, 64
    %v1556 = vpop.permute.xlu0 %1555
    %1557 = vrot.lane.b32.xlu0 %v1510, 64
    %v1558 = vpop.permute.xlu0 %1557
    %1575 = vst.msk [vmem:[#allocation3 + $0x4] sm:$0xf] %vm1315, %v1528
    %1576 = vst.msk [vmem:[#allocation3 + $0x18] sm:$0xf] %vm1315, %v1530
    %1577 = vst.msk [vmem:[#allocation3 + $0x2c] sm:$0xf] %vm1315, %v1532
    %1578 = vst.msk [vmem:[#allocation3 + $0x40] sm:$0xf] %vm1315, %v1534
    %1579 = vst.msk [vmem:[#allocation3 + $0x54] sm:$0xf] %vm1315, %v1536
    %1580 = vst.msk [vmem:[#allocation3 + $0x68] sm:$0xf] %vm1315, %v1538
    %1581 = vst.msk [vmem:[#allocation3 + $0x7c] sm:$0xf] %vm1315, %v1540
    %1582 = vst.msk [vmem:[#allocation3 + $0x90] sm:$0xf] %vm1315, %v1542
    %1583 = vst.msk [vmem:[#allocation3 + $0xa4] sm:$0xf] %vm1315, %v1544
    %1584 = vst.msk [vmem:[#allocation3 + $0xb8] sm:$0xf] %vm1315, %v1546
    %1585 = vst.msk [vmem:[#allocation3 + $0xcc] sm:$0xf] %vm1315, %v1548
    %1586 = vst.msk [vmem:[#allocation3 + $0xe0] sm:$0xf] %vm1315, %v1550
    %1587 = vst.msk [vmem:[#allocation3 + $0xf4] sm:$0xf] %vm1315, %v1552
    %1588 = vst.msk [vmem:[#allocation3 + $0x108] sm:$0xf] %vm1315, %v1554
    %1589 = vst.msk [vmem:[#allocation3 + $0x11c] sm:$0xf] %vm1315, %v1556
    %1590 = vst.msk [vmem:[#allocation3 + $0x130] sm:$0xf] %vm1315, %v1558
    %v1591 = vld [vmem:[%s600] sm:$0xf]
    %v1592 = vld [vmem:[%s600 + $0x4] sm:$0x1]
    %v1593 = vld [vmem:[%s600 + $0x8] sm:$0xf]
    %v1594 = vld [vmem:[%s600 + $0xc] sm:$0x1]
    %v1595 = vld [vmem:[%s600 + $0x10] sm:$0xf]
    %v1596 = vld [vmem:[%s600 + $0x14] sm:$0x1]
    %v1597 = vld [vmem:[%s600 + $0x18] sm:$0xf]
    %v1598 = vld [vmem:[%s600 + $0x1c] sm:$0x1]
    %v1599 = vld [vmem:[%s600 + $0x20] sm:$0xf]
    %v1600 = vld [vmem:[%s600 + $0x24] sm:$0x1]
    %v1601 = vld [vmem:[%s600 + $0x28] sm:$0xf]
    %v1602 = vld [vmem:[%s600 + $0x2c] sm:$0x1]
    %v1603 = vld [vmem:[%s600 + $0x30] sm:$0xf]
    %v1604 = vld [vmem:[%s600 + $0x34] sm:$0x1]
    %v1605 = vld [vmem:[%s600 + $0x38] sm:$0xf]
    %v1606 = vld [vmem:[%s600 + $0x3c] sm:$0x1]
    %v1607 = vld [vmem:[%s600 + $0x50] sm:$0xf]
    %v1608 = vld [vmem:[%s600 + $0x54] sm:$0x1]
    %v1609 = vld [vmem:[%s600 + $0x58] sm:$0xf]
    %v1610 = vld [vmem:[%s600 + $0x5c] sm:$0x1]
    %v1611 = vld [vmem:[%s600 + $0x60] sm:$0xf]
    %v1612 = vld [vmem:[%s600 + $0x64] sm:$0x1]
    %v1613 = vld [vmem:[%s600 + $0x68] sm:$0xf]
    %v1614 = vld [vmem:[%s600 + $0x6c] sm:$0x1]
    %v1615 = vld [vmem:[%s600 + $0x70] sm:$0xf]
    %v1616 = vld [vmem:[%s600 + $0x74] sm:$0x1]
    %v1617 = vld [vmem:[%s600 + $0x78] sm:$0xf]
    %v1618 = vld [vmem:[%s600 + $0x7c] sm:$0x1]
    %v1619 = vld [vmem:[%s600 + $0x80] sm:$0xf]
    %v1620 = vld [vmem:[%s600 + $0x84] sm:$0x1]
    %v1621 = vld [vmem:[%s600 + $0x88] sm:$0xf]
    %v1622 = vld [vmem:[%s600 + $0x8c] sm:$0x1]
    %v1624 = vshrl.u32 %v1591, 16
    %v1626 = vrot.slane %v1624, 4
    %v1627 = vshll.u32 %v1591, 16
    %v1629 = vrot.slane %v1627, 5
    %v1630 = vor.u32 %v1626, %v1629
    %v1631 = vrot.slane %v1630, 4
    %v1633 = vshll.u32 %v1592, 16
    %v1635 = vrot.slane %v1633, 5
    %v1636 = vsel %vm1042, %v1631, %v1635
    %v1638 = vshrl.u32 %v1593, 16
    %v1640 = vrot.slane %v1638, 4
    %v1641 = vshll.u32 %v1593, 16
    %v1643 = vrot.slane %v1641, 5
    %v1644 = vor.u32 %v1640, %v1643
    %v1645 = vrot.slane %v1644, 4
    %v1647 = vshll.u32 %v1594, 16
    %v1649 = vrot.slane %v1647, 5
    %v1650 = vsel %vm1042, %v1645, %v1649
    %v1652 = vshrl.u32 %v1595, 16
    %v1654 = vrot.slane %v1652, 4
    %v1655 = vshll.u32 %v1595, 16
    %v1657 = vrot.slane %v1655, 5
    %v1658 = vor.u32 %v1654, %v1657
    %v1659 = vrot.slane %v1658, 4
    %v1661 = vshll.u32 %v1596, 16
    %v1663 = vrot.slane %v1661, 5
    %v1664 = vsel %vm1042, %v1659, %v1663
    %v1666 = vshrl.u32 %v1597, 16
    %v1668 = vrot.slane %v1666, 4
    %v1669 = vshll.u32 %v1597, 16
    %v1671 = vrot.slane %v1669, 5
    %v1672 = vor.u32 %v1668, %v1671
    %v1673 = vrot.slane %v1672, 4
    %v1675 = vshll.u32 %v1598, 16
    %v1677 = vrot.slane %v1675, 5
    %v1678 = vsel %vm1042, %v1673, %v1677
    %v1680 = vshrl.u32 %v1599, 16
    %v1682 = vrot.slane %v1680, 4
    %v1683 = vshll.u32 %v1599, 16
    %v1685 = vrot.slane %v1683, 5
    %v1686 = vor.u32 %v1682, %v1685
    %v1687 = vrot.slane %v1686, 4
    %v1689 = vshll.u32 %v1600, 16
    %v1691 = vrot.slane %v1689, 5
    %v1692 = vsel %vm1042, %v1687, %v1691
    %v1694 = vshrl.u32 %v1601, 16
    %v1696 = vrot.slane %v1694, 4
    %v1697 = vshll.u32 %v1601, 16
    %v1699 = vrot.slane %v1697, 5
    %v1700 = vor.u32 %v1696, %v1699
    %v1701 = vrot.slane %v1700, 4
    %v1703 = vshll.u32 %v1602, 16
    %v1705 = vrot.slane %v1703, 5
    %v1706 = vsel %vm1042, %v1701, %v1705
    %v1708 = vshrl.u32 %v1603, 16
    %v1710 = vrot.slane %v1708, 4
    %v1711 = vshll.u32 %v1603, 16
    %v1713 = vrot.slane %v1711, 5
    %v1714 = vor.u32 %v1710, %v1713
    %v1715 = vrot.slane %v1714, 4
    %v1717 = vshll.u32 %v1604, 16
    %v1719 = vrot.slane %v1717, 5
    %v1720 = vsel %vm1042, %v1715, %v1719
    %v1722 = vshrl.u32 %v1605, 16
    %v1724 = vrot.slane %v1722, 4
    %v1725 = vshll.u32 %v1605, 16
    %v1727 = vrot.slane %v1725, 5
    %v1728 = vor.u32 %v1724, %v1727
    %v1729 = vrot.slane %v1728, 4
    %v1731 = vshll.u32 %v1606, 16
    %v1733 = vrot.slane %v1731, 5
    %v1734 = vsel %vm1042, %v1729, %v1733
    %v1736 = vshrl.u32 %v1607, 16
    %v1738 = vrot.slane %v1736, 4
    %v1739 = vshll.u32 %v1607, 16
    %v1741 = vrot.slane %v1739, 5
    %v1742 = vor.u32 %v1738, %v1741
    %v1743 = vrot.slane %v1742, 4
    %v1745 = vshll.u32 %v1608, 16
    %v1747 = vrot.slane %v1745, 5
    %v1748 = vsel %vm1042, %v1743, %v1747
    %v1750 = vshrl.u32 %v1609, 16
    %v1752 = vrot.slane %v1750, 4
    %v1753 = vshll.u32 %v1609, 16
    %v1755 = vrot.slane %v1753, 5
    %v1756 = vor.u32 %v1752, %v1755
    %v1757 = vrot.slane %v1756, 4
    %v1759 = vshll.u32 %v1610, 16
    %v1761 = vrot.slane %v1759, 5
    %v1762 = vsel %vm1042, %v1757, %v1761
    %v1764 = vshrl.u32 %v1611, 16
    %v1766 = vrot.slane %v1764, 4
    %v1767 = vshll.u32 %v1611, 16
    %v1769 = vrot.slane %v1767, 5
    %v1770 = vor.u32 %v1766, %v1769
    %v1771 = vrot.slane %v1770, 4
    %v1773 = vshll.u32 %v1612, 16
    %v1775 = vrot.slane %v1773, 5
    %v1776 = vsel %vm1042, %v1771, %v1775
    %v1778 = vshrl.u32 %v1613, 16
    %v1780 = vrot.slane %v1778, 4
    %v1781 = vshll.u32 %v1613, 16
    %v1783 = vrot.slane %v1781, 5
    %v1784 = vor.u32 %v1780, %v1783
    %v1785 = vrot.slane %v1784, 4
    %v1787 = vshll.u32 %v1614, 16
    %v1789 = vrot.slane %v1787, 5
    %v1790 = vsel %vm1042, %v1785, %v1789
    %v1792 = vshrl.u32 %v1615, 16
    %v1794 = vrot.slane %v1792, 4
    %v1795 = vshll.u32 %v1615, 16
    %v1797 = vrot.slane %v1795, 5
    %v1798 = vor.u32 %v1794, %v1797
    %v1799 = vrot.slane %v1798, 4
    %v1801 = vshll.u32 %v1616, 16
    %v1803 = vrot.slane %v1801, 5
    %v1804 = vsel %vm1042, %v1799, %v1803
    %v1806 = vshrl.u32 %v1617, 16
    %v1808 = vrot.slane %v1806, 4
    %v1809 = vshll.u32 %v1617, 16
    %v1811 = vrot.slane %v1809, 5
    %v1812 = vor.u32 %v1808, %v1811
    %v1813 = vrot.slane %v1812, 4
    %v1815 = vshll.u32 %v1618, 16
    %v1817 = vrot.slane %v1815, 5
    %v1818 = vsel %vm1042, %v1813, %v1817
    %v1820 = vshrl.u32 %v1619, 16
    %v1822 = vrot.slane %v1820, 4
    %v1823 = vshll.u32 %v1619, 16
    %v1825 = vrot.slane %v1823, 5
    %v1826 = vor.u32 %v1822, %v1825
    %v1827 = vrot.slane %v1826, 4
    %v1829 = vshll.u32 %v1620, 16
    %v1831 = vrot.slane %v1829, 5
    %v1832 = vsel %vm1042, %v1827, %v1831
    %v1834 = vshrl.u32 %v1621, 16
    %v1836 = vrot.slane %v1834, 4
    %v1837 = vshll.u32 %v1621, 16
    %v1839 = vrot.slane %v1837, 5
    %v1840 = vor.u32 %v1836, %v1839
    %v1841 = vrot.slane %v1840, 4
    %v1843 = vshll.u32 %v1622, 16
    %v1845 = vrot.slane %v1843, 5
    %v1846 = vsel %vm1042, %v1841, %v1845
    %1863 = vst.msk [vmem:[#allocation3 + $0x8] sm:$0xf] %vm589, %v1636
    %1864 = vst.msk [vmem:[#allocation3 + $0x1c] sm:$0xf] %vm589, %v1650
    %1865 = vst.msk [vmem:[#allocation3 + $0x30] sm:$0xf] %vm589, %v1664
    %1866 = vst.msk [vmem:[#allocation3 + $0x44] sm:$0xf] %vm589, %v1678
    %1867 = vst.msk [vmem:[#allocation3 + $0x58] sm:$0xf] %vm589, %v1692
    %1868 = vst.msk [vmem:[#allocation3 + $0x6c] sm:$0xf] %vm589, %v1706
    %1869 = vst.msk [vmem:[#allocation3 + $0x80] sm:$0xf] %vm589, %v1720
    %1870 = vst.msk [vmem:[#allocation3 + $0x94] sm:$0xf] %vm589, %v1734
    %1871 = vst.msk [vmem:[#allocation3 + $0xa8] sm:$0xf] %vm589, %v1748
    %1872 = vst.msk [vmem:[#allocation3 + $0xbc] sm:$0xf] %vm589, %v1762
    %1873 = vst.msk [vmem:[#allocation3 + $0xd0] sm:$0xf] %vm589, %v1776
    %1874 = vst.msk [vmem:[#allocation3 + $0xe4] sm:$0xf] %vm589, %v1790
    %1875 = vst.msk [vmem:[#allocation3 + $0xf8] sm:$0xf] %vm589, %v1804
    %1876 = vst.msk [vmem:[#allocation3 + $0x10c] sm:$0xf] %vm589, %v1818
    %1877 = vst.msk [vmem:[#allocation3 + $0x120] sm:$0xf] %vm589, %v1832
    %1878 = vst.msk [vmem:[#allocation3 + $0x134] sm:$0xf] %vm589, %v1846
    %v1879 = vld [vmem:[%s600] sm:$0xe]
    %v1880 = vld [vmem:[%s600 + $0x4] sm:$0x1]
    %v1881 = vld [vmem:[%s600 + $0x8] sm:$0xe]
    %v1882 = vld [vmem:[%s600 + $0xc] sm:$0x1]
    %v1883 = vld [vmem:[%s600 + $0x10] sm:$0xe]
    %v1884 = vld [vmem:[%s600 + $0x14] sm:$0x1]
    %v1885 = vld [vmem:[%s600 + $0x18] sm:$0xe]
    %v1886 = vld [vmem:[%s600 + $0x1c] sm:$0x1]
    %v1887 = vld [vmem:[%s600 + $0x20] sm:$0xe]
    %v1888 = vld [vmem:[%s600 + $0x24] sm:$0x1]
    %v1889 = vld [vmem:[%s600 + $0x28] sm:$0xe]
    %v1890 = vld [vmem:[%s600 + $0x2c] sm:$0x1]
    %v1891 = vld [vmem:[%s600 + $0x30] sm:$0xe]
    %v1892 = vld [vmem:[%s600 + $0x34] sm:$0x1]
    %v1893 = vld [vmem:[%s600 + $0x38] sm:$0xe]
    %v1894 = vld [vmem:[%s600 + $0x3c] sm:$0x1]
    %v1895 = vld [vmem:[%s600 + $0x50] sm:$0xe]
    %v1896 = vld [vmem:[%s600 + $0x54] sm:$0x1]
    %v1897 = vld [vmem:[%s600 + $0x58] sm:$0xe]
    %v1898 = vld [vmem:[%s600 + $0x5c] sm:$0x1]
    %v1899 = vld [vmem:[%s600 + $0x60] sm:$0xe]
    %v1900 = vld [vmem:[%s600 + $0x64] sm:$0x1]
    %v1901 = vld [vmem:[%s600 + $0x68] sm:$0xe]
    %v1902 = vld [vmem:[%s600 + $0x6c] sm:$0x1]
    %v1903 = vld [vmem:[%s600 + $0x70] sm:$0xe]
    %v1904 = vld [vmem:[%s600 + $0x74] sm:$0x1]
    %v1905 = vld [vmem:[%s600 + $0x78] sm:$0xe]
    %v1906 = vld [vmem:[%s600 + $0x7c] sm:$0x1]
    %v1907 = vld [vmem:[%s600 + $0x80] sm:$0xe]
    %v1908 = vld [vmem:[%s600 + $0x84] sm:$0x1]
    %v1909 = vld [vmem:[%s600 + $0x88] sm:$0xe]
    %v1910 = vld [vmem:[%s600 + $0x8c] sm:$0x1]
    %v1943 = vrot.slane %v1879, 5
    %v1944 = vrot.slane %v1943, 4
    %v1945 = vrot.slane %v1880, 5
    %v1946 = vsel %vm1398, %v1944, %v1945
    %v1947 = vrot.slane %v1881, 5
    %v1948 = vrot.slane %v1947, 4
    %v1949 = vrot.slane %v1882, 5
    %v1950 = vsel %vm1398, %v1948, %v1949
    %v1951 = vrot.slane %v1883, 5
    %v1952 = vrot.slane %v1951, 4
    %v1953 = vrot.slane %v1884, 5
    %v1954 = vsel %vm1398, %v1952, %v1953
    %v1955 = vrot.slane %v1885, 5
    %v1956 = vrot.slane %v1955, 4
    %v1957 = vrot.slane %v1886, 5
    %v1958 = vsel %vm1398, %v1956, %v1957
    %v1959 = vrot.slane %v1887, 5
    %v1960 = vrot.slane %v1959, 4
    %v1961 = vrot.slane %v1888, 5
    %v1962 = vsel %vm1398, %v1960, %v1961
    %v1963 = vrot.slane %v1889, 5
    %v1964 = vrot.slane %v1963, 4
    %v1965 = vrot.slane %v1890, 5
    %v1966 = vsel %vm1398, %v1964, %v1965
    %v1967 = vrot.slane %v1891, 5
    %v1968 = vrot.slane %v1967, 4
    %v1969 = vrot.slane %v1892, 5
    %v1970 = vsel %vm1398, %v1968, %v1969
    %v1971 = vrot.slane %v1893, 5
    %v1972 = vrot.slane %v1971, 4
    %v1973 = vrot.slane %v1894, 5
    %v1974 = vsel %vm1398, %v1972, %v1973
    %v1975 = vrot.slane %v1895, 5
    %v1976 = vrot.slane %v1975, 4
    %v1977 = vrot.slane %v1896, 5
    %v1978 = vsel %vm1398, %v1976, %v1977
    %v1979 = vrot.slane %v1897, 5
    %v1980 = vrot.slane %v1979, 4
    %v1981 = vrot.slane %v1898, 5
    %v1982 = vsel %vm1398, %v1980, %v1981
    %v1983 = vrot.slane %v1899, 5
    %v1984 = vrot.slane %v1983, 4
    %v1985 = vrot.slane %v1900, 5
    %v1986 = vsel %vm1398, %v1984, %v1985
    %v1987 = vrot.slane %v1901, 5
    %v1988 = vrot.slane %v1987, 4
    %v1989 = vrot.slane %v1902, 5
    %v1990 = vsel %vm1398, %v1988, %v1989
    %v1991 = vrot.slane %v1903, 5
    %v1992 = vrot.slane %v1991, 4
    %v1993 = vrot.slane %v1904, 5
    %v1994 = vsel %vm1398, %v1992, %v1993
    %v1995 = vrot.slane %v1905, 5
    %v1996 = vrot.slane %v1995, 4
    %v1997 = vrot.slane %v1906, 5
    %v1998 = vsel %vm1398, %v1996, %v1997
    %v1999 = vrot.slane %v1907, 5
    %v2000 = vrot.slane %v1999, 4
    %v2001 = vrot.slane %v1908, 5
    %v2002 = vsel %vm1398, %v2000, %v2001
    %v2003 = vrot.slane %v1909, 5
    %v2004 = vrot.slane %v2003, 4
    %v2005 = vrot.slane %v1910, 5
    %v2006 = vsel %vm1398, %v2004, %v2005
    %2007 = vrot.lane.b32.xlu0 %v1946, 64
    %v2008 = vpop.permute.xlu0 %2007
    %2009 = vrot.lane.b32.xlu0 %v1950, 64
    %v2010 = vpop.permute.xlu0 %2009
    %2011 = vrot.lane.b32.xlu0 %v1954, 64
    %v2012 = vpop.permute.xlu0 %2011
    %2013 = vrot.lane.b32.xlu0 %v1958, 64
    %v2014 = vpop.permute.xlu0 %2013
    %2015 = vrot.lane.b32.xlu0 %v1962, 64
    %v2016 = vpop.permute.xlu0 %2015
    %2017 = vrot.lane.b32.xlu0 %v1966, 64
    %v2018 = vpop.permute.xlu0 %2017
    %2019 = vrot.lane.b32.xlu0 %v1970, 64
    %v2020 = vpop.permute.xlu0 %2019
    %2021 = vrot.lane.b32.xlu0 %v1974, 64
    %v2022 = vpop.permute.xlu0 %2021
    %2023 = vrot.lane.b32.xlu0 %v1978, 64
    %v2024 = vpop.permute.xlu0 %2023
    %2025 = vrot.lane.b32.xlu0 %v1982, 64
    %v2026 = vpop.permute.xlu0 %2025
    %2027 = vrot.lane.b32.xlu0 %v1986, 64
    %v2028 = vpop.permute.xlu0 %2027
    %2029 = vrot.lane.b32.xlu0 %v1990, 64
    %v2030 = vpop.permute.xlu0 %2029
    %2031 = vrot.lane.b32.xlu0 %v1994, 64
    %v2032 = vpop.permute.xlu0 %2031
    %2033 = vrot.lane.b32.xlu0 %v1998, 64
    %v2034 = vpop.permute.xlu0 %2033
    %2035 = vrot.lane.b32.xlu0 %v2002, 64
    %v2036 = vpop.permute.xlu0 %2035
    %2037 = vrot.lane.b32.xlu0 %v2006, 64
    %v2038 = vpop.permute.xlu0 %2037
    %2055 = vst.msk [vmem:[#allocation3 + $0x8] sm:$0xf] %vm1315, %v2008
    %2056 = vst.msk [vmem:[#allocation3 + $0x1c] sm:$0xf] %vm1315, %v2010
    %2057 = vst.msk [vmem:[#allocation3 + $0x30] sm:$0xf] %vm1315, %v2012
    %2058 = vst.msk [vmem:[#allocation3 + $0x44] sm:$0xf] %vm1315, %v2014
    %2059 = vst.msk [vmem:[#allocation3 + $0x58] sm:$0xf] %vm1315, %v2016
    %2060 = vst.msk [vmem:[#allocation3 + $0x6c] sm:$0xf] %vm1315, %v2018
    %2061 = vst.msk [vmem:[#allocation3 + $0x80] sm:$0xf] %vm1315, %v2020
    %2062 = vst.msk [vmem:[#allocation3 + $0x94] sm:$0xf] %vm1315, %v2022
    %2063 = vst.msk [vmem:[#allocation3 + $0xa8] sm:$0xf] %vm1315, %v2024
    %2064 = vst.msk [vmem:[#allocation3 + $0xbc] sm:$0xf] %vm1315, %v2026
    %2065 = vst.msk [vmem:[#allocation3 + $0xd0] sm:$0xf] %vm1315, %v2028
    %2066 = vst.msk [vmem:[#allocation3 + $0xe4] sm:$0xf] %vm1315, %v2030
    %2067 = vst.msk [vmem:[#allocation3 + $0xf8] sm:$0xf] %vm1315, %v2032
    %2068 = vst.msk [vmem:[#allocation3 + $0x10c] sm:$0xf] %vm1315, %v2034
    %2069 = vst.msk [vmem:[#allocation3 + $0x120] sm:$0xf] %vm1315, %v2036
    %2070 = vst.msk [vmem:[#allocation3 + $0x134] sm:$0xf] %vm1315, %v2038
    %s2071 = scalar_lea.vmem [#allocation2], 16
    %v2072 = vld [vmem:[%s2071] sm:$0xf]
    %v2073 = vld [vmem:[%s2071 + $0x8] sm:$0xf]
    %v2074 = vld [vmem:[%s2071 + $0x10] sm:$0xf]
    %v2075 = vld [vmem:[%s2071 + $0x18] sm:$0xf]
    %v2076 = vld [vmem:[%s2071 + $0x20] sm:$0xf]
    %v2077 = vld [vmem:[%s2071 + $0x28] sm:$0xf]
    %v2078 = vld [vmem:[%s2071 + $0x30] sm:$0xf]
    %v2079 = vld [vmem:[%s2071 + $0x38] sm:$0xf]
    %v2080 = vld [vmem:[%s2071 + $0x50] sm:$0xf]
    %v2081 = vld [vmem:[%s2071 + $0x58] sm:$0xf]
    %v2082 = vld [vmem:[%s2071 + $0x60] sm:$0xf]
    %v2083 = vld [vmem:[%s2071 + $0x68] sm:$0xf]
    %v2084 = vld [vmem:[%s2071 + $0x70] sm:$0xf]
    %v2085 = vld [vmem:[%s2071 + $0x78] sm:$0xf]
    %v2086 = vld [vmem:[%s2071 + $0x80] sm:$0xf]
    %v2087 = vld [vmem:[%s2071 + $0x88] sm:$0xf]
    %2088 = vst.msk [vmem:[#allocation3 + $0xc] sm:$0xf] %vm589, %v2072
    %2089 = vst.msk [vmem:[#allocation3 + $0x20] sm:$0xf] %vm589, %v2073
    %2090 = vst.msk [vmem:[#allocation3 + $0x34] sm:$0xf] %vm589, %v2074
    %2091 = vst.msk [vmem:[#allocation3 + $0x48] sm:$0xf] %vm589, %v2075
    %2092 = vst.msk [vmem:[#allocation3 + $0x5c] sm:$0xf] %vm589, %v2076
    %2093 = vst.msk [vmem:[#allocation3 + $0x70] sm:$0xf] %vm589, %v2077
    %2094 = vst.msk [vmem:[#allocation3 + $0x84] sm:$0xf] %vm589, %v2078
    %2095 = vst.msk [vmem:[#allocation3 + $0x98] sm:$0xf] %vm589, %v2079
    %2096 = vst.msk [vmem:[#allocation3 + $0xac] sm:$0xf] %vm589, %v2080
    %2097 = vst.msk [vmem:[#allocation3 + $0xc0] sm:$0xf] %vm589, %v2081
    %2098 = vst.msk [vmem:[#allocation3 + $0xd4] sm:$0xf] %vm589, %v2082
    %2099 = vst.msk [vmem:[#allocation3 + $0xe8] sm:$0xf] %vm589, %v2083
    %2100 = vst.msk [vmem:[#allocation3 + $0xfc] sm:$0xf] %vm589, %v2084
    %2101 = vst.msk [vmem:[#allocation3 + $0x110] sm:$0xf] %vm589, %v2085
    %2102 = vst.msk [vmem:[#allocation3 + $0x124] sm:$0xf] %vm589, %v2086
    %2103 = vst.msk [vmem:[#allocation3 + $0x138] sm:$0xf] %vm589, %v2087
    %v2104 = vld [vmem:[%s2071] sm:$0xf]
    %v2105 = vld [vmem:[%s2071 + $0x4] sm:$0x1]
    %v2106 = vld [vmem:[%s2071 + $0x8] sm:$0xf]
    %v2107 = vld [vmem:[%s2071 + $0xc] sm:$0x1]
    %v2108 = vld [vmem:[%s2071 + $0x10] sm:$0xf]
    %v2109 = vld [vmem:[%s2071 + $0x14] sm:$0x1]
    %v2110 = vld [vmem:[%s2071 + $0x18] sm:$0xf]
    %v2111 = vld [vmem:[%s2071 + $0x1c] sm:$0x1]
    %v2112 = vld [vmem:[%s2071 + $0x20] sm:$0xf]
    %v2113 = vld [vmem:[%s2071 + $0x24] sm:$0x1]
    %v2114 = vld [vmem:[%s2071 + $0x28] sm:$0xf]
    %v2115 = vld [vmem:[%s2071 + $0x2c] sm:$0x1]
    %v2116 = vld [vmem:[%s2071 + $0x30] sm:$0xf]
    %v2117 = vld [vmem:[%s2071 + $0x34] sm:$0x1]
    %v2118 = vld [vmem:[%s2071 + $0x38] sm:$0xf]
    %v2119 = vld [vmem:[%s2071 + $0x3c] sm:$0x1]
    %v2120 = vld [vmem:[%s2071 + $0x50] sm:$0xf]
    %v2121 = vld [vmem:[%s2071 + $0x54] sm:$0x1]
    %v2122 = vld [vmem:[%s2071 + $0x58] sm:$0xf]
    %v2123 = vld [vmem:[%s2071 + $0x5c] sm:$0x1]
    %v2124 = vld [vmem:[%s2071 + $0x60] sm:$0xf]
    %v2125 = vld [vmem:[%s2071 + $0x64] sm:$0x1]
    %v2126 = vld [vmem:[%s2071 + $0x68] sm:$0xf]
    %v2127 = vld [vmem:[%s2071 + $0x6c] sm:$0x1]
    %v2128 = vld [vmem:[%s2071 + $0x70] sm:$0xf]
    %v2129 = vld [vmem:[%s2071 + $0x74] sm:$0x1]
    %v2130 = vld [vmem:[%s2071 + $0x78] sm:$0xf]
    %v2131 = vld [vmem:[%s2071 + $0x7c] sm:$0x1]
    %v2132 = vld [vmem:[%s2071 + $0x80] sm:$0xf]
    %v2133 = vld [vmem:[%s2071 + $0x84] sm:$0x1]
    %v2134 = vld [vmem:[%s2071 + $0x88] sm:$0xf]
    %v2135 = vld [vmem:[%s2071 + $0x8c] sm:$0x1]
    %v2137 = vshrl.u32 %v2104, 16
    %v2139 = vrot.slane %v2137, 4
    %v2140 = vshll.u32 %v2104, 16
    %v2142 = vrot.slane %v2140, 5
    %v2143 = vor.u32 %v2139, %v2142
    %v2144 = vrot.slane %v2143, 4
    %v2146 = vshll.u32 %v2105, 16
    %v2148 = vrot.slane %v2146, 5
    %v2149 = vsel %vm1042, %v2144, %v2148
    %v2151 = vshrl.u32 %v2106, 16
    %v2153 = vrot.slane %v2151, 4
    %v2154 = vshll.u32 %v2106, 16
    %v2156 = vrot.slane %v2154, 5
    %v2157 = vor.u32 %v2153, %v2156
    %v2158 = vrot.slane %v2157, 4
    %v2160 = vshll.u32 %v2107, 16
    %v2162 = vrot.slane %v2160, 5
    %v2163 = vsel %vm1042, %v2158, %v2162
    %v2165 = vshrl.u32 %v2108, 16
    %v2167 = vrot.slane %v2165, 4
    %v2168 = vshll.u32 %v2108, 16
    %v2170 = vrot.slane %v2168, 5
    %v2171 = vor.u32 %v2167, %v2170
    %v2172 = vrot.slane %v2171, 4
    %v2174 = vshll.u32 %v2109, 16
    %v2176 = vrot.slane %v2174, 5
    %v2177 = vsel %vm1042, %v2172, %v2176
    %v2179 = vshrl.u32 %v2110, 16
    %v2181 = vrot.slane %v2179, 4
    %v2182 = vshll.u32 %v2110, 16
    %v2184 = vrot.slane %v2182, 5
    %v2185 = vor.u32 %v2181, %v2184
    %v2186 = vrot.slane %v2185, 4
    %v2188 = vshll.u32 %v2111, 16
    %v2190 = vrot.slane %v2188, 5
    %v2191 = vsel %vm1042, %v2186, %v2190
    %v2193 = vshrl.u32 %v2112, 16
    %v2195 = vrot.slane %v2193, 4
    %v2196 = vshll.u32 %v2112, 16
    %v2198 = vrot.slane %v2196, 5
    %v2199 = vor.u32 %v2195, %v2198
    %v2200 = vrot.slane %v2199, 4
    %v2202 = vshll.u32 %v2113, 16
    %v2204 = vrot.slane %v2202, 5
    %v2205 = vsel %vm1042, %v2200, %v2204
    %v2207 = vshrl.u32 %v2114, 16
    %v2209 = vrot.slane %v2207, 4
    %v2210 = vshll.u32 %v2114, 16
    %v2212 = vrot.slane %v2210, 5
    %v2213 = vor.u32 %v2209, %v2212
    %v2214 = vrot.slane %v2213, 4
    %v2216 = vshll.u32 %v2115, 16
    %v2218 = vrot.slane %v2216, 5
    %v2219 = vsel %vm1042, %v2214, %v2218
    %v2221 = vshrl.u32 %v2116, 16
    %v2223 = vrot.slane %v2221, 4
    %v2224 = vshll.u32 %v2116, 16
    %v2226 = vrot.slane %v2224, 5
    %v2227 = vor.u32 %v2223, %v2226
    %v2228 = vrot.slane %v2227, 4
    %v2230 = vshll.u32 %v2117, 16
    %v2232 = vrot.slane %v2230, 5
    %v2233 = vsel %vm1042, %v2228, %v2232
    %v2235 = vshrl.u32 %v2118, 16
    %v2237 = vrot.slane %v2235, 4
    %v2238 = vshll.u32 %v2118, 16
    %v2240 = vrot.slane %v2238, 5
    %v2241 = vor.u32 %v2237, %v2240
    %v2242 = vrot.slane %v2241, 4
    %v2244 = vshll.u32 %v2119, 16
    %v2246 = vrot.slane %v2244, 5
    %v2247 = vsel %vm1042, %v2242, %v2246
    %v2249 = vshrl.u32 %v2120, 16
    %v2251 = vrot.slane %v2249, 4
    %v2252 = vshll.u32 %v2120, 16
    %v2254 = vrot.slane %v2252, 5
    %v2255 = vor.u32 %v2251, %v2254
    %v2256 = vrot.slane %v2255, 4
    %v2258 = vshll.u32 %v2121, 16
    %v2260 = vrot.slane %v2258, 5
    %v2261 = vsel %vm1042, %v2256, %v2260
    %v2263 = vshrl.u32 %v2122, 16
    %v2265 = vrot.slane %v2263, 4
    %v2266 = vshll.u32 %v2122, 16
    %v2268 = vrot.slane %v2266, 5
    %v2269 = vor.u32 %v2265, %v2268
    %v2270 = vrot.slane %v2269, 4
    %v2272 = vshll.u32 %v2123, 16
    %v2274 = vrot.slane %v2272, 5
    %v2275 = vsel %vm1042, %v2270, %v2274
    %v2277 = vshrl.u32 %v2124, 16
    %v2279 = vrot.slane %v2277, 4
    %v2280 = vshll.u32 %v2124, 16
    %v2282 = vrot.slane %v2280, 5
    %v2283 = vor.u32 %v2279, %v2282
    %v2284 = vrot.slane %v2283, 4
    %v2286 = vshll.u32 %v2125, 16
    %v2288 = vrot.slane %v2286, 5
    %v2289 = vsel %vm1042, %v2284, %v2288
    %v2291 = vshrl.u32 %v2126, 16
    %v2293 = vrot.slane %v2291, 4
    %v2294 = vshll.u32 %v2126, 16
    %v2296 = vrot.slane %v2294, 5
    %v2297 = vor.u32 %v2293, %v2296
    %v2298 = vrot.slane %v2297, 4
    %v2300 = vshll.u32 %v2127, 16
    %v2302 = vrot.slane %v2300, 5
    %v2303 = vsel %vm1042, %v2298, %v2302
    %v2305 = vshrl.u32 %v2128, 16
    %v2307 = vrot.slane %v2305, 4
    %v2308 = vshll.u32 %v2128, 16
    %v2310 = vrot.slane %v2308, 5
    %v2311 = vor.u32 %v2307, %v2310
    %v2312 = vrot.slane %v2311, 4
    %v2314 = vshll.u32 %v2129, 16
    %v2316 = vrot.slane %v2314, 5
    %v2317 = vsel %vm1042, %v2312, %v2316
    %v2319 = vshrl.u32 %v2130, 16
    %v2321 = vrot.slane %v2319, 4
    %v2322 = vshll.u32 %v2130, 16
    %v2324 = vrot.slane %v2322, 5
    %v2325 = vor.u32 %v2321, %v2324
    %v2326 = vrot.slane %v2325, 4
    %v2328 = vshll.u32 %v2131, 16
    %v2330 = vrot.slane %v2328, 5
    %v2331 = vsel %vm1042, %v2326, %v2330
    %v2333 = vshrl.u32 %v2132, 16
    %v2335 = vrot.slane %v2333, 4
    %v2336 = vshll.u32 %v2132, 16
    %v2338 = vrot.slane %v2336, 5
    %v2339 = vor.u32 %v2335, %v2338
    %v2340 = vrot.slane %v2339, 4
    %v2342 = vshll.u32 %v2133, 16
    %v2344 = vrot.slane %v2342, 5
    %v2345 = vsel %vm1042, %v2340, %v2344
    %v2347 = vshrl.u32 %v2134, 16
    %v2349 = vrot.slane %v2347, 4
    %v2350 = vshll.u32 %v2134, 16
    %v2352 = vrot.slane %v2350, 5
    %v2353 = vor.u32 %v2349, %v2352
    %v2354 = vrot.slane %v2353, 4
    %v2356 = vshll.u32 %v2135, 16
    %v2358 = vrot.slane %v2356, 5
    %v2359 = vsel %vm1042, %v2354, %v2358
    %2360 = vrot.lane.b32.xlu0 %v2149, 64
    %v2361 = vpop.permute.xlu0 %2360
    %2362 = vrot.lane.b32.xlu0 %v2163, 64
    %v2363 = vpop.permute.xlu0 %2362
    %2364 = vrot.lane.b32.xlu0 %v2177, 64
    %v2365 = vpop.permute.xlu0 %2364
    %2366 = vrot.lane.b32.xlu0 %v2191, 64
    %v2367 = vpop.permute.xlu0 %2366
    %2368 = vrot.lane.b32.xlu0 %v2205, 64
    %v2369 = vpop.permute.xlu0 %2368
    %2370 = vrot.lane.b32.xlu0 %v2219, 64
    %v2371 = vpop.permute.xlu0 %2370
    %2372 = vrot.lane.b32.xlu0 %v2233, 64
    %v2373 = vpop.permute.xlu0 %2372
    %2374 = vrot.lane.b32.xlu0 %v2247, 64
    %v2375 = vpop.permute.xlu0 %2374
    %2376 = vrot.lane.b32.xlu0 %v2261, 64
    %v2377 = vpop.permute.xlu0 %2376
    %2378 = vrot.lane.b32.xlu0 %v2275, 64
    %v2379 = vpop.permute.xlu0 %2378
    %2380 = vrot.lane.b32.xlu0 %v2289, 64
    %v2381 = vpop.permute.xlu0 %2380
    %2382 = vrot.lane.b32.xlu0 %v2303, 64
    %v2383 = vpop.permute.xlu0 %2382
    %2384 = vrot.lane.b32.xlu0 %v2317, 64
    %v2385 = vpop.permute.xlu0 %2384
    %2386 = vrot.lane.b32.xlu0 %v2331, 64
    %v2387 = vpop.permute.xlu0 %2386
    %2388 = vrot.lane.b32.xlu0 %v2345, 64
    %v2389 = vpop.permute.xlu0 %2388
    %2390 = vrot.lane.b32.xlu0 %v2359, 64
    %v2391 = vpop.permute.xlu0 %2390
    %2408 = vst.msk [vmem:[#allocation3 + $0xc] sm:$0xf] %vm1315, %v2361
    %2409 = vst.msk [vmem:[#allocation3 + $0x20] sm:$0xf] %vm1315, %v2363
    %2410 = vst.msk [vmem:[#allocation3 + $0x34] sm:$0xf] %vm1315, %v2365
    %2411 = vst.msk [vmem:[#allocation3 + $0x48] sm:$0xf] %vm1315, %v2367
    %2412 = vst.msk [vmem:[#allocation3 + $0x5c] sm:$0xf] %vm1315, %v2369
    %2413 = vst.msk [vmem:[#allocation3 + $0x70] sm:$0xf] %vm1315, %v2371
    %2414 = vst.msk [vmem:[#allocation3 + $0x84] sm:$0xf] %vm1315, %v2373
    %2415 = vst.msk [vmem:[#allocation3 + $0x98] sm:$0xf] %vm1315, %v2375
    %2416 = vst.msk [vmem:[#allocation3 + $0xac] sm:$0xf] %vm1315, %v2377
    %2417 = vst.msk [vmem:[#allocation3 + $0xc0] sm:$0xf] %vm1315, %v2379
    %2418 = vst.msk [vmem:[#allocation3 + $0xd4] sm:$0xf] %vm1315, %v2381
    %2419 = vst.msk [vmem:[#allocation3 + $0xe8] sm:$0xf] %vm1315, %v2383
    %2420 = vst.msk [vmem:[#allocation3 + $0xfc] sm:$0xf] %vm1315, %v2385
    %2421 = vst.msk [vmem:[#allocation3 + $0x110] sm:$0xf] %vm1315, %v2387
    %2422 = vst.msk [vmem:[#allocation3 + $0x124] sm:$0xf] %vm1315, %v2389
    %2423 = vst.msk [vmem:[#allocation3 + $0x138] sm:$0xf] %vm1315, %v2391
    %v2424 = vld [vmem:[%s2071] sm:$0xe]
    %v2425 = vld [vmem:[%s2071 + $0x4] sm:$0x1]
    %v2426 = vld [vmem:[%s2071 + $0x8] sm:$0xe]
    %v2427 = vld [vmem:[%s2071 + $0xc] sm:$0x1]
    %v2428 = vld [vmem:[%s2071 + $0x10] sm:$0xe]
    %v2429 = vld [vmem:[%s2071 + $0x14] sm:$0x1]
    %v2430 = vld [vmem:[%s2071 + $0x18] sm:$0xe]
    %v2431 = vld [vmem:[%s2071 + $0x1c] sm:$0x1]
    %v2432 = vld [vmem:[%s2071 + $0x20] sm:$0xe]
    %v2433 = vld [vmem:[%s2071 + $0x24] sm:$0x1]
    %v2434 = vld [vmem:[%s2071 + $0x28] sm:$0xe]
    %v2435 = vld [vmem:[%s2071 + $0x2c] sm:$0x1]
    %v2436 = vld [vmem:[%s2071 + $0x30] sm:$0xe]
    %v2437 = vld [vmem:[%s2071 + $0x34] sm:$0x1]
    %v2438 = vld [vmem:[%s2071 + $0x38] sm:$0xe]
    %v2439 = vld [vmem:[%s2071 + $0x3c] sm:$0x1]
    %v2440 = vld [vmem:[%s2071 + $0x50] sm:$0xe]
    %v2441 = vld [vmem:[%s2071 + $0x54] sm:$0x1]
    %v2442 = vld [vmem:[%s2071 + $0x58] sm:$0xe]
    %v2443 = vld [vmem:[%s2071 + $0x5c] sm:$0x1]
    %v2444 = vld [vmem:[%s2071 + $0x60] sm:$0xe]
    %v2445 = vld [vmem:[%s2071 + $0x64] sm:$0x1]
    %v2446 = vld [vmem:[%s2071 + $0x68] sm:$0xe]
    %v2447 = vld [vmem:[%s2071 + $0x6c] sm:$0x1]
    %v2448 = vld [vmem:[%s2071 + $0x70] sm:$0xe]
    %v2449 = vld [vmem:[%s2071 + $0x74] sm:$0x1]
    %v2450 = vld [vmem:[%s2071 + $0x78] sm:$0xe]
    %v2451 = vld [vmem:[%s2071 + $0x7c] sm:$0x1]
    %v2452 = vld [vmem:[%s2071 + $0x80] sm:$0xe]
    %v2453 = vld [vmem:[%s2071 + $0x84] sm:$0x1]
    %v2454 = vld [vmem:[%s2071 + $0x88] sm:$0xe]
    %v2455 = vld [vmem:[%s2071 + $0x8c] sm:$0x1]
    %v2488 = vrot.slane %v2424, 5
    %v2489 = vrot.slane %v2488, 4
    %v2490 = vrot.slane %v2425, 5
    %v2491 = vsel %vm1398, %v2489, %v2490
    %v2492 = vrot.slane %v2426, 5
    %v2493 = vrot.slane %v2492, 4
    %v2494 = vrot.slane %v2427, 5
    %v2495 = vsel %vm1398, %v2493, %v2494
    %v2496 = vrot.slane %v2428, 5
    %v2497 = vrot.slane %v2496, 4
    %v2498 = vrot.slane %v2429, 5
    %v2499 = vsel %vm1398, %v2497, %v2498
    %v2500 = vrot.slane %v2430, 5
    %v2501 = vrot.slane %v2500, 4
    %v2502 = vrot.slane %v2431, 5
    %v2503 = vsel %vm1398, %v2501, %v2502
    %v2504 = vrot.slane %v2432, 5
    %v2505 = vrot.slane %v2504, 4
    %v2506 = vrot.slane %v2433, 5
    %v2507 = vsel %vm1398, %v2505, %v2506
    %v2508 = vrot.slane %v2434, 5
    %v2509 = vrot.slane %v2508, 4
    %v2510 = vrot.slane %v2435, 5
    %v2511 = vsel %vm1398, %v2509, %v2510
    %v2512 = vrot.slane %v2436, 5
    %v2513 = vrot.slane %v2512, 4
    %v2514 = vrot.slane %v2437, 5
    %v2515 = vsel %vm1398, %v2513, %v2514
    %v2516 = vrot.slane %v2438, 5
    %v2517 = vrot.slane %v2516, 4
    %v2518 = vrot.slane %v2439, 5
    %v2519 = vsel %vm1398, %v2517, %v2518
    %v2520 = vrot.slane %v2440, 5
    %v2521 = vrot.slane %v2520, 4
    %v2522 = vrot.slane %v2441, 5
    %v2523 = vsel %vm1398, %v2521, %v2522
    %v2524 = vrot.slane %v2442, 5
    %v2525 = vrot.slane %v2524, 4
    %v2526 = vrot.slane %v2443, 5
    %v2527 = vsel %vm1398, %v2525, %v2526
    %v2528 = vrot.slane %v2444, 5
    %v2529 = vrot.slane %v2528, 4
    %v2530 = vrot.slane %v2445, 5
    %v2531 = vsel %vm1398, %v2529, %v2530
    %v2532 = vrot.slane %v2446, 5
    %v2533 = vrot.slane %v2532, 4
    %v2534 = vrot.slane %v2447, 5
    %v2535 = vsel %vm1398, %v2533, %v2534
    %v2536 = vrot.slane %v2448, 5
    %v2537 = vrot.slane %v2536, 4
    %v2538 = vrot.slane %v2449, 5
    %v2539 = vsel %vm1398, %v2537, %v2538
    %v2540 = vrot.slane %v2450, 5
    %v2541 = vrot.slane %v2540, 4
    %v2542 = vrot.slane %v2451, 5
    %v2543 = vsel %vm1398, %v2541, %v2542
    %v2544 = vrot.slane %v2452, 5
    %v2545 = vrot.slane %v2544, 4
    %v2546 = vrot.slane %v2453, 5
    %v2547 = vsel %vm1398, %v2545, %v2546
    %v2548 = vrot.slane %v2454, 5
    %v2549 = vrot.slane %v2548, 4
    %v2550 = vrot.slane %v2455, 5
    %v2551 = vsel %vm1398, %v2549, %v2550
    %2568 = vst.msk [vmem:[#allocation3 + $0x10] sm:$0xf] %vm589, %v2491
    %2569 = vst.msk [vmem:[#allocation3 + $0x24] sm:$0xf] %vm589, %v2495
    %2570 = vst.msk [vmem:[#allocation3 + $0x38] sm:$0xf] %vm589, %v2499
    %2571 = vst.msk [vmem:[#allocation3 + $0x4c] sm:$0xf] %vm589, %v2503
    %2572 = vst.msk [vmem:[#allocation3 + $0x60] sm:$0xf] %vm589, %v2507
    %2573 = vst.msk [vmem:[#allocation3 + $0x74] sm:$0xf] %vm589, %v2511
    %2574 = vst.msk [vmem:[#allocation3 + $0x88] sm:$0xf] %vm589, %v2515
    %2575 = vst.msk [vmem:[#allocation3 + $0x9c] sm:$0xf] %vm589, %v2519
    %2576 = vst.msk [vmem:[#allocation3 + $0xb0] sm:$0xf] %vm589, %v2523
    %2577 = vst.msk [vmem:[#allocation3 + $0xc4] sm:$0xf] %vm589, %v2527
    %2578 = vst.msk [vmem:[#allocation3 + $0xd8] sm:$0xf] %vm589, %v2531
    %2579 = vst.msk [vmem:[#allocation3 + $0xec] sm:$0xf] %vm589, %v2535
    %2580 = vst.msk [vmem:[#allocation3 + $0x100] sm:$0xf] %vm589, %v2539
    %2581 = vst.msk [vmem:[#allocation3 + $0x114] sm:$0xf] %vm589, %v2543
    %2582 = vst.msk [vmem:[#allocation3 + $0x128] sm:$0xf] %vm589, %v2547
    %2583 = vst.msk [vmem:[#allocation3 + $0x13c] sm:$0xf] %vm589, %v2551
    %v2584 = vld [vmem:[#allocation3] sm:$0xff]
    %v2585 = vld [vmem:[#allocation3 + $0x8] sm:$0xff]
    %v2586 = vld [vmem:[#allocation3 + $0x10] sm:$0xf]
    %v2587 = vld [vmem:[#allocation3 + $0x14] sm:$0xff]
    %v2588 = vld [vmem:[#allocation3 + $0x1c] sm:$0xff]
    %v2589 = vld [vmem:[#allocation3 + $0x24] sm:$0xf]
    %v2590 = vld [vmem:[#allocation3 + $0x28] sm:$0xff]
    %v2591 = vld [vmem:[#allocation3 + $0x30] sm:$0xff]
    %v2592 = vld [vmem:[#allocation3 + $0x38] sm:$0xf]
    %v2593 = vld [vmem:[#allocation3 + $0x3c] sm:$0xff]
    %v2594 = vld [vmem:[#allocation3 + $0x44] sm:$0xff]
    %v2595 = vld [vmem:[#allocation3 + $0x4c] sm:$0xf]
    %v2596 = vld [vmem:[#allocation3 + $0x50] sm:$0xff]
    %v2597 = vld [vmem:[#allocation3 + $0x58] sm:$0xff]
    %v2598 = vld [vmem:[#allocation3 + $0x60] sm:$0xf]
    %v2599 = vld [vmem:[#allocation3 + $0x64] sm:$0xff]
    %v2600 = vld [vmem:[#allocation3 + $0x6c] sm:$0xff]
    %v2601 = vld [vmem:[#allocation3 + $0x74] sm:$0xf]
    %v2602 = vld [vmem:[#allocation3 + $0x78] sm:$0xff]
    %v2603 = vld [vmem:[#allocation3 + $0x80] sm:$0xff]
    %v2604 = vld [vmem:[#allocation3 + $0x88] sm:$0xf]
    %v2605 = vld [vmem:[#allocation3 + $0x8c] sm:$0xff]
    %v2606 = vld [vmem:[#allocation3 + $0x94] sm:$0xff]
    %v2607 = vld [vmem:[#allocation3 + $0x9c] sm:$0xf]
    %v2608 = vld [vmem:[#allocation3 + $0xa0] sm:$0xff]
    %v2609 = vld [vmem:[#allocation3 + $0xa8] sm:$0xff]
    %v2610 = vld [vmem:[#allocation3 + $0xb0] sm:$0xf]
    %v2611 = vld [vmem:[#allocation3 + $0xb4] sm:$0xff]
    %v2612 = vld [vmem:[#allocation3 + $0xbc] sm:$0xff]
    %v2613 = vld [vmem:[#allocation3 + $0xc4] sm:$0xf]
    %v2614 = vld [vmem:[#allocation3 + $0xc8] sm:$0xff]
    %v2615 = vld [vmem:[#allocation3 + $0xd0] sm:$0xff]
    %v2616 = vld [vmem:[#allocation3 + $0xd8] sm:$0xf]
    %v2617 = vld [vmem:[#allocation3 + $0xdc] sm:$0xff]
    %v2618 = vld [vmem:[#allocation3 + $0xe4] sm:$0xff]
    %v2619 = vld [vmem:[#allocation3 + $0xec] sm:$0xf]
    %v2620 = vld [vmem:[#allocation3 + $0xf0] sm:$0xff]
    %v2621 = vld [vmem:[#allocation3 + $0xf8] sm:$0xff]
    %v2622 = vld [vmem:[#allocation3 + $0x100] sm:$0xf]
    %v2623 = vld [vmem:[#allocation3 + $0x104] sm:$0xff]
    %v2624 = vld [vmem:[#allocation3 + $0x10c] sm:$0xff]
    %v2625 = vld [vmem:[#allocation3 + $0x114] sm:$0xf]
    %v2626 = vld [vmem:[#allocation3 + $0x118] sm:$0xff]
    %v2627 = vld [vmem:[#allocation3 + $0x120] sm:$0xff]
    %v2628 = vld [vmem:[#allocation3 + $0x128] sm:$0xf]
    %v2629 = vld [vmem:[#allocation3 + $0x12c] sm:$0xff]
    %v2630 = vld [vmem:[#allocation3 + $0x134] sm:$0xff]
    %v2631 = vld [vmem:[#allocation3 + $0x13c] sm:$0xf]
    %v2632 = vld [vmem:[#allocation13] sm:$0xf]
    %v2633 = vld [vmem:[#allocation13 + $0x4] sm:$0xf]
    %v2634 = vld [vmem:[#allocation13 + $0x8] sm:$0xf]
    %v2635 = vld [vmem:[#allocation13 + $0xc] sm:$0xf]
    %v2636 = vld [vmem:[#allocation13 + $0x10] sm:$0xf]
    %v2637 = vld [vmem:[#allocation13 + $0x14] sm:$0xf]
    %v2638 = vld [vmem:[#allocation13 + $0x18] sm:$0xf]
    %v2639 = vld [vmem:[#allocation13 + $0x1c] sm:$0xf]
    %v2640 = vld [vmem:[#allocation13 + $0x20] sm:$0xf]
    %v2641 = vld [vmem:[#allocation13 + $0x24] sm:$0xf]
    %v2642 = vld [vmem:[#allocation13 + $0x28] sm:$0xf]
    %v2643 = vld [vmem:[#allocation13 + $0x2c] sm:$0xf]
    %v2644 = vld [vmem:[#allocation13 + $0x30] sm:$0xf]
    %v2645 = vld [vmem:[#allocation13 + $0x34] sm:$0xf]
    %v2646 = vld [vmem:[#allocation13 + $0x38] sm:$0xf]
    %v2647 = vld [vmem:[#allocation13 + $0x3c] sm:$0xf]
    %v2648 = vld [vmem:[#allocation13 + $0x40] sm:$0xf]
    %v2649 = vld [vmem:[#allocation13 + $0x44] sm:$0xf]
    %v2650 = vld [vmem:[#allocation13 + $0x48] sm:$0xf]
    %v2651 = vld [vmem:[#allocation13 + $0x4c] sm:$0xf]
    %v2652 = vld [vmem:[#allocation13 + $0x50] sm:$0xf]
    %v2653 = vld [vmem:[#allocation13 + $0x54] sm:$0xf]
    %v2654 = vld [vmem:[#allocation13 + $0x58] sm:$0xf]
    %v2655 = vld [vmem:[#allocation13 + $0x5c] sm:$0xf]
    %v2656 = vld [vmem:[#allocation13 + $0x60] sm:$0xf]
    %v2657 = vld [vmem:[#allocation13 + $0x64] sm:$0xf]
    %v2658 = vld [vmem:[#allocation13 + $0x68] sm:$0xf]
    %v2659 = vld [vmem:[#allocation13 + $0x6c] sm:$0xf]
    %v2660 = vld [vmem:[#allocation13 + $0x70] sm:$0xf]
    %v2661 = vld [vmem:[#allocation13 + $0x74] sm:$0xf]
    %v2662 = vld [vmem:[#allocation13 + $0x78] sm:$0xf]
    %v2663 = vld [vmem:[#allocation13 + $0x7c] sm:$0xf]
    %v2664 = vld [vmem:[#allocation13 + $0x80] sm:$0xf]
    %v2665 = vld [vmem:[#allocation13 + $0x84] sm:$0xf]
    %v2666 = vld [vmem:[#allocation13 + $0x88] sm:$0xf]
    %v2667 = vld [vmem:[#allocation13 + $0x8c] sm:$0xf]
    %v2668 = vld [vmem:[#allocation13 + $0x90] sm:$0xf]
    %v2669 = vld [vmem:[#allocation13 + $0x94] sm:$0xf]
    %v2670 = vld [vmem:[#allocation13 + $0x98] sm:$0xf]
    %v2671 = vld [vmem:[#allocation13 + $0x9c] sm:$0xf]
    %v2672 = vld [vmem:[#allocation13 + $0xa0] sm:$0xf]
    %v2673 = vld [vmem:[#allocation13 + $0xa4] sm:$0xf]
    %v2674 = vld [vmem:[#allocation13 + $0xa8] sm:$0xf]
    %v2675 = vld [vmem:[#allocation13 + $0xac] sm:$0xf]
    %v2676 = vld [vmem:[#allocation13 + $0xb0] sm:$0xf]
    %v2677 = vld [vmem:[#allocation13 + $0xb4] sm:$0xf]
    %v2678 = vld [vmem:[#allocation13 + $0xb8] sm:$0xf]
    %v2679 = vld [vmem:[#allocation13 + $0xbc] sm:$0xf]
    %v2680 = vld [vmem:[#allocation13 + $0xc0] sm:$0xf]
    %v2681 = vld [vmem:[#allocation13 + $0xc4] sm:$0xf]
    %v2682 = vld [vmem:[#allocation13 + $0xc8] sm:$0xf]
    %v2683 = vld [vmem:[#allocation13 + $0xcc] sm:$0xf]
    %v2684 = vld [vmem:[#allocation13 + $0xd0] sm:$0xf]
    %v2685 = vld [vmem:[#allocation13 + $0xd4] sm:$0xf]
    %v2686 = vld [vmem:[#allocation13 + $0xd8] sm:$0xf]
    %v2687 = vld [vmem:[#allocation13 + $0xdc] sm:$0xf]
    %v2688 = vld [vmem:[#allocation13 + $0xe0] sm:$0xf]
    %v2689 = vld [vmem:[#allocation13 + $0xe4] sm:$0xf]
    %v2690 = vld [vmem:[#allocation13 + $0xe8] sm:$0xf]
    %v2691 = vld [vmem:[#allocation13 + $0xec] sm:$0xf]
    %v2692 = vld [vmem:[#allocation13 + $0xf0] sm:$0xf]
    %v2693 = vld [vmem:[#allocation13 + $0xf4] sm:$0xf]
    %v2694 = vld [vmem:[#allocation13 + $0xf8] sm:$0xf]
    %v2695 = vld [vmem:[#allocation13 + $0xfc] sm:$0xf]
    %v2696 = vld [vmem:[#allocation13 + $0x100] sm:$0xf]
    %v2697 = vld [vmem:[#allocation13 + $0x104] sm:$0xf]
    %v2698 = vld [vmem:[#allocation13 + $0x108] sm:$0xf]
    %v2699 = vld [vmem:[#allocation13 + $0x10c] sm:$0xf]
    %v2700 = vld [vmem:[#allocation13 + $0x110] sm:$0xf]
    %v2701 = vld [vmem:[#allocation13 + $0x114] sm:$0xf]
    %v2702 = vld [vmem:[#allocation13 + $0x118] sm:$0xf]
    %v2703 = vld [vmem:[#allocation13 + $0x11c] sm:$0xf]
    %v2704 = vld [vmem:[#allocation14] sm:$0x1]
    %v2706 = vperm.slane %v2704, 0
    %v2756 = vunpack.c.l.b16 %v2584
    %v2757 = vunpack.c.h.b16 %v2584
    %v2758 = vunpack.c.l.b16 %v2585
    %v2759 = vunpack.c.h.b16 %v2585
    %v2760 = vunpack.c.l.b16 %v2586
    %v2761 = vunpack.c.l.b16 %v2587
    %v2762 = vunpack.c.h.b16 %v2587
    %v2763 = vunpack.c.l.b16 %v2588
    %v2764 = vunpack.c.h.b16 %v2588
    %v2765 = vunpack.c.l.b16 %v2589
    %v2766 = vunpack.c.l.b16 %v2590
    %v2767 = vunpack.c.h.b16 %v2590
    %v2768 = vunpack.c.l.b16 %v2591
    %v2769 = vunpack.c.h.b16 %v2591
    %v2770 = vunpack.c.l.b16 %v2592
    %v2771 = vunpack.c.l.b16 %v2593
    %v2772 = vunpack.c.h.b16 %v2593
    %v2773 = vunpack.c.l.b16 %v2594
    %v2774 = vunpack.c.h.b16 %v2594
    %v2775 = vunpack.c.l.b16 %v2595
    %v2776 = vunpack.c.l.b16 %v2596
    %v2777 = vunpack.c.h.b16 %v2596
    %v2778 = vunpack.c.l.b16 %v2597
    %v2779 = vunpack.c.h.b16 %v2597
    %v2780 = vunpack.c.l.b16 %v2598
    %v2781 = vunpack.c.l.b16 %v2599
    %v2782 = vunpack.c.h.b16 %v2599
    %v2783 = vunpack.c.l.b16 %v2600
    %v2784 = vunpack.c.h.b16 %v2600
    %v2785 = vunpack.c.l.b16 %v2601
    %v2786 = vunpack.c.l.b16 %v2602
    %v2787 = vunpack.c.h.b16 %v2602
    %v2788 = vunpack.c.l.b16 %v2603
    %v2789 = vunpack.c.h.b16 %v2603
    %v2790 = vunpack.c.l.b16 %v2604
    %v2791 = vunpack.c.l.b16 %v2605
    %v2792 = vunpack.c.h.b16 %v2605
    %v2793 = vunpack.c.l.b16 %v2606
    %v2794 = vunpack.c.h.b16 %v2606
    %v2795 = vunpack.c.l.b16 %v2607
    %v2796 = vunpack.c.l.b16 %v2608
    %v2797 = vunpack.c.h.b16 %v2608
    %v2798 = vunpack.c.l.b16 %v2609
    %v2799 = vunpack.c.h.b16 %v2609
    %v2800 = vunpack.c.l.b16 %v2610
    %v2801 = vunpack.c.l.b16 %v2611
    %v2802 = vunpack.c.h.b16 %v2611
    %v2803 = vunpack.c.l.b16 %v2612
    %v2804 = vunpack.c.h.b16 %v2612
    %v2805 = vunpack.c.l.b16 %v2613
    %v2806 = vunpack.c.l.b16 %v2614
    %v2807 = vunpack.c.h.b16 %v2614
    %v2808 = vunpack.c.l.b16 %v2615
    %v2809 = vunpack.c.h.b16 %v2615
    %v2810 = vunpack.c.l.b16 %v2616
    %v2811 = vunpack.c.l.b16 %v2617
    %v2812 = vunpack.c.h.b16 %v2617
    %v2813 = vunpack.c.l.b16 %v2618
    %v2814 = vunpack.c.h.b16 %v2618
    %v2815 = vunpack.c.l.b16 %v2619
    %v2816 = vunpack.c.l.b16 %v2620
    %v2817 = vunpack.c.h.b16 %v2620
    %v2818 = vunpack.c.l.b16 %v2621
    %v2819 = vunpack.c.h.b16 %v2621
    %v2820 = vunpack.c.l.b16 %v2622
    %v2821 = vunpack.c.l.b16 %v2623
    %v2822 = vunpack.c.h.b16 %v2623
    %v2823 = vunpack.c.l.b16 %v2624
    %v2824 = vunpack.c.h.b16 %v2624
    %v2825 = vunpack.c.l.b16 %v2625
    %v2826 = vunpack.c.l.b16 %v2626
    %v2827 = vunpack.c.h.b16 %v2626
    %v2828 = vunpack.c.l.b16 %v2627
    %v2829 = vunpack.c.h.b16 %v2627
    %v2830 = vunpack.c.l.b16 %v2628
    %v2831 = vunpack.c.l.b16 %v2629
    %v2832 = vunpack.c.h.b16 %v2629
    %v2833 = vunpack.c.l.b16 %v2630
    %v2834 = vunpack.c.h.b16 %v2630
    %v2835 = vunpack.c.l.b16 %v2631
    %v2836 = vpack.c.b16 %v2761, %v2756
    %v2837 = vpack.c.b16 %v2762, %v2757
    %v2838 = vpack.c.b16 %v2763, %v2758
    %v2839 = vpack.c.b16 %v2764, %v2759
    %v2840 = vpack.c.b16 %v2765, %v2760
    %v2841 = vpack.c.b16 %v2771, %v2766
    %v2842 = vpack.c.b16 %v2772, %v2767
    %v2843 = vpack.c.b16 %v2773, %v2768
    %v2844 = vpack.c.b16 %v2774, %v2769
    %v2845 = vpack.c.b16 %v2775, %v2770
    %v2846 = vpack.c.b16 %v2781, %v2776
    %v2847 = vpack.c.b16 %v2782, %v2777
    %v2848 = vpack.c.b16 %v2783, %v2778
    %v2849 = vpack.c.b16 %v2784, %v2779
    %v2850 = vpack.c.b16 %v2785, %v2780
    %v2851 = vpack.c.b16 %v2791, %v2786
    %v2852 = vpack.c.b16 %v2792, %v2787
    %v2853 = vpack.c.b16 %v2793, %v2788
    %v2854 = vpack.c.b16 %v2794, %v2789
    %v2855 = vpack.c.b16 %v2795, %v2790
    %v2856 = vpack.c.b16 %v2801, %v2796
    %v2857 = vpack.c.b16 %v2802, %v2797
    %v2858 = vpack.c.b16 %v2803, %v2798
    %v2859 = vpack.c.b16 %v2804, %v2799
    %v2860 = vpack.c.b16 %v2805, %v2800
    %v2861 = vpack.c.b16 %v2811, %v2806
    %v2862 = vpack.c.b16 %v2812, %v2807
    %v2863 = vpack.c.b16 %v2813, %v2808
    %v2864 = vpack.c.b16 %v2814, %v2809
    %v2865 = vpack.c.b16 %v2815, %v2810
    %v2866 = vpack.c.b16 %v2821, %v2816
    %v2867 = vpack.c.b16 %v2822, %v2817
    %v2868 = vpack.c.b16 %v2823, %v2818
    %v2869 = vpack.c.b16 %v2824, %v2819
    %v2870 = vpack.c.b16 %v2825, %v2820
    %v2871 = vpack.c.b16 %v2831, %v2826
    %v2872 = vpack.c.b16 %v2832, %v2827
    %v2873 = vpack.c.b16 %v2833, %v2828
    %v2874 = vpack.c.b16 %v2834, %v2829
    %v2875 = vpack.c.b16 %v2835, %v2830
    %v2980 = vunpack.c.l.b16 %v2632
    %v2981 = vunpack.c.l.b16 %v2633
    %v2982 = vunpack.c.l.b16 %v2634
    %v2983 = vunpack.c.l.b16 %v2635
    %v2984 = vunpack.c.l.b16 %v2636
    %v2985 = vunpack.c.l.b16 %v2637
    %v2986 = vunpack.c.l.b16 %v2638
    %v2987 = vunpack.c.l.b16 %v2639
    %v2988 = vunpack.c.l.b16 %v2640
    %v2989 = vunpack.c.l.b16 %v2641
    %v2990 = vunpack.c.l.b16 %v2642
    %v2991 = vunpack.c.l.b16 %v2643
    %v2992 = vunpack.c.l.b16 %v2644
    %v2993 = vunpack.c.l.b16 %v2645
    %v2994 = vunpack.c.l.b16 %v2646
    %v2995 = vunpack.c.l.b16 %v2647
    %v2996 = vunpack.c.l.b16 %v2648
    %v2997 = vunpack.c.l.b16 %v2649
    %v2998 = vunpack.c.l.b16 %v2650
    %v2999 = vunpack.c.l.b16 %v2651
    %v3000 = vunpack.c.l.b16 %v2652
    %v3001 = vunpack.c.l.b16 %v2653
    %v3002 = vunpack.c.l.b16 %v2654
    %v3003 = vunpack.c.l.b16 %v2655
    %v3004 = vunpack.c.l.b16 %v2656
    %v3005 = vunpack.c.l.b16 %v2657
    %v3006 = vunpack.c.l.b16 %v2658
    %v3007 = vunpack.c.l.b16 %v2659
    %v3008 = vunpack.c.l.b16 %v2660
    %v3009 = vunpack.c.l.b16 %v2661
    %v3010 = vunpack.c.l.b16 %v2662
    %v3011 = vunpack.c.l.b16 %v2663
    %v3012 = vunpack.c.l.b16 %v2664
    %v3013 = vunpack.c.l.b16 %v2665
    %v3014 = vunpack.c.l.b16 %v2666
    %v3015 = vunpack.c.l.b16 %v2667
    %v3016 = vunpack.c.l.b16 %v2668
    %v3017 = vunpack.c.l.b16 %v2669
    %v3018 = vunpack.c.l.b16 %v2670
    %v3019 = vunpack.c.l.b16 %v2671
    %v3020 = vunpack.c.l.b16 %v2672
    %v3021 = vunpack.c.l.b16 %v2673
    %v3022 = vunpack.c.l.b16 %v2674
    %v3023 = vunpack.c.l.b16 %v2675
    %v3024 = vunpack.c.l.b16 %v2676
    %v3025 = vunpack.c.l.b16 %v2677
    %v3026 = vunpack.c.l.b16 %v2678
    %v3027 = vunpack.c.l.b16 %v2679
    %v3028 = vunpack.c.l.b16 %v2680
    %v3029 = vunpack.c.l.b16 %v2681
    %v3030 = vunpack.c.l.b16 %v2682
    %v3031 = vunpack.c.l.b16 %v2683
    %v3032 = vunpack.c.l.b16 %v2684
    %v3033 = vunpack.c.l.b16 %v2685
    %v3034 = vunpack.c.l.b16 %v2686
    %v3035 = vunpack.c.l.b16 %v2687
    %v3036 = vunpack.c.l.b16 %v2688
    %v3037 = vunpack.c.l.b16 %v2689
    %v3038 = vunpack.c.l.b16 %v2690
    %v3039 = vunpack.c.l.b16 %v2691
    %v3040 = vunpack.c.l.b16 %v2692
    %v3041 = vunpack.c.l.b16 %v2693
    %v3042 = vunpack.c.l.b16 %v2694
    %v3043 = vunpack.c.l.b16 %v2695
    %v3044 = vunpack.c.l.b16 %v2696
    %v3045 = vunpack.c.l.b16 %v2697
    %v3046 = vunpack.c.l.b16 %v2698
    %v3047 = vunpack.c.l.b16 %v2699
    %v3048 = vunpack.c.l.b16 %v2700
    %v3049 = vunpack.c.l.b16 %v2701
    %v3050 = vunpack.c.l.b16 %v2702
    %v3051 = vunpack.c.l.b16 %v2703
    %v3052 = vpack.c.b16 %v2981, %v2980
    %v3053 = vpack.c.b16 %v2983, %v2982
    %v3054 = vpack.c.b16 %v2985, %v2984
    %v3055 = vpack.c.b16 %v2987, %v2986
    %v3056 = vpack.c.b16 %v2989, %v2988
    %v3057 = vpack.c.b16 %v2991, %v2990
    %v3058 = vpack.c.b16 %v2993, %v2992
    %v3059 = vpack.c.b16 %v2995, %v2994
    %v3060 = vpack.c.b16 %v2997, %v2996
    %v3061 = vpack.c.b16 %v2999, %v2998
    %v3062 = vpack.c.b16 %v3001, %v3000
    %v3063 = vpack.c.b16 %v3003, %v3002
    %v3064 = vpack.c.b16 %v3005, %v3004
    %v3065 = vpack.c.b16 %v3007, %v3006
    %v3066 = vpack.c.b16 %v3009, %v3008
    %v3067 = vpack.c.b16 %v3011, %v3010
    %v3068 = vpack.c.b16 %v3013, %v3012
    %v3069 = vpack.c.b16 %v3015, %v3014
    %v3070 = vpack.c.b16 %v3017, %v3016
    %v3071 = vpack.c.b16 %v3019, %v3018
    %v3072 = vpack.c.b16 %v3021, %v3020
    %v3073 = vpack.c.b16 %v3023, %v3022
    %v3074 = vpack.c.b16 %v3025, %v3024
    %v3075 = vpack.c.b16 %v3027, %v3026
    %v3076 = vpack.c.b16 %v3029, %v3028
    %v3077 = vpack.c.b16 %v3031, %v3030
    %v3078 = vpack.c.b16 %v3033, %v3032
    %v3079 = vpack.c.b16 %v3035, %v3034
    %v3080 = vpack.c.b16 %v3037, %v3036
    %v3081 = vpack.c.b16 %v3039, %v3038
    %v3082 = vpack.c.b16 %v3041, %v3040
    %v3083 = vpack.c.b16 %v3043, %v3042
    %v3084 = vpack.c.b16 %v3045, %v3044
    %v3085 = vpack.c.b16 %v3047, %v3046
    %v3086 = vpack.c.b16 %v3049, %v3048
    %v3087 = vpack.c.b16 %v3051, %v3050
    %vm3124 = vcmask 523264
    %v3126 = vsel %vm3124, %v2840, 0
    %v3129 = vsel %vm3124, %v2845, 0
    %v3132 = vsel %vm3124, %v2850, 0
    %v3135 = vsel %vm3124, %v2855, 0
    %v3138 = vsel %vm3124, %v2860, 0
    %v3141 = vsel %vm3124, %v2865, 0
    %v3144 = vsel %vm3124, %v2870, 0
    %v3147 = vsel %vm3124, %v2875, 0
    %3149 = vmatpush.bf16.msra.mxu0 %v3059
    %3150 = vmatpush.bf16.msra.mxu0 %v3058
    %3151 = vmatpush.bf16.msra.mxu0 %v3057
    %3152 = vmatpush.bf16.msra.mxu0 %v3056
    %3153 = vmatpush.bf16.msra.mxu0 %v3055
    %3154 = vmatpush.bf16.msra.mxu0 %v3054
    %3155 = vmatpush.bf16.msra.mxu0 %v3053
    %3156 = vmatpush.bf16.msra.mxu0 %v3052
    %3157 = vmatmul.bf16.gmra.mxu0 %v2836
    %v3158 = vpop.f32.mrf.mxu0
    %v3159 = vadd.f32 %v2706, %v3158
    %v3160 = vpop.f32.mrf.mxu0
    %v3161 = vadd.f32 %v2706, %v3160
    %3162 = vmatmul.bf16.gmra.mxu0 %v2841
    %v3163 = vpop.f32.mrf.mxu0
    %v3164 = vadd.f32 %v2706, %v3163
    %v3165 = vpop.f32.mrf.mxu0
    %v3166 = vadd.f32 %v2706, %v3165
    %3167 = vmatmul.bf16.gmra.mxu0 %v2846
    %v3168 = vpop.f32.mrf.mxu0
    %v3169 = vadd.f32 %v2706, %v3168
    %v3170 = vpop.f32.mrf.mxu0
    %v3171 = vadd.f32 %v2706, %v3170
    %3172 = vmatmul.bf16.gmra.mxu0 %v2851
    %v3173 = vpop.f32.mrf.mxu0
    %v3174 = vadd.f32 %v2706, %v3173
    %v3175 = vpop.f32.mrf.mxu0
    %v3176 = vadd.f32 %v2706, %v3175
    %3177 = vmatmul.bf16.gmra.mxu0 %v2856
    %v3178 = vpop.f32.mrf.mxu0
    %v3179 = vadd.f32 %v2706, %v3178
    %v3180 = vpop.f32.mrf.mxu0
    %v3181 = vadd.f32 %v2706, %v3180
    %3182 = vmatmul.bf16.gmra.mxu0 %v2861
    %v3183 = vpop.f32.mrf.mxu0
    %v3184 = vadd.f32 %v2706, %v3183
    %v3185 = vpop.f32.mrf.mxu0
    %v3186 = vadd.f32 %v2706, %v3185
    %3187 = vmatmul.bf16.gmra.mxu0 %v2866
    %v3188 = vpop.f32.mrf.mxu0
    %v3189 = vadd.f32 %v2706, %v3188
    %v3190 = vpop.f32.mrf.mxu0
    %v3191 = vadd.f32 %v2706, %v3190
    %3192 = vmatmul.bf16.gmra.mxu0 %v2871
    %v3193 = vpop.f32.mrf.mxu0
    %v3194 = vadd.f32 %v2706, %v3193
    %v3195 = vpop.f32.mrf.mxu0
    %v3196 = vadd.f32 %v2706, %v3195
    %3197 = vdwg.mxu0
    %3198 = vmatpush.bf16.msra.mxu0 %v3067
    %3199 = vmatpush.bf16.msra.mxu0 %v3066
    %3200 = vmatpush.bf16.msra.mxu0 %v3065
    %3201 = vmatpush.bf16.msra.mxu0 %v3064
    %3202 = vmatpush.bf16.msra.mxu0 %v3063
    %3203 = vmatpush.bf16.msra.mxu0 %v3062
    %3204 = vmatpush.bf16.msra.mxu0 %v3061
    %3205 = vmatpush.bf16.msra.mxu0 %v3060
    %3206 = vmatmul.bf16.gmra.mxu0 %v2837
    %v3207 = vpop.f32.mrf.mxu0
    %v3208 = vadd.f32 %v3159, %v3207
    %v3209 = vpop.f32.mrf.mxu0
    %v3210 = vadd.f32 %v3161, %v3209
    %3211 = vmatmul.bf16.gmra.mxu0 %v2842
    %v3212 = vpop.f32.mrf.mxu0
    %v3213 = vadd.f32 %v3164, %v3212
    %v3214 = vpop.f32.mrf.mxu0
    %v3215 = vadd.f32 %v3166, %v3214
    %3216 = vmatmul.bf16.gmra.mxu0 %v2847
    %v3217 = vpop.f32.mrf.mxu0
    %v3218 = vadd.f32 %v3169, %v3217
    %v3219 = vpop.f32.mrf.mxu0
    %v3220 = vadd.f32 %v3171, %v3219
    %3221 = vmatmul.bf16.gmra.mxu0 %v2852
    %v3222 = vpop.f32.mrf.mxu0
    %v3223 = vadd.f32 %v3174, %v3222
    %v3224 = vpop.f32.mrf.mxu0
    %v3225 = vadd.f32 %v3176, %v3224
    %3226 = vmatmul.bf16.gmra.mxu0 %v2857
    %v3227 = vpop.f32.mrf.mxu0
    %v3228 = vadd.f32 %v3179, %v3227
    %v3229 = vpop.f32.mrf.mxu0
    %v3230 = vadd.f32 %v3181, %v3229
    %3231 = vmatmul.bf16.gmra.mxu0 %v2862
    %v3232 = vpop.f32.mrf.mxu0
    %v3233 = vadd.f32 %v3184, %v3232
    %v3234 = vpop.f32.mrf.mxu0
    %v3235 = vadd.f32 %v3186, %v3234
    %3236 = vmatmul.bf16.gmra.mxu0 %v2867
    %v3237 = vpop.f32.mrf.mxu0
    %v3238 = vadd.f32 %v3189, %v3237
    %v3239 = vpop.f32.mrf.mxu0
    %v3240 = vadd.f32 %v3191, %v3239
    %3241 = vmatmul.bf16.gmra.mxu0 %v2872
    %v3242 = vpop.f32.mrf.mxu0
    %v3243 = vadd.f32 %v3194, %v3242
    %v3244 = vpop.f32.mrf.mxu0
    %v3245 = vadd.f32 %v3196, %v3244
    %3246 = vdwg.mxu0
    %3247 = vmatpush.bf16.msra.mxu0 %v3075
    %3248 = vmatpush.bf16.msra.mxu0 %v3074
    %3249 = vmatpush.bf16.msra.mxu0 %v3073
    %3250 = vmatpush.bf16.msra.mxu0 %v3072
    %3251 = vmatpush.bf16.msra.mxu0 %v3071
    %3252 = vmatpush.bf16.msra.mxu0 %v3070
    %3253 = vmatpush.bf16.msra.mxu0 %v3069
    %3254 = vmatpush.bf16.msra.mxu0 %v3068
    %3255 = vmatmul.bf16.gmra.mxu0 %v2838
    %v3256 = vpop.f32.mrf.mxu0
    %v3257 = vadd.f32 %v3208, %v3256
    %v3258 = vpop.f32.mrf.mxu0
    %v3259 = vadd.f32 %v3210, %v3258
    %3260 = vmatmul.bf16.gmra.mxu0 %v2843
    %v3261 = vpop.f32.mrf.mxu0
    %v3262 = vadd.f32 %v3213, %v3261
    %v3263 = vpop.f32.mrf.mxu0
    %v3264 = vadd.f32 %v3215, %v3263
    %3265 = vmatmul.bf16.gmra.mxu0 %v2848
    %v3266 = vpop.f32.mrf.mxu0
    %v3267 = vadd.f32 %v3218, %v3266
    %v3268 = vpop.f32.mrf.mxu0
    %v3269 = vadd.f32 %v3220, %v3268
    %3270 = vmatmul.bf16.gmra.mxu0 %v2853
    %v3271 = vpop.f32.mrf.mxu0
    %v3272 = vadd.f32 %v3223, %v3271
    %v3273 = vpop.f32.mrf.mxu0
    %v3274 = vadd.f32 %v3225, %v3273
    %3275 = vmatmul.bf16.gmra.mxu0 %v2858
    %v3276 = vpop.f32.mrf.mxu0
    %v3277 = vadd.f32 %v3228, %v3276
    %v3278 = vpop.f32.mrf.mxu0
    %v3279 = vadd.f32 %v3230, %v3278
    %3280 = vmatmul.bf16.gmra.mxu0 %v2863
    %v3281 = vpop.f32.mrf.mxu0
    %v3282 = vadd.f32 %v3233, %v3281
    %v3283 = vpop.f32.mrf.mxu0
    %v3284 = vadd.f32 %v3235, %v3283
    %3285 = vmatmul.bf16.gmra.mxu0 %v2868
    %v3286 = vpop.f32.mrf.mxu0
    %v3287 = vadd.f32 %v3238, %v3286
    %v3288 = vpop.f32.mrf.mxu0
    %v3289 = vadd.f32 %v3240, %v3288
    %3290 = vmatmul.bf16.gmra.mxu0 %v2873
    %v3291 = vpop.f32.mrf.mxu0
    %v3292 = vadd.f32 %v3243, %v3291
    %v3293 = vpop.f32.mrf.mxu0
    %v3294 = vadd.f32 %v3245, %v3293
    %3295 = vdwg.mxu0
    %3296 = vmatpush.bf16.msra.mxu0 %v3083
    %3297 = vmatpush.bf16.msra.mxu0 %v3082
    %3298 = vmatpush.bf16.msra.mxu0 %v3081
    %3299 = vmatpush.bf16.msra.mxu0 %v3080
    %3300 = vmatpush.bf16.msra.mxu0 %v3079
    %3301 = vmatpush.bf16.msra.mxu0 %v3078
    %3302 = vmatpush.bf16.msra.mxu0 %v3077
    %3303 = vmatpush.bf16.msra.mxu0 %v3076
    %3304 = vmatmul.bf16.gmra.mxu0 %v2839
    %v3305 = vpop.f32.mrf.mxu0
    %v3306 = vadd.f32 %v3257, %v3305
    %v3307 = vpop.f32.mrf.mxu0
    %v3308 = vadd.f32 %v3259, %v3307
    %3309 = vmatmul.bf16.gmra.mxu0 %v2844
    %v3310 = vpop.f32.mrf.mxu0
    %v3311 = vadd.f32 %v3262, %v3310
    %v3312 = vpop.f32.mrf.mxu0
    %v3313 = vadd.f32 %v3264, %v3312
    %3314 = vmatmul.bf16.gmra.mxu0 %v2849
    %v3315 = vpop.f32.mrf.mxu0
    %v3316 = vadd.f32 %v3267, %v3315
    %v3317 = vpop.f32.mrf.mxu0
    %v3318 = vadd.f32 %v3269, %v3317
    %3319 = vmatmul.bf16.gmra.mxu0 %v2854
    %v3320 = vpop.f32.mrf.mxu0
    %v3321 = vadd.f32 %v3272, %v3320
    %v3322 = vpop.f32.mrf.mxu0
    %v3323 = vadd.f32 %v3274, %v3322
    %3324 = vmatmul.bf16.gmra.mxu0 %v2859
    %v3325 = vpop.f32.mrf.mxu0
    %v3326 = vadd.f32 %v3277, %v3325
    %v3327 = vpop.f32.mrf.mxu0
    %v3328 = vadd.f32 %v3279, %v3327
    %3329 = vmatmul.bf16.gmra.mxu0 %v2864
    %v3330 = vpop.f32.mrf.mxu0
    %v3331 = vadd.f32 %v3282, %v3330
    %v3332 = vpop.f32.mrf.mxu0
    %v3333 = vadd.f32 %v3284, %v3332
    %3334 = vmatmul.bf16.gmra.mxu0 %v2869
    %v3335 = vpop.f32.mrf.mxu0
    %v3336 = vadd.f32 %v3287, %v3335
    %v3337 = vpop.f32.mrf.mxu0
    %v3338 = vadd.f32 %v3289, %v3337
    %3339 = vmatmul.bf16.gmra.mxu0 %v2874
    %v3340 = vpop.f32.mrf.mxu0
    %v3341 = vadd.f32 %v3292, %v3340
    %v3342 = vpop.f32.mrf.mxu0
    %v3343 = vadd.f32 %v3294, %v3342
    %3344 = vdwg.mxu0
    %3345 = vmatpush.bf16.msra.mxu0 0
    %3346 = vmatpush.bf16.msra.mxu0 0
    %3347 = vmatpush.bf16.msra.mxu0 0
    %3348 = vmatpush.bf16.msra.mxu0 0
    %3349 = vmatpush.bf16.msra.mxu0 %v3087
    %3350 = vmatpush.bf16.msra.mxu0 %v3086
    %3351 = vmatpush.bf16.msra.mxu0 %v3085
    %3352 = vmatpush.bf16.msra.mxu0 %v3084
    %3353 = vmatmul.bf16.gmra.mxu0 %v3126
    %v3354 = vpop.f32.mrf.mxu0
    %v3355 = vadd.f32 %v3306, %v3354
    %v3356 = vpop.f32.mrf.mxu0
    %v3357 = vadd.f32 %v3308, %v3356
    %3358 = vmatmul.bf16.gmra.mxu0 %v3129
    %v3359 = vpop.f32.mrf.mxu0
    %v3360 = vadd.f32 %v3311, %v3359
    %v3361 = vpop.f32.mrf.mxu0
    %v3362 = vadd.f32 %v3313, %v3361
    %3363 = vmatmul.bf16.gmra.mxu0 %v3132
    %v3364 = vpop.f32.mrf.mxu0
    %v3365 = vadd.f32 %v3316, %v3364
    %v3366 = vpop.f32.mrf.mxu0
    %v3367 = vadd.f32 %v3318, %v3366
    %3368 = vmatmul.bf16.gmra.mxu0 %v3135
    %v3369 = vpop.f32.mrf.mxu0
    %v3370 = vadd.f32 %v3321, %v3369
    %v3371 = vpop.f32.mrf.mxu0
    %v3372 = vadd.f32 %v3323, %v3371
    %3373 = vmatmul.bf16.gmra.mxu0 %v3138
    %v3374 = vpop.f32.mrf.mxu0
    %v3375 = vadd.f32 %v3326, %v3374
    %v3376 = vpop.f32.mrf.mxu0
    %v3377 = vadd.f32 %v3328, %v3376
    %3378 = vmatmul.bf16.gmra.mxu0 %v3141
    %v3379 = vpop.f32.mrf.mxu0
    %v3380 = vadd.f32 %v3331, %v3379
    %v3381 = vpop.f32.mrf.mxu0
    %v3382 = vadd.f32 %v3333, %v3381
    %3383 = vmatmul.bf16.gmra.mxu0 %v3144
    %v3384 = vpop.f32.mrf.mxu0
    %v3385 = vadd.f32 %v3336, %v3384
    %v3386 = vpop.f32.mrf.mxu0
    %v3387 = vadd.f32 %v3338, %v3386
    %3388 = vmatmul.bf16.gmra.mxu0 %v3147
    %v3389 = vpop.f32.mrf.mxu0
    %v3390 = vadd.f32 %v3341, %v3389
    %v3391 = vpop.f32.mrf.mxu0
    %v3392 = vadd.f32 %v3343, %v3391
    %3393 = vdwg.mxu0
    %v3394 = vmax.f32 %v3355, 0.0
    %v3395 = vmax.f32 %v3357, 0.0
    %v3396 = vmax.f32 %v3360, 0.0
    %v3397 = vmax.f32 %v3362, 0.0
    %v3398 = vmax.f32 %v3365, 0.0
    %v3399 = vmax.f32 %v3367, 0.0
    %v3400 = vmax.f32 %v3370, 0.0
    %v3401 = vmax.f32 %v3372, 0.0
    %v3402 = vmax.f32 %v3375, 0.0
    %v3403 = vmax.f32 %v3377, 0.0
    %v3404 = vmax.f32 %v3380, 0.0
    %v3405 = vmax.f32 %v3382, 0.0
    %v3406 = vmax.f32 %v3385, 0.0
    %v3407 = vmax.f32 %v3387, 0.0
    %v3408 = vmax.f32 %v3390, 0.0
    %v3409 = vmax.f32 %v3392, 0.0
    %v3426 = vrot.slane %v3394, 2
    %v3427 = vrot.slane %v3394, 4
    %v3428 = vrot.slane %v3394, 6
    %v3429 = vrot.slane %v3395, 2
    %v3430 = vrot.slane %v3395, 4
    %v3431 = vrot.slane %v3395, 6
    %v3432 = vrot.slane %v3396, 2
    %v3433 = vrot.slane %v3396, 4
    %v3434 = vrot.slane %v3396, 6
    %v3435 = vrot.slane %v3397, 2
    %v3436 = vrot.slane %v3397, 4
    %v3437 = vrot.slane %v3397, 6
    %v3438 = vrot.slane %v3398, 2
    %v3439 = vrot.slane %v3398, 4
    %v3440 = vrot.slane %v3398, 6
    %v3441 = vrot.slane %v3399, 2
    %v3442 = vrot.slane %v3399, 4
    %v3443 = vrot.slane %v3399, 6
    %v3444 = vrot.slane %v3400, 2
    %v3445 = vrot.slane %v3400, 4
    %v3446 = vrot.slane %v3400, 6
    %v3447 = vrot.slane %v3401, 2
    %v3448 = vrot.slane %v3401, 4
    %v3449 = vrot.slane %v3401, 6
    %v3450 = vrot.slane %v3402, 2
    %v3451 = vrot.slane %v3402, 4
    %v3452 = vrot.slane %v3402, 6
    %v3453 = vrot.slane %v3403, 2
    %v3454 = vrot.slane %v3403, 4
    %v3455 = vrot.slane %v3403, 6
    %v3456 = vrot.slane %v3404, 2
    %v3457 = vrot.slane %v3404, 4
    %v3458 = vrot.slane %v3404, 6
    %v3459 = vrot.slane %v3405, 2
    %v3460 = vrot.slane %v3405, 4
    %v3461 = vrot.slane %v3405, 6
    %v3462 = vrot.slane %v3406, 2
    %v3463 = vrot.slane %v3406, 4
    %v3464 = vrot.slane %v3406, 6
    %v3465 = vrot.slane %v3407, 2
    %v3466 = vrot.slane %v3407, 4
    %v3467 = vrot.slane %v3407, 6
    %v3468 = vrot.slane %v3408, 2
    %v3469 = vrot.slane %v3408, 4
    %v3470 = vrot.slane %v3408, 6
    %v3471 = vrot.slane %v3409, 2
    %v3472 = vrot.slane %v3409, 4
    %v3473 = vrot.slane %v3409, 6
    %vm3522 = vcmask 1041408
    %v3523 = vsel %vm3522, %v3394, -inf
    %v3524 = vrot.slane %v3523, 4
    %v3525 = vmax.f32 %v3523, %v3524
    %v3526 = vrot.slane %v3525, 2
    %v3527 = vmax.f32 %v3525, %v3526
    %v3528 = vrot.slane %v3527, 1
    %v3529 = vmax.f32 %v3527, %v3528
    %v3530 = vsel %vm3522, %v3426, -inf
    %v3531 = vrot.slane %v3530, 4
    %v3532 = vmax.f32 %v3530, %v3531
    %v3533 = vrot.slane %v3532, 2
    %v3534 = vmax.f32 %v3532, %v3533
    %v3535 = vrot.slane %v3534, 1
    %v3536 = vmax.f32 %v3534, %v3535
    %v3537 = vsel %vm3522, %v3427, -inf
    %v3538 = vrot.slane %v3537, 4
    %v3539 = vmax.f32 %v3537, %v3538
    %v3540 = vrot.slane %v3539, 2
    %v3541 = vmax.f32 %v3539, %v3540
    %v3542 = vrot.slane %v3541, 1
    %v3543 = vmax.f32 %v3541, %v3542
    %v3544 = vsel %vm3522, %v3428, -inf
    %v3545 = vrot.slane %v3544, 4
    %v3546 = vmax.f32 %v3544, %v3545
    %v3547 = vrot.slane %v3546, 2
    %v3548 = vmax.f32 %v3546, %v3547
    %v3549 = vrot.slane %v3548, 1
    %v3550 = vmax.f32 %v3548, %v3549
    %v3551 = vsel %vm3522, %v3395, -inf
    %v3552 = vrot.slane %v3551, 4
    %v3553 = vmax.f32 %v3551, %v3552
    %v3554 = vrot.slane %v3553, 2
    %v3555 = vmax.f32 %v3553, %v3554
    %v3556 = vrot.slane %v3555, 1
    %v3557 = vmax.f32 %v3555, %v3556
    %v3558 = vsel %vm3522, %v3429, -inf
    %v3559 = vrot.slane %v3558, 4
    %v3560 = vmax.f32 %v3558, %v3559
    %v3561 = vrot.slane %v3560, 2
    %v3562 = vmax.f32 %v3560, %v3561
    %v3563 = vrot.slane %v3562, 1
    %v3564 = vmax.f32 %v3562, %v3563
    %v3565 = vsel %vm3522, %v3430, -inf
    %v3566 = vrot.slane %v3565, 4
    %v3567 = vmax.f32 %v3565, %v3566
    %v3568 = vrot.slane %v3567, 2
    %v3569 = vmax.f32 %v3567, %v3568
    %v3570 = vrot.slane %v3569, 1
    %v3571 = vmax.f32 %v3569, %v3570
    %v3572 = vsel %vm3522, %v3431, -inf
    %v3573 = vrot.slane %v3572, 4
    %v3574 = vmax.f32 %v3572, %v3573
    %v3575 = vrot.slane %v3574, 2
    %v3576 = vmax.f32 %v3574, %v3575
    %v3577 = vrot.slane %v3576, 1
    %v3578 = vmax.f32 %v3576, %v3577
    %v3579 = vsel %vm3522, %v3396, -inf
    %v3580 = vrot.slane %v3579, 4
    %v3581 = vmax.f32 %v3579, %v3580
    %v3582 = vrot.slane %v3581, 2
    %v3583 = vmax.f32 %v3581, %v3582
    %v3584 = vrot.slane %v3583, 1
    %v3585 = vmax.f32 %v3583, %v3584
    %v3586 = vsel %vm3522, %v3432, -inf
    %v3587 = vrot.slane %v3586, 4
    %v3588 = vmax.f32 %v3586, %v3587
    %v3589 = vrot.slane %v3588, 2
    %v3590 = vmax.f32 %v3588, %v3589
    %v3591 = vrot.slane %v3590, 1
    %v3592 = vmax.f32 %v3590, %v3591
    %v3593 = vsel %vm3522, %v3433, -inf
    %v3594 = vrot.slane %v3593, 4
    %v3595 = vmax.f32 %v3593, %v3594
    %v3596 = vrot.slane %v3595, 2
    %v3597 = vmax.f32 %v3595, %v3596
    %v3598 = vrot.slane %v3597, 1
    %v3599 = vmax.f32 %v3597, %v3598
    %v3600 = vsel %vm3522, %v3434, -inf
    %v3601 = vrot.slane %v3600, 4
    %v3602 = vmax.f32 %v3600, %v3601
    %v3603 = vrot.slane %v3602, 2
    %v3604 = vmax.f32 %v3602, %v3603
    %v3605 = vrot.slane %v3604, 1
    %v3606 = vmax.f32 %v3604, %v3605
    %v3607 = vsel %vm3522, %v3397, -inf
    %v3608 = vrot.slane %v3607, 4
    %v3609 = vmax.f32 %v3607, %v3608
    %v3610 = vrot.slane %v3609, 2
    %v3611 = vmax.f32 %v3609, %v3610
    %v3612 = vrot.slane %v3611, 1
    %v3613 = vmax.f32 %v3611, %v3612
    %v3614 = vsel %vm3522, %v3435, -inf
    %v3615 = vrot.slane %v3614, 4
    %v3616 = vmax.f32 %v3614, %v3615
    %v3617 = vrot.slane %v3616, 2
    %v3618 = vmax.f32 %v3616, %v3617
    %v3619 = vrot.slane %v3618, 1
    %v3620 = vmax.f32 %v3618, %v3619
    %v3621 = vsel %vm3522, %v3436, -inf
    %v3622 = vrot.slane %v3621, 4
    %v3623 = vmax.f32 %v3621, %v3622
    %v3624 = vrot.slane %v3623, 2
    %v3625 = vmax.f32 %v3623, %v3624
    %v3626 = vrot.slane %v3625, 1
    %v3627 = vmax.f32 %v3625, %v3626
    %v3628 = vsel %vm3522, %v3437, -inf
    %v3629 = vrot.slane %v3628, 4
    %v3630 = vmax.f32 %v3628, %v3629
    %v3631 = vrot.slane %v3630, 2
    %v3632 = vmax.f32 %v3630, %v3631
    %v3633 = vrot.slane %v3632, 1
    %v3634 = vmax.f32 %v3632, %v3633
    %v3635 = vsel %vm3522, %v3398, -inf
    %v3636 = vrot.slane %v3635, 4
    %v3637 = vmax.f32 %v3635, %v3636
    %v3638 = vrot.slane %v3637, 2
    %v3639 = vmax.f32 %v3637, %v3638
    %v3640 = vrot.slane %v3639, 1
    %v3641 = vmax.f32 %v3639, %v3640
    %v3642 = vsel %vm3522, %v3438, -inf
    %v3643 = vrot.slane %v3642, 4
    %v3644 = vmax.f32 %v3642, %v3643
    %v3645 = vrot.slane %v3644, 2
    %v3646 = vmax.f32 %v3644, %v3645
    %v3647 = vrot.slane %v3646, 1
    %v3648 = vmax.f32 %v3646, %v3647
    %v3649 = vsel %vm3522, %v3439, -inf
    %v3650 = vrot.slane %v3649, 4
    %v3651 = vmax.f32 %v3649, %v3650
    %v3652 = vrot.slane %v3651, 2
    %v3653 = vmax.f32 %v3651, %v3652
    %v3654 = vrot.slane %v3653, 1
    %v3655 = vmax.f32 %v3653, %v3654
    %v3656 = vsel %vm3522, %v3440, -inf
    %v3657 = vrot.slane %v3656, 4
    %v3658 = vmax.f32 %v3656, %v3657
    %v3659 = vrot.slane %v3658, 2
    %v3660 = vmax.f32 %v3658, %v3659
    %v3661 = vrot.slane %v3660, 1
    %v3662 = vmax.f32 %v3660, %v3661
    %v3663 = vsel %vm3522, %v3399, -inf
    %v3664 = vrot.slane %v3663, 4
    %v3665 = vmax.f32 %v3663, %v3664
    %v3666 = vrot.slane %v3665, 2
    %v3667 = vmax.f32 %v3665, %v3666
    %v3668 = vrot.slane %v3667, 1
    %v3669 = vmax.f32 %v3667, %v3668
    %v3670 = vsel %vm3522, %v3441, -inf
    %v3671 = vrot.slane %v3670, 4
    %v3672 = vmax.f32 %v3670, %v3671
    %v3673 = vrot.slane %v3672, 2
    %v3674 = vmax.f32 %v3672, %v3673
    %v3675 = vrot.slane %v3674, 1
    %v3676 = vmax.f32 %v3674, %v3675
    %v3677 = vsel %vm3522, %v3442, -inf
    %v3678 = vrot.slane %v3677, 4
    %v3679 = vmax.f32 %v3677, %v3678
    %v3680 = vrot.slane %v3679, 2
    %v3681 = vmax.f32 %v3679, %v3680
    %v3682 = vrot.slane %v3681, 1
    %v3683 = vmax.f32 %v3681, %v3682
    %v3684 = vsel %vm3522, %v3443, -inf
    %v3685 = vrot.slane %v3684, 4
    %v3686 = vmax.f32 %v3684, %v3685
    %v3687 = vrot.slane %v3686, 2
    %v3688 = vmax.f32 %v3686, %v3687
    %v3689 = vrot.slane %v3688, 1
    %v3690 = vmax.f32 %v3688, %v3689
    %v3691 = vsel %vm3522, %v3400, -inf
    %v3692 = vrot.slane %v3691, 4
    %v3693 = vmax.f32 %v3691, %v3692
    %v3694 = vrot.slane %v3693, 2
    %v3695 = vmax.f32 %v3693, %v3694
    %v3696 = vrot.slane %v3695, 1
    %v3697 = vmax.f32 %v3695, %v3696
    %v3698 = vsel %vm3522, %v3444, -inf
    %v3699 = vrot.slane %v3698, 4
    %v3700 = vmax.f32 %v3698, %v3699
    %v3701 = vrot.slane %v3700, 2
    %v3702 = vmax.f32 %v3700, %v3701
    %v3703 = vrot.slane %v3702, 1
    %v3704 = vmax.f32 %v3702, %v3703
    %v3705 = vsel %vm3522, %v3445, -inf
    %v3706 = vrot.slane %v3705, 4
    %v3707 = vmax.f32 %v3705, %v3706
    %v3708 = vrot.slane %v3707, 2
    %v3709 = vmax.f32 %v3707, %v3708
    %v3710 = vrot.slane %v3709, 1
    %v3711 = vmax.f32 %v3709, %v3710
    %v3712 = vsel %vm3522, %v3446, -inf
    %v3713 = vrot.slane %v3712, 4
    %v3714 = vmax.f32 %v3712, %v3713
    %v3715 = vrot.slane %v3714, 2
    %v3716 = vmax.f32 %v3714, %v3715
    %v3717 = vrot.slane %v3716, 1
    %v3718 = vmax.f32 %v3716, %v3717
    %v3719 = vsel %vm3522, %v3401, -inf
    %v3720 = vrot.slane %v3719, 4
    %v3721 = vmax.f32 %v3719, %v3720
    %v3722 = vrot.slane %v3721, 2
    %v3723 = vmax.f32 %v3721, %v3722
    %v3724 = vrot.slane %v3723, 1
    %v3725 = vmax.f32 %v3723, %v3724
    %v3726 = vsel %vm3522, %v3447, -inf
    %v3727 = vrot.slane %v3726, 4
    %v3728 = vmax.f32 %v3726, %v3727
    %v3729 = vrot.slane %v3728, 2
    %v3730 = vmax.f32 %v3728, %v3729
    %v3731 = vrot.slane %v3730, 1
    %v3732 = vmax.f32 %v3730, %v3731
    %v3733 = vsel %vm3522, %v3448, -inf
    %v3734 = vrot.slane %v3733, 4
    %v3735 = vmax.f32 %v3733, %v3734
    %v3736 = vrot.slane %v3735, 2
    %v3737 = vmax.f32 %v3735, %v3736
    %v3738 = vrot.slane %v3737, 1
    %v3739 = vmax.f32 %v3737, %v3738
    %v3740 = vsel %vm3522, %v3449, -inf
    %v3741 = vrot.slane %v3740, 4
    %v3742 = vmax.f32 %v3740, %v3741
    %v3743 = vrot.slane %v3742, 2
    %v3744 = vmax.f32 %v3742, %v3743
    %v3745 = vrot.slane %v3744, 1
    %v3746 = vmax.f32 %v3744, %v3745
    %v3747 = vsel %vm3522, %v3402, -inf
    %v3748 = vrot.slane %v3747, 4
    %v3749 = vmax.f32 %v3747, %v3748
    %v3750 = vrot.slane %v3749, 2
    %v3751 = vmax.f32 %v3749, %v3750
    %v3752 = vrot.slane %v3751, 1
    %v3753 = vmax.f32 %v3751, %v3752
    %v3754 = vsel %vm3522, %v3450, -inf
    %v3755 = vrot.slane %v3754, 4
    %v3756 = vmax.f32 %v3754, %v3755
    %v3757 = vrot.slane %v3756, 2
    %v3758 = vmax.f32 %v3756, %v3757
    %v3759 = vrot.slane %v3758, 1
    %v3760 = vmax.f32 %v3758, %v3759
    %v3761 = vsel %vm3522, %v3451, -inf
    %v3762 = vrot.slane %v3761, 4
    %v3763 = vmax.f32 %v3761, %v3762
    %v3764 = vrot.slane %v3763, 2
    %v3765 = vmax.f32 %v3763, %v3764
    %v3766 = vrot.slane %v3765, 1
    %v3767 = vmax.f32 %v3765, %v3766
    %v3768 = vsel %vm3522, %v3452, -inf
    %v3769 = vrot.slane %v3768, 4
    %v3770 = vmax.f32 %v3768, %v3769
    %v3771 = vrot.slane %v3770, 2
    %v3772 = vmax.f32 %v3770, %v3771
    %v3773 = vrot.slane %v3772, 1
    %v3774 = vmax.f32 %v3772, %v3773
    %v3775 = vsel %vm3522, %v3403, -inf
    %v3776 = vrot.slane %v3775, 4
    %v3777 = vmax.f32 %v3775, %v3776
    %v3778 = vrot.slane %v3777, 2
    %v3779 = vmax.f32 %v3777, %v3778
    %v3780 = vrot.slane %v3779, 1
    %v3781 = vmax.f32 %v3779, %v3780
    %v3782 = vsel %vm3522, %v3453, -inf
    %v3783 = vrot.slane %v3782, 4
    %v3784 = vmax.f32 %v3782, %v3783
    %v3785 = vrot.slane %v3784, 2
    %v3786 = vmax.f32 %v3784, %v3785
    %v3787 = vrot.slane %v3786, 1
    %v3788 = vmax.f32 %v3786, %v3787
    %v3789 = vsel %vm3522, %v3454, -inf
    %v3790 = vrot.slane %v3789, 4
    %v3791 = vmax.f32 %v3789, %v3790
    %v3792 = vrot.slane %v3791, 2
    %v3793 = vmax.f32 %v3791, %v3792
    %v3794 = vrot.slane %v3793, 1
    %v3795 = vmax.f32 %v3793, %v3794
    %v3796 = vsel %vm3522, %v3455, -inf
    %v3797 = vrot.slane %v3796, 4
    %v3798 = vmax.f32 %v3796, %v3797
    %v3799 = vrot.slane %v3798, 2
    %v3800 = vmax.f32 %v3798, %v3799
    %v3801 = vrot.slane %v3800, 1
    %v3802 = vmax.f32 %v3800, %v3801
    %v3803 = vsel %vm3522, %v3404, -inf
    %v3804 = vrot.slane %v3803, 4
    %v3805 = vmax.f32 %v3803, %v3804
    %v3806 = vrot.slane %v3805, 2
    %v3807 = vmax.f32 %v3805, %v3806
    %v3808 = vrot.slane %v3807, 1
    %v3809 = vmax.f32 %v3807, %v3808
    %v3810 = vsel %vm3522, %v3456, -inf
    %v3811 = vrot.slane %v3810, 4
    %v3812 = vmax.f32 %v3810, %v3811
    %v3813 = vrot.slane %v3812, 2
    %v3814 = vmax.f32 %v3812, %v3813
    %v3815 = vrot.slane %v3814, 1
    %v3816 = vmax.f32 %v3814, %v3815
    %v3817 = vsel %vm3522, %v3457, -inf
    %v3818 = vrot.slane %v3817, 4
    %v3819 = vmax.f32 %v3817, %v3818
    %v3820 = vrot.slane %v3819, 2
    %v3821 = vmax.f32 %v3819, %v3820
    %v3822 = vrot.slane %v3821, 1
    %v3823 = vmax.f32 %v3821, %v3822
    %v3824 = vsel %vm3522, %v3458, -inf
    %v3825 = vrot.slane %v3824, 4
    %v3826 = vmax.f32 %v3824, %v3825
    %v3827 = vrot.slane %v3826, 2
    %v3828 = vmax.f32 %v3826, %v3827
    %v3829 = vrot.slane %v3828, 1
    %v3830 = vmax.f32 %v3828, %v3829
    %v3831 = vsel %vm3522, %v3405, -inf
    %v3832 = vrot.slane %v3831, 4
    %v3833 = vmax.f32 %v3831, %v3832
    %v3834 = vrot.slane %v3833, 2
    %v3835 = vmax.f32 %v3833, %v3834
    %v3836 = vrot.slane %v3835, 1
    %v3837 = vmax.f32 %v3835, %v3836
    %v3838 = vsel %vm3522, %v3459, -inf
    %v3839 = vrot.slane %v3838, 4
    %v3840 = vmax.f32 %v3838, %v3839
    %v3841 = vrot.slane %v3840, 2
    %v3842 = vmax.f32 %v3840, %v3841
    %v3843 = vrot.slane %v3842, 1
    %v3844 = vmax.f32 %v3842, %v3843
    %v3845 = vsel %vm3522, %v3460, -inf
    %v3846 = vrot.slane %v3845, 4
    %v3847 = vmax.f32 %v3845, %v3846
    %v3848 = vrot.slane %v3847, 2
    %v3849 = vmax.f32 %v3847, %v3848
    %v3850 = vrot.slane %v3849, 1
    %v3851 = vmax.f32 %v3849, %v3850
    %v3852 = vsel %vm3522, %v3461, -inf
    %v3853 = vrot.slane %v3852, 4
    %v3854 = vmax.f32 %v3852, %v3853
    %v3855 = vrot.slane %v3854, 2
    %v3856 = vmax.f32 %v3854, %v3855
    %v3857 = vrot.slane %v3856, 1
    %v3858 = vmax.f32 %v3856, %v3857
    %v3859 = vsel %vm3522, %v3406, -inf
    %v3860 = vrot.slane %v3859, 4
    %v3861 = vmax.f32 %v3859, %v3860
    %v3862 = vrot.slane %v3861, 2
    %v3863 = vmax.f32 %v3861, %v3862
    %v3864 = vrot.slane %v3863, 1
    %v3865 = vmax.f32 %v3863, %v3864
    %v3866 = vsel %vm3522, %v3462, -inf
    %v3867 = vrot.slane %v3866, 4
    %v3868 = vmax.f32 %v3866, %v3867
    %v3869 = vrot.slane %v3868, 2
    %v3870 = vmax.f32 %v3868, %v3869
    %v3871 = vrot.slane %v3870, 1
    %v3872 = vmax.f32 %v3870, %v3871
    %v3873 = vsel %vm3522, %v3463, -inf
    %v3874 = vrot.slane %v3873, 4
    %v3875 = vmax.f32 %v3873, %v3874
    %v3876 = vrot.slane %v3875, 2
    %v3877 = vmax.f32 %v3875, %v3876
    %v3878 = vrot.slane %v3877, 1
    %v3879 = vmax.f32 %v3877, %v3878
    %v3880 = vsel %vm3522, %v3464, -inf
    %v3881 = vrot.slane %v3880, 4
    %v3882 = vmax.f32 %v3880, %v3881
    %v3883 = vrot.slane %v3882, 2
    %v3884 = vmax.f32 %v3882, %v3883
    %v3885 = vrot.slane %v3884, 1
    %v3886 = vmax.f32 %v3884, %v3885
    %v3887 = vsel %vm3522, %v3407, -inf
    %v3888 = vrot.slane %v3887, 4
    %v3889 = vmax.f32 %v3887, %v3888
    %v3890 = vrot.slane %v3889, 2
    %v3891 = vmax.f32 %v3889, %v3890
    %v3892 = vrot.slane %v3891, 1
    %v3893 = vmax.f32 %v3891, %v3892
    %v3894 = vsel %vm3522, %v3465, -inf
    %v3895 = vrot.slane %v3894, 4
    %v3896 = vmax.f32 %v3894, %v3895
    %v3897 = vrot.slane %v3896, 2
    %v3898 = vmax.f32 %v3896, %v3897
    %v3899 = vrot.slane %v3898, 1
    %v3900 = vmax.f32 %v3898, %v3899
    %v3901 = vsel %vm3522, %v3466, -inf
    %v3902 = vrot.slane %v3901, 4
    %v3903 = vmax.f32 %v3901, %v3902
    %v3904 = vrot.slane %v3903, 2
    %v3905 = vmax.f32 %v3903, %v3904
    %v3906 = vrot.slane %v3905, 1
    %v3907 = vmax.f32 %v3905, %v3906
    %v3908 = vsel %vm3522, %v3467, -inf
    %v3909 = vrot.slane %v3908, 4
    %v3910 = vmax.f32 %v3908, %v3909
    %v3911 = vrot.slane %v3910, 2
    %v3912 = vmax.f32 %v3910, %v3911
    %v3913 = vrot.slane %v3912, 1
    %v3914 = vmax.f32 %v3912, %v3913
    %v3915 = vsel %vm3522, %v3408, -inf
    %v3916 = vrot.slane %v3915, 4
    %v3917 = vmax.f32 %v3915, %v3916
    %v3918 = vrot.slane %v3917, 2
    %v3919 = vmax.f32 %v3917, %v3918
    %v3920 = vrot.slane %v3919, 1
    %v3921 = vmax.f32 %v3919, %v3920
    %v3922 = vsel %vm3522, %v3468, -inf
    %v3923 = vrot.slane %v3922, 4
    %v3924 = vmax.f32 %v3922, %v3923
    %v3925 = vrot.slane %v3924, 2
    %v3926 = vmax.f32 %v3924, %v3925
    %v3927 = vrot.slane %v3926, 1
    %v3928 = vmax.f32 %v3926, %v3927
    %v3929 = vsel %vm3522, %v3469, -inf
    %v3930 = vrot.slane %v3929, 4
    %v3931 = vmax.f32 %v3929, %v3930
    %v3932 = vrot.slane %v3931, 2
    %v3933 = vmax.f32 %v3931, %v3932
    %v3934 = vrot.slane %v3933, 1
    %v3935 = vmax.f32 %v3933, %v3934
    %v3936 = vsel %vm3522, %v3470, -inf
    %v3937 = vrot.slane %v3936, 4
    %v3938 = vmax.f32 %v3936, %v3937
    %v3939 = vrot.slane %v3938, 2
    %v3940 = vmax.f32 %v3938, %v3939
    %v3941 = vrot.slane %v3940, 1
    %v3942 = vmax.f32 %v3940, %v3941
    %v3943 = vsel %vm3522, %v3409, -inf
    %v3944 = vrot.slane %v3943, 4
    %v3945 = vmax.f32 %v3943, %v3944
    %v3946 = vrot.slane %v3945, 2
    %v3947 = vmax.f32 %v3945, %v3946
    %v3948 = vrot.slane %v3947, 1
    %v3949 = vmax.f32 %v3947, %v3948
    %v3950 = vsel %vm3522, %v3471, -inf
    %v3951 = vrot.slane %v3950, 4
    %v3952 = vmax.f32 %v3950, %v3951
    %v3953 = vrot.slane %v3952, 2
    %v3954 = vmax.f32 %v3952, %v3953
    %v3955 = vrot.slane %v3954, 1
    %v3956 = vmax.f32 %v3954, %v3955
    %v3957 = vsel %vm3522, %v3472, -inf
    %v3958 = vrot.slane %v3957, 4
    %v3959 = vmax.f32 %v3957, %v3958
    %v3960 = vrot.slane %v3959, 2
    %v3961 = vmax.f32 %v3959, %v3960
    %v3962 = vrot.slane %v3961, 1
    %v3963 = vmax.f32 %v3961, %v3962
    %v3964 = vsel %vm3522, %v3473, -inf
    %v3965 = vrot.slane %v3964, 4
    %v3966 = vmax.f32 %v3964, %v3965
    %v3967 = vrot.slane %v3966, 2
    %v3968 = vmax.f32 %v3966, %v3967
    %v3969 = vrot.slane %v3968, 1
    %v3970 = vmax.f32 %v3968, %v3969
    %v3971 = vmax.f32 %v3529, %v3557
    %v3972 = vmax.f32 %v3536, %v3564
    %v3973 = vmax.f32 %v3543, %v3571
    %v3974 = vmax.f32 %v3550, %v3578
    %v3975 = vmax.f32 %v3585, %v3613
    %v3976 = vmax.f32 %v3592, %v3620
    %v3977 = vmax.f32 %v3599, %v3627
    %v3978 = vmax.f32 %v3606, %v3634
    %v3979 = vmax.f32 %v3641, %v3669
    %v3980 = vmax.f32 %v3648, %v3676
    %v3981 = vmax.f32 %v3655, %v3683
    %v3982 = vmax.f32 %v3662, %v3690
    %v3983 = vmax.f32 %v3697, %v3725
    %v3984 = vmax.f32 %v3704, %v3732
    %v3985 = vmax.f32 %v3711, %v3739
    %v3986 = vmax.f32 %v3718, %v3746
    %v3987 = vmax.f32 %v3753, %v3781
    %v3988 = vmax.f32 %v3760, %v3788
    %v3989 = vmax.f32 %v3767, %v3795
    %v3990 = vmax.f32 %v3774, %v3802
    %v3991 = vmax.f32 %v3809, %v3837
    %v3992 = vmax.f32 %v3816, %v3844
    %v3993 = vmax.f32 %v3823, %v3851
    %v3994 = vmax.f32 %v3830, %v3858
    %v3995 = vmax.f32 %v3865, %v3893
    %v3996 = vmax.f32 %v3872, %v3900
    %v3997 = vmax.f32 %v3879, %v3907
    %v3998 = vmax.f32 %v3886, %v3914
    %v3999 = vmax.f32 %v3921, %v3949
    %v4000 = vmax.f32 %v3928, %v3956
    %v4001 = vmax.f32 %v3935, %v3963
    %v4002 = vmax.f32 %v3942, %v3970
    %4003 = vst [vmem:[#allocation4] sm:$0x7] 0
    %4004 = vst [vmem:[#allocation4 + $0x18] sm:$0x7] 0
    %s4005 = scalar_lea.vmem [#allocation4], 20
    %4006 = vst [vmem:[%s4005] sm:$0x7] 0
    %4007 = vst [vmem:[%s4005 + $0x18] sm:$0x7] 0
    %s4008 = scalar_lea.vmem [#allocation4], 4
    %vm4009 = vcmask 1040384
    %vm4010 = vmand %vm4009, %vm602
    %v4011 = vld [vmem:[%s4008] sm:$0x1]
    %v4012 = vsel %vm4010, 0, %v4011
    %4013 = vst [vmem:[%s4008] sm:$0x1] %v4012
    %v4014 = vld [vmem:[%s4008 + $0x4] sm:$0x1]
    %v4015 = vsel %vm4010, 0, %v4014
    %4016 = vst [vmem:[%s4008 + $0x4] sm:$0x1] %v4015
    %v4017 = vld [vmem:[%s4008 + $0x8] sm:$0x1]
    %v4018 = vsel %vm4010, 0, %v4017
    %4019 = vst [vmem:[%s4008 + $0x8] sm:$0x1] %v4018
    %v4020 = vld [vmem:[%s4008 + $0xc] sm:$0x1]
    %v4021 = vsel %vm4010, 0, %v4020
    %4022 = vst [vmem:[%s4008 + $0xc] sm:$0x1] %v4021
    %v4023 = vld [vmem:[%s4008 + $0x18] sm:$0x1]
    %v4024 = vsel %vm4010, 0, %v4023
    %4025 = vst [vmem:[%s4008 + $0x18] sm:$0x1] %v4024
    %v4026 = vld [vmem:[%s4008 + $0x1c] sm:$0x1]
    %v4027 = vsel %vm4010, 0, %v4026
    %4028 = vst [vmem:[%s4008 + $0x1c] sm:$0x1] %v4027
    %v4029 = vld [vmem:[%s4008 + $0x20] sm:$0x1]
    %v4030 = vsel %vm4010, 0, %v4029
    %4031 = vst [vmem:[%s4008 + $0x20] sm:$0x1] %v4030
    %v4032 = vld [vmem:[%s4008 + $0x24] sm:$0x1]
    %v4033 = vsel %vm4010, 0, %v4032
    %4034 = vst [vmem:[%s4008 + $0x24] sm:$0x1] %v4033
    %vm4035 = vcmask 1042434
    %vm4036 = vsmask.f32 7946
    %vm4037 = vmand %vm4035, %vm4036
    %v4038 = vld [vmem:[%s4008] sm:$0x4]
    %v4039 = vsel %vm4037, 0, %v4038
    %4040 = vst [vmem:[%s4008] sm:$0x4] %v4039
    %v4041 = vld [vmem:[%s4008 + $0x4] sm:$0x4]
    %v4042 = vsel %vm4037, 0, %v4041
    %4043 = vst [vmem:[%s4008 + $0x4] sm:$0x4] %v4042
    %v4044 = vld [vmem:[%s4008 + $0x8] sm:$0x4]
    %v4045 = vsel %vm4037, 0, %v4044
    %4046 = vst [vmem:[%s4008 + $0x8] sm:$0x4] %v4045
    %v4047 = vld [vmem:[%s4008 + $0xc] sm:$0x4]
    %v4048 = vsel %vm4037, 0, %v4047
    %4049 = vst [vmem:[%s4008 + $0xc] sm:$0x4] %v4048
    %v4050 = vld [vmem:[%s4008 + $0x18] sm:$0x4]
    %v4051 = vsel %vm4037, 0, %v4050
    %4052 = vst [vmem:[%s4008 + $0x18] sm:$0x4] %v4051
    %v4053 = vld [vmem:[%s4008 + $0x1c] sm:$0x4]
    %v4054 = vsel %vm4037, 0, %v4053
    %4055 = vst [vmem:[%s4008 + $0x1c] sm:$0x4] %v4054
    %v4056 = vld [vmem:[%s4008 + $0x20] sm:$0x4]
    %v4057 = vsel %vm4037, 0, %v4056
    %4058 = vst [vmem:[%s4008 + $0x20] sm:$0x4] %v4057
    %v4059 = vld [vmem:[%s4008 + $0x24] sm:$0x4]
    %v4060 = vsel %vm4037, 0, %v4059
    %4061 = vst [vmem:[%s4008 + $0x24] sm:$0x4] %v4060
    %v4062 = vpack.c.bf16 %v3971, %v3971
    %v4063 = vpack.c.bf16 %v3972, %v3972
    %v4064 = vpack.c.bf16 %v3973, %v3973
    %v4065 = vpack.c.bf16 %v3974, %v3974
    %v4066 = vpack.c.bf16 %v3975, %v3975
    %v4067 = vpack.c.bf16 %v3976, %v3976
    %v4068 = vpack.c.bf16 %v3977, %v3977
    %v4069 = vpack.c.bf16 %v3978, %v3978
    %v4070 = vpack.c.bf16 %v3979, %v3979
    %v4071 = vpack.c.bf16 %v3980, %v3980
    %v4072 = vpack.c.bf16 %v3981, %v3981
    %v4073 = vpack.c.bf16 %v3982, %v3982
    %v4074 = vpack.c.bf16 %v3983, %v3983
    %v4075 = vpack.c.bf16 %v3984, %v3984
    %v4076 = vpack.c.bf16 %v3985, %v3985
    %v4077 = vpack.c.bf16 %v3986, %v3986
    %v4078 = vpack.c.bf16 %v3987, %v3987
    %v4079 = vpack.c.bf16 %v3988, %v3988
    %v4080 = vpack.c.bf16 %v3989, %v3989
    %v4081 = vpack.c.bf16 %v3990, %v3990
    %v4082 = vpack.c.bf16 %v3991, %v3991
    %v4083 = vpack.c.bf16 %v3992, %v3992
    %v4084 = vpack.c.bf16 %v3993, %v3993
    %v4085 = vpack.c.bf16 %v3994, %v3994
    %v4086 = vpack.c.bf16 %v3995, %v3995
    %v4087 = vpack.c.bf16 %v3996, %v3996
    %v4088 = vpack.c.bf16 %v3997, %v3997
    %v4089 = vpack.c.bf16 %v3998, %v3998
    %v4090 = vpack.c.bf16 %v3999, %v3999
    %v4091 = vpack.c.bf16 %v4000, %v4000
    %v4092 = vpack.c.bf16 %v4001, %v4001
    %v4093 = vpack.c.bf16 %v4002, %v4002
    %v4126 = vunpack.c.l.b16 %v4062
    %v4127 = vunpack.c.l.b16 %v4063
    %v4128 = vunpack.c.l.b16 %v4064
    %v4129 = vunpack.c.l.b16 %v4065
    %v4130 = vunpack.c.l.b16 %v4066
    %v4131 = vunpack.c.l.b16 %v4067
    %v4132 = vunpack.c.l.b16 %v4068
    %v4133 = vunpack.c.l.b16 %v4069
    %v4134 = vunpack.c.l.b16 %v4070
    %v4135 = vunpack.c.l.b16 %v4071
    %v4136 = vunpack.c.l.b16 %v4072
    %v4137 = vunpack.c.l.b16 %v4073
    %v4138 = vunpack.c.l.b16 %v4074
    %v4139 = vunpack.c.l.b16 %v4075
    %v4140 = vunpack.c.l.b16 %v4076
    %v4141 = vunpack.c.l.b16 %v4077
    %v4142 = vunpack.c.l.b16 %v4078
    %v4143 = vunpack.c.l.b16 %v4079
    %v4144 = vunpack.c.l.b16 %v4080
    %v4145 = vunpack.c.l.b16 %v4081
    %v4146 = vunpack.c.l.b16 %v4082
    %v4147 = vunpack.c.l.b16 %v4083
    %v4148 = vunpack.c.l.b16 %v4084
    %v4149 = vunpack.c.l.b16 %v4085
    %v4150 = vunpack.c.l.b16 %v4086
    %v4151 = vunpack.c.l.b16 %v4087
    %v4152 = vunpack.c.l.b16 %v4088
    %v4153 = vunpack.c.l.b16 %v4089
    %v4154 = vunpack.c.l.b16 %v4090
    %v4155 = vunpack.c.l.b16 %v4091
    %v4156 = vunpack.c.l.b16 %v4092
    %v4157 = vunpack.c.l.b16 %v4093
    %vm4158 = vcmask 1042434
    %v4159 = vsel %vm4158, %v4127, %v4126
    %vm4160 = vcmask 1043459
    %v4161 = vsel %vm4160, %v4128, %v4159
    %vm4162 = vcmask 1044484
    %v4163 = vsel %vm4162, %v4129, %v4161
    %v4164 = vsel %vm4158, %v4131, %v4130
    %v4165 = vsel %vm4160, %v4132, %v4164
    %v4166 = vsel %vm4162, %v4133, %v4165
    %v4167 = vsel %vm4158, %v4135, %v4134
    %v4168 = vsel %vm4160, %v4136, %v4167
    %v4169 = vsel %vm4162, %v4137, %v4168
    %v4170 = vsel %vm4158, %v4139, %v4138
    %v4171 = vsel %vm4160, %v4140, %v4170
    %v4172 = vsel %vm4162, %v4141, %v4171
    %v4173 = vsel %vm4158, %v4143, %v4142
    %v4174 = vsel %vm4160, %v4144, %v4173
    %v4175 = vsel %vm4162, %v4145, %v4174
    %v4176 = vsel %vm4158, %v4147, %v4146
    %v4177 = vsel %vm4160, %v4148, %v4176
    %v4178 = vsel %vm4162, %v4149, %v4177
    %v4179 = vsel %vm4158, %v4151, %v4150
    %v4180 = vsel %vm4160, %v4152, %v4179
    %v4181 = vsel %vm4162, %v4153, %v4180
    %v4182 = vsel %vm4158, %v4155, %v4154
    %v4183 = vsel %vm4160, %v4156, %v4182
    %v4184 = vsel %vm4162, %v4157, %v4183
    %v4185 = vpack.c.b16 %v4163, %v4163
    %v4186 = vpack.c.b16 %v4166, %v4166
    %v4187 = vpack.c.b16 %v4169, %v4169
    %v4188 = vpack.c.b16 %v4172, %v4172
    %v4189 = vpack.c.b16 %v4175, %v4175
    %v4190 = vpack.c.b16 %v4178, %v4178
    %v4191 = vpack.c.b16 %v4181, %v4181
    %v4192 = vpack.c.b16 %v4184, %v4184
    %vm4201 = vsmask.f32 2306
    %vm4202 = vmand %vm1396, %vm4201
    %v4203 = vld [vmem:[%s4008] sm:$0x7]
    %v4204 = vsel %vm4202, %v4185, %v4203
    %4205 = vst [vmem:[%s4008] sm:$0x7] %v4204
    %v4206 = vld [vmem:[%s4008 + $0x4] sm:$0x7]
    %v4207 = vsel %vm4202, %v4186, %v4206
    %4208 = vst [vmem:[%s4008 + $0x4] sm:$0x7] %v4207
    %v4209 = vld [vmem:[%s4008 + $0x8] sm:$0x7]
    %v4210 = vsel %vm4202, %v4187, %v4209
    %4211 = vst [vmem:[%s4008 + $0x8] sm:$0x7] %v4210
    %v4212 = vld [vmem:[%s4008 + $0xc] sm:$0x7]
    %v4213 = vsel %vm4202, %v4188, %v4212
    %4214 = vst [vmem:[%s4008 + $0xc] sm:$0x7] %v4213
    %v4215 = vld [vmem:[%s4008 + $0x18] sm:$0x7]
    %v4216 = vsel %vm4202, %v4189, %v4215
    %4217 = vst [vmem:[%s4008 + $0x18] sm:$0x7] %v4216
    %v4218 = vld [vmem:[%s4008 + $0x1c] sm:$0x7]
    %v4219 = vsel %vm4202, %v4190, %v4218
    %4220 = vst [vmem:[%s4008 + $0x1c] sm:$0x7] %v4219
    %v4221 = vld [vmem:[%s4008 + $0x20] sm:$0x7]
    %v4222 = vsel %vm4202, %v4191, %v4221
    %4223 = vst [vmem:[%s4008 + $0x20] sm:$0x7] %v4222
    %v4224 = vld [vmem:[%s4008 + $0x24] sm:$0x7]
    %v4225 = vsel %vm4202, %v4192, %v4224
    %4226 = vst [vmem:[%s4008 + $0x24] sm:$0x7] %v4225
    %v4227 = vld [vmem:[#allocation4] sm:$0x3]
    %v4228 = vld [vmem:[#allocation4 + $0x4] sm:$0x3]
    %v4229 = vld [vmem:[#allocation4 + $0x8] sm:$0x3]
    %v4230 = vld [vmem:[#allocation4 + $0xc] sm:$0x3]
    %v4231 = vld [vmem:[#allocation4 + $0x18] sm:$0x3]
    %v4232 = vld [vmem:[#allocation4 + $0x1c] sm:$0x3]
    %v4233 = vld [vmem:[#allocation4 + $0x20] sm:$0x3]
    %v4234 = vld [vmem:[#allocation4 + $0x24] sm:$0x3]
    %4236 = vst [vmem:[#allocation1] ss:$2 sm:$0xff] %v4227
    %s4238 = scalar_lea.vmem [#allocation1], 1
    %4239 = vst [vmem:[%s4238] ss:$2 sm:$0xff] %v4228
    %s4241 = scalar_lea.vmem [#allocation1], 16
    %4242 = vst [vmem:[%s4241] ss:$2 sm:$0xff] %v4229
    %s4244 = scalar_lea.vmem [#allocation1], 17
    %4245 = vst [vmem:[%s4244] ss:$2 sm:$0xff] %v4230
    %s4247 = scalar_lea.vmem [#allocation1], 32
    %4248 = vst [vmem:[%s4247] ss:$2 sm:$0xff] %v4231
    %s4250 = scalar_lea.vmem [#allocation1], 33
    %4251 = vst [vmem:[%s4250] ss:$2 sm:$0xff] %v4232
    %s4253 = scalar_lea.vmem [#allocation1], 48
    %4254 = vst [vmem:[%s4253] ss:$2 sm:$0xff] %v4233
    %s4256 = scalar_lea.vmem [#allocation1], 49
    %4257 = vst [vmem:[%s4256] ss:$2 sm:$0xff] %v4234
    %v4258 = vld.sshfl [vmem:[#allocation1] sm:$0xff pattern:$0x75643120]
    %v4259 = vld.sshfl [vmem:[#allocation1 + $0x10] sm:$0xff pattern:$0x75643120]
    %v4260 = vld.sshfl [vmem:[#allocation1 + $0x20] sm:$0xff pattern:$0x75643120]
    %v4261 = vld.sshfl [vmem:[#allocation1 + $0x30] sm:$0xff pattern:$0x75643120]
    %4266 = vst [vmem:[#allocation5] sm:$0xf] %v4258
    %4267 = vst [vmem:[#allocation5 + $0x24] sm:$0xf] %v4259
    %4268 = vst [vmem:[#allocation5 + $0x48] sm:$0xf] %v4260
    %4269 = vst [vmem:[#allocation5 + $0x6c] sm:$0xf] %v4261
    %v4270 = vld [vmem:[#allocation4] sm:$0x7]
    %v4271 = vld [vmem:[#allocation4 + $0x4] sm:$0x7]
    %v4272 = vld [vmem:[#allocation4 + $0x8] sm:$0x7]
    %v4273 = vld [vmem:[#allocation4 + $0xc] sm:$0x7]
    %v4274 = vld [vmem:[#allocation4 + $0x18] sm:$0x7]
    %v4275 = vld [vmem:[#allocation4 + $0x1c] sm:$0x7]
    %v4276 = vld [vmem:[#allocation4 + $0x20] sm:$0x7]
    %v4277 = vld [vmem:[#allocation4 + $0x24] sm:$0x7]
    %v4286 = vrot.slane %v4270, 2
    %v4287 = vrot.slane %v4271, 2
    %v4288 = vrot.slane %v4272, 2
    %v4289 = vrot.slane %v4273, 2
    %v4290 = vrot.slane %v4274, 2
    %v4291 = vrot.slane %v4275, 2
    %v4292 = vrot.slane %v4276, 2
    %v4293 = vrot.slane %v4277, 2
    %v4296 = vsel %vm3522, %v4270, %v4286
    %vm4297 = vcmask 1043458
    %v4298 = vsel %vm4297, %v4270, %v4286
    %v4300 = vrot.slane %v4298, 2
    %v4303 = vsel %vm3522, %v4271, %v4287
    %v4304 = vsel %vm4297, %v4271, %v4287
    %v4306 = vrot.slane %v4304, 2
    %v4309 = vsel %vm3522, %v4272, %v4288
    %v4310 = vsel %vm4297, %v4272, %v4288
    %v4312 = vrot.slane %v4310, 2
    %v4315 = vsel %vm3522, %v4273, %v4289
    %v4316 = vsel %vm4297, %v4273, %v4289
    %v4318 = vrot.slane %v4316, 2
    %v4321 = vsel %vm3522, %v4274, %v4290
    %v4322 = vsel %vm4297, %v4274, %v4290
    %v4324 = vrot.slane %v4322, 2
    %v4327 = vsel %vm3522, %v4275, %v4291
    %v4328 = vsel %vm4297, %v4275, %v4291
    %v4330 = vrot.slane %v4328, 2
    %v4333 = vsel %vm3522, %v4276, %v4292
    %v4334 = vsel %vm4297, %v4276, %v4292
    %v4336 = vrot.slane %v4334, 2
    %v4339 = vsel %vm3522, %v4277, %v4293
    %v4340 = vsel %vm4297, %v4277, %v4293
    %v4342 = vrot.slane %v4340, 2
    %vm4343 = vsmask.f32 1280
    %vm4344 = vsmask.f32 3336
    %vm4345 = vmor %vm4343, %vm4344
    %vm4346 = vsmask.f32 5392
    %vm4347 = vmor %vm4345, %vm4346
    %vm4348 = vsmask.f32 7448
    %vm4349 = vmor %vm4347, %vm4348
    %v4350 = vshrl.u32 %v4296, 16
    %v4352 = vrot.slane %v4350, 6
    %v4353 = vshll.u32 %v4296, 16
    %v4355 = vrot.slane %v4353, 7
    %v4356 = vor.u32 %v4352, %v4355
    %v4357 = vrot.slane %v4356, 2
    %v4359 = vshll.u32 %v4300, 16
    %v4361 = vrot.slane %v4359, 7
    %v4362 = vsel %vm4349, %v4357, %v4361
    %v4363 = vshrl.u32 %v4303, 16
    %v4365 = vrot.slane %v4363, 6
    %v4366 = vshll.u32 %v4303, 16
    %v4368 = vrot.slane %v4366, 7
    %v4369 = vor.u32 %v4365, %v4368
    %v4370 = vrot.slane %v4369, 2
    %v4372 = vshll.u32 %v4306, 16
    %v4374 = vrot.slane %v4372, 7
    %v4375 = vsel %vm4349, %v4370, %v4374
    %v4376 = vshrl.u32 %v4309, 16
    %v4378 = vrot.slane %v4376, 6
    %v4379 = vshll.u32 %v4309, 16
    %v4381 = vrot.slane %v4379, 7
    %v4382 = vor.u32 %v4378, %v4381
    %v4383 = vrot.slane %v4382, 2
    %v4385 = vshll.u32 %v4312, 16
    %v4387 = vrot.slane %v4385, 7
    %v4388 = vsel %vm4349, %v4383, %v4387
    %v4389 = vshrl.u32 %v4315, 16
    %v4391 = vrot.slane %v4389, 6
    %v4392 = vshll.u32 %v4315, 16
    %v4394 = vrot.slane %v4392, 7
    %v4395 = vor.u32 %v4391, %v4394
    %v4396 = vrot.slane %v4395, 2
    %v4398 = vshll.u32 %v4318, 16
    %v4400 = vrot.slane %v4398, 7
    %v4401 = vsel %vm4349, %v4396, %v4400
    %v4402 = vshrl.u32 %v4321, 16
    %v4404 = vrot.slane %v4402, 6
    %v4405 = vshll.u32 %v4321, 16
    %v4407 = vrot.slane %v4405, 7
    %v4408 = vor.u32 %v4404, %v4407
    %v4409 = vrot.slane %v4408, 2
    %v4411 = vshll.u32 %v4324, 16
    %v4413 = vrot.slane %v4411, 7
    %v4414 = vsel %vm4349, %v4409, %v4413
    %v4415 = vshrl.u32 %v4327, 16
    %v4417 = vrot.slane %v4415, 6
    %v4418 = vshll.u32 %v4327, 16
    %v4420 = vrot.slane %v4418, 7
    %v4421 = vor.u32 %v4417, %v4420
    %v4422 = vrot.slane %v4421, 2
    %v4424 = vshll.u32 %v4330, 16
    %v4426 = vrot.slane %v4424, 7
    %v4427 = vsel %vm4349, %v4422, %v4426
    %v4428 = vshrl.u32 %v4333, 16
    %v4430 = vrot.slane %v4428, 6
    %v4431 = vshll.u32 %v4333, 16
    %v4433 = vrot.slane %v4431, 7
    %v4434 = vor.u32 %v4430, %v4433
    %v4435 = vrot.slane %v4434, 2
    %v4437 = vshll.u32 %v4336, 16
    %v4439 = vrot.slane %v4437, 7
    %v4440 = vsel %vm4349, %v4435, %v4439
    %v4441 = vshrl.u32 %v4339, 16
    %v4443 = vrot.slane %v4441, 6
    %v4444 = vshll.u32 %v4339, 16
    %v4446 = vrot.slane %v4444, 7
    %v4447 = vor.u32 %v4443, %v4446
    %v4448 = vrot.slane %v4447, 2
    %v4450 = vshll.u32 %v4342, 16
    %v4452 = vrot.slane %v4450, 7
    %v4453 = vsel %vm4349, %v4448, %v4452
    %4455 = vst [vmem:[#allocation1] ss:$2 sm:$0xff] %v4362
    %s4457 = scalar_lea.vmem [#allocation1], 1
    %4458 = vst [vmem:[%s4457] ss:$2 sm:$0xff] %v4375
    %s4460 = scalar_lea.vmem [#allocation1], 16
    %4461 = vst [vmem:[%s4460] ss:$2 sm:$0xff] %v4388
    %s4463 = scalar_lea.vmem [#allocation1], 17
    %4464 = vst [vmem:[%s4463] ss:$2 sm:$0xff] %v4401
    %s4466 = scalar_lea.vmem [#allocation1], 32
    %4467 = vst [vmem:[%s4466] ss:$2 sm:$0xff] %v4414
    %s4469 = scalar_lea.vmem [#allocation1], 33
    %4470 = vst [vmem:[%s4469] ss:$2 sm:$0xff] %v4427
    %s4472 = scalar_lea.vmem [#allocation1], 48
    %4473 = vst [vmem:[%s4472] ss:$2 sm:$0xff] %v4440
    %s4475 = scalar_lea.vmem [#allocation1], 49
    %4476 = vst [vmem:[%s4475] ss:$2 sm:$0xff] %v4453
    %v4477 = vld.sshfl [vmem:[#allocation1] sm:$0xff pattern:$0x75643120]
    %v4478 = vld.sshfl [vmem:[#allocation1 + $0x10] sm:$0xff pattern:$0x75643120]
    %v4479 = vld.sshfl [vmem:[#allocation1 + $0x20] sm:$0xff pattern:$0x75643120]
    %v4480 = vld.sshfl [vmem:[#allocation1 + $0x30] sm:$0xff pattern:$0x75643120]
    %4485 = vst [vmem:[#allocation5 + $0x4] sm:$0xf] %v4477
    %4486 = vst [vmem:[#allocation5 + $0x28] sm:$0xf] %v4478
    %4487 = vst [vmem:[#allocation5 + $0x4c] sm:$0xf] %v4479
    %4488 = vst [vmem:[#allocation5 + $0x70] sm:$0xf] %v4480
    %v4489 = vld [vmem:[#allocation4] sm:$0x6]
    %v4490 = vld [vmem:[#allocation4 + $0x4] sm:$0x6]
    %v4491 = vld [vmem:[#allocation4 + $0x8] sm:$0x6]
    %v4492 = vld [vmem:[#allocation4 + $0xc] sm:$0x6]
    %v4493 = vld [vmem:[#allocation4 + $0x18] sm:$0x6]
    %v4494 = vld [vmem:[#allocation4 + $0x1c] sm:$0x6]
    %v4495 = vld [vmem:[#allocation4 + $0x20] sm:$0x6]
    %v4496 = vld [vmem:[#allocation4 + $0x24] sm:$0x6]
    %v4505 = vrot.slane %v4489, 2
    %v4506 = vrot.slane %v4490, 2
    %v4507 = vrot.slane %v4491, 2
    %v4508 = vrot.slane %v4492, 2
    %v4509 = vrot.slane %v4493, 2
    %v4510 = vrot.slane %v4494, 2
    %v4511 = vrot.slane %v4495, 2
    %v4512 = vrot.slane %v4496, 2
    %v4515 = vsel %vm3522, %v4489, %v4505
    %v4517 = vsel %vm4297, %v4489, %v4505
    %v4519 = vrot.slane %v4517, 2
    %v4522 = vsel %vm3522, %v4490, %v4506
    %v4524 = vsel %vm4297, %v4490, %v4506
    %v4526 = vrot.slane %v4524, 2
    %v4529 = vsel %vm3522, %v4491, %v4507
    %v4531 = vsel %vm4297, %v4491, %v4507
    %v4533 = vrot.slane %v4531, 2
    %v4536 = vsel %vm3522, %v4492, %v4508
    %v4538 = vsel %vm4297, %v4492, %v4508
    %v4540 = vrot.slane %v4538, 2
    %v4543 = vsel %vm3522, %v4493, %v4509
    %v4545 = vsel %vm4297, %v4493, %v4509
    %v4547 = vrot.slane %v4545, 2
    %v4550 = vsel %vm3522, %v4494, %v4510
    %v4552 = vsel %vm4297, %v4494, %v4510
    %v4554 = vrot.slane %v4552, 2
    %v4557 = vsel %vm3522, %v4495, %v4511
    %v4559 = vsel %vm4297, %v4495, %v4511
    %v4561 = vrot.slane %v4559, 2
    %v4564 = vsel %vm3522, %v4496, %v4512
    %v4566 = vsel %vm4297, %v4496, %v4512
    %v4568 = vrot.slane %v4566, 2
    %vm4569 = vmor %vm4009, %vm4035
    %vm4570 = vcmask 1044484
    %vm4571 = vmor %vm4569, %vm4570
    %vm4572 = vcmask 1046534
    %vm4573 = vmor %vm4571, %vm4572
    %v4574 = vrot.slane %v4515, 7
    %v4575 = vrot.slane %v4574, 2
    %v4576 = vrot.slane %v4519, 7
    %v4577 = vsel %vm4573, %v4575, %v4576
    %v4578 = vrot.slane %v4522, 7
    %v4579 = vrot.slane %v4578, 2
    %v4580 = vrot.slane %v4526, 7
    %v4581 = vsel %vm4573, %v4579, %v4580
    %v4582 = vrot.slane %v4529, 7
    %v4583 = vrot.slane %v4582, 2
    %v4584 = vrot.slane %v4533, 7
    %v4585 = vsel %vm4573, %v4583, %v4584
    %v4586 = vrot.slane %v4536, 7
    %v4587 = vrot.slane %v4586, 2
    %v4588 = vrot.slane %v4540, 7
    %v4589 = vsel %vm4573, %v4587, %v4588
    %v4590 = vrot.slane %v4543, 7
    %v4591 = vrot.slane %v4590, 2
    %v4592 = vrot.slane %v4547, 7
    %v4593 = vsel %vm4573, %v4591, %v4592
    %v4594 = vrot.slane %v4550, 7
    %v4595 = vrot.slane %v4594, 2
    %v4596 = vrot.slane %v4554, 7
    %v4597 = vsel %vm4573, %v4595, %v4596
    %v4598 = vrot.slane %v4557, 7
    %v4599 = vrot.slane %v4598, 2
    %v4600 = vrot.slane %v4561, 7
    %v4601 = vsel %vm4573, %v4599, %v4600
    %v4602 = vrot.slane %v4564, 7
    %v4603 = vrot.slane %v4602, 2
    %v4604 = vrot.slane %v4568, 7
    %v4605 = vsel %vm4573, %v4603, %v4604
    %4607 = vst [vmem:[#allocation1] ss:$2 sm:$0xff] %v4577
    %s4609 = scalar_lea.vmem [#allocation1], 1
    %4610 = vst [vmem:[%s4609] ss:$2 sm:$0xff] %v4581
    %s4612 = scalar_lea.vmem [#allocation1], 16
    %4613 = vst [vmem:[%s4612] ss:$2 sm:$0xff] %v4585
    %s4615 = scalar_lea.vmem [#allocation1], 17
    %4616 = vst [vmem:[%s4615] ss:$2 sm:$0xff] %v4589
    %s4618 = scalar_lea.vmem [#allocation1], 32
    %4619 = vst [vmem:[%s4618] ss:$2 sm:$0xff] %v4593
    %s4621 = scalar_lea.vmem [#allocation1], 33
    %4622 = vst [vmem:[%s4621] ss:$2 sm:$0xff] %v4597
    %s4624 = scalar_lea.vmem [#allocation1], 48
    %4625 = vst [vmem:[%s4624] ss:$2 sm:$0xff] %v4601
    %s4627 = scalar_lea.vmem [#allocation1], 49
    %4628 = vst [vmem:[%s4627] ss:$2 sm:$0xff] %v4605
    %v4629 = vld.sshfl [vmem:[#allocation1] sm:$0xff pattern:$0x75643120]
    %v4630 = vld.sshfl [vmem:[#allocation1 + $0x10] sm:$0xff pattern:$0x75643120]
    %v4631 = vld.sshfl [vmem:[#allocation1 + $0x20] sm:$0xff pattern:$0x75643120]
    %v4632 = vld.sshfl [vmem:[#allocation1 + $0x30] sm:$0xff pattern:$0x75643120]
    %4637 = vst [vmem:[#allocation5 + $0x8] sm:$0xf] %v4629
    %4638 = vst [vmem:[#allocation5 + $0x2c] sm:$0xf] %v4630
    %4639 = vst [vmem:[#allocation5 + $0x50] sm:$0xf] %v4631
    %4640 = vst [vmem:[#allocation5 + $0x74] sm:$0xf] %v4632
    %v4641 = vld [vmem:[%s4008] sm:$0x3]
    %v4642 = vld [vmem:[%s4008 + $0x4] sm:$0x3]
    %v4643 = vld [vmem:[%s4008 + $0x8] sm:$0x3]
    %v4644 = vld [vmem:[%s4008 + $0xc] sm:$0x3]
    %v4645 = vld [vmem:[%s4008 + $0x18] sm:$0x3]
    %v4646 = vld [vmem:[%s4008 + $0x1c] sm:$0x3]
    %v4647 = vld [vmem:[%s4008 + $0x20] sm:$0x3]
    %v4648 = vld [vmem:[%s4008 + $0x24] sm:$0x3]
    %4650 = vst [vmem:[#allocation1] ss:$2 sm:$0xff] %v4641
    %s4652 = scalar_lea.vmem [#allocation1], 1
    %4653 = vst [vmem:[%s4652] ss:$2 sm:$0xff] %v4642
    %s4655 = scalar_lea.vmem [#allocation1], 16
    %4656 = vst [vmem:[%s4655] ss:$2 sm:$0xff] %v4643
    %s4658 = scalar_lea.vmem [#allocation1], 17
    %4659 = vst [vmem:[%s4658] ss:$2 sm:$0xff] %v4644
    %s4661 = scalar_lea.vmem [#allocation1], 32
    %4662 = vst [vmem:[%s4661] ss:$2 sm:$0xff] %v4645
    %s4664 = scalar_lea.vmem [#allocation1], 33
    %4665 = vst [vmem:[%s4664] ss:$2 sm:$0xff] %v4646
    %s4667 = scalar_lea.vmem [#allocation1], 48
    %4668 = vst [vmem:[%s4667] ss:$2 sm:$0xff] %v4647
    %s4670 = scalar_lea.vmem [#allocation1], 49
    %4671 = vst [vmem:[%s4670] ss:$2 sm:$0xff] %v4648
    %v4672 = vld.sshfl [vmem:[#allocation1] sm:$0xff pattern:$0x75643120]
    %v4673 = vld.sshfl [vmem:[#allocation1 + $0x10] sm:$0xff pattern:$0x75643120]
    %v4674 = vld.sshfl [vmem:[#allocation1 + $0x20] sm:$0xff pattern:$0x75643120]
    %v4675 = vld.sshfl [vmem:[#allocation1 + $0x30] sm:$0xff pattern:$0x75643120]
    %4680 = vst [vmem:[#allocation5 + $0xc] sm:$0xf] %v4672
    %4681 = vst [vmem:[#allocation5 + $0x30] sm:$0xf] %v4673
    %4682 = vst [vmem:[#allocation5 + $0x54] sm:$0xf] %v4674
    %4683 = vst [vmem:[#allocation5 + $0x78] sm:$0xf] %v4675
    %v4684 = vld [vmem:[%s4008] sm:$0x7]
    %v4685 = vld [vmem:[%s4008 + $0x4] sm:$0x7]
    %v4686 = vld [vmem:[%s4008 + $0x8] sm:$0x7]
    %v4687 = vld [vmem:[%s4008 + $0xc] sm:$0x7]
    %v4688 = vld [vmem:[%s4008 + $0x18] sm:$0x7]
    %v4689 = vld [vmem:[%s4008 + $0x1c] sm:$0x7]
    %v4690 = vld [vmem:[%s4008 + $0x20] sm:$0x7]
    %v4691 = vld [vmem:[%s4008 + $0x24] sm:$0x7]
    %v4700 = vrot.slane %v4684, 2
    %v4701 = vrot.slane %v4685, 2
    %v4702 = vrot.slane %v4686, 2
    %v4703 = vrot.slane %v4687, 2
    %v4704 = vrot.slane %v4688, 2
    %v4705 = vrot.slane %v4689, 2
    %v4706 = vrot.slane %v4690, 2
    %v4707 = vrot.slane %v4691, 2
    %v4710 = vsel %vm3522, %v4684, %v4700
    %v4711 = vsel %vm4297, %v4684, %v4700
    %v4713 = vrot.slane %v4711, 2
    %v4716 = vsel %vm3522, %v4685, %v4701
    %v4717 = vsel %vm4297, %v4685, %v4701
    %v4719 = vrot.slane %v4717, 2
    %v4722 = vsel %vm3522, %v4686, %v4702
    %v4723 = vsel %vm4297, %v4686, %v4702
    %v4725 = vrot.slane %v4723, 2
    %v4728 = vsel %vm3522, %v4687, %v4703
    %v4729 = vsel %vm4297, %v4687, %v4703
    %v4731 = vrot.slane %v4729, 2
    %v4734 = vsel %vm3522, %v4688, %v4704
    %v4735 = vsel %vm4297, %v4688, %v4704
    %v4737 = vrot.slane %v4735, 2
    %v4740 = vsel %vm3522, %v4689, %v4705
    %v4741 = vsel %vm4297, %v4689, %v4705
    %v4743 = vrot.slane %v4741, 2
    %v4746 = vsel %vm3522, %v4690, %v4706
    %v4747 = vsel %vm4297, %v4690, %v4706
    %v4749 = vrot.slane %v4747, 2
    %v4752 = vsel %vm3522, %v4691, %v4707
    %v4753 = vsel %vm4297, %v4691, %v4707
    %v4755 = vrot.slane %v4753, 2
    %v4756 = vshrl.u32 %v4710, 16
    %v4758 = vrot.slane %v4756, 6
    %v4759 = vshll.u32 %v4710, 16
    %v4761 = vrot.slane %v4759, 7
    %v4762 = vor.u32 %v4758, %v4761
    %v4763 = vrot.slane %v4762, 2
    %v4765 = vshll.u32 %v4713, 16
    %v4767 = vrot.slane %v4765, 7
    %v4768 = vsel %vm4349, %v4763, %v4767
    %v4769 = vshrl.u32 %v4716, 16
    %v4771 = vrot.slane %v4769, 6
    %v4772 = vshll.u32 %v4716, 16
    %v4774 = vrot.slane %v4772, 7
    %v4775 = vor.u32 %v4771, %v4774
    %v4776 = vrot.slane %v4775, 2
    %v4778 = vshll.u32 %v4719, 16
    %v4780 = vrot.slane %v4778, 7
    %v4781 = vsel %vm4349, %v4776, %v4780
    %v4782 = vshrl.u32 %v4722, 16
    %v4784 = vrot.slane %v4782, 6
    %v4785 = vshll.u32 %v4722, 16
    %v4787 = vrot.slane %v4785, 7
    %v4788 = vor.u32 %v4784, %v4787
    %v4789 = vrot.slane %v4788, 2
    %v4791 = vshll.u32 %v4725, 16
    %v4793 = vrot.slane %v4791, 7
    %v4794 = vsel %vm4349, %v4789, %v4793
    %v4795 = vshrl.u32 %v4728, 16
    %v4797 = vrot.slane %v4795, 6
    %v4798 = vshll.u32 %v4728, 16
    %v4800 = vrot.slane %v4798, 7
    %v4801 = vor.u32 %v4797, %v4800
    %v4802 = vrot.slane %v4801, 2
    %v4804 = vshll.u32 %v4731, 16
    %v4806 = vrot.slane %v4804, 7
    %v4807 = vsel %vm4349, %v4802, %v4806
    %v4808 = vshrl.u32 %v4734, 16
    %v4810 = vrot.slane %v4808, 6
    %v4811 = vshll.u32 %v4734, 16
    %v4813 = vrot.slane %v4811, 7
    %v4814 = vor.u32 %v4810, %v4813
    %v4815 = vrot.slane %v4814, 2
    %v4817 = vshll.u32 %v4737, 16
    %v4819 = vrot.slane %v4817, 7
    %v4820 = vsel %vm4349, %v4815, %v4819
    %v4821 = vshrl.u32 %v4740, 16
    %v4823 = vrot.slane %v4821, 6
    %v4824 = vshll.u32 %v4740, 16
    %v4826 = vrot.slane %v4824, 7
    %v4827 = vor.u32 %v4823, %v4826
    %v4828 = vrot.slane %v4827, 2
    %v4830 = vshll.u32 %v4743, 16
    %v4832 = vrot.slane %v4830, 7
    %v4833 = vsel %vm4349, %v4828, %v4832
    %v4834 = vshrl.u32 %v4746, 16
    %v4836 = vrot.slane %v4834, 6
    %v4837 = vshll.u32 %v4746, 16
    %v4839 = vrot.slane %v4837, 7
    %v4840 = vor.u32 %v4836, %v4839
    %v4841 = vrot.slane %v4840, 2
    %v4843 = vshll.u32 %v4749, 16
    %v4845 = vrot.slane %v4843, 7
    %v4846 = vsel %vm4349, %v4841, %v4845
    %v4847 = vshrl.u32 %v4752, 16
    %v4849 = vrot.slane %v4847, 6
    %v4850 = vshll.u32 %v4752, 16
    %v4852 = vrot.slane %v4850, 7
    %v4853 = vor.u32 %v4849, %v4852
    %v4854 = vrot.slane %v4853, 2
    %v4856 = vshll.u32 %v4755, 16
    %v4858 = vrot.slane %v4856, 7
    %v4859 = vsel %vm4349, %v4854, %v4858
    %4861 = vst [vmem:[#allocation1] ss:$2 sm:$0xff] %v4768
    %s4863 = scalar_lea.vmem [#allocation1], 1
    %4864 = vst [vmem:[%s4863] ss:$2 sm:$0xff] %v4781
    %s4866 = scalar_lea.vmem [#allocation1], 16
    %4867 = vst [vmem:[%s4866] ss:$2 sm:$0xff] %v4794
    %s4869 = scalar_lea.vmem [#allocation1], 17
    %4870 = vst [vmem:[%s4869] ss:$2 sm:$0xff] %v4807
    %s4872 = scalar_lea.vmem [#allocation1], 32
    %4873 = vst [vmem:[%s4872] ss:$2 sm:$0xff] %v4820
    %s4875 = scalar_lea.vmem [#allocation1], 33
    %4876 = vst [vmem:[%s4875] ss:$2 sm:$0xff] %v4833
    %s4878 = scalar_lea.vmem [#allocation1], 48
    %4879 = vst [vmem:[%s4878] ss:$2 sm:$0xff] %v4846
    %s4881 = scalar_lea.vmem [#allocation1], 49
    %4882 = vst [vmem:[%s4881] ss:$2 sm:$0xff] %v4859
    %v4883 = vld.sshfl [vmem:[#allocation1] sm:$0xff pattern:$0x75643120]
    %v4884 = vld.sshfl [vmem:[#allocation1 + $0x10] sm:$0xff pattern:$0x75643120]
    %v4885 = vld.sshfl [vmem:[#allocation1 + $0x20] sm:$0xff pattern:$0x75643120]
    %v4886 = vld.sshfl [vmem:[#allocation1 + $0x30] sm:$0xff pattern:$0x75643120]
    %4891 = vst [vmem:[#allocation5 + $0x10] sm:$0xf] %v4883
    %4892 = vst [vmem:[#allocation5 + $0x34] sm:$0xf] %v4884
    %4893 = vst [vmem:[#allocation5 + $0x58] sm:$0xf] %v4885
    %4894 = vst [vmem:[#allocation5 + $0x7c] sm:$0xf] %v4886
    %v4895 = vld [vmem:[%s4008] sm:$0x6]
    %v4896 = vld [vmem:[%s4008 + $0x4] sm:$0x6]
    %v4897 = vld [vmem:[%s4008 + $0x8] sm:$0x6]
    %v4898 = vld [vmem:[%s4008 + $0xc] sm:$0x6]
    %v4899 = vld [vmem:[%s4008 + $0x18] sm:$0x6]
    %v4900 = vld [vmem:[%s4008 + $0x1c] sm:$0x6]
    %v4901 = vld [vmem:[%s4008 + $0x20] sm:$0x6]
    %v4902 = vld [vmem:[%s4008 + $0x24] sm:$0x6]
    %v4911 = vrot.slane %v4895, 2
    %v4912 = vrot.slane %v4896, 2
    %v4913 = vrot.slane %v4897, 2
    %v4914 = vrot.slane %v4898, 2
    %v4915 = vrot.slane %v4899, 2
    %v4916 = vrot.slane %v4900, 2
    %v4917 = vrot.slane %v4901, 2
    %v4918 = vrot.slane %v4902, 2
    %v4921 = vsel %vm3522, %v4895, %v4911
    %v4923 = vsel %vm4297, %v4895, %v4911
    %v4925 = vrot.slane %v4923, 2
    %v4928 = vsel %vm3522, %v4896, %v4912
    %v4930 = vsel %vm4297, %v4896, %v4912
    %v4932 = vrot.slane %v4930, 2
    %v4935 = vsel %vm3522, %v4897, %v4913
    %v4937 = vsel %vm4297, %v4897, %v4913
    %v4939 = vrot.slane %v4937, 2
    %v4942 = vsel %vm3522, %v4898, %v4914
    %v4944 = vsel %vm4297, %v4898, %v4914
    %v4946 = vrot.slane %v4944, 2
    %v4949 = vsel %vm3522, %v4899, %v4915
    %v4951 = vsel %vm4297, %v4899, %v4915
    %v4953 = vrot.slane %v4951, 2
    %v4956 = vsel %vm3522, %v4900, %v4916
    %v4958 = vsel %vm4297, %v4900, %v4916
    %v4960 = vrot.slane %v4958, 2
    %v4963 = vsel %vm3522, %v4901, %v4917
    %v4965 = vsel %vm4297, %v4901, %v4917
    %v4967 = vrot.slane %v4965, 2
    %v4970 = vsel %vm3522, %v4902, %v4918
    %v4972 = vsel %vm4297, %v4902, %v4918
    %v4974 = vrot.slane %v4972, 2
    %v4975 = vrot.slane %v4921, 7
    %v4976 = vrot.slane %v4975, 2
    %v4977 = vrot.slane %v4925, 7
    %v4978 = vsel %vm4573, %v4976, %v4977
    %v4979 = vrot.slane %v4928, 7
    %v4980 = vrot.slane %v4979, 2
    %v4981 = vrot.slane %v4932, 7
    %v4982 = vsel %vm4573, %v4980, %v4981
    %v4983 = vrot.slane %v4935, 7
    %v4984 = vrot.slane %v4983, 2
    %v4985 = vrot.slane %v4939, 7
    %v4986 = vsel %vm4573, %v4984, %v4985
    %v4987 = vrot.slane %v4942, 7
    %v4988 = vrot.slane %v4987, 2
    %v4989 = vrot.slane %v4946, 7
    %v4990 = vsel %vm4573, %v4988, %v4989
    %v4991 = vrot.slane %v4949, 7
    %v4992 = vrot.slane %v4991, 2
    %v4993 = vrot.slane %v4953, 7
    %v4994 = vsel %vm4573, %v4992, %v4993
    %v4995 = vrot.slane %v4956, 7
    %v4996 = vrot.slane %v4995, 2
    %v4997 = vrot.slane %v4960, 7
    %v4998 = vsel %vm4573, %v4996, %v4997
    %v4999 = vrot.slane %v4963, 7
    %v5000 = vrot.slane %v4999, 2
    %v5001 = vrot.slane %v4967, 7
    %v5002 = vsel %vm4573, %v5000, %v5001
    %v5003 = vrot.slane %v4970, 7
    %v5004 = vrot.slane %v5003, 2
    %v5005 = vrot.slane %v4974, 7
    %v5006 = vsel %vm4573, %v5004, %v5005
    %5008 = vst [vmem:[#allocation1] ss:$2 sm:$0xff] %v4978
    %s5010 = scalar_lea.vmem [#allocation1], 1
    %5011 = vst [vmem:[%s5010] ss:$2 sm:$0xff] %v4982
    %s5013 = scalar_lea.vmem [#allocation1], 16
    %5014 = vst [vmem:[%s5013] ss:$2 sm:$0xff] %v4986
    %s5016 = scalar_lea.vmem [#allocation1], 17
    %5017 = vst [vmem:[%s5016] ss:$2 sm:$0xff] %v4990
    %s5019 = scalar_lea.vmem [#allocation1], 32
    %5020 = vst [vmem:[%s5019] ss:$2 sm:$0xff] %v4994
    %s5022 = scalar_lea.vmem [#allocation1], 33
    %5023 = vst [vmem:[%s5022] ss:$2 sm:$0xff] %v4998
    %s5025 = scalar_lea.vmem [#allocation1], 48
    %5026 = vst [vmem:[%s5025] ss:$2 sm:$0xff] %v5002
    %s5028 = scalar_lea.vmem [#allocation1], 49
    %5029 = vst [vmem:[%s5028] ss:$2 sm:$0xff] %v5006
    %v5030 = vld.sshfl [vmem:[#allocation1] sm:$0xff pattern:$0x75643120]
    %v5031 = vld.sshfl [vmem:[#allocation1 + $0x10] sm:$0xff pattern:$0x75643120]
    %v5032 = vld.sshfl [vmem:[#allocation1 + $0x20] sm:$0xff pattern:$0x75643120]
    %v5033 = vld.sshfl [vmem:[#allocation1 + $0x30] sm:$0xff pattern:$0x75643120]
    %5038 = vst [vmem:[#allocation5 + $0x14] sm:$0xf] %v5030
    %5039 = vst [vmem:[#allocation5 + $0x38] sm:$0xf] %v5031
    %5040 = vst [vmem:[#allocation5 + $0x5c] sm:$0xf] %v5032
    %5041 = vst [vmem:[#allocation5 + $0x80] sm:$0xf] %v5033
    %s5042 = scalar_lea.vmem [#allocation4], 8
    %v5043 = vld [vmem:[%s5042] sm:$0x3]
    %v5044 = vld [vmem:[%s5042 + $0x4] sm:$0x3]
    %v5045 = vld [vmem:[%s5042 + $0x8] sm:$0x3]
    %v5046 = vld [vmem:[%s5042 + $0xc] sm:$0x3]
    %v5047 = vld [vmem:[%s5042 + $0x18] sm:$0x3]
    %v5048 = vld [vmem:[%s5042 + $0x1c] sm:$0x3]
    %v5049 = vld [vmem:[%s5042 + $0x20] sm:$0x3]
    %v5050 = vld [vmem:[%s5042 + $0x24] sm:$0x3]
    %5052 = vst [vmem:[#allocation1] ss:$2 sm:$0xff] %v5043
    %s5054 = scalar_lea.vmem [#allocation1], 1
    %5055 = vst [vmem:[%s5054] ss:$2 sm:$0xff] %v5044
    %s5057 = scalar_lea.vmem [#allocation1], 16
    %5058 = vst [vmem:[%s5057] ss:$2 sm:$0xff] %v5045
    %s5060 = scalar_lea.vmem [#allocation1], 17
    %5061 = vst [vmem:[%s5060] ss:$2 sm:$0xff] %v5046
    %s5063 = scalar_lea.vmem [#allocation1], 32
    %5064 = vst [vmem:[%s5063] ss:$2 sm:$0xff] %v5047
    %s5066 = scalar_lea.vmem [#allocation1], 33
    %5067 = vst [vmem:[%s5066] ss:$2 sm:$0xff] %v5048
    %s5069 = scalar_lea.vmem [#allocation1], 48
    %5070 = vst [vmem:[%s5069] ss:$2 sm:$0xff] %v5049
    %s5072 = scalar_lea.vmem [#allocation1], 49
    %5073 = vst [vmem:[%s5072] ss:$2 sm:$0xff] %v5050
    %v5074 = vld.sshfl [vmem:[#allocation1] sm:$0xff pattern:$0x75643120]
    %v5075 = vld.sshfl [vmem:[#allocation1 + $0x10] sm:$0xff pattern:$0x75643120]
    %v5076 = vld.sshfl [vmem:[#allocation1 + $0x20] sm:$0xff pattern:$0x75643120]
    %v5077 = vld.sshfl [vmem:[#allocation1 + $0x30] sm:$0xff pattern:$0x75643120]
    %5082 = vst [vmem:[#allocation5 + $0x18] sm:$0xf] %v5074
    %5083 = vst [vmem:[#allocation5 + $0x3c] sm:$0xf] %v5075
    %5084 = vst [vmem:[#allocation5 + $0x60] sm:$0xf] %v5076
    %5085 = vst [vmem:[#allocation5 + $0x84] sm:$0xf] %v5077
    %v5086 = vld [vmem:[%s5042] sm:$0x7]
    %v5087 = vld [vmem:[%s5042 + $0x4] sm:$0x7]
    %v5088 = vld [vmem:[%s5042 + $0x8] sm:$0x7]
    %v5089 = vld [vmem:[%s5042 + $0xc] sm:$0x7]
    %v5090 = vld [vmem:[%s5042 + $0x18] sm:$0x7]
    %v5091 = vld [vmem:[%s5042 + $0x1c] sm:$0x7]
    %v5092 = vld [vmem:[%s5042 + $0x20] sm:$0x7]
    %v5093 = vld [vmem:[%s5042 + $0x24] sm:$0x7]
    %v5102 = vrot.slane %v5086, 2
    %v5103 = vrot.slane %v5087, 2
    %v5104 = vrot.slane %v5088, 2
    %v5105 = vrot.slane %v5089, 2
    %v5106 = vrot.slane %v5090, 2
    %v5107 = vrot.slane %v5091, 2
    %v5108 = vrot.slane %v5092, 2
    %v5109 = vrot.slane %v5093, 2
    %v5112 = vsel %vm3522, %v5086, %v5102
    %v5113 = vsel %vm4297, %v5086, %v5102
    %v5115 = vrot.slane %v5113, 2
    %v5118 = vsel %vm3522, %v5087, %v5103
    %v5119 = vsel %vm4297, %v5087, %v5103
    %v5121 = vrot.slane %v5119, 2
    %v5124 = vsel %vm3522, %v5088, %v5104
    %v5125 = vsel %vm4297, %v5088, %v5104
    %v5127 = vrot.slane %v5125, 2
    %v5130 = vsel %vm3522, %v5089, %v5105
    %v5131 = vsel %vm4297, %v5089, %v5105
    %v5133 = vrot.slane %v5131, 2
    %v5136 = vsel %vm3522, %v5090, %v5106
    %v5137 = vsel %vm4297, %v5090, %v5106
    %v5139 = vrot.slane %v5137, 2
    %v5142 = vsel %vm3522, %v5091, %v5107
    %v5143 = vsel %vm4297, %v5091, %v5107
    %v5145 = vrot.slane %v5143, 2
    %v5148 = vsel %vm3522, %v5092, %v5108
    %v5149 = vsel %vm4297, %v5092, %v5108
    %v5151 = vrot.slane %v5149, 2
    %v5154 = vsel %vm3522, %v5093, %v5109
    %v5155 = vsel %vm4297, %v5093, %v5109
    %v5157 = vrot.slane %v5155, 2
    %v5158 = vshrl.u32 %v5112, 16
    %v5160 = vrot.slane %v5158, 6
    %v5161 = vshll.u32 %v5112, 16
    %v5163 = vrot.slane %v5161, 7
    %v5164 = vor.u32 %v5160, %v5163
    %v5165 = vrot.slane %v5164, 2
    %v5167 = vshll.u32 %v5115, 16
    %v5169 = vrot.slane %v5167, 7
    %v5170 = vsel %vm4349, %v5165, %v5169
    %v5171 = vshrl.u32 %v5118, 16
    %v5173 = vrot.slane %v5171, 6
    %v5174 = vshll.u32 %v5118, 16
    %v5176 = vrot.slane %v5174, 7
    %v5177 = vor.u32 %v5173, %v5176
    %v5178 = vrot.slane %v5177, 2
    %v5180 = vshll.u32 %v5121, 16
    %v5182 = vrot.slane %v5180, 7
    %v5183 = vsel %vm4349, %v5178, %v5182
    %v5184 = vshrl.u32 %v5124, 16
    %v5186 = vrot.slane %v5184, 6
    %v5187 = vshll.u32 %v5124, 16
    %v5189 = vrot.slane %v5187, 7
    %v5190 = vor.u32 %v5186, %v5189
    %v5191 = vrot.slane %v5190, 2
    %v5193 = vshll.u32 %v5127, 16
    %v5195 = vrot.slane %v5193, 7
    %v5196 = vsel %vm4349, %v5191, %v5195
    %v5197 = vshrl.u32 %v5130, 16
    %v5199 = vrot.slane %v5197, 6
    %v5200 = vshll.u32 %v5130, 16
    %v5202 = vrot.slane %v5200, 7
    %v5203 = vor.u32 %v5199, %v5202
    %v5204 = vrot.slane %v5203, 2
    %v5206 = vshll.u32 %v5133, 16
    %v5208 = vrot.slane %v5206, 7
    %v5209 = vsel %vm4349, %v5204, %v5208
    %v5210 = vshrl.u32 %v5136, 16
    %v5212 = vrot.slane %v5210, 6
    %v5213 = vshll.u32 %v5136, 16
    %v5215 = vrot.slane %v5213, 7
    %v5216 = vor.u32 %v5212, %v5215
    %v5217 = vrot.slane %v5216, 2
    %v5219 = vshll.u32 %v5139, 16
    %v5221 = vrot.slane %v5219, 7
    %v5222 = vsel %vm4349, %v5217, %v5221
    %v5223 = vshrl.u32 %v5142, 16
    %v5225 = vrot.slane %v5223, 6
    %v5226 = vshll.u32 %v5142, 16
    %v5228 = vrot.slane %v5226, 7
    %v5229 = vor.u32 %v5225, %v5228
    %v5230 = vrot.slane %v5229, 2
    %v5232 = vshll.u32 %v5145, 16
    %v5234 = vrot.slane %v5232, 7
    %v5235 = vsel %vm4349, %v5230, %v5234
    %v5236 = vshrl.u32 %v5148, 16
    %v5238 = vrot.slane %v5236, 6
    %v5239 = vshll.u32 %v5148, 16
    %v5241 = vrot.slane %v5239, 7
    %v5242 = vor.u32 %v5238, %v5241
    %v5243 = vrot.slane %v5242, 2
    %v5245 = vshll.u32 %v5151, 16
    %v5247 = vrot.slane %v5245, 7
    %v5248 = vsel %vm4349, %v5243, %v5247
    %v5249 = vshrl.u32 %v5154, 16
    %v5251 = vrot.slane %v5249, 6
    %v5252 = vshll.u32 %v5154, 16
    %v5254 = vrot.slane %v5252, 7
    %v5255 = vor.u32 %v5251, %v5254
    %v5256 = vrot.slane %v5255, 2
    %v5258 = vshll.u32 %v5157, 16
    %v5260 = vrot.slane %v5258, 7
    %v5261 = vsel %vm4349, %v5256, %v5260
    %5263 = vst [vmem:[#allocation1] ss:$2 sm:$0xff] %v5170
    %s5265 = scalar_lea.vmem [#allocation1], 1
    %5266 = vst [vmem:[%s5265] ss:$2 sm:$0xff] %v5183
    %s5268 = scalar_lea.vmem [#allocation1], 16
    %5269 = vst [vmem:[%s5268] ss:$2 sm:$0xff] %v5196
    %s5271 = scalar_lea.vmem [#allocation1], 17
    %5272 = vst [vmem:[%s5271] ss:$2 sm:$0xff] %v5209
    %s5274 = scalar_lea.vmem [#allocation1], 32
    %5275 = vst [vmem:[%s5274] ss:$2 sm:$0xff] %v5222
    %s5277 = scalar_lea.vmem [#allocation1], 33
    %5278 = vst [vmem:[%s5277] ss:$2 sm:$0xff] %v5235
    %s5280 = scalar_lea.vmem [#allocation1], 48
    %5281 = vst [vmem:[%s5280] ss:$2 sm:$0xff] %v5248
    %s5283 = scalar_lea.vmem [#allocation1], 49
    %5284 = vst [vmem:[%s5283] ss:$2 sm:$0xff] %v5261
    %v5285 = vld.sshfl [vmem:[#allocation1] sm:$0xff pattern:$0x75643120]
    %v5286 = vld.sshfl [vmem:[#allocation1 + $0x10] sm:$0xff pattern:$0x75643120]
    %v5287 = vld.sshfl [vmem:[#allocation1 + $0x20] sm:$0xff pattern:$0x75643120]
    %v5288 = vld.sshfl [vmem:[#allocation1 + $0x30] sm:$0xff pattern:$0x75643120]
    %5293 = vst [vmem:[#allocation5 + $0x1c] sm:$0xf] %v5285
    %5294 = vst [vmem:[#allocation5 + $0x40] sm:$0xf] %v5286
    %5295 = vst [vmem:[#allocation5 + $0x64] sm:$0xf] %v5287
    %5296 = vst [vmem:[#allocation5 + $0x88] sm:$0xf] %v5288
    %v5297 = vld [vmem:[%s5042] sm:$0x6]
    %v5298 = vld [vmem:[%s5042 + $0x4] sm:$0x6]
    %v5299 = vld [vmem:[%s5042 + $0x8] sm:$0x6]
    %v5300 = vld [vmem:[%s5042 + $0xc] sm:$0x6]
    %v5301 = vld [vmem:[%s5042 + $0x18] sm:$0x6]
    %v5302 = vld [vmem:[%s5042 + $0x1c] sm:$0x6]
    %v5303 = vld [vmem:[%s5042 + $0x20] sm:$0x6]
    %v5304 = vld [vmem:[%s5042 + $0x24] sm:$0x6]
    %v5313 = vrot.slane %v5297, 2
    %v5314 = vrot.slane %v5298, 2
    %v5315 = vrot.slane %v5299, 2
    %v5316 = vrot.slane %v5300, 2
    %v5317 = vrot.slane %v5301, 2
    %v5318 = vrot.slane %v5302, 2
    %v5319 = vrot.slane %v5303, 2
    %v5320 = vrot.slane %v5304, 2
    %v5323 = vsel %vm3522, %v5297, %v5313
    %v5325 = vsel %vm4297, %v5297, %v5313
    %v5327 = vrot.slane %v5325, 2
    %v5330 = vsel %vm3522, %v5298, %v5314
    %v5332 = vsel %vm4297, %v5298, %v5314
    %v5334 = vrot.slane %v5332, 2
    %v5337 = vsel %vm3522, %v5299, %v5315
    %v5339 = vsel %vm4297, %v5299, %v5315
    %v5341 = vrot.slane %v5339, 2
    %v5344 = vsel %vm3522, %v5300, %v5316
    %v5346 = vsel %vm4297, %v5300, %v5316
    %v5348 = vrot.slane %v5346, 2
    %v5351 = vsel %vm3522, %v5301, %v5317
    %v5353 = vsel %vm4297, %v5301, %v5317
    %v5355 = vrot.slane %v5353, 2
    %v5358 = vsel %vm3522, %v5302, %v5318
    %v5360 = vsel %vm4297, %v5302, %v5318
    %v5362 = vrot.slane %v5360, 2
    %v5365 = vsel %vm3522, %v5303, %v5319
    %v5367 = vsel %vm4297, %v5303, %v5319
    %v5369 = vrot.slane %v5367, 2
    %v5372 = vsel %vm3522, %v5304, %v5320
    %v5374 = vsel %vm4297, %v5304, %v5320
    %v5376 = vrot.slane %v5374, 2
    %v5377 = vrot.slane %v5323, 7
    %v5378 = vrot.slane %v5377, 2
    %v5379 = vrot.slane %v5327, 7
    %v5380 = vsel %vm4573, %v5378, %v5379
    %v5381 = vrot.slane %v5330, 7
    %v5382 = vrot.slane %v5381, 2
    %v5383 = vrot.slane %v5334, 7
    %v5384 = vsel %vm4573, %v5382, %v5383
    %v5385 = vrot.slane %v5337, 7
    %v5386 = vrot.slane %v5385, 2
    %v5387 = vrot.slane %v5341, 7
    %v5388 = vsel %vm4573, %v5386, %v5387
    %v5389 = vrot.slane %v5344, 7
    %v5390 = vrot.slane %v5389, 2
    %v5391 = vrot.slane %v5348, 7
    %v5392 = vsel %vm4573, %v5390, %v5391
    %v5393 = vrot.slane %v5351, 7
    %v5394 = vrot.slane %v5393, 2
    %v5395 = vrot.slane %v5355, 7
    %v5396 = vsel %vm4573, %v5394, %v5395
    %v5397 = vrot.slane %v5358, 7
    %v5398 = vrot.slane %v5397, 2
    %v5399 = vrot.slane %v5362, 7
    %v5400 = vsel %vm4573, %v5398, %v5399
    %v5401 = vrot.slane %v5365, 7
    %v5402 = vrot.slane %v5401, 2
    %v5403 = vrot.slane %v5369, 7
    %v5404 = vsel %vm4573, %v5402, %v5403
    %v5405 = vrot.slane %v5372, 7
    %v5406 = vrot.slane %v5405, 2
    %v5407 = vrot.slane %v5376, 7
    %v5408 = vsel %vm4573, %v5406, %v5407
    %5410 = vst [vmem:[#allocation1] ss:$2 sm:$0xff] %v5380
    %s5412 = scalar_lea.vmem [#allocation1], 1
    %5413 = vst [vmem:[%s5412] ss:$2 sm:$0xff] %v5384
    %s5415 = scalar_lea.vmem [#allocation1], 16
    %5416 = vst [vmem:[%s5415] ss:$2 sm:$0xff] %v5388
    %s5418 = scalar_lea.vmem [#allocation1], 17
    %5419 = vst [vmem:[%s5418] ss:$2 sm:$0xff] %v5392
    %s5421 = scalar_lea.vmem [#allocation1], 32
    %5422 = vst [vmem:[%s5421] ss:$2 sm:$0xff] %v5396
    %s5424 = scalar_lea.vmem [#allocation1], 33
    %5425 = vst [vmem:[%s5424] ss:$2 sm:$0xff] %v5400
    %s5427 = scalar_lea.vmem [#allocation1], 48
    %5428 = vst [vmem:[%s5427] ss:$2 sm:$0xff] %v5404
    %s5430 = scalar_lea.vmem [#allocation1], 49
    %5431 = vst [vmem:[%s5430] ss:$2 sm:$0xff] %v5408
    %v5432 = vld.sshfl [vmem:[#allocation1] sm:$0xff pattern:$0x75643120]
    %v5433 = vld.sshfl [vmem:[#allocation1 + $0x10] sm:$0xff pattern:$0x75643120]
    %v5434 = vld.sshfl [vmem:[#allocation1 + $0x20] sm:$0xff pattern:$0x75643120]
    %v5435 = vld.sshfl [vmem:[#allocation1 + $0x30] sm:$0xff pattern:$0x75643120]
    %5440 = vst [vmem:[#allocation5 + $0x20] sm:$0xf] %v5432
    %5441 = vst [vmem:[#allocation5 + $0x44] sm:$0xf] %v5433
    %5442 = vst [vmem:[#allocation5 + $0x68] sm:$0xf] %v5434
    %5443 = vst [vmem:[#allocation5 + $0x8c] sm:$0xf] %v5435
    %v5444 = vld [vmem:[#allocation5] sm:$0xff]
    %v5445 = vld [vmem:[#allocation5 + $0x8] sm:$0xff]
    %v5446 = vld [vmem:[#allocation5 + $0x10] sm:$0xff]
    %v5447 = vld [vmem:[#allocation5 + $0x18] sm:$0xff]
    %v5448 = vld [vmem:[#allocation5 + $0x20] sm:$0xf]
    %v5449 = vld [vmem:[#allocation5 + $0x24] sm:$0xff]
    %v5450 = vld [vmem:[#allocation5 + $0x2c] sm:$0xff]
    %v5451 = vld [vmem:[#allocation5 + $0x34] sm:$0xff]
    %v5452 = vld [vmem:[#allocation5 + $0x3c] sm:$0xff]
    %v5453 = vld [vmem:[#allocation5 + $0x44] sm:$0xf]
    %v5454 = vld [vmem:[#allocation5 + $0x48] sm:$0xff]
    %v5455 = vld [vmem:[#allocation5 + $0x50] sm:$0xff]
    %v5456 = vld [vmem:[#allocation5 + $0x58] sm:$0xff]
    %v5457 = vld [vmem:[#allocation5 + $0x60] sm:$0xff]
    %v5458 = vld [vmem:[#allocation5 + $0x68] sm:$0xf]
    %v5459 = vld [vmem:[#allocation5 + $0x6c] sm:$0xff]
    %v5460 = vld [vmem:[#allocation5 + $0x74] sm:$0xff]
    %v5461 = vld [vmem:[#allocation5 + $0x7c] sm:$0xff]
    %v5462 = vld [vmem:[#allocation5 + $0x84] sm:$0xff]
    %v5463 = vld [vmem:[#allocation5 + $0x8c] sm:$0xf]
    %v5464 = vld [vmem:[#allocation16] sm:$0xff]
    %v5465 = vld [vmem:[#allocation16 + $0x8] sm:$0xff]
    %v5466 = vld [vmem:[#allocation16 + $0x10] sm:$0xff]
    %v5467 = vld [vmem:[#allocation16 + $0x18] sm:$0xff]
    %v5468 = vld [vmem:[#allocation16 + $0x20] sm:$0xff]
    %v5469 = vld [vmem:[#allocation16 + $0x28] sm:$0xff]
    %v5470 = vld [vmem:[#allocation16 + $0x30] sm:$0xff]
    %v5471 = vld [vmem:[#allocation16 + $0x38] sm:$0xff]
    %v5472 = vld [vmem:[#allocation16 + $0x40] sm:$0xff]
    %v5473 = vld [vmem:[#allocation16 + $0x48] sm:$0xff]
    %v5474 = vld [vmem:[#allocation16 + $0x50] sm:$0xff]
    %v5475 = vld [vmem:[#allocation16 + $0x58] sm:$0xff]
    %v5476 = vld [vmem:[#allocation16 + $0x60] sm:$0xff]
    %v5477 = vld [vmem:[#allocation16 + $0x68] sm:$0xff]
    %v5478 = vld [vmem:[#allocation16 + $0x70] sm:$0xff]
    %v5479 = vld [vmem:[#allocation16 + $0x78] sm:$0xff]
    %v5480 = vld [vmem:[#allocation16 + $0x80] sm:$0xff]
    %v5481 = vld [vmem:[#allocation16 + $0x88] sm:$0xff]
    %v5482 = vld [vmem:[#allocation16 + $0x90] sm:$0xff]
    %v5483 = vld [vmem:[#allocation16 + $0x98] sm:$0xff]
    %v5484 = vld [vmem:[#allocation16 + $0xa0] sm:$0xff]
    %v5485 = vld [vmem:[#allocation16 + $0xa8] sm:$0xff]
    %v5486 = vld [vmem:[#allocation16 + $0xb0] sm:$0xff]
    %v5487 = vld [vmem:[#allocation16 + $0xb8] sm:$0xff]
    %v5488 = vld [vmem:[#allocation16 + $0xc0] sm:$0xff]
    %v5489 = vld [vmem:[#allocation16 + $0xc8] sm:$0xff]
    %v5490 = vld [vmem:[#allocation16 + $0xd0] sm:$0xff]
    %v5491 = vld [vmem:[#allocation16 + $0xd8] sm:$0xff]
    %v5492 = vld [vmem:[#allocation16 + $0xe0] sm:$0xff]
    %v5493 = vld [vmem:[#allocation16 + $0xe8] sm:$0xff]
    %v5494 = vld [vmem:[#allocation16 + $0xf0] sm:$0xff]
    %v5495 = vld [vmem:[#allocation16 + $0xf8] sm:$0xff]
    %v5496 = vld [vmem:[#allocation16 + $0x100] sm:$0xff]
    %v5497 = vld [vmem:[#allocation16 + $0x108] sm:$0xff]
    %v5498 = vld [vmem:[#allocation16 + $0x110] sm:$0xff]
    %v5499 = vld [vmem:[#allocation16 + $0x118] sm:$0xff]
    %v5500 = vld [vmem:[#allocation16 + $0x120] sm:$0xff]
    %v5501 = vld [vmem:[#allocation16 + $0x128] sm:$0xff]
    %v5502 = vld [vmem:[#allocation16 + $0x130] sm:$0xff]
    %v5503 = vld [vmem:[#allocation16 + $0x138] sm:$0xff]
    %v5504 = vld [vmem:[#allocation16 + $0x140] sm:$0xff]
    %v5505 = vld [vmem:[#allocation16 + $0x148] sm:$0xff]
    %v5506 = vld [vmem:[#allocation16 + $0x150] sm:$0xff]
    %v5507 = vld [vmem:[#allocation16 + $0x158] sm:$0xff]
    %v5508 = vld [vmem:[#allocation16 + $0x160] sm:$0xff]
    %v5509 = vld [vmem:[#allocation16 + $0x168] sm:$0xff]
    %v5510 = vld [vmem:[#allocation16 + $0x170] sm:$0xff]
    %v5511 = vld [vmem:[#allocation16 + $0x178] sm:$0xff]
    %v5512 = vld [vmem:[#allocation16 + $0x180] sm:$0xff]
    %v5513 = vld [vmem:[#allocation16 + $0x188] sm:$0xff]
    %v5514 = vld [vmem:[#allocation16 + $0x190] sm:$0xff]
    %v5515 = vld [vmem:[#allocation16 + $0x198] sm:$0xff]
    %v5516 = vld [vmem:[#allocation16 + $0x1a0] sm:$0xff]
    %v5517 = vld [vmem:[#allocation16 + $0x1a8] sm:$0xff]
    %v5518 = vld [vmem:[#allocation16 + $0x1b0] sm:$0xff]
    %v5519 = vld [vmem:[#allocation16 + $0x1b8] sm:$0xff]
    %v5520 = vld [vmem:[#allocation16 + $0x1c0] sm:$0xff]
    %v5521 = vld [vmem:[#allocation16 + $0x1c8] sm:$0xff]
    %v5522 = vld [vmem:[#allocation16 + $0x1d0] sm:$0xff]
    %v5523 = vld [vmem:[#allocation16 + $0x1d8] sm:$0xff]
    %v5524 = vld [vmem:[#allocation16 + $0x1e0] sm:$0xff]
    %v5525 = vld [vmem:[#allocation16 + $0x1e8] sm:$0xff]
    %v5526 = vld [vmem:[#allocation16 + $0x1f0] sm:$0xff]
    %v5527 = vld [vmem:[#allocation16 + $0x1f8] sm:$0xff]
    %v5528 = vld [vmem:[#allocation16 + $0x200] sm:$0xff]
    %v5529 = vld [vmem:[#allocation16 + $0x208] sm:$0xff]
    %v5530 = vld [vmem:[#allocation16 + $0x210] sm:$0xff]
    %v5531 = vld [vmem:[#allocation16 + $0x218] sm:$0xff]
    %v5532 = vld [vmem:[#allocation16 + $0x220] sm:$0xff]
    %v5533 = vld [vmem:[#allocation16 + $0x228] sm:$0xff]
    %v5534 = vld [vmem:[#allocation16 + $0x230] sm:$0xff]
    %v5535 = vld [vmem:[#allocation16 + $0x238] sm:$0xff]
    %v5536 = vld [vmem:[#allocation16 + $0x240] sm:$0xff]
    %v5537 = vld [vmem:[#allocation16 + $0x248] sm:$0xff]
    %v5538 = vld [vmem:[#allocation16 + $0x250] sm:$0xff]
    %v5539 = vld [vmem:[#allocation16 + $0x258] sm:$0xff]
    %v5540 = vld [vmem:[#allocation16 + $0x260] sm:$0xff]
    %v5541 = vld [vmem:[#allocation16 + $0x268] sm:$0xff]
    %v5542 = vld [vmem:[#allocation16 + $0x270] sm:$0xff]
    %v5543 = vld [vmem:[#allocation16 + $0x278] sm:$0xff]
    %v5544 = vld [vmem:[#allocation16 + $0x280] sm:$0xff]
    %v5545 = vld [vmem:[#allocation16 + $0x288] sm:$0xff]
    %v5546 = vld [vmem:[#allocation16 + $0x290] sm:$0xff]
    %v5547 = vld [vmem:[#allocation16 + $0x298] sm:$0xff]
    %v5548 = vld [vmem:[#allocation16 + $0x2a0] sm:$0xff]
    %v5549 = vld [vmem:[#allocation16 + $0x2a8] sm:$0xff]
    %v5550 = vld [vmem:[#allocation16 + $0x2b0] sm:$0xff]
    %v5551 = vld [vmem:[#allocation16 + $0x2b8] sm:$0xff]
    %v5552 = vld [vmem:[#allocation16 + $0x2c0] sm:$0xff]
    %v5553 = vld [vmem:[#allocation16 + $0x2c8] sm:$0xff]
    %v5554 = vld [vmem:[#allocation16 + $0x2d0] sm:$0xff]
    %v5555 = vld [vmem:[#allocation16 + $0x2d8] sm:$0xff]
    %v5556 = vld [vmem:[#allocation16 + $0x2e0] sm:$0xff]
    %v5557 = vld [vmem:[#allocation16 + $0x2e8] sm:$0xff]
    %v5558 = vld [vmem:[#allocation16 + $0x2f0] sm:$0xff]
    %v5559 = vld [vmem:[#allocation16 + $0x2f8] sm:$0xff]
    %v5560 = vld [vmem:[#allocation16 + $0x300] sm:$0xff]
    %v5561 = vld [vmem:[#allocation16 + $0x308] sm:$0xff]
    %v5562 = vld [vmem:[#allocation16 + $0x310] sm:$0xff]
    %v5563 = vld [vmem:[#allocation16 + $0x318] sm:$0xff]
    %v5564 = vld [vmem:[#allocation16 + $0x320] sm:$0xff]
    %v5565 = vld [vmem:[#allocation16 + $0x328] sm:$0xff]
    %v5566 = vld [vmem:[#allocation16 + $0x330] sm:$0xff]
    %v5567 = vld [vmem:[#allocation16 + $0x338] sm:$0xff]
    %v5568 = vld [vmem:[#allocation16 + $0x340] sm:$0xff]
    %v5569 = vld [vmem:[#allocation16 + $0x348] sm:$0xff]
    %v5570 = vld [vmem:[#allocation16 + $0x350] sm:$0xff]
    %v5571 = vld [vmem:[#allocation16 + $0x358] sm:$0xff]
    %v5572 = vld [vmem:[#allocation16 + $0x360] sm:$0xff]
    %v5573 = vld [vmem:[#allocation16 + $0x368] sm:$0xff]
    %v5574 = vld [vmem:[#allocation16 + $0x370] sm:$0xff]
    %v5575 = vld [vmem:[#allocation16 + $0x378] sm:$0xff]
    %v5576 = vld [vmem:[#allocation16 + $0x380] sm:$0xff]
    %v5577 = vld [vmem:[#allocation16 + $0x388] sm:$0xff]
    %v5578 = vld [vmem:[#allocation16 + $0x390] sm:$0xff]
    %v5579 = vld [vmem:[#allocation16 + $0x398] sm:$0xff]
    %v5580 = vld [vmem:[#allocation16 + $0x3a0] sm:$0xff]
    %v5581 = vld [vmem:[#allocation16 + $0x3a8] sm:$0xff]
    %v5582 = vld [vmem:[#allocation16 + $0x3b0] sm:$0xff]
    %v5583 = vld [vmem:[#allocation16 + $0x3b8] sm:$0xff]
    %v5584 = vld [vmem:[#allocation16 + $0x3c0] sm:$0xff]
    %v5585 = vld [vmem:[#allocation16 + $0x3c8] sm:$0xff]
    %v5586 = vld [vmem:[#allocation16 + $0x3d0] sm:$0xff]
    %v5587 = vld [vmem:[#allocation16 + $0x3d8] sm:$0xff]
    %v5588 = vld [vmem:[#allocation16 + $0x3e0] sm:$0xff]
    %v5589 = vld [vmem:[#allocation16 + $0x3e8] sm:$0xff]
    %v5590 = vld [vmem:[#allocation16 + $0x3f0] sm:$0xff]
    %v5591 = vld [vmem:[#allocation16 + $0x3f8] sm:$0xff]
    %v5592 = vld [vmem:[#allocation16 + $0x400] sm:$0xff]
    %v5593 = vld [vmem:[#allocation16 + $0x408] sm:$0xff]
    %v5594 = vld [vmem:[#allocation16 + $0x410] sm:$0xff]
    %v5595 = vld [vmem:[#allocation16 + $0x418] sm:$0xff]
    %v5596 = vld [vmem:[#allocation16 + $0x420] sm:$0xff]
    %v5597 = vld [vmem:[#allocation16 + $0x428] sm:$0xff]
    %v5598 = vld [vmem:[#allocation16 + $0x430] sm:$0xff]
    %v5599 = vld [vmem:[#allocation16 + $0x438] sm:$0xff]
    %v5600 = vld [vmem:[#allocation16 + $0x440] sm:$0xff]
    %v5601 = vld [vmem:[#allocation16 + $0x448] sm:$0xff]
    %v5602 = vld [vmem:[#allocation16 + $0x450] sm:$0xff]
    %v5603 = vld [vmem:[#allocation16 + $0x458] sm:$0xff]
    %v5604 = vld [vmem:[#allocation16 + $0x460] sm:$0xff]
    %v5605 = vld [vmem:[#allocation16 + $0x468] sm:$0xff]
    %v5606 = vld [vmem:[#allocation16 + $0x470] sm:$0xff]
    %v5607 = vld [vmem:[#allocation16 + $0x478] sm:$0xff]
    %v5608 = vld [vmem:[#allocation17] sm:$0x3]
    %v5610 = vperm.slane %v5608, 0
    %v5611 = vperm.slane %v5608, 1
    %v5634 = vunpack.c.l.b16 %v5444
    %v5635 = vunpack.c.h.b16 %v5444
    %v5636 = vunpack.c.l.b16 %v5445
    %v5637 = vunpack.c.h.b16 %v5445
    %v5638 = vunpack.c.l.b16 %v5446
    %v5639 = vunpack.c.h.b16 %v5446
    %v5640 = vunpack.c.l.b16 %v5447
    %v5641 = vunpack.c.h.b16 %v5447
    %v5642 = vunpack.c.l.b16 %v5448
    %v5643 = vunpack.c.l.b16 %v5449
    %v5644 = vunpack.c.h.b16 %v5449
    %v5645 = vunpack.c.l.b16 %v5450
    %v5646 = vunpack.c.h.b16 %v5450
    %v5647 = vunpack.c.l.b16 %v5451
    %v5648 = vunpack.c.h.b16 %v5451
    %v5649 = vunpack.c.l.b16 %v5452
    %v5650 = vunpack.c.h.b16 %v5452
    %v5651 = vunpack.c.l.b16 %v5453
    %v5652 = vunpack.c.l.b16 %v5454
    %v5653 = vunpack.c.h.b16 %v5454
    %v5654 = vunpack.c.l.b16 %v5455
    %v5655 = vunpack.c.h.b16 %v5455
    %v5656 = vunpack.c.l.b16 %v5456
    %v5657 = vunpack.c.h.b16 %v5456
    %v5658 = vunpack.c.l.b16 %v5457
    %v5659 = vunpack.c.h.b16 %v5457
    %v5660 = vunpack.c.l.b16 %v5458
    %v5661 = vunpack.c.l.b16 %v5459
    %v5662 = vunpack.c.h.b16 %v5459
    %v5663 = vunpack.c.l.b16 %v5460
    %v5664 = vunpack.c.h.b16 %v5460
    %v5665 = vunpack.c.l.b16 %v5461
    %v5666 = vunpack.c.h.b16 %v5461
    %v5667 = vunpack.c.l.b16 %v5462
    %v5668 = vunpack.c.h.b16 %v5462
    %v5669 = vunpack.c.l.b16 %v5463
    %v5670 = vpack.c.b16 %v5643, %v5634
    %v5671 = vpack.c.b16 %v5644, %v5635
    %v5672 = vpack.c.b16 %v5645, %v5636
    %v5673 = vpack.c.b16 %v5646, %v5637
    %v5674 = vpack.c.b16 %v5647, %v5638
    %v5675 = vpack.c.b16 %v5648, %v5639
    %v5676 = vpack.c.b16 %v5649, %v5640
    %v5677 = vpack.c.b16 %v5650, %v5641
    %v5678 = vpack.c.b16 %v5651, %v5642
    %v5679 = vpack.c.b16 %v5661, %v5652
    %v5680 = vpack.c.b16 %v5662, %v5653
    %v5681 = vpack.c.b16 %v5663, %v5654
    %v5682 = vpack.c.b16 %v5664, %v5655
    %v5683 = vpack.c.b16 %v5665, %v5656
    %v5684 = vpack.c.b16 %v5666, %v5657
    %v5685 = vpack.c.b16 %v5667, %v5658
    %v5686 = vpack.c.b16 %v5668, %v5659
    %v5687 = vpack.c.b16 %v5669, %v5660
    %v5850 = vunpack.c.l.b16 %v5464
    %v5851 = vunpack.c.h.b16 %v5464
    %v5852 = vunpack.c.l.b16 %v5465
    %v5853 = vunpack.c.h.b16 %v5465
    %v5854 = vunpack.c.l.b16 %v5466
    %v5855 = vunpack.c.h.b16 %v5466
    %v5856 = vunpack.c.l.b16 %v5467
    %v5857 = vunpack.c.h.b16 %v5467
    %v5858 = vunpack.c.l.b16 %v5468
    %v5859 = vunpack.c.h.b16 %v5468
    %v5860 = vunpack.c.l.b16 %v5469
    %v5861 = vunpack.c.h.b16 %v5469
    %v5862 = vunpack.c.l.b16 %v5470
    %v5863 = vunpack.c.h.b16 %v5470
    %v5864 = vunpack.c.l.b16 %v5471
    %v5865 = vunpack.c.h.b16 %v5471
    %v5866 = vunpack.c.l.b16 %v5472
    %v5867 = vunpack.c.h.b16 %v5472
    %v5868 = vunpack.c.l.b16 %v5473
    %v5869 = vunpack.c.h.b16 %v5473
    %v5870 = vunpack.c.l.b16 %v5474
    %v5871 = vunpack.c.h.b16 %v5474
    %v5872 = vunpack.c.l.b16 %v5475
    %v5873 = vunpack.c.h.b16 %v5475
    %v5874 = vunpack.c.l.b16 %v5476
    %v5875 = vunpack.c.h.b16 %v5476
    %v5876 = vunpack.c.l.b16 %v5477
    %v5877 = vunpack.c.h.b16 %v5477
    %v5878 = vunpack.c.l.b16 %v5478
    %v5879 = vunpack.c.h.b16 %v5478
    %v5880 = vunpack.c.l.b16 %v5479
    %v5881 = vunpack.c.h.b16 %v5479
    %v5882 = vunpack.c.l.b16 %v5480
    %v5883 = vunpack.c.h.b16 %v5480
    %v5884 = vunpack.c.l.b16 %v5481
    %v5885 = vunpack.c.h.b16 %v5481
    %v5886 = vunpack.c.l.b16 %v5482
    %v5887 = vunpack.c.h.b16 %v5482
    %v5888 = vunpack.c.l.b16 %v5483
    %v5889 = vunpack.c.h.b16 %v5483
    %v5890 = vunpack.c.l.b16 %v5484
    %v5891 = vunpack.c.h.b16 %v5484
    %v5892 = vunpack.c.l.b16 %v5485
    %v5893 = vunpack.c.h.b16 %v5485
    %v5894 = vunpack.c.l.b16 %v5486
    %v5895 = vunpack.c.h.b16 %v5486
    %v5896 = vunpack.c.l.b16 %v5487
    %v5897 = vunpack.c.h.b16 %v5487
    %v5898 = vunpack.c.l.b16 %v5488
    %v5899 = vunpack.c.h.b16 %v5488
    %v5900 = vunpack.c.l.b16 %v5489
    %v5901 = vunpack.c.h.b16 %v5489
    %v5902 = vunpack.c.l.b16 %v5490
    %v5903 = vunpack.c.h.b16 %v5490
    %v5904 = vunpack.c.l.b16 %v5491
    %v5905 = vunpack.c.h.b16 %v5491
    %v5906 = vunpack.c.l.b16 %v5492
    %v5907 = vunpack.c.h.b16 %v5492
    %v5908 = vunpack.c.l.b16 %v5493
    %v5909 = vunpack.c.h.b16 %v5493
    %v5910 = vunpack.c.l.b16 %v5494
    %v5911 = vunpack.c.h.b16 %v5494
    %v5912 = vunpack.c.l.b16 %v5495
    %v5913 = vunpack.c.h.b16 %v5495
    %v5914 = vunpack.c.l.b16 %v5496
    %v5915 = vunpack.c.h.b16 %v5496
    %v5916 = vunpack.c.l.b16 %v5497
    %v5917 = vunpack.c.h.b16 %v5497
    %v5918 = vunpack.c.l.b16 %v5498
    %v5919 = vunpack.c.h.b16 %v5498
    %v5920 = vunpack.c.l.b16 %v5499
    %v5921 = vunpack.c.h.b16 %v5499
    %v5922 = vunpack.c.l.b16 %v5500
    %v5923 = vunpack.c.h.b16 %v5500
    %v5924 = vunpack.c.l.b16 %v5501
    %v5925 = vunpack.c.h.b16 %v5501
    %v5926 = vunpack.c.l.b16 %v5502
    %v5927 = vunpack.c.h.b16 %v5502
    %v5928 = vunpack.c.l.b16 %v5503
    %v5929 = vunpack.c.h.b16 %v5503
    %v5930 = vunpack.c.l.b16 %v5504
    %v5931 = vunpack.c.h.b16 %v5504
    %v5932 = vunpack.c.l.b16 %v5505
    %v5933 = vunpack.c.h.b16 %v5505
    %v5934 = vunpack.c.l.b16 %v5506
    %v5935 = vunpack.c.h.b16 %v5506
    %v5936 = vunpack.c.l.b16 %v5507
    %v5937 = vunpack.c.h.b16 %v5507
    %v5938 = vunpack.c.l.b16 %v5508
    %v5939 = vunpack.c.h.b16 %v5508
    %v5940 = vunpack.c.l.b16 %v5509
    %v5941 = vunpack.c.h.b16 %v5509
    %v5942 = vunpack.c.l.b16 %v5510
    %v5943 = vunpack.c.h.b16 %v5510
    %v5944 = vunpack.c.l.b16 %v5511
    %v5945 = vunpack.c.h.b16 %v5511
    %v5946 = vunpack.c.l.b16 %v5512
    %v5947 = vunpack.c.h.b16 %v5512
    %v5948 = vunpack.c.l.b16 %v5513
    %v5949 = vunpack.c.h.b16 %v5513
    %v5950 = vunpack.c.l.b16 %v5514
    %v5951 = vunpack.c.h.b16 %v5514
    %v5952 = vunpack.c.l.b16 %v5515
    %v5953 = vunpack.c.h.b16 %v5515
    %v5954 = vunpack.c.l.b16 %v5516
    %v5955 = vunpack.c.h.b16 %v5516
    %v5956 = vunpack.c.l.b16 %v5517
    %v5957 = vunpack.c.h.b16 %v5517
    %v5958 = vunpack.c.l.b16 %v5518
    %v5959 = vunpack.c.h.b16 %v5518
    %v5960 = vunpack.c.l.b16 %v5519
    %v5961 = vunpack.c.h.b16 %v5519
    %v5962 = vunpack.c.l.b16 %v5520
    %v5963 = vunpack.c.h.b16 %v5520
    %v5964 = vunpack.c.l.b16 %v5521
    %v5965 = vunpack.c.h.b16 %v5521
    %v5966 = vunpack.c.l.b16 %v5522
    %v5967 = vunpack.c.h.b16 %v5522
    %v5968 = vunpack.c.l.b16 %v5523
    %v5969 = vunpack.c.h.b16 %v5523
    %v5970 = vunpack.c.l.b16 %v5524
    %v5971 = vunpack.c.h.b16 %v5524
    %v5972 = vunpack.c.l.b16 %v5525
    %v5973 = vunpack.c.h.b16 %v5525
    %v5974 = vunpack.c.l.b16 %v5526
    %v5975 = vunpack.c.h.b16 %v5526
    %v5976 = vunpack.c.l.b16 %v5527
    %v5977 = vunpack.c.h.b16 %v5527
    %v5978 = vunpack.c.l.b16 %v5528
    %v5979 = vunpack.c.h.b16 %v5528
    %v5980 = vunpack.c.l.b16 %v5529
    %v5981 = vunpack.c.h.b16 %v5529
    %v5982 = vunpack.c.l.b16 %v5530
    %v5983 = vunpack.c.h.b16 %v5530
    %v5984 = vunpack.c.l.b16 %v5531
    %v5985 = vunpack.c.h.b16 %v5531
    %v5986 = vunpack.c.l.b16 %v5532
    %v5987 = vunpack.c.h.b16 %v5532
    %v5988 = vunpack.c.l.b16 %v5533
    %v5989 = vunpack.c.h.b16 %v5533
    %v5990 = vunpack.c.l.b16 %v5534
    %v5991 = vunpack.c.h.b16 %v5534
    %v5992 = vunpack.c.l.b16 %v5535
    %v5993 = vunpack.c.h.b16 %v5535
    %v5994 = vunpack.c.l.b16 %v5536
    %v5995 = vunpack.c.h.b16 %v5536
    %v5996 = vunpack.c.l.b16 %v5537
    %v5997 = vunpack.c.h.b16 %v5537
    %v5998 = vunpack.c.l.b16 %v5538
    %v5999 = vunpack.c.h.b16 %v5538
    %v6000 = vunpack.c.l.b16 %v5539
    %v6001 = vunpack.c.h.b16 %v5539
    %v6002 = vunpack.c.l.b16 %v5540
    %v6003 = vunpack.c.h.b16 %v5540
    %v6004 = vunpack.c.l.b16 %v5541
    %v6005 = vunpack.c.h.b16 %v5541
    %v6006 = vunpack.c.l.b16 %v5542
    %v6007 = vunpack.c.h.b16 %v5542
    %v6008 = vunpack.c.l.b16 %v5543
    %v6009 = vunpack.c.h.b16 %v5543
    %v6010 = vunpack.c.l.b16 %v5544
    %v6011 = vunpack.c.h.b16 %v5544
    %v6012 = vunpack.c.l.b16 %v5545
    %v6013 = vunpack.c.h.b16 %v5545
    %v6014 = vunpack.c.l.b16 %v5546
    %v6015 = vunpack.c.h.b16 %v5546
    %v6016 = vunpack.c.l.b16 %v5547
    %v6017 = vunpack.c.h.b16 %v5547
    %v6018 = vunpack.c.l.b16 %v5548
    %v6019 = vunpack.c.h.b16 %v5548
    %v6020 = vunpack.c.l.b16 %v5549
    %v6021 = vunpack.c.h.b16 %v5549
    %v6022 = vunpack.c.l.b16 %v5550
    %v6023 = vunpack.c.h.b16 %v5550
    %v6024 = vunpack.c.l.b16 %v5551
    %v6025 = vunpack.c.h.b16 %v5551
    %v6026 = vunpack.c.l.b16 %v5552
    %v6027 = vunpack.c.h.b16 %v5552
    %v6028 = vunpack.c.l.b16 %v5553
    %v6029 = vunpack.c.h.b16 %v5553
    %v6030 = vunpack.c.l.b16 %v5554
    %v6031 = vunpack.c.h.b16 %v5554
    %v6032 = vunpack.c.l.b16 %v5555
    %v6033 = vunpack.c.h.b16 %v5555
    %v6034 = vunpack.c.l.b16 %v5556
    %v6035 = vunpack.c.h.b16 %v5556
    %v6036 = vunpack.c.l.b16 %v5557
    %v6037 = vunpack.c.h.b16 %v5557
    %v6038 = vunpack.c.l.b16 %v5558
    %v6039 = vunpack.c.h.b16 %v5558
    %v6040 = vunpack.c.l.b16 %v5559
    %v6041 = vunpack.c.h.b16 %v5559
    %v6042 = vunpack.c.l.b16 %v5560
    %v6043 = vunpack.c.h.b16 %v5560
    %v6044 = vunpack.c.l.b16 %v5561
    %v6045 = vunpack.c.h.b16 %v5561
    %v6046 = vunpack.c.l.b16 %v5562
    %v6047 = vunpack.c.h.b16 %v5562
    %v6048 = vunpack.c.l.b16 %v5563
    %v6049 = vunpack.c.h.b16 %v5563
    %v6050 = vunpack.c.l.b16 %v5564
    %v6051 = vunpack.c.h.b16 %v5564
    %v6052 = vunpack.c.l.b16 %v5565
    %v6053 = vunpack.c.h.b16 %v5565
    %v6054 = vunpack.c.l.b16 %v5566
    %v6055 = vunpack.c.h.b16 %v5566
    %v6056 = vunpack.c.l.b16 %v5567
    %v6057 = vunpack.c.h.b16 %v5567
    %v6058 = vunpack.c.l.b16 %v5568
    %v6059 = vunpack.c.h.b16 %v5568
    %v6060 = vunpack.c.l.b16 %v5569
    %v6061 = vunpack.c.h.b16 %v5569
    %v6062 = vunpack.c.l.b16 %v5570
    %v6063 = vunpack.c.h.b16 %v5570
    %v6064 = vunpack.c.l.b16 %v5571
    %v6065 = vunpack.c.h.b16 %v5571
    %v6066 = vunpack.c.l.b16 %v5572
    %v6067 = vunpack.c.h.b16 %v5572
    %v6068 = vunpack.c.l.b16 %v5573
    %v6069 = vunpack.c.h.b16 %v5573
    %v6070 = vunpack.c.l.b16 %v5574
    %v6071 = vunpack.c.h.b16 %v5574
    %v6072 = vunpack.c.l.b16 %v5575
    %v6073 = vunpack.c.h.b16 %v5575
    %v6074 = vunpack.c.l.b16 %v5576
    %v6075 = vunpack.c.h.b16 %v5576
    %v6076 = vunpack.c.l.b16 %v5577
    %v6077 = vunpack.c.h.b16 %v5577
    %v6078 = vunpack.c.l.b16 %v5578
    %v6079 = vunpack.c.h.b16 %v5578
    %v6080 = vunpack.c.l.b16 %v5579
    %v6081 = vunpack.c.h.b16 %v5579
    %v6082 = vunpack.c.l.b16 %v5580
    %v6083 = vunpack.c.h.b16 %v5580
    %v6084 = vunpack.c.l.b16 %v5581
    %v6085 = vunpack.c.h.b16 %v5581
    %v6086 = vunpack.c.l.b16 %v5582
    %v6087 = vunpack.c.h.b16 %v5582
    %v6088 = vunpack.c.l.b16 %v5583
    %v6089 = vunpack.c.h.b16 %v5583
    %v6090 = vunpack.c.l.b16 %v5584
    %v6091 = vunpack.c.h.b16 %v5584
    %v6092 = vunpack.c.l.b16 %v5585
    %v6093 = vunpack.c.h.b16 %v5585
    %v6094 = vunpack.c.l.b16 %v5586
    %v6095 = vunpack.c.h.b16 %v5586
    %v6096 = vunpack.c.l.b16 %v5587
    %v6097 = vunpack.c.h.b16 %v5587
    %v6098 = vunpack.c.l.b16 %v5588
    %v6099 = vunpack.c.h.b16 %v5588
    %v6100 = vunpack.c.l.b16 %v5589
    %v6101 = vunpack.c.h.b16 %v5589
    %v6102 = vunpack.c.l.b16 %v5590
    %v6103 = vunpack.c.h.b16 %v5590
    %v6104 = vunpack.c.l.b16 %v5591
    %v6105 = vunpack.c.h.b16 %v5591
    %v6106 = vunpack.c.l.b16 %v5592
    %v6107 = vunpack.c.h.b16 %v5592
    %v6108 = vunpack.c.l.b16 %v5593
    %v6109 = vunpack.c.h.b16 %v5593
    %v6110 = vunpack.c.l.b16 %v5594
    %v6111 = vunpack.c.h.b16 %v5594
    %v6112 = vunpack.c.l.b16 %v5595
    %v6113 = vunpack.c.h.b16 %v5595
    %v6114 = vunpack.c.l.b16 %v5596
    %v6115 = vunpack.c.h.b16 %v5596
    %v6116 = vunpack.c.l.b16 %v5597
    %v6117 = vunpack.c.h.b16 %v5597
    %v6118 = vunpack.c.l.b16 %v5598
    %v6119 = vunpack.c.h.b16 %v5598
    %v6120 = vunpack.c.l.b16 %v5599
    %v6121 = vunpack.c.h.b16 %v5599
    %v6122 = vunpack.c.l.b16 %v5600
    %v6123 = vunpack.c.h.b16 %v5600
    %v6124 = vunpack.c.l.b16 %v5601
    %v6125 = vunpack.c.h.b16 %v5601
    %v6126 = vunpack.c.l.b16 %v5602
    %v6127 = vunpack.c.h.b16 %v5602
    %v6128 = vunpack.c.l.b16 %v5603
    %v6129 = vunpack.c.h.b16 %v5603
    %v6130 = vunpack.c.l.b16 %v5604
    %v6131 = vunpack.c.h.b16 %v5604
    %v6132 = vunpack.c.l.b16 %v5605
    %v6133 = vunpack.c.h.b16 %v5605
    %v6134 = vunpack.c.l.b16 %v5606
    %v6135 = vunpack.c.h.b16 %v5606
    %v6136 = vunpack.c.l.b16 %v5607
    %v6137 = vunpack.c.h.b16 %v5607
    %v6138 = vpack.c.b16 %v5852, %v5850
    %v6139 = vpack.c.b16 %v5853, %v5851
    %v6140 = vpack.c.b16 %v5856, %v5854
    %v6141 = vpack.c.b16 %v5857, %v5855
    %v6142 = vpack.c.b16 %v5860, %v5858
    %v6143 = vpack.c.b16 %v5861, %v5859
    %v6144 = vpack.c.b16 %v5864, %v5862
    %v6145 = vpack.c.b16 %v5865, %v5863
    %v6146 = vpack.c.b16 %v5868, %v5866
    %v6147 = vpack.c.b16 %v5869, %v5867
    %v6148 = vpack.c.b16 %v5872, %v5870
    %v6149 = vpack.c.b16 %v5873, %v5871
    %v6150 = vpack.c.b16 %v5876, %v5874
    %v6151 = vpack.c.b16 %v5877, %v5875
    %v6152 = vpack.c.b16 %v5880, %v5878
    %v6153 = vpack.c.b16 %v5881, %v5879
    %v6154 = vpack.c.b16 %v5884, %v5882
    %v6155 = vpack.c.b16 %v5885, %v5883
    %v6156 = vpack.c.b16 %v5888, %v5886
    %v6157 = vpack.c.b16 %v5889, %v5887
    %v6158 = vpack.c.b16 %v5892, %v5890
    %v6159 = vpack.c.b16 %v5893, %v5891
    %v6160 = vpack.c.b16 %v5896, %v5894
    %v6161 = vpack.c.b16 %v5897, %v5895
    %v6162 = vpack.c.b16 %v5900, %v5898
    %v6163 = vpack.c.b16 %v5901, %v5899
    %v6164 = vpack.c.b16 %v5904, %v5902
    %v6165 = vpack.c.b16 %v5905, %v5903
    %v6166 = vpack.c.b16 %v5908, %v5906
    %v6167 = vpack.c.b16 %v5909, %v5907
    %v6168 = vpack.c.b16 %v5912, %v5910
    %v6169 = vpack.c.b16 %v5913, %v5911
    %v6170 = vpack.c.b16 %v5916, %v5914
    %v6171 = vpack.c.b16 %v5917, %v5915
    %v6172 = vpack.c.b16 %v5920, %v5918
    %v6173 = vpack.c.b16 %v5921, %v5919
    %v6174 = vpack.c.b16 %v5924, %v5922
    %v6175 = vpack.c.b16 %v5925, %v5923
    %v6176 = vpack.c.b16 %v5928, %v5926
    %v6177 = vpack.c.b16 %v5929, %v5927
    %v6178 = vpack.c.b16 %v5932, %v5930
    %v6179 = vpack.c.b16 %v5933, %v5931
    %v6180 = vpack.c.b16 %v5936, %v5934
    %v6181 = vpack.c.b16 %v5937, %v5935
    %v6182 = vpack.c.b16 %v5940, %v5938
    %v6183 = vpack.c.b16 %v5941, %v5939
    %v6184 = vpack.c.b16 %v5944, %v5942
    %v6185 = vpack.c.b16 %v5945, %v5943
    %v6186 = vpack.c.b16 %v5948, %v5946
    %v6187 = vpack.c.b16 %v5949, %v5947
    %v6188 = vpack.c.b16 %v5952, %v5950
    %v6189 = vpack.c.b16 %v5953, %v5951
    %v6190 = vpack.c.b16 %v5956, %v5954
    %v6191 = vpack.c.b16 %v5957, %v5955
    %v6192 = vpack.c.b16 %v5960, %v5958
    %v6193 = vpack.c.b16 %v5961, %v5959
    %v6194 = vpack.c.b16 %v5964, %v5962
    %v6195 = vpack.c.b16 %v5965, %v5963
    %v6196 = vpack.c.b16 %v5968, %v5966
    %v6197 = vpack.c.b16 %v5969, %v5967
    %v6198 = vpack.c.b16 %v5972, %v5970
    %v6199 = vpack.c.b16 %v5973, %v5971
    %v6200 = vpack.c.b16 %v5976, %v5974
    %v6201 = vpack.c.b16 %v5977, %v5975
    %v6202 = vpack.c.b16 %v5980, %v5978
    %v6203 = vpack.c.b16 %v5981, %v5979
    %v6204 = vpack.c.b16 %v5984, %v5982
    %v6205 = vpack.c.b16 %v5985, %v5983
    %v6206 = vpack.c.b16 %v5988, %v5986
    %v6207 = vpack.c.b16 %v5989, %v5987
    %v6208 = vpack.c.b16 %v5992, %v5990
    %v6209 = vpack.c.b16 %v5993, %v5991
    %v6210 = vpack.c.b16 %v5996, %v5994
    %v6211 = vpack.c.b16 %v5997, %v5995
    %v6212 = vpack.c.b16 %v6000, %v5998
    %v6213 = vpack.c.b16 %v6001, %v5999
    %v6214 = vpack.c.b16 %v6004, %v6002
    %v6215 = vpack.c.b16 %v6005, %v6003
    %v6216 = vpack.c.b16 %v6008, %v6006
    %v6217 = vpack.c.b16 %v6009, %v6007
    %v6218 = vpack.c.b16 %v6012, %v6010
    %v6219 = vpack.c.b16 %v6013, %v6011
    %v6220 = vpack.c.b16 %v6016, %v6014
    %v6221 = vpack.c.b16 %v6017, %v6015
    %v6222 = vpack.c.b16 %v6020, %v6018
    %v6223 = vpack.c.b16 %v6021, %v6019
    %v6224 = vpack.c.b16 %v6024, %v6022
    %v6225 = vpack.c.b16 %v6025, %v6023
    %v6226 = vpack.c.b16 %v6028, %v6026
    %v6227 = vpack.c.b16 %v6029, %v6027
    %v6228 = vpack.c.b16 %v6032, %v6030
    %v6229 = vpack.c.b16 %v6033, %v6031
    %v6230 = vpack.c.b16 %v6036, %v6034
    %v6231 = vpack.c.b16 %v6037, %v6035
    %v6232 = vpack.c.b16 %v6040, %v6038
    %v6233 = vpack.c.b16 %v6041, %v6039
    %v6234 = vpack.c.b16 %v6044, %v6042
    %v6235 = vpack.c.b16 %v6045, %v6043
    %v6236 = vpack.c.b16 %v6048, %v6046
    %v6237 = vpack.c.b16 %v6049, %v6047
    %v6238 = vpack.c.b16 %v6052, %v6050
    %v6239 = vpack.c.b16 %v6053, %v6051
    %v6240 = vpack.c.b16 %v6056, %v6054
    %v6241 = vpack.c.b16 %v6057, %v6055
    %v6242 = vpack.c.b16 %v6060, %v6058
    %v6243 = vpack.c.b16 %v6061, %v6059
    %v6244 = vpack.c.b16 %v6064, %v6062
    %v6245 = vpack.c.b16 %v6065, %v6063
    %v6246 = vpack.c.b16 %v6068, %v6066
    %v6247 = vpack.c.b16 %v6069, %v6067
    %v6248 = vpack.c.b16 %v6072, %v6070
    %v6249 = vpack.c.b16 %v6073, %v6071
    %v6250 = vpack.c.b16 %v6076, %v6074
    %v6251 = vpack.c.b16 %v6077, %v6075
    %v6252 = vpack.c.b16 %v6080, %v6078
    %v6253 = vpack.c.b16 %v6081, %v6079
    %v6254 = vpack.c.b16 %v6084, %v6082
    %v6255 = vpack.c.b16 %v6085, %v6083
    %v6256 = vpack.c.b16 %v6088, %v6086
    %v6257 = vpack.c.b16 %v6089, %v6087
    %v6258 = vpack.c.b16 %v6092, %v6090
    %v6259 = vpack.c.b16 %v6093, %v6091
    %v6260 = vpack.c.b16 %v6096, %v6094
    %v6261 = vpack.c.b16 %v6097, %v6095
    %v6262 = vpack.c.b16 %v6100, %v6098
    %v6263 = vpack.c.b16 %v6101, %v6099
    %v6264 = vpack.c.b16 %v6104, %v6102
    %v6265 = vpack.c.b16 %v6105, %v6103
    %v6266 = vpack.c.b16 %v6108, %v6106
    %v6267 = vpack.c.b16 %v6109, %v6107
    %v6268 = vpack.c.b16 %v6112, %v6110
    %v6269 = vpack.c.b16 %v6113, %v6111
    %v6270 = vpack.c.b16 %v6116, %v6114
    %v6271 = vpack.c.b16 %v6117, %v6115
    %v6272 = vpack.c.b16 %v6120, %v6118
    %v6273 = vpack.c.b16 %v6121, %v6119
    %v6274 = vpack.c.b16 %v6124, %v6122
    %v6275 = vpack.c.b16 %v6125, %v6123
    %v6276 = vpack.c.b16 %v6128, %v6126
    %v6277 = vpack.c.b16 %v6129, %v6127
    %v6278 = vpack.c.b16 %v6132, %v6130
    %v6279 = vpack.c.b16 %v6133, %v6131
    %v6280 = vpack.c.b16 %v6136, %v6134
    %v6281 = vpack.c.b16 %v6137, %v6135
    %6426 = vmatpush.bf16.msra.mxu0 %v6152
    %6427 = vmatpush.bf16.msra.mxu0 %v6150
    %6428 = vmatpush.bf16.msra.mxu0 %v6148
    %6429 = vmatpush.bf16.msra.mxu0 %v6146
    %6430 = vmatpush.bf16.msra.mxu0 %v6144
    %6431 = vmatpush.bf16.msra.mxu0 %v6142
    %6432 = vmatpush.bf16.msra.mxu0 %v6140
    %6433 = vmatpush.bf16.msra.mxu0 %v6138
    %6434 = vmatmul.bf16.gmra.mxu0 %v5670
    %v6435 = vpop.f32.mrf.mxu0
    %v6436 = vadd.f32 %v5610, %v6435
    %v6437 = vpop.f32.mrf.mxu0
    %v6438 = vadd.f32 %v5610, %v6437
    %6439 = vmatmul.bf16.gmra.mxu0 %v5679
    %v6440 = vpop.f32.mrf.mxu0
    %v6441 = vadd.f32 %v5610, %v6440
    %v6442 = vpop.f32.mrf.mxu0
    %v6443 = vadd.f32 %v5610, %v6442
    %6444 = vdwg.mxu0
    %6445 = vmatpush.bf16.msra.mxu0 %v6168
    %6446 = vmatpush.bf16.msra.mxu0 %v6166
    %6447 = vmatpush.bf16.msra.mxu0 %v6164
    %6448 = vmatpush.bf16.msra.mxu0 %v6162
    %6449 = vmatpush.bf16.msra.mxu0 %v6160
    %6450 = vmatpush.bf16.msra.mxu0 %v6158
    %6451 = vmatpush.bf16.msra.mxu0 %v6156
    %6452 = vmatpush.bf16.msra.mxu0 %v6154
    %6453 = vmatmul.bf16.gmra.mxu0 %v5671
    %v6454 = vpop.f32.mrf.mxu0
    %v6455 = vadd.f32 %v6436, %v6454
    %v6456 = vpop.f32.mrf.mxu0
    %v6457 = vadd.f32 %v6438, %v6456
    %6458 = vmatmul.bf16.gmra.mxu0 %v5680
    %v6459 = vpop.f32.mrf.mxu0
    %v6460 = vadd.f32 %v6441, %v6459
    %v6461 = vpop.f32.mrf.mxu0
    %v6462 = vadd.f32 %v6443, %v6461
    %6463 = vdwg.mxu0
    %6464 = vmatpush.bf16.msra.mxu0 %v6184
    %6465 = vmatpush.bf16.msra.mxu0 %v6182
    %6466 = vmatpush.bf16.msra.mxu0 %v6180
    %6467 = vmatpush.bf16.msra.mxu0 %v6178
    %6468 = vmatpush.bf16.msra.mxu0 %v6176
    %6469 = vmatpush.bf16.msra.mxu0 %v6174
    %6470 = vmatpush.bf16.msra.mxu0 %v6172
    %6471 = vmatpush.bf16.msra.mxu0 %v6170
    %6472 = vmatmul.bf16.gmra.mxu0 %v5672
    %v6473 = vpop.f32.mrf.mxu0
    %v6474 = vadd.f32 %v6455, %v6473
    %v6475 = vpop.f32.mrf.mxu0
    %v6476 = vadd.f32 %v6457, %v6475
    %6477 = vmatmul.bf16.gmra.mxu0 %v5681
    %v6478 = vpop.f32.mrf.mxu0
    %v6479 = vadd.f32 %v6460, %v6478
    %v6480 = vpop.f32.mrf.mxu0
    %v6481 = vadd.f32 %v6462, %v6480
    %6482 = vdwg.mxu0
    %6483 = vmatpush.bf16.msra.mxu0 %v6200
    %6484 = vmatpush.bf16.msra.mxu0 %v6198
    %6485 = vmatpush.bf16.msra.mxu0 %v6196
    %6486 = vmatpush.bf16.msra.mxu0 %v6194
    %6487 = vmatpush.bf16.msra.mxu0 %v6192
    %6488 = vmatpush.bf16.msra.mxu0 %v6190
    %6489 = vmatpush.bf16.msra.mxu0 %v6188
    %6490 = vmatpush.bf16.msra.mxu0 %v6186
    %6491 = vmatmul.bf16.gmra.mxu0 %v5673
    %v6492 = vpop.f32.mrf.mxu0
    %v6493 = vadd.f32 %v6474, %v6492
    %v6494 = vpop.f32.mrf.mxu0
    %v6495 = vadd.f32 %v6476, %v6494
    %6496 = vmatmul.bf16.gmra.mxu0 %v5682
    %v6497 = vpop.f32.mrf.mxu0
    %v6498 = vadd.f32 %v6479, %v6497
    %v6499 = vpop.f32.mrf.mxu0
    %v6500 = vadd.f32 %v6481, %v6499
    %6501 = vdwg.mxu0
    %6502 = vmatpush.bf16.msra.mxu0 %v6216
    %6503 = vmatpush.bf16.msra.mxu0 %v6214
    %6504 = vmatpush.bf16.msra.mxu0 %v6212
    %6505 = vmatpush.bf16.msra.mxu0 %v6210
    %6506 = vmatpush.bf16.msra.mxu0 %v6208
    %6507 = vmatpush.bf16.msra.mxu0 %v6206
    %6508 = vmatpush.bf16.msra.mxu0 %v6204
    %6509 = vmatpush.bf16.msra.mxu0 %v6202
    %6510 = vmatmul.bf16.gmra.mxu0 %v5674
    %v6511 = vpop.f32.mrf.mxu0
    %v6512 = vadd.f32 %v6493, %v6511
    %v6513 = vpop.f32.mrf.mxu0
    %v6514 = vadd.f32 %v6495, %v6513
    %6515 = vmatmul.bf16.gmra.mxu0 %v5683
    %v6516 = vpop.f32.mrf.mxu0
    %v6517 = vadd.f32 %v6498, %v6516
    %v6518 = vpop.f32.mrf.mxu0
    %v6519 = vadd.f32 %v6500, %v6518
    %6520 = vdwg.mxu0
    %6521 = vmatpush.bf16.msra.mxu0 %v6232
    %6522 = vmatpush.bf16.msra.mxu0 %v6230
    %6523 = vmatpush.bf16.msra.mxu0 %v6228
    %6524 = vmatpush.bf16.msra.mxu0 %v6226
    %6525 = vmatpush.bf16.msra.mxu0 %v6224
    %6526 = vmatpush.bf16.msra.mxu0 %v6222
    %6527 = vmatpush.bf16.msra.mxu0 %v6220
    %6528 = vmatpush.bf16.msra.mxu0 %v6218
    %6529 = vmatmul.bf16.gmra.mxu0 %v5675
    %v6530 = vpop.f32.mrf.mxu0
    %v6531 = vadd.f32 %v6512, %v6530
    %v6532 = vpop.f32.mrf.mxu0
    %v6533 = vadd.f32 %v6514, %v6532
    %6534 = vmatmul.bf16.gmra.mxu0 %v5684
    %v6535 = vpop.f32.mrf.mxu0
    %v6536 = vadd.f32 %v6517, %v6535
    %v6537 = vpop.f32.mrf.mxu0
    %v6538 = vadd.f32 %v6519, %v6537
    %6539 = vdwg.mxu0
    %6540 = vmatpush.bf16.msra.mxu0 %v6248
    %6541 = vmatpush.bf16.msra.mxu0 %v6246
    %6542 = vmatpush.bf16.msra.mxu0 %v6244
    %6543 = vmatpush.bf16.msra.mxu0 %v6242
    %6544 = vmatpush.bf16.msra.mxu0 %v6240
    %6545 = vmatpush.bf16.msra.mxu0 %v6238
    %6546 = vmatpush.bf16.msra.mxu0 %v6236
    %6547 = vmatpush.bf16.msra.mxu0 %v6234
    %6548 = vmatmul.bf16.gmra.mxu0 %v5676
    %v6549 = vpop.f32.mrf.mxu0
    %v6550 = vadd.f32 %v6531, %v6549
    %v6551 = vpop.f32.mrf.mxu0
    %v6552 = vadd.f32 %v6533, %v6551
    %6553 = vmatmul.bf16.gmra.mxu0 %v5685
    %v6554 = vpop.f32.mrf.mxu0
    %v6555 = vadd.f32 %v6536, %v6554
    %v6556 = vpop.f32.mrf.mxu0
    %v6557 = vadd.f32 %v6538, %v6556
    %6558 = vdwg.mxu0
    %6559 = vmatpush.bf16.msra.mxu0 %v6264
    %6560 = vmatpush.bf16.msra.mxu0 %v6262
    %6561 = vmatpush.bf16.msra.mxu0 %v6260
    %6562 = vmatpush.bf16.msra.mxu0 %v6258
    %6563 = vmatpush.bf16.msra.mxu0 %v6256
    %6564 = vmatpush.bf16.msra.mxu0 %v6254
    %6565 = vmatpush.bf16.msra.mxu0 %v6252
    %6566 = vmatpush.bf16.msra.mxu0 %v6250
    %6567 = vmatmul.bf16.gmra.mxu0 %v5677
    %v6568 = vpop.f32.mrf.mxu0
    %v6569 = vadd.f32 %v6550, %v6568
    %v6570 = vpop.f32.mrf.mxu0
    %v6571 = vadd.f32 %v6552, %v6570
    %6572 = vmatmul.bf16.gmra.mxu0 %v5686
    %v6573 = vpop.f32.mrf.mxu0
    %v6574 = vadd.f32 %v6555, %v6573
    %v6575 = vpop.f32.mrf.mxu0
    %v6576 = vadd.f32 %v6557, %v6575
    %6577 = vdwg.mxu0
    %6578 = vmatpush.bf16.msra.mxu0 %v6280
    %6579 = vmatpush.bf16.msra.mxu0 %v6278
    %6580 = vmatpush.bf16.msra.mxu0 %v6276
    %6581 = vmatpush.bf16.msra.mxu0 %v6274
    %6582 = vmatpush.bf16.msra.mxu0 %v6272
    %6583 = vmatpush.bf16.msra.mxu0 %v6270
    %6584 = vmatpush.bf16.msra.mxu0 %v6268
    %6585 = vmatpush.bf16.msra.mxu0 %v6266
    %6586 = vmatmul.bf16.gmra.mxu0 %v5678
    %v6587 = vpop.f32.mrf.mxu0
    %v6588 = vadd.f32 %v6569, %v6587
    %v6589 = vpop.f32.mrf.mxu0
    %v6590 = vadd.f32 %v6571, %v6589
    %6591 = vmatmul.bf16.gmra.mxu0 %v5687
    %v6592 = vpop.f32.mrf.mxu0
    %v6593 = vadd.f32 %v6574, %v6592
    %v6594 = vpop.f32.mrf.mxu0
    %v6595 = vadd.f32 %v6576, %v6594
    %6596 = vdwg.mxu0
    %6597 = vmatpush.bf16.msra.mxu0 %v6153
    %6598 = vmatpush.bf16.msra.mxu0 %v6151
    %6599 = vmatpush.bf16.msra.mxu0 %v6149
    %6600 = vmatpush.bf16.msra.mxu0 %v6147
    %6601 = vmatpush.bf16.msra.mxu0 %v6145
    %6602 = vmatpush.bf16.msra.mxu0 %v6143
    %6603 = vmatpush.bf16.msra.mxu0 %v6141
    %6604 = vmatpush.bf16.msra.mxu0 %v6139
    %6605 = vmatmul.bf16.gmra.mxu0 %v5670
    %v6606 = vpop.f32.mrf.mxu0
    %v6607 = vadd.f32 %v5611, %v6606
    %v6608 = vpop.f32.mrf.mxu0
    %v6609 = vadd.f32 %v5611, %v6608
    %6610 = vmatmul.bf16.gmra.mxu0 %v5679
    %v6611 = vpop.f32.mrf.mxu0
    %v6612 = vadd.f32 %v5611, %v6611
    %v6613 = vpop.f32.mrf.mxu0
    %v6614 = vadd.f32 %v5611, %v6613
    %6615 = vdwg.mxu0
    %6616 = vmatpush.bf16.msra.mxu0 %v6169
    %6617 = vmatpush.bf16.msra.mxu0 %v6167
    %6618 = vmatpush.bf16.msra.mxu0 %v6165
    %6619 = vmatpush.bf16.msra.mxu0 %v6163
    %6620 = vmatpush.bf16.msra.mxu0 %v6161
    %6621 = vmatpush.bf16.msra.mxu0 %v6159
    %6622 = vmatpush.bf16.msra.mxu0 %v6157
    %6623 = vmatpush.bf16.msra.mxu0 %v6155
    %6624 = vmatmul.bf16.gmra.mxu0 %v5671
    %v6625 = vpop.f32.mrf.mxu0
    %v6626 = vadd.f32 %v6607, %v6625
    %v6627 = vpop.f32.mrf.mxu0
    %v6628 = vadd.f32 %v6609, %v6627
    %6629 = vmatmul.bf16.gmra.mxu0 %v5680
    %v6630 = vpop.f32.mrf.mxu0
    %v6631 = vadd.f32 %v6612, %v6630
    %v6632 = vpop.f32.mrf.mxu0
    %v6633 = vadd.f32 %v6614, %v6632
    %6634 = vdwg.mxu0
    %6635 = vmatpush.bf16.msra.mxu0 %v6185
    %6636 = vmatpush.bf16.msra.mxu0 %v6183
    %6637 = vmatpush.bf16.msra.mxu0 %v6181
    %6638 = vmatpush.bf16.msra.mxu0 %v6179
    %6639 = vmatpush.bf16.msra.mxu0 %v6177
    %6640 = vmatpush.bf16.msra.mxu0 %v6175
    %6641 = vmatpush.bf16.msra.mxu0 %v6173
    %6642 = vmatpush.bf16.msra.mxu0 %v6171
    %6643 = vmatmul.bf16.gmra.mxu0 %v5672
    %v6644 = vpop.f32.mrf.mxu0
    %v6645 = vadd.f32 %v6626, %v6644
    %v6646 = vpop.f32.mrf.mxu0
    %v6647 = vadd.f32 %v6628, %v6646
    %6648 = vmatmul.bf16.gmra.mxu0 %v5681
    %v6649 = vpop.f32.mrf.mxu0
    %v6650 = vadd.f32 %v6631, %v6649
    %v6651 = vpop.f32.mrf.mxu0
    %v6652 = vadd.f32 %v6633, %v6651
    %6653 = vdwg.mxu0
    %6654 = vmatpush.bf16.msra.mxu0 %v6201
    %6655 = vmatpush.bf16.msra.mxu0 %v6199
    %6656 = vmatpush.bf16.msra.mxu0 %v6197
    %6657 = vmatpush.bf16.msra.mxu0 %v6195
    %6658 = vmatpush.bf16.msra.mxu0 %v6193
    %6659 = vmatpush.bf16.msra.mxu0 %v6191
    %6660 = vmatpush.bf16.msra.mxu0 %v6189
    %6661 = vmatpush.bf16.msra.mxu0 %v6187
    %6662 = vmatmul.bf16.gmra.mxu0 %v5673
    %v6663 = vpop.f32.mrf.mxu0
    %v6664 = vadd.f32 %v6645, %v6663
    %v6665 = vpop.f32.mrf.mxu0
    %v6666 = vadd.f32 %v6647, %v6665
    %6667 = vmatmul.bf16.gmra.mxu0 %v5682
    %v6668 = vpop.f32.mrf.mxu0
    %v6669 = vadd.f32 %v6650, %v6668
    %v6670 = vpop.f32.mrf.mxu0
    %v6671 = vadd.f32 %v6652, %v6670
    %6672 = vdwg.mxu0
    %6673 = vmatpush.bf16.msra.mxu0 %v6217
    %6674 = vmatpush.bf16.msra.mxu0 %v6215
    %6675 = vmatpush.bf16.msra.mxu0 %v6213
    %6676 = vmatpush.bf16.msra.mxu0 %v6211
    %6677 = vmatpush.bf16.msra.mxu0 %v6209
    %6678 = vmatpush.bf16.msra.mxu0 %v6207
    %6679 = vmatpush.bf16.msra.mxu0 %v6205
    %6680 = vmatpush.bf16.msra.mxu0 %v6203
    %6681 = vmatmul.bf16.gmra.mxu0 %v5674
    %v6682 = vpop.f32.mrf.mxu0
    %v6683 = vadd.f32 %v6664, %v6682
    %v6684 = vpop.f32.mrf.mxu0
    %v6685 = vadd.f32 %v6666, %v6684
    %6686 = vmatmul.bf16.gmra.mxu0 %v5683
    %v6687 = vpop.f32.mrf.mxu0
    %v6688 = vadd.f32 %v6669, %v6687
    %v6689 = vpop.f32.mrf.mxu0
    %v6690 = vadd.f32 %v6671, %v6689
    %6691 = vdwg.mxu0
    %6692 = vmatpush.bf16.msra.mxu0 %v6233
    %6693 = vmatpush.bf16.msra.mxu0 %v6231
    %6694 = vmatpush.bf16.msra.mxu0 %v6229
    %6695 = vmatpush.bf16.msra.mxu0 %v6227
    %6696 = vmatpush.bf16.msra.mxu0 %v6225
    %6697 = vmatpush.bf16.msra.mxu0 %v6223
    %6698 = vmatpush.bf16.msra.mxu0 %v6221
    %6699 = vmatpush.bf16.msra.mxu0 %v6219
    %6700 = vmatmul.bf16.gmra.mxu0 %v5675
    %v6701 = vpop.f32.mrf.mxu0
    %v6702 = vadd.f32 %v6683, %v6701
    %v6703 = vpop.f32.mrf.mxu0
    %v6704 = vadd.f32 %v6685, %v6703
    %6705 = vmatmul.bf16.gmra.mxu0 %v5684
    %v6706 = vpop.f32.mrf.mxu0
    %v6707 = vadd.f32 %v6688, %v6706
    %v6708 = vpop.f32.mrf.mxu0
    %v6709 = vadd.f32 %v6690, %v6708
    %6710 = vdwg.mxu0
    %6711 = vmatpush.bf16.msra.mxu0 %v6249
    %6712 = vmatpush.bf16.msra.mxu0 %v6247
    %6713 = vmatpush.bf16.msra.mxu0 %v6245
    %6714 = vmatpush.bf16.msra.mxu0 %v6243
    %6715 = vmatpush.bf16.msra.mxu0 %v6241
    %6716 = vmatpush.bf16.msra.mxu0 %v6239
    %6717 = vmatpush.bf16.msra.mxu0 %v6237
    %6718 = vmatpush.bf16.msra.mxu0 %v6235
    %6719 = vmatmul.bf16.gmra.mxu0 %v5676
    %v6720 = vpop.f32.mrf.mxu0
    %v6721 = vadd.f32 %v6702, %v6720
    %v6722 = vpop.f32.mrf.mxu0
    %v6723 = vadd.f32 %v6704, %v6722
    %6724 = vmatmul.bf16.gmra.mxu0 %v5685
    %v6725 = vpop.f32.mrf.mxu0
    %v6726 = vadd.f32 %v6707, %v6725
    %v6727 = vpop.f32.mrf.mxu0
    %v6728 = vadd.f32 %v6709, %v6727
    %6729 = vdwg.mxu0
    %6730 = vmatpush.bf16.msra.mxu0 %v6265
    %6731 = vmatpush.bf16.msra.mxu0 %v6263
    %6732 = vmatpush.bf16.msra.mxu0 %v6261
    %6733 = vmatpush.bf16.msra.mxu0 %v6259
    %6734 = vmatpush.bf16.msra.mxu0 %v6257
    %6735 = vmatpush.bf16.msra.mxu0 %v6255
    %6736 = vmatpush.bf16.msra.mxu0 %v6253
    %6737 = vmatpush.bf16.msra.mxu0 %v6251
    %6738 = vmatmul.bf16.gmra.mxu0 %v5677
    %v6739 = vpop.f32.mrf.mxu0
    %v6740 = vadd.f32 %v6721, %v6739
    %v6741 = vpop.f32.mrf.mxu0
    %v6742 = vadd.f32 %v6723, %v6741
    %6743 = vmatmul.bf16.gmra.mxu0 %v5686
    %v6744 = vpop.f32.mrf.mxu0
    %v6745 = vadd.f32 %v6726, %v6744
    %v6746 = vpop.f32.mrf.mxu0
    %v6747 = vadd.f32 %v6728, %v6746
    %6748 = vdwg.mxu0
    %6749 = vmatpush.bf16.msra.mxu0 %v6281
    %6750 = vmatpush.bf16.msra.mxu0 %v6279
    %6751 = vmatpush.bf16.msra.mxu0 %v6277
    %6752 = vmatpush.bf16.msra.mxu0 %v6275
    %6753 = vmatpush.bf16.msra.mxu0 %v6273
    %6754 = vmatpush.bf16.msra.mxu0 %v6271
    %6755 = vmatpush.bf16.msra.mxu0 %v6269
    %6756 = vmatpush.bf16.msra.mxu0 %v6267
    %6757 = vmatmul.bf16.gmra.mxu0 %v5678
    %v6758 = vpop.f32.mrf.mxu0
    %v6759 = vadd.f32 %v6740, %v6758
    %v6760 = vpop.f32.mrf.mxu0
    %v6761 = vadd.f32 %v6742, %v6760
    %6762 = vmatmul.bf16.gmra.mxu0 %v5687
    %v6763 = vpop.f32.mrf.mxu0
    %v6764 = vadd.f32 %v6745, %v6763
    %v6765 = vpop.f32.mrf.mxu0
    %v6766 = vadd.f32 %v6747, %v6765
    %6767 = vdwg.mxu0
    %v6768 = vmax.f32 %v6588, 0.0
    %v6769 = vmax.f32 %v6759, 0.0
    %v6770 = vmax.f32 %v6590, 0.0
    %v6771 = vmax.f32 %v6761, 0.0
    %v6772 = vmax.f32 %v6593, 0.0
    %v6773 = vmax.f32 %v6764, 0.0
    %v6774 = vmax.f32 %v6595, 0.0
    %v6775 = vmax.f32 %v6766, 0.0
    %v6784 = vrot.slane %v6769, 6
    %v6785 = vrot.slane %v6771, 6
    %v6786 = vrot.slane %v6773, 6
    %v6787 = vrot.slane %v6775, 6
    %v6788 = vsel %vm3522, %v6768, %v6784
    %v6789 = vsel %vm4297, %v6768, %v6784
    %v6790 = vrot.slane %v6789, 2
    %vm6791 = vcmask 1045508
    %v6792 = vsel %vm6791, %v6768, %v6784
    %v6793 = vrot.slane %v6792, 4
    %vm6794 = vcmask 1045504
    %v6795 = vsel %vm6794, %v6784, %v6768
    %v6796 = vrot.slane %v6795, 6
    %v6797 = vsel %vm3522, %v6770, %v6785
    %v6798 = vsel %vm4297, %v6770, %v6785
    %v6799 = vrot.slane %v6798, 2
    %v6800 = vsel %vm6791, %v6770, %v6785
    %v6801 = vrot.slane %v6800, 4
    %v6802 = vsel %vm6794, %v6785, %v6770
    %v6803 = vrot.slane %v6802, 6
    %v6804 = vsel %vm3522, %v6772, %v6786
    %v6805 = vsel %vm4297, %v6772, %v6786
    %v6806 = vrot.slane %v6805, 2
    %v6807 = vsel %vm6791, %v6772, %v6786
    %v6808 = vrot.slane %v6807, 4
    %v6809 = vsel %vm6794, %v6786, %v6772
    %v6810 = vrot.slane %v6809, 6
    %v6811 = vsel %vm3522, %v6774, %v6787
    %v6812 = vsel %vm4297, %v6774, %v6787
    %v6813 = vrot.slane %v6812, 2
    %v6814 = vsel %vm6791, %v6774, %v6787
    %v6815 = vrot.slane %v6814, 4
    %v6816 = vsel %vm6794, %v6787, %v6774
    %v6817 = vrot.slane %v6816, 6
    %6818 = vst [vmem:[#allocation1] ss:$4 sm:$0xff] %v6788
    %v6819 = vld.sshfl [vmem:[#allocation1] sm:$0xff pattern:$0x73625140]
    %v6820 = vld.sshfl [vmem:[#allocation1 + $0x8] sm:$0xff pattern:$0x73625140]
    %s6821 = scalar_lea.vmem [#allocation1], 32
    %6822 = vst [vmem:[%s6821] ss:$4 sm:$0xff] %v6790
    %v6823 = vld.sshfl [vmem:[#allocation1 + $0x20] sm:$0xff pattern:$0x73625140]
    %v6824 = vld.sshfl [vmem:[#allocation1 + $0x28] sm:$0xff pattern:$0x73625140]
    %6825 = vst [vmem:[#allocation1] ss:$4 sm:$0xff] %v6793
    %v6826 = vld.sshfl [vmem:[#allocation1] sm:$0xff pattern:$0x73625140]
    %v6827 = vld.sshfl [vmem:[#allocation1 + $0x8] sm:$0xff pattern:$0x73625140]
    %6828 = vst [vmem:[%s6821] ss:$4 sm:$0xff] %v6796
    %v6829 = vld.sshfl [vmem:[#allocation1 + $0x20] sm:$0xff pattern:$0x73625140]
    %v6830 = vld.sshfl [vmem:[#allocation1 + $0x28] sm:$0xff pattern:$0x73625140]
    %6831 = vst [vmem:[#allocation1] ss:$4 sm:$0xff] %v6797
    %v6832 = vld.sshfl [vmem:[#allocation1] sm:$0xff pattern:$0x73625140]
    %v6833 = vld.sshfl [vmem:[#allocation1 + $0x8] sm:$0xff pattern:$0x73625140]
    %6834 = vst [vmem:[%s6821] ss:$4 sm:$0xff] %v6799
    %v6835 = vld.sshfl [vmem:[#allocation1 + $0x20] sm:$0xff pattern:$0x73625140]
    %v6836 = vld.sshfl [vmem:[#allocation1 + $0x28] sm:$0xff pattern:$0x73625140]
    %6837 = vst [vmem:[#allocation1] ss:$4 sm:$0xff] %v6801
    %v6838 = vld.sshfl [vmem:[#allocation1] sm:$0xff pattern:$0x73625140]
    %v6839 = vld.sshfl [vmem:[#allocation1 + $0x8] sm:$0xff pattern:$0x73625140]
    %6840 = vst [vmem:[%s6821] ss:$4 sm:$0xff] %v6803
    %v6841 = vld.sshfl [vmem:[#allocation1 + $0x20] sm:$0xff pattern:$0x73625140]
    %v6842 = vld.sshfl [vmem:[#allocation1 + $0x28] sm:$0xff pattern:$0x73625140]
    %6843 = vst [vmem:[#allocation1] ss:$4 sm:$0xff] %v6804
    %v6844 = vld.sshfl [vmem:[#allocation1] sm:$0xff pattern:$0x73625140]
    %v6845 = vld.sshfl [vmem:[#allocation1 + $0x8] sm:$0xff pattern:$0x73625140]
    %6846 = vst [vmem:[%s6821] ss:$4 sm:$0xff] %v6806
    %v6847 = vld.sshfl [vmem:[#allocation1 + $0x20] sm:$0xff pattern:$0x73625140]
    %v6848 = vld.sshfl [vmem:[#allocation1 + $0x28] sm:$0xff pattern:$0x73625140]
    %6849 = vst [vmem:[#allocation1] ss:$4 sm:$0xff] %v6808
    %v6850 = vld.sshfl [vmem:[#allocation1] sm:$0xff pattern:$0x73625140]
    %v6851 = vld.sshfl [vmem:[#allocation1 + $0x8] sm:$0xff pattern:$0x73625140]
    %6852 = vst [vmem:[%s6821] ss:$4 sm:$0xff] %v6810
    %v6853 = vld.sshfl [vmem:[#allocation1 + $0x20] sm:$0xff pattern:$0x73625140]
    %v6854 = vld.sshfl [vmem:[#allocation1 + $0x28] sm:$0xff pattern:$0x73625140]
    %6855 = vst [vmem:[#allocation1] ss:$4 sm:$0xff] %v6811
    %v6856 = vld.sshfl [vmem:[#allocation1] sm:$0xff pattern:$0x73625140]
    %v6857 = vld.sshfl [vmem:[#allocation1 + $0x8] sm:$0xff pattern:$0x73625140]
    %6858 = vst [vmem:[%s6821] ss:$4 sm:$0xff] %v6813
    %v6859 = vld.sshfl [vmem:[#allocation1 + $0x20] sm:$0xff pattern:$0x73625140]
    %v6860 = vld.sshfl [vmem:[#allocation1 + $0x28] sm:$0xff pattern:$0x73625140]
    %6861 = vst [vmem:[#allocation1] ss:$4 sm:$0xff] %v6815
    %v6862 = vld.sshfl [vmem:[#allocation1] sm:$0xff pattern:$0x73625140]
    %v6863 = vld.sshfl [vmem:[#allocation1 + $0x8] sm:$0xff pattern:$0x73625140]
    %6864 = vst [vmem:[%s6821] ss:$4 sm:$0xff] %v6817
    %v6865 = vld.sshfl [vmem:[#allocation1 + $0x20] sm:$0xff pattern:$0x73625140]
    %v6866 = vld.sshfl [vmem:[#allocation1 + $0x28] sm:$0xff pattern:$0x73625140]
    %v6899 = vsel %vm3522, %v6819, -inf
    %v6900 = vrot.slane %v6899, 4
    %v6901 = vmax.f32 %v6899, %v6900
    %v6902 = vrot.slane %v6901, 2
    %v6903 = vmax.f32 %v6901, %v6902
    %v6904 = vrot.slane %v6903, 1
    %v6905 = vmax.f32 %v6903, %v6904
    %v6906 = vsel %vm3522, %v6820, -inf
    %v6907 = vrot.slane %v6906, 4
    %v6908 = vmax.f32 %v6906, %v6907
    %v6909 = vrot.slane %v6908, 2
    %v6910 = vmax.f32 %v6908, %v6909
    %v6911 = vrot.slane %v6910, 1
    %v6912 = vmax.f32 %v6910, %v6911
    %v6913 = vsel %vm3522, %v6823, -inf
    %v6914 = vrot.slane %v6913, 4
    %v6915 = vmax.f32 %v6913, %v6914
    %v6916 = vrot.slane %v6915, 2
    %v6917 = vmax.f32 %v6915, %v6916
    %v6918 = vrot.slane %v6917, 1
    %v6919 = vmax.f32 %v6917, %v6918
    %v6920 = vsel %vm3522, %v6824, -inf
    %v6921 = vrot.slane %v6920, 4
    %v6922 = vmax.f32 %v6920, %v6921
    %v6923 = vrot.slane %v6922, 2
    %v6924 = vmax.f32 %v6922, %v6923
    %v6925 = vrot.slane %v6924, 1
    %v6926 = vmax.f32 %v6924, %v6925
    %v6927 = vsel %vm3522, %v6826, -inf
    %v6928 = vrot.slane %v6927, 4
    %v6929 = vmax.f32 %v6927, %v6928
    %v6930 = vrot.slane %v6929, 2
    %v6931 = vmax.f32 %v6929, %v6930
    %v6932 = vrot.slane %v6931, 1
    %v6933 = vmax.f32 %v6931, %v6932
    %v6934 = vsel %vm3522, %v6827, -inf
    %v6935 = vrot.slane %v6934, 4
    %v6936 = vmax.f32 %v6934, %v6935
    %v6937 = vrot.slane %v6936, 2
    %v6938 = vmax.f32 %v6936, %v6937
    %v6939 = vrot.slane %v6938, 1
    %v6940 = vmax.f32 %v6938, %v6939
    %v6941 = vsel %vm3522, %v6829, -inf
    %v6942 = vrot.slane %v6941, 4
    %v6943 = vmax.f32 %v6941, %v6942
    %v6944 = vrot.slane %v6943, 2
    %v6945 = vmax.f32 %v6943, %v6944
    %v6946 = vrot.slane %v6945, 1
    %v6947 = vmax.f32 %v6945, %v6946
    %v6948 = vsel %vm3522, %v6830, -inf
    %v6949 = vrot.slane %v6948, 4
    %v6950 = vmax.f32 %v6948, %v6949
    %v6951 = vrot.slane %v6950, 2
    %v6952 = vmax.f32 %v6950, %v6951
    %v6953 = vrot.slane %v6952, 1
    %v6954 = vmax.f32 %v6952, %v6953
    %v6955 = vsel %vm3522, %v6832, -inf
    %v6956 = vrot.slane %v6955, 4
    %v6957 = vmax.f32 %v6955, %v6956
    %v6958 = vrot.slane %v6957, 2
    %v6959 = vmax.f32 %v6957, %v6958
    %v6960 = vrot.slane %v6959, 1
    %v6961 = vmax.f32 %v6959, %v6960
    %v6962 = vsel %vm3522, %v6833, -inf
    %v6963 = vrot.slane %v6962, 4
    %v6964 = vmax.f32 %v6962, %v6963
    %v6965 = vrot.slane %v6964, 2
    %v6966 = vmax.f32 %v6964, %v6965
    %v6967 = vrot.slane %v6966, 1
    %v6968 = vmax.f32 %v6966, %v6967
    %v6969 = vsel %vm3522, %v6835, -inf
    %v6970 = vrot.slane %v6969, 4
    %v6971 = vmax.f32 %v6969, %v6970
    %v6972 = vrot.slane %v6971, 2
    %v6973 = vmax.f32 %v6971, %v6972
    %v6974 = vrot.slane %v6973, 1
    %v6975 = vmax.f32 %v6973, %v6974
    %v6976 = vsel %vm3522, %v6836, -inf
    %v6977 = vrot.slane %v6976, 4
    %v6978 = vmax.f32 %v6976, %v6977
    %v6979 = vrot.slane %v6978, 2
    %v6980 = vmax.f32 %v6978, %v6979
    %v6981 = vrot.slane %v6980, 1
    %v6982 = vmax.f32 %v6980, %v6981
    %v6983 = vsel %vm3522, %v6838, -inf
    %v6984 = vrot.slane %v6983, 4
    %v6985 = vmax.f32 %v6983, %v6984
    %v6986 = vrot.slane %v6985, 2
    %v6987 = vmax.f32 %v6985, %v6986
    %v6988 = vrot.slane %v6987, 1
    %v6989 = vmax.f32 %v6987, %v6988
    %v6990 = vsel %vm3522, %v6839, -inf
    %v6991 = vrot.slane %v6990, 4
    %v6992 = vmax.f32 %v6990, %v6991
    %v6993 = vrot.slane %v6992, 2
    %v6994 = vmax.f32 %v6992, %v6993
    %v6995 = vrot.slane %v6994, 1
    %v6996 = vmax.f32 %v6994, %v6995
    %v6997 = vsel %vm3522, %v6841, -inf
    %v6998 = vrot.slane %v6997, 4
    %v6999 = vmax.f32 %v6997, %v6998
    %v7000 = vrot.slane %v6999, 2
    %v7001 = vmax.f32 %v6999, %v7000
    %v7002 = vrot.slane %v7001, 1
    %v7003 = vmax.f32 %v7001, %v7002
    %v7004 = vsel %vm3522, %v6842, -inf
    %v7005 = vrot.slane %v7004, 4
    %v7006 = vmax.f32 %v7004, %v7005
    %v7007 = vrot.slane %v7006, 2
    %v7008 = vmax.f32 %v7006, %v7007
    %v7009 = vrot.slane %v7008, 1
    %v7010 = vmax.f32 %v7008, %v7009
    %v7011 = vsel %vm3522, %v6844, -inf
    %v7012 = vrot.slane %v7011, 4
    %v7013 = vmax.f32 %v7011, %v7012
    %v7014 = vrot.slane %v7013, 2
    %v7015 = vmax.f32 %v7013, %v7014
    %v7016 = vrot.slane %v7015, 1
    %v7017 = vmax.f32 %v7015, %v7016
    %v7018 = vsel %vm3522, %v6845, -inf
    %v7019 = vrot.slane %v7018, 4
    %v7020 = vmax.f32 %v7018, %v7019
    %v7021 = vrot.slane %v7020, 2
    %v7022 = vmax.f32 %v7020, %v7021
    %v7023 = vrot.slane %v7022, 1
    %v7024 = vmax.f32 %v7022, %v7023
    %v7025 = vsel %vm3522, %v6847, -inf
    %v7026 = vrot.slane %v7025, 4
    %v7027 = vmax.f32 %v7025, %v7026
    %v7028 = vrot.slane %v7027, 2
    %v7029 = vmax.f32 %v7027, %v7028
    %v7030 = vrot.slane %v7029, 1
    %v7031 = vmax.f32 %v7029, %v7030
    %v7032 = vsel %vm3522, %v6848, -inf
    %v7033 = vrot.slane %v7032, 4
    %v7034 = vmax.f32 %v7032, %v7033
    %v7035 = vrot.slane %v7034, 2
    %v7036 = vmax.f32 %v7034, %v7035
    %v7037 = vrot.slane %v7036, 1
    %v7038 = vmax.f32 %v7036, %v7037
    %v7039 = vsel %vm3522, %v6850, -inf
    %v7040 = vrot.slane %v7039, 4
    %v7041 = vmax.f32 %v7039, %v7040
    %v7042 = vrot.slane %v7041, 2
    %v7043 = vmax.f32 %v7041, %v7042
    %v7044 = vrot.slane %v7043, 1
    %v7045 = vmax.f32 %v7043, %v7044
    %v7046 = vsel %vm3522, %v6851, -inf
    %v7047 = vrot.slane %v7046, 4
    %v7048 = vmax.f32 %v7046, %v7047
    %v7049 = vrot.slane %v7048, 2
    %v7050 = vmax.f32 %v7048, %v7049
    %v7051 = vrot.slane %v7050, 1
    %v7052 = vmax.f32 %v7050, %v7051
    %v7053 = vsel %vm3522, %v6853, -inf
    %v7054 = vrot.slane %v7053, 4
    %v7055 = vmax.f32 %v7053, %v7054
    %v7056 = vrot.slane %v7055, 2
    %v7057 = vmax.f32 %v7055, %v7056
    %v7058 = vrot.slane %v7057, 1
    %v7059 = vmax.f32 %v7057, %v7058
    %v7060 = vsel %vm3522, %v6854, -inf
    %v7061 = vrot.slane %v7060, 4
    %v7062 = vmax.f32 %v7060, %v7061
    %v7063 = vrot.slane %v7062, 2
    %v7064 = vmax.f32 %v7062, %v7063
    %v7065 = vrot.slane %v7064, 1
    %v7066 = vmax.f32 %v7064, %v7065
    %v7067 = vsel %vm3522, %v6856, -inf
    %v7068 = vrot.slane %v7067, 4
    %v7069 = vmax.f32 %v7067, %v7068
    %v7070 = vrot.slane %v7069, 2
    %v7071 = vmax.f32 %v7069, %v7070
    %v7072 = vrot.slane %v7071, 1
    %v7073 = vmax.f32 %v7071, %v7072
    %v7074 = vsel %vm3522, %v6857, -inf
    %v7075 = vrot.slane %v7074, 4
    %v7076 = vmax.f32 %v7074, %v7075
    %v7077 = vrot.slane %v7076, 2
    %v7078 = vmax.f32 %v7076, %v7077
    %v7079 = vrot.slane %v7078, 1
    %v7080 = vmax.f32 %v7078, %v7079
    %v7081 = vsel %vm3522, %v6859, -inf
    %v7082 = vrot.slane %v7081, 4
    %v7083 = vmax.f32 %v7081, %v7082
    %v7084 = vrot.slane %v7083, 2
    %v7085 = vmax.f32 %v7083, %v7084
    %v7086 = vrot.slane %v7085, 1
    %v7087 = vmax.f32 %v7085, %v7086
    %v7088 = vsel %vm3522, %v6860, -inf
    %v7089 = vrot.slane %v7088, 4
    %v7090 = vmax.f32 %v7088, %v7089
    %v7091 = vrot.slane %v7090, 2
    %v7092 = vmax.f32 %v7090, %v7091
    %v7093 = vrot.slane %v7092, 1
    %v7094 = vmax.f32 %v7092, %v7093
    %v7095 = vsel %vm3522, %v6862, -inf
    %v7096 = vrot.slane %v7095, 4
    %v7097 = vmax.f32 %v7095, %v7096
    %v7098 = vrot.slane %v7097, 2
    %v7099 = vmax.f32 %v7097, %v7098
    %v7100 = vrot.slane %v7099, 1
    %v7101 = vmax.f32 %v7099, %v7100
    %v7102 = vsel %vm3522, %v6863, -inf
    %v7103 = vrot.slane %v7102, 4
    %v7104 = vmax.f32 %v7102, %v7103
    %v7105 = vrot.slane %v7104, 2
    %v7106 = vmax.f32 %v7104, %v7105
    %v7107 = vrot.slane %v7106, 1
    %v7108 = vmax.f32 %v7106, %v7107
    %v7109 = vsel %vm3522, %v6865, -inf
    %v7110 = vrot.slane %v7109, 4
    %v7111 = vmax.f32 %v7109, %v7110
    %v7112 = vrot.slane %v7111, 2
    %v7113 = vmax.f32 %v7111, %v7112
    %v7114 = vrot.slane %v7113, 1
    %v7115 = vmax.f32 %v7113, %v7114
    %v7116 = vsel %vm3522, %v6866, -inf
    %v7117 = vrot.slane %v7116, 4
    %v7118 = vmax.f32 %v7116, %v7117
    %v7119 = vrot.slane %v7118, 2
    %v7120 = vmax.f32 %v7118, %v7119
    %v7121 = vrot.slane %v7120, 1
    %v7122 = vmax.f32 %v7120, %v7121
    %v7123 = vmax.f32 %v6905, %v6933
    %v7124 = vmax.f32 %v6912, %v6940
    %v7125 = vmax.f32 %v6919, %v6947
    %v7126 = vmax.f32 %v6926, %v6954
    %v7127 = vmax.f32 %v6961, %v6989
    %v7128 = vmax.f32 %v6968, %v6996
    %v7129 = vmax.f32 %v6975, %v7003
    %v7130 = vmax.f32 %v6982, %v7010
    %v7131 = vmax.f32 %v7017, %v7045
    %v7132 = vmax.f32 %v7024, %v7052
    %v7133 = vmax.f32 %v7031, %v7059
    %v7134 = vmax.f32 %v7038, %v7066
    %v7135 = vmax.f32 %v7073, %v7101
    %v7136 = vmax.f32 %v7080, %v7108
    %v7137 = vmax.f32 %v7087, %v7115
    %v7138 = vmax.f32 %v7094, %v7122
    %7139 = vst [vmem:[#allocation6] sm:$0xf] 0
    %7140 = vst [vmem:[#allocation6 + $0x10] sm:$0xf] 0
    %s7141 = scalar_lea.vmem [#allocation6], 12
    %7142 = vst [vmem:[%s7141] sm:$0xf] 0
    %7143 = vst [vmem:[%s7141 + $0x10] sm:$0xf] 0
    %s7144 = scalar_lea.vmem [#allocation6], 4
    %vm7145 = vsmask.f32 2304
    %vm7146 = vmand %vm4035, %vm7145
    %vm7147 = vmor %vm7146, %vm4010
    %v7148 = vld [vmem:[%s7144] sm:$0x5]
    %v7149 = vsel %vm7147, 0, %v7148
    %7150 = vst [vmem:[%s7144] sm:$0x5] %v7149
    %v7151 = vld [vmem:[%s7144 + $0x4] sm:$0x5]
    %v7152 = vsel %vm7147, 0, %v7151
    %7153 = vst [vmem:[%s7144 + $0x4] sm:$0x5] %v7152
    %v7154 = vld [vmem:[%s7144 + $0x10] sm:$0x5]
    %v7155 = vsel %vm7147, 0, %v7154
    %7156 = vst [vmem:[%s7144 + $0x10] sm:$0x5] %v7155
    %v7157 = vld [vmem:[%s7144 + $0x14] sm:$0x5]
    %v7158 = vsel %vm7147, 0, %v7157
    %7159 = vst [vmem:[%s7144 + $0x14] sm:$0x5] %v7158
    %vm7160 = vcmask 1041409
    %vm7161 = vsmask.f32 7942
    %vm7162 = vmand %vm7160, %vm7161
    %vm7163 = vcmask 1043459
    %vm7164 = vsmask.f32 7950
    %vm7165 = vmand %vm7163, %vm7164
    %vm7166 = vmor %vm7165, %vm7162
    %v7167 = vld [vmem:[%s7144] sm:$0xa]
    %v7168 = vsel %vm7166, 0, %v7167
    %7169 = vst [vmem:[%s7144] sm:$0xa] %v7168
    %v7170 = vld [vmem:[%s7144 + $0x4] sm:$0xa]
    %v7171 = vsel %vm7166, 0, %v7170
    %7172 = vst [vmem:[%s7144 + $0x4] sm:$0xa] %v7171
    %v7173 = vld [vmem:[%s7144 + $0x10] sm:$0xa]
    %v7174 = vsel %vm7166, 0, %v7173
    %7175 = vst [vmem:[%s7144 + $0x10] sm:$0xa] %v7174
    %v7176 = vld [vmem:[%s7144 + $0x14] sm:$0xa]
    %v7177 = vsel %vm7166, 0, %v7176
    %7178 = vst [vmem:[%s7144 + $0x14] sm:$0xa] %v7177
    %v7179 = vpack.c.bf16 %v7124, %v7123
    %v7180 = vpack.c.bf16 %v7126, %v7125
    %v7181 = vpack.c.bf16 %v7128, %v7127
    %v7182 = vpack.c.bf16 %v7130, %v7129
    %v7183 = vpack.c.bf16 %v7132, %v7131
    %v7184 = vpack.c.bf16 %v7134, %v7133
    %v7185 = vpack.c.bf16 %v7136, %v7135
    %v7186 = vpack.c.bf16 %v7138, %v7137
    %v7195 = vrot.slane %v7179, 2
    %v7196 = vrot.slane %v7180, 2
    %v7197 = vrot.slane %v7181, 2
    %v7198 = vrot.slane %v7182, 2
    %v7199 = vrot.slane %v7183, 2
    %v7200 = vrot.slane %v7184, 2
    %v7201 = vrot.slane %v7185, 2
    %v7202 = vrot.slane %v7186, 2
    %v7205 = vsel %vm3522, %v7179, %v7195
    %v7208 = vsel %vm3522, %v7180, %v7196
    %v7211 = vsel %vm3522, %v7181, %v7197
    %v7214 = vsel %vm3522, %v7182, %v7198
    %v7217 = vsel %vm3522, %v7183, %v7199
    %v7220 = vsel %vm3522, %v7184, %v7200
    %v7223 = vsel %vm3522, %v7185, %v7201
    %v7226 = vsel %vm3522, %v7186, %v7202
    %7227 = vst [vmem:[#allocation1] ss:$2 sm:$0xff] %v7205
    %v7228 = vld.sshfl [vmem:[#allocation1] sm:$0xff pattern:$0x75643120]
    %s7230 = scalar_lea.vmem [#allocation1], 16
    %7231 = vst [vmem:[%s7230] ss:$2 sm:$0xff] %v7208
    %v7232 = vld.sshfl [vmem:[#allocation1 + $0x10] sm:$0xff pattern:$0x75643120]
    %s7234 = scalar_lea.vmem [#allocation1], 32
    %7235 = vst [vmem:[%s7234] ss:$2 sm:$0xff] %v7211
    %v7236 = vld.sshfl [vmem:[#allocation1 + $0x20] sm:$0xff pattern:$0x75643120]
    %s7238 = scalar_lea.vmem [#allocation1], 48
    %7239 = vst [vmem:[%s7238] ss:$2 sm:$0xff] %v7214
    %v7240 = vld.sshfl [vmem:[#allocation1 + $0x30] sm:$0xff pattern:$0x75643120]
    %7242 = vst [vmem:[#allocation1] ss:$2 sm:$0xff] %v7217
    %v7243 = vld.sshfl [vmem:[#allocation1] sm:$0xff pattern:$0x75643120]
    %7245 = vst [vmem:[%s7230] ss:$2 sm:$0xff] %v7220
    %v7246 = vld.sshfl [vmem:[#allocation1 + $0x10] sm:$0xff pattern:$0x75643120]
    %7248 = vst [vmem:[%s7234] ss:$2 sm:$0xff] %v7223
    %v7249 = vld.sshfl [vmem:[#allocation1 + $0x20] sm:$0xff pattern:$0x75643120]
    %7251 = vst [vmem:[%s7238] ss:$2 sm:$0xff] %v7226
    %v7252 = vld.sshfl [vmem:[#allocation1 + $0x30] sm:$0xff pattern:$0x75643120]
    %v7254 = vunpack.c.l.b16 %v7228
    %v7255 = vunpack.c.h.b16 %v7228
    %v7256 = vunpack.c.l.b16 %v7232
    %v7257 = vunpack.c.h.b16 %v7232
    %v7258 = vunpack.c.l.b16 %v7236
    %v7259 = vunpack.c.h.b16 %v7236
    %v7260 = vunpack.c.l.b16 %v7240
    %v7261 = vunpack.c.h.b16 %v7240
    %v7262 = vunpack.c.l.b16 %v7243
    %v7263 = vunpack.c.h.b16 %v7243
    %v7264 = vunpack.c.l.b16 %v7246
    %v7265 = vunpack.c.h.b16 %v7246
    %v7266 = vunpack.c.l.b16 %v7249
    %v7267 = vunpack.c.h.b16 %v7249
    %v7268 = vunpack.c.l.b16 %v7252
    %v7269 = vunpack.c.h.b16 %v7252
    %v7270 = vrot.slane %v7254, 7
    %v7271 = vrot.slane %v7256, 6
    %v7272 = vsel %vm4158, %v7271, %v7270
    %v7273 = vrot.slane %v7255, 7
    %v7274 = vrot.slane %v7257, 6
    %v7275 = vsel %vm4158, %v7274, %v7273
    %v7276 = vrot.slane %v7258, 7
    %v7277 = vrot.slane %v7260, 6
    %v7278 = vsel %vm4158, %v7277, %v7276
    %v7279 = vrot.slane %v7259, 7
    %v7280 = vrot.slane %v7261, 6
    %v7281 = vsel %vm4158, %v7280, %v7279
    %v7282 = vrot.slane %v7262, 7
    %v7283 = vrot.slane %v7264, 6
    %v7284 = vsel %vm4158, %v7283, %v7282
    %v7285 = vrot.slane %v7263, 7
    %v7286 = vrot.slane %v7265, 6
    %v7287 = vsel %vm4158, %v7286, %v7285
    %v7288 = vrot.slane %v7266, 7
    %v7289 = vrot.slane %v7268, 6
    %v7290 = vsel %vm4158, %v7289, %v7288
    %v7291 = vrot.slane %v7267, 7
    %v7292 = vrot.slane %v7269, 6
    %v7293 = vsel %vm4158, %v7292, %v7291
    %v7294 = vpack.c.b16 %v7275, %v7272
    %v7295 = vpack.c.b16 %v7281, %v7278
    %v7296 = vpack.c.b16 %v7287, %v7284
    %v7297 = vpack.c.b16 %v7293, %v7290
    %v7298 = vrot.slane %v7294, 2
    %v7299 = vrot.slane %v7295, 2
    %v7300 = vrot.slane %v7296, 2
    %v7301 = vrot.slane %v7297, 2
    %v7304 = vsel %vm3522, %v7294, %v7298
    %v7307 = vsel %vm3522, %v7295, %v7299
    %v7310 = vsel %vm3522, %v7296, %v7300
    %v7313 = vsel %vm3522, %v7297, %v7301
    %vm7318 = vcmask 1041408
    %vm7319 = vsmask.f32 1282
    %vm7320 = vmand %vm7318, %vm7319
    %vm7321 = vcmask 1043458
    %vm7322 = vsmask.f32 3338
    %vm7323 = vmand %vm7321, %vm7322
    %vm7324 = vmor %vm7323, %vm7320
    %v7325 = vld [vmem:[%s7144] sm:$0xf]
    %v7326 = vsel %vm7324, %v7304, %v7325
    %7327 = vst [vmem:[%s7144] sm:$0xf] %v7326
    %v7328 = vld [vmem:[%s7144 + $0x4] sm:$0xf]
    %v7329 = vsel %vm7324, %v7307, %v7328
    %7330 = vst [vmem:[%s7144 + $0x4] sm:$0xf] %v7329
    %v7331 = vld [vmem:[%s7144 + $0x10] sm:$0xf]
    %v7332 = vsel %vm7324, %v7310, %v7331
    %7333 = vst [vmem:[%s7144 + $0x10] sm:$0xf] %v7332
    %v7334 = vld [vmem:[%s7144 + $0x14] sm:$0xf]
    %v7335 = vsel %vm7324, %v7313, %v7334
    %7336 = vst [vmem:[%s7144 + $0x14] sm:$0xf] %v7335
    %v7337 = vld [vmem:[#allocation6] sm:$0x5]
    %v7338 = vld [vmem:[#allocation6 + $0x4] sm:$0x5]
    %v7339 = vld [vmem:[#allocation6 + $0x10] sm:$0x5]
    %v7340 = vld [vmem:[#allocation6 + $0x14] sm:$0x5]
    %v7345 = vrot.slane %v7337, 1
    %v7346 = vrot.slane %v7337, 2
    %v7347 = vrot.slane %v7337, 3
    %v7348 = vrot.slane %v7338, 1
    %v7349 = vrot.slane %v7338, 2
    %v7350 = vrot.slane %v7338, 3
    %v7351 = vrot.slane %v7339, 1
    %v7352 = vrot.slane %v7339, 2
    %v7353 = vrot.slane %v7339, 3
    %v7354 = vrot.slane %v7340, 1
    %v7355 = vrot.slane %v7340, 2
    %v7356 = vrot.slane %v7340, 3
    %vm7357 = vcmask 1040384
    %v7360 = vsel %vm7357, %v7337, %v7345
    %v7363 = vsel %vm4158, %v7346, %v7347
    %v7364 = vsel %vm3522, %v7360, %v7363
    %v7367 = vsel %vm7357, %v7338, %v7348
    %v7370 = vsel %vm4158, %v7349, %v7350
    %v7371 = vsel %vm3522, %v7367, %v7370
    %v7374 = vsel %vm7357, %v7339, %v7351
    %v7377 = vsel %vm4158, %v7352, %v7353
    %v7378 = vsel %vm3522, %v7374, %v7377
    %v7381 = vsel %vm7357, %v7340, %v7354
    %v7384 = vsel %vm4158, %v7355, %v7356
    %v7385 = vsel %vm3522, %v7381, %v7384
    %7386 = vst [vmem:[#allocation1] ss:$4 sm:$0xff] %v7364
    %s7387 = scalar_lea.vmem [#allocation1], 1
    %7388 = vst [vmem:[%s7387] ss:$4 sm:$0xff] %v7371
    %s7389 = scalar_lea.vmem [#allocation1], 2
    %7390 = vst [vmem:[%s7389] ss:$4 sm:$0xff] %v7378
    %s7391 = scalar_lea.vmem [#allocation1], 3
    %7392 = vst [vmem:[%s7391] ss:$4 sm:$0xff] %v7385
    %v7393 = vld [vmem:[#allocation1] sm:$0xff]
    %7395 = vst [vmem:[#allocation7] sm:$0xff] %v7393
    %v7396 = vld [vmem:[#allocation6] sm:$0xf]
    %v7397 = vld [vmem:[#allocation6 + $0x4] sm:$0xf]
    %v7398 = vld [vmem:[#allocation6 + $0x10] sm:$0xf]
    %v7399 = vld [vmem:[#allocation6 + $0x14] sm:$0xf]
    %v7404 = vrot.slane %v7396, 1
    %v7405 = vrot.slane %v7396, 2
    %v7406 = vrot.slane %v7396, 3
    %v7407 = vrot.slane %v7397, 1
    %v7408 = vrot.slane %v7397, 2
    %v7409 = vrot.slane %v7397, 3
    %v7410 = vrot.slane %v7398, 1
    %v7411 = vrot.slane %v7398, 2
    %v7412 = vrot.slane %v7398, 3
    %v7413 = vrot.slane %v7399, 1
    %v7414 = vrot.slane %v7399, 2
    %v7415 = vrot.slane %v7399, 3
    %v7418 = vsel %vm7357, %v7396, %v7404
    %v7421 = vsel %vm4158, %v7405, %v7406
    %v7422 = vsel %vm3522, %v7418, %v7421
    %vm7423 = vcmask 1041409
    %v7424 = vsel %vm7423, %v7396, %v7404
    %v7425 = vsel %vm4160, %v7405, %v7406
    %vm7426 = vcmask 1042433
    %v7427 = vsel %vm7426, %v7424, %v7425
    %v7429 = vrot.slane %v7427, 1
    %v7432 = vsel %vm7357, %v7397, %v7407
    %v7435 = vsel %vm4158, %v7408, %v7409
    %v7436 = vsel %vm3522, %v7432, %v7435
    %v7437 = vsel %vm7423, %v7397, %v7407
    %v7438 = vsel %vm4160, %v7408, %v7409
    %v7439 = vsel %vm7426, %v7437, %v7438
    %v7441 = vrot.slane %v7439, 1
    %v7444 = vsel %vm7357, %v7398, %v7410
    %v7447 = vsel %vm4158, %v7411, %v7412
    %v7448 = vsel %vm3522, %v7444, %v7447
    %v7449 = vsel %vm7423, %v7398, %v7410
    %v7450 = vsel %vm4160, %v7411, %v7412
    %v7451 = vsel %vm7426, %v7449, %v7450
    %v7453 = vrot.slane %v7451, 1
    %v7456 = vsel %vm7357, %v7399, %v7413
    %v7459 = vsel %vm4158, %v7414, %v7415
    %v7460 = vsel %vm3522, %v7456, %v7459
    %v7461 = vsel %vm7423, %v7399, %v7413
    %v7462 = vsel %vm4160, %v7414, %v7415
    %v7463 = vsel %vm7426, %v7461, %v7462
    %v7465 = vrot.slane %v7463, 1
    %vm7466 = vsmask.f32 1284
    %vm7467 = vmor %vm602, %vm7466
    %vm7468 = vsmask.f32 2312
    %vm7469 = vmor %vm7467, %vm7468
    %vm7470 = vsmask.f32 3340
    %vm7471 = vmor %vm7469, %vm7470
    %vm7472 = vsmask.f32 4368
    %vm7473 = vmor %vm7471, %vm7472
    %vm7474 = vsmask.f32 5396
    %vm7475 = vmor %vm7473, %vm7474
    %vm7476 = vsmask.f32 6424
    %vm7477 = vmor %vm7475, %vm7476
    %vm7478 = vsmask.f32 7452
    %vm7479 = vmor %vm7477, %vm7478
    %v7480 = vshrl.u32 %v7422, 16
    %v7482 = vrot.slane %v7480, 7
    %v7483 = vrot.slane %v7482, 1
    %v7485 = vshll.u32 %v7429, 16
    %v7487 = vsel %vm7479, %v7483, %v7485
    %v7488 = vshrl.u32 %v7436, 16
    %v7490 = vrot.slane %v7488, 7
    %v7491 = vrot.slane %v7490, 1
    %v7493 = vshll.u32 %v7441, 16
    %v7495 = vsel %vm7479, %v7491, %v7493
    %v7496 = vshrl.u32 %v7448, 16
    %v7498 = vrot.slane %v7496, 7
    %v7499 = vrot.slane %v7498, 1
    %v7501 = vshll.u32 %v7453, 16
    %v7503 = vsel %vm7479, %v7499, %v7501
    %v7504 = vshrl.u32 %v7460, 16
    %v7506 = vrot.slane %v7504, 7
    %v7507 = vrot.slane %v7506, 1
    %v7509 = vshll.u32 %v7465, 16
    %v7511 = vsel %vm7479, %v7507, %v7509
    %7513 = vst [vmem:[#allocation1] ss:$4 sm:$0xff] %v7487
    %s7515 = scalar_lea.vmem [#allocation1], 1
    %7516 = vst [vmem:[%s7515] ss:$4 sm:$0xff] %v7495
    %s7518 = scalar_lea.vmem [#allocation1], 2
    %7519 = vst [vmem:[%s7518] ss:$4 sm:$0xff] %v7503
    %s7521 = scalar_lea.vmem [#allocation1], 3
    %7522 = vst [vmem:[%s7521] ss:$4 sm:$0xff] %v7511
    %v7523 = vld [vmem:[#allocation1] sm:$0xff]
    %7525 = vst [vmem:[#allocation7 + $0x8] sm:$0xff] %v7523
    %v7526 = vld [vmem:[#allocation6] sm:$0xa]
    %v7527 = vld [vmem:[#allocation6 + $0x4] sm:$0xa]
    %v7528 = vld [vmem:[#allocation6 + $0x10] sm:$0xa]
    %v7529 = vld [vmem:[#allocation6 + $0x14] sm:$0xa]
    %7531 = vst [vmem:[#allocation1] sm:$0xff] %v7526
    %s7532 = scalar_lea.vmem [#allocation1], 1
    %v7533 = vld [vmem:[%s7532] ss:$2 sm:$0xff]
    %7535 = vst [vmem:[#allocation1 + $0x10] sm:$0xff] %v7527
    %s7536 = scalar_lea.vmem [#allocation1], 17
    %v7537 = vld [vmem:[%s7536] ss:$2 sm:$0xff]
    %7539 = vst [vmem:[#allocation1 + $0x20] sm:$0xff] %v7528
    %s7540 = scalar_lea.vmem [#allocation1], 33
    %v7541 = vld [vmem:[%s7540] ss:$2 sm:$0xff]
    %7543 = vst [vmem:[#allocation1 + $0x30] sm:$0xff] %v7529
    %s7544 = scalar_lea.vmem [#allocation1], 49
    %v7545 = vld [vmem:[%s7544] ss:$2 sm:$0xff]
    %7546 = vst [vmem:[#allocation1] ss:$4 sm:$0xff] %v7533
    %s7547 = scalar_lea.vmem [#allocation1], 1
    %7548 = vst [vmem:[%s7547] ss:$4 sm:$0xff] %v7537
    %s7549 = scalar_lea.vmem [#allocation1], 2
    %7550 = vst [vmem:[%s7549] ss:$4 sm:$0xff] %v7541
    %s7551 = scalar_lea.vmem [#allocation1], 3
    %7552 = vst [vmem:[%s7551] ss:$4 sm:$0xff] %v7545
    %v7553 = vld [vmem:[#allocation1] sm:$0xff]
    %7555 = vst [vmem:[#allocation7 + $0x10] sm:$0xff] %v7553
    %v7556 = vld [vmem:[%s7144] sm:$0x5]
    %v7557 = vld [vmem:[%s7144 + $0x4] sm:$0x5]
    %v7558 = vld [vmem:[%s7144 + $0x10] sm:$0x5]
    %v7559 = vld [vmem:[%s7144 + $0x14] sm:$0x5]
    %v7564 = vrot.slane %v7556, 1
    %v7565 = vrot.slane %v7556, 2
    %v7566 = vrot.slane %v7556, 3
    %v7567 = vrot.slane %v7557, 1
    %v7568 = vrot.slane %v7557, 2
    %v7569 = vrot.slane %v7557, 3
    %v7570 = vrot.slane %v7558, 1
    %v7571 = vrot.slane %v7558, 2
    %v7572 = vrot.slane %v7558, 3
    %v7573 = vrot.slane %v7559, 1
    %v7574 = vrot.slane %v7559, 2
    %v7575 = vrot.slane %v7559, 3
    %v7578 = vsel %vm7357, %v7556, %v7564
    %v7581 = vsel %vm4158, %v7565, %v7566
    %v7582 = vsel %vm3522, %v7578, %v7581
    %v7585 = vsel %vm7357, %v7557, %v7567
    %v7588 = vsel %vm4158, %v7568, %v7569
    %v7589 = vsel %vm3522, %v7585, %v7588
    %v7592 = vsel %vm7357, %v7558, %v7570
    %v7595 = vsel %vm4158, %v7571, %v7572
    %v7596 = vsel %vm3522, %v7592, %v7595
    %v7599 = vsel %vm7357, %v7559, %v7573
    %v7602 = vsel %vm4158, %v7574, %v7575
    %v7603 = vsel %vm3522, %v7599, %v7602
    %7604 = vst [vmem:[#allocation1] ss:$4 sm:$0xff] %v7582
    %s7605 = scalar_lea.vmem [#allocation1], 1
    %7606 = vst [vmem:[%s7605] ss:$4 sm:$0xff] %v7589
    %s7607 = scalar_lea.vmem [#allocation1], 2
    %7608 = vst [vmem:[%s7607] ss:$4 sm:$0xff] %v7596
    %s7609 = scalar_lea.vmem [#allocation1], 3
    %7610 = vst [vmem:[%s7609] ss:$4 sm:$0xff] %v7603
    %v7611 = vld [vmem:[#allocation1] sm:$0xff]
    %7613 = vst [vmem:[#allocation7 + $0x18] sm:$0xff] %v7611
    %v7614 = vld [vmem:[%s7144] sm:$0xf]
    %v7615 = vld [vmem:[%s7144 + $0x4] sm:$0xf]
    %v7616 = vld [vmem:[%s7144 + $0x10] sm:$0xf]
    %v7617 = vld [vmem:[%s7144 + $0x14] sm:$0xf]
    %v7622 = vrot.slane %v7614, 1
    %v7623 = vrot.slane %v7614, 2
    %v7624 = vrot.slane %v7614, 3
    %v7625 = vrot.slane %v7615, 1
    %v7626 = vrot.slane %v7615, 2
    %v7627 = vrot.slane %v7615, 3
    %v7628 = vrot.slane %v7616, 1
    %v7629 = vrot.slane %v7616, 2
    %v7630 = vrot.slane %v7616, 3
    %v7631 = vrot.slane %v7617, 1
    %v7632 = vrot.slane %v7617, 2
    %v7633 = vrot.slane %v7617, 3
    %v7636 = vsel %vm7357, %v7614, %v7622
    %v7639 = vsel %vm4158, %v7623, %v7624
    %v7640 = vsel %vm3522, %v7636, %v7639
    %v7641 = vsel %vm7423, %v7614, %v7622
    %v7642 = vsel %vm4160, %v7623, %v7624
    %v7643 = vsel %vm7426, %v7641, %v7642
    %v7645 = vrot.slane %v7643, 1
    %v7648 = vsel %vm7357, %v7615, %v7625
    %v7651 = vsel %vm4158, %v7626, %v7627
    %v7652 = vsel %vm3522, %v7648, %v7651
    %v7653 = vsel %vm7423, %v7615, %v7625
    %v7654 = vsel %vm4160, %v7626, %v7627
    %v7655 = vsel %vm7426, %v7653, %v7654
    %v7657 = vrot.slane %v7655, 1
    %v7660 = vsel %vm7357, %v7616, %v7628
    %v7663 = vsel %vm4158, %v7629, %v7630
    %v7664 = vsel %vm3522, %v7660, %v7663
    %v7665 = vsel %vm7423, %v7616, %v7628
    %v7666 = vsel %vm4160, %v7629, %v7630
    %v7667 = vsel %vm7426, %v7665, %v7666
    %v7669 = vrot.slane %v7667, 1
    %v7672 = vsel %vm7357, %v7617, %v7631
    %v7675 = vsel %vm4158, %v7632, %v7633
    %v7676 = vsel %vm3522, %v7672, %v7675
    %v7677 = vsel %vm7423, %v7617, %v7631
    %v7678 = vsel %vm4160, %v7632, %v7633
    %v7679 = vsel %vm7426, %v7677, %v7678
    %v7681 = vrot.slane %v7679, 1
    %v7682 = vshrl.u32 %v7640, 16
    %v7684 = vrot.slane %v7682, 7
    %v7685 = vrot.slane %v7684, 1
    %v7687 = vshll.u32 %v7645, 16
    %v7689 = vsel %vm7479, %v7685, %v7687
    %v7690 = vshrl.u32 %v7652, 16
    %v7692 = vrot.slane %v7690, 7
    %v7693 = vrot.slane %v7692, 1
    %v7695 = vshll.u32 %v7657, 16
    %v7697 = vsel %vm7479, %v7693, %v7695
    %v7698 = vshrl.u32 %v7664, 16
    %v7700 = vrot.slane %v7698, 7
    %v7701 = vrot.slane %v7700, 1
    %v7703 = vshll.u32 %v7669, 16
    %v7705 = vsel %vm7479, %v7701, %v7703
    %v7706 = vshrl.u32 %v7676, 16
    %v7708 = vrot.slane %v7706, 7
    %v7709 = vrot.slane %v7708, 1
    %v7711 = vshll.u32 %v7681, 16
    %v7713 = vsel %vm7479, %v7709, %v7711
    %7715 = vst [vmem:[#allocation1] ss:$4 sm:$0xff] %v7689
    %s7717 = scalar_lea.vmem [#allocation1], 1
    %7718 = vst [vmem:[%s7717] ss:$4 sm:$0xff] %v7697
    %s7720 = scalar_lea.vmem [#allocation1], 2
    %7721 = vst [vmem:[%s7720] ss:$4 sm:$0xff] %v7705
    %s7723 = scalar_lea.vmem [#allocation1], 3
    %7724 = vst [vmem:[%s7723] ss:$4 sm:$0xff] %v7713
    %v7725 = vld [vmem:[#allocation1] sm:$0xff]
    %7727 = vst [vmem:[#allocation7 + $0x20] sm:$0xff] %v7725
    %v7728 = vld [vmem:[%s7144] sm:$0xa]
    %v7729 = vld [vmem:[%s7144 + $0x4] sm:$0xa]
    %v7730 = vld [vmem:[%s7144 + $0x10] sm:$0xa]
    %v7731 = vld [vmem:[%s7144 + $0x14] sm:$0xa]
    %7733 = vst [vmem:[#allocation1] sm:$0xff] %v7728
    %s7734 = scalar_lea.vmem [#allocation1], 1
    %v7735 = vld [vmem:[%s7734] ss:$2 sm:$0xff]
    %7737 = vst [vmem:[#allocation1 + $0x10] sm:$0xff] %v7729
    %s7738 = scalar_lea.vmem [#allocation1], 17
    %v7739 = vld [vmem:[%s7738] ss:$2 sm:$0xff]
    %7741 = vst [vmem:[#allocation1 + $0x20] sm:$0xff] %v7730
    %s7742 = scalar_lea.vmem [#allocation1], 33
    %v7743 = vld [vmem:[%s7742] ss:$2 sm:$0xff]
    %7745 = vst [vmem:[#allocation1 + $0x30] sm:$0xff] %v7731
    %s7746 = scalar_lea.vmem [#allocation1], 49
    %v7747 = vld [vmem:[%s7746] ss:$2 sm:$0xff]
    %7748 = vst [vmem:[#allocation1] ss:$4 sm:$0xff] %v7735
    %s7749 = scalar_lea.vmem [#allocation1], 1
    %7750 = vst [vmem:[%s7749] ss:$4 sm:$0xff] %v7739
    %s7751 = scalar_lea.vmem [#allocation1], 2
    %7752 = vst [vmem:[%s7751] ss:$4 sm:$0xff] %v7743
    %s7753 = scalar_lea.vmem [#allocation1], 3
    %7754 = vst [vmem:[%s7753] ss:$4 sm:$0xff] %v7747
    %v7755 = vld [vmem:[#allocation1] sm:$0xff]
    %7757 = vst [vmem:[#allocation7 + $0x28] sm:$0xff] %v7755
    %s7758 = scalar_lea.vmem [#allocation6], 8
    %v7759 = vld [vmem:[%s7758] sm:$0x5]
    %v7760 = vld [vmem:[%s7758 + $0x4] sm:$0x5]
    %v7761 = vld [vmem:[%s7758 + $0x10] sm:$0x5]
    %v7762 = vld [vmem:[%s7758 + $0x14] sm:$0x5]
    %v7767 = vrot.slane %v7759, 1
    %v7768 = vrot.slane %v7759, 2
    %v7769 = vrot.slane %v7759, 3
    %v7770 = vrot.slane %v7760, 1
    %v7771 = vrot.slane %v7760, 2
    %v7772 = vrot.slane %v7760, 3
    %v7773 = vrot.slane %v7761, 1
    %v7774 = vrot.slane %v7761, 2
    %v7775 = vrot.slane %v7761, 3
    %v7776 = vrot.slane %v7762, 1
    %v7777 = vrot.slane %v7762, 2
    %v7778 = vrot.slane %v7762, 3
    %v7781 = vsel %vm7357, %v7759, %v7767
    %v7784 = vsel %vm4158, %v7768, %v7769
    %v7785 = vsel %vm3522, %v7781, %v7784
    %v7788 = vsel %vm7357, %v7760, %v7770
    %v7791 = vsel %vm4158, %v7771, %v7772
    %v7792 = vsel %vm3522, %v7788, %v7791
    %v7795 = vsel %vm7357, %v7761, %v7773
    %v7798 = vsel %vm4158, %v7774, %v7775
    %v7799 = vsel %vm3522, %v7795, %v7798
    %v7802 = vsel %vm7357, %v7762, %v7776
    %v7805 = vsel %vm4158, %v7777, %v7778
    %v7806 = vsel %vm3522, %v7802, %v7805
    %7807 = vst [vmem:[#allocation1] ss:$4 sm:$0xff] %v7785
    %s7808 = scalar_lea.vmem [#allocation1], 1
    %7809 = vst [vmem:[%s7808] ss:$4 sm:$0xff] %v7792
    %s7810 = scalar_lea.vmem [#allocation1], 2
    %7811 = vst [vmem:[%s7810] ss:$4 sm:$0xff] %v7799
    %s7812 = scalar_lea.vmem [#allocation1], 3
    %7813 = vst [vmem:[%s7812] ss:$4 sm:$0xff] %v7806
    %v7814 = vld [vmem:[#allocation1] sm:$0xff]
    %7816 = vst [vmem:[#allocation7 + $0x30] sm:$0xff] %v7814
    %v7817 = vld [vmem:[%s7758] sm:$0xf]
    %v7818 = vld [vmem:[%s7758 + $0x4] sm:$0xf]
    %v7819 = vld [vmem:[%s7758 + $0x10] sm:$0xf]
    %v7820 = vld [vmem:[%s7758 + $0x14] sm:$0xf]
    %v7825 = vrot.slane %v7817, 1
    %v7826 = vrot.slane %v7817, 2
    %v7827 = vrot.slane %v7817, 3
    %v7828 = vrot.slane %v7818, 1
    %v7829 = vrot.slane %v7818, 2
    %v7830 = vrot.slane %v7818, 3
    %v7831 = vrot.slane %v7819, 1
    %v7832 = vrot.slane %v7819, 2
    %v7833 = vrot.slane %v7819, 3
    %v7834 = vrot.slane %v7820, 1
    %v7835 = vrot.slane %v7820, 2
    %v7836 = vrot.slane %v7820, 3
    %v7839 = vsel %vm7357, %v7817, %v7825
    %v7842 = vsel %vm4158, %v7826, %v7827
    %v7843 = vsel %vm3522, %v7839, %v7842
    %v7844 = vsel %vm7423, %v7817, %v7825
    %v7845 = vsel %vm4160, %v7826, %v7827
    %v7846 = vsel %vm7426, %v7844, %v7845
    %v7848 = vrot.slane %v7846, 1
    %v7851 = vsel %vm7357, %v7818, %v7828
    %v7854 = vsel %vm4158, %v7829, %v7830
    %v7855 = vsel %vm3522, %v7851, %v7854
    %v7856 = vsel %vm7423, %v7818, %v7828
    %v7857 = vsel %vm4160, %v7829, %v7830
    %v7858 = vsel %vm7426, %v7856, %v7857
    %v7860 = vrot.slane %v7858, 1
    %v7863 = vsel %vm7357, %v7819, %v7831
    %v7866 = vsel %vm4158, %v7832, %v7833
    %v7867 = vsel %vm3522, %v7863, %v7866
    %v7868 = vsel %vm7423, %v7819, %v7831
    %v7869 = vsel %vm4160, %v7832, %v7833
    %v7870 = vsel %vm7426, %v7868, %v7869
    %v7872 = vrot.slane %v7870, 1
    %v7875 = vsel %vm7357, %v7820, %v7834
    %v7878 = vsel %vm4158, %v7835, %v7836
    %v7879 = vsel %vm3522, %v7875, %v7878
    %v7880 = vsel %vm7423, %v7820, %v7834
    %v7881 = vsel %vm4160, %v7835, %v7836
    %v7882 = vsel %vm7426, %v7880, %v7881
    %v7884 = vrot.slane %v7882, 1
    %v7885 = vshrl.u32 %v7843, 16
    %v7887 = vrot.slane %v7885, 7
    %v7888 = vrot.slane %v7887, 1
    %v7890 = vshll.u32 %v7848, 16
    %v7892 = vsel %vm7479, %v7888, %v7890
    %v7893 = vshrl.u32 %v7855, 16
    %v7895 = vrot.slane %v7893, 7
    %v7896 = vrot.slane %v7895, 1
    %v7898 = vshll.u32 %v7860, 16
    %v7900 = vsel %vm7479, %v7896, %v7898
    %v7901 = vshrl.u32 %v7867, 16
    %v7903 = vrot.slane %v7901, 7
    %v7904 = vrot.slane %v7903, 1
    %v7906 = vshll.u32 %v7872, 16
    %v7908 = vsel %vm7479, %v7904, %v7906
    %v7909 = vshrl.u32 %v7879, 16
    %v7911 = vrot.slane %v7909, 7
    %v7912 = vrot.slane %v7911, 1
    %v7914 = vshll.u32 %v7884, 16
    %v7916 = vsel %vm7479, %v7912, %v7914
    %7918 = vst [vmem:[#allocation1] ss:$4 sm:$0xff] %v7892
    %s7920 = scalar_lea.vmem [#allocation1], 1
    %7921 = vst [vmem:[%s7920] ss:$4 sm:$0xff] %v7900
    %s7923 = scalar_lea.vmem [#allocation1], 2
    %7924 = vst [vmem:[%s7923] ss:$4 sm:$0xff] %v7908
    %s7926 = scalar_lea.vmem [#allocation1], 3
    %7927 = vst [vmem:[%s7926] ss:$4 sm:$0xff] %v7916
    %v7928 = vld [vmem:[#allocation1] sm:$0xff]
    %7930 = vst [vmem:[#allocation7 + $0x38] sm:$0xff] %v7928
    %v7931 = vld [vmem:[%s7758] sm:$0xa]
    %v7932 = vld [vmem:[%s7758 + $0x4] sm:$0xa]
    %v7933 = vld [vmem:[%s7758 + $0x10] sm:$0xa]
    %v7934 = vld [vmem:[%s7758 + $0x14] sm:$0xa]
    %7936 = vst [vmem:[#allocation1] sm:$0xff] %v7931
    %s7937 = scalar_lea.vmem [#allocation1], 1
    %v7938 = vld [vmem:[%s7937] ss:$2 sm:$0xff]
    %7940 = vst [vmem:[#allocation1 + $0x10] sm:$0xff] %v7932
    %s7941 = scalar_lea.vmem [#allocation1], 17
    %v7942 = vld [vmem:[%s7941] ss:$2 sm:$0xff]
    %7944 = vst [vmem:[#allocation1 + $0x20] sm:$0xff] %v7933
    %s7945 = scalar_lea.vmem [#allocation1], 33
    %v7946 = vld [vmem:[%s7945] ss:$2 sm:$0xff]
    %7948 = vst [vmem:[#allocation1 + $0x30] sm:$0xff] %v7934
    %s7949 = scalar_lea.vmem [#allocation1], 49
    %v7950 = vld [vmem:[%s7949] ss:$2 sm:$0xff]
    %7951 = vst [vmem:[#allocation1] ss:$4 sm:$0xff] %v7938
    %s7952 = scalar_lea.vmem [#allocation1], 1
    %7953 = vst [vmem:[%s7952] ss:$4 sm:$0xff] %v7942
    %s7954 = scalar_lea.vmem [#allocation1], 2
    %7955 = vst [vmem:[%s7954] ss:$4 sm:$0xff] %v7946
    %s7956 = scalar_lea.vmem [#allocation1], 3
    %7957 = vst [vmem:[%s7956] ss:$4 sm:$0xff] %v7950
    %v7958 = vld [vmem:[#allocation1] sm:$0xff]
    %7960 = vst [vmem:[#allocation7 + $0x40] sm:$0xff] %v7958
    %v7961 = vld [vmem:[#allocation7] sm:$0xff]
    %v7962 = vld [vmem:[#allocation7 + $0x8] sm:$0xff]
    %v7963 = vld [vmem:[#allocation7 + $0x10] sm:$0xff]
    %v7964 = vld [vmem:[#allocation7 + $0x18] sm:$0xff]
    %v7965 = vld [vmem:[#allocation7 + $0x20] sm:$0xff]
    %v7966 = vld [vmem:[#allocation7 + $0x28] sm:$0xff]
    %v7967 = vld [vmem:[#allocation7 + $0x30] sm:$0xff]
    %v7968 = vld [vmem:[#allocation7 + $0x38] sm:$0xff]
    %v7969 = vld [vmem:[#allocation7 + $0x40] sm:$0xff]
    %v7970 = vld [vmem:[#allocation19] sm:$0xff]
    %v7971 = vld [vmem:[#allocation19 + $0x8] sm:$0xff]
    %v7972 = vld [vmem:[#allocation19 + $0x10] sm:$0xff]
    %v7973 = vld [vmem:[#allocation19 + $0x18] sm:$0xff]
    %v7974 = vld [vmem:[#allocation19 + $0x20] sm:$0xff]
    %v7975 = vld [vmem:[#allocation19 + $0x28] sm:$0xff]
    %v7976 = vld [vmem:[#allocation19 + $0x30] sm:$0xff]
    %v7977 = vld [vmem:[#allocation19 + $0x38] sm:$0xff]
    %v7978 = vld [vmem:[#allocation19 + $0x40] sm:$0xff]
    %v7979 = vld [vmem:[#allocation19 + $0x48] sm:$0xff]
    %v7980 = vld [vmem:[#allocation19 + $0x50] sm:$0xff]
    %v7981 = vld [vmem:[#allocation19 + $0x58] sm:$0xff]
    %v7982 = vld [vmem:[#allocation19 + $0x60] sm:$0xff]
    %v7983 = vld [vmem:[#allocation19 + $0x68] sm:$0xff]
    %v7984 = vld [vmem:[#allocation19 + $0x70] sm:$0xff]
    %v7985 = vld [vmem:[#allocation19 + $0x78] sm:$0xff]
    %v7986 = vld [vmem:[#allocation19 + $0x80] sm:$0xff]
    %v7987 = vld [vmem:[#allocation19 + $0x88] sm:$0xff]
    %v7988 = vld [vmem:[#allocation19 + $0x90] sm:$0xff]
    %v7989 = vld [vmem:[#allocation19 + $0x98] sm:$0xff]
    %v7990 = vld [vmem:[#allocation19 + $0xa0] sm:$0xff]
    %v7991 = vld [vmem:[#allocation19 + $0xa8] sm:$0xff]
    %v7992 = vld [vmem:[#allocation19 + $0xb0] sm:$0xff]
    %v7993 = vld [vmem:[#allocation19 + $0xb8] sm:$0xff]
    %v7994 = vld [vmem:[#allocation19 + $0xc0] sm:$0xff]
    %v7995 = vld [vmem:[#allocation19 + $0xc8] sm:$0xff]
    %v7996 = vld [vmem:[#allocation19 + $0xd0] sm:$0xff]
    %v7997 = vld [vmem:[#allocation19 + $0xd8] sm:$0xff]
    %v7998 = vld [vmem:[#allocation19 + $0xe0] sm:$0xff]
    %v7999 = vld [vmem:[#allocation19 + $0xe8] sm:$0xff]
    %v8000 = vld [vmem:[#allocation19 + $0xf0] sm:$0xff]
    %v8001 = vld [vmem:[#allocation19 + $0xf8] sm:$0xff]
    %v8002 = vld [vmem:[#allocation19 + $0x100] sm:$0xff]
    %v8003 = vld [vmem:[#allocation19 + $0x108] sm:$0xff]
    %v8004 = vld [vmem:[#allocation19 + $0x110] sm:$0xff]
    %v8005 = vld [vmem:[#allocation19 + $0x118] sm:$0xff]
    %v8006 = vld [vmem:[#allocation19 + $0x120] sm:$0xff]
    %v8007 = vld [vmem:[#allocation19 + $0x128] sm:$0xff]
    %v8008 = vld [vmem:[#allocation19 + $0x130] sm:$0xff]
    %v8009 = vld [vmem:[#allocation19 + $0x138] sm:$0xff]
    %v8010 = vld [vmem:[#allocation19 + $0x140] sm:$0xff]
    %v8011 = vld [vmem:[#allocation19 + $0x148] sm:$0xff]
    %v8012 = vld [vmem:[#allocation19 + $0x150] sm:$0xff]
    %v8013 = vld [vmem:[#allocation19 + $0x158] sm:$0xff]
    %v8014 = vld [vmem:[#allocation19 + $0x160] sm:$0xff]
    %v8015 = vld [vmem:[#allocation19 + $0x168] sm:$0xff]
    %v8016 = vld [vmem:[#allocation19 + $0x170] sm:$0xff]
    %v8017 = vld [vmem:[#allocation19 + $0x178] sm:$0xff]
    %v8018 = vld [vmem:[#allocation19 + $0x180] sm:$0xff]
    %v8019 = vld [vmem:[#allocation19 + $0x188] sm:$0xff]
    %v8020 = vld [vmem:[#allocation19 + $0x190] sm:$0xff]
    %v8021 = vld [vmem:[#allocation19 + $0x198] sm:$0xff]
    %v8022 = vld [vmem:[#allocation19 + $0x1a0] sm:$0xff]
    %v8023 = vld [vmem:[#allocation19 + $0x1a8] sm:$0xff]
    %v8024 = vld [vmem:[#allocation19 + $0x1b0] sm:$0xff]
    %v8025 = vld [vmem:[#allocation19 + $0x1b8] sm:$0xff]
    %v8026 = vld [vmem:[#allocation19 + $0x1c0] sm:$0xff]
    %v8027 = vld [vmem:[#allocation19 + $0x1c8] sm:$0xff]
    %v8028 = vld [vmem:[#allocation19 + $0x1d0] sm:$0xff]
    %v8029 = vld [vmem:[#allocation19 + $0x1d8] sm:$0xff]
    %v8030 = vld [vmem:[#allocation19 + $0x1e0] sm:$0xff]
    %v8031 = vld [vmem:[#allocation19 + $0x1e8] sm:$0xff]
    %v8032 = vld [vmem:[#allocation19 + $0x1f0] sm:$0xff]
    %v8033 = vld [vmem:[#allocation19 + $0x1f8] sm:$0xff]
    %v8034 = vld [vmem:[#allocation19 + $0x200] sm:$0xff]
    %v8035 = vld [vmem:[#allocation19 + $0x208] sm:$0xff]
    %v8036 = vld [vmem:[#allocation19 + $0x210] sm:$0xff]
    %v8037 = vld [vmem:[#allocation19 + $0x218] sm:$0xff]
    %v8038 = vld [vmem:[#allocation19 + $0x220] sm:$0xff]
    %v8039 = vld [vmem:[#allocation19 + $0x228] sm:$0xff]
    %v8040 = vld [vmem:[#allocation19 + $0x230] sm:$0xff]
    %v8041 = vld [vmem:[#allocation19 + $0x238] sm:$0xff]
    %v8042 = vld [vmem:[#allocation19 + $0x240] sm:$0xff]
    %v8043 = vld [vmem:[#allocation19 + $0x248] sm:$0xff]
    %v8044 = vld [vmem:[#allocation19 + $0x250] sm:$0xff]
    %v8045 = vld [vmem:[#allocation19 + $0x258] sm:$0xff]
    %v8046 = vld [vmem:[#allocation19 + $0x260] sm:$0xff]
    %v8047 = vld [vmem:[#allocation19 + $0x268] sm:$0xff]
    %v8048 = vld [vmem:[#allocation19 + $0x270] sm:$0xff]
    %v8049 = vld [vmem:[#allocation19 + $0x278] sm:$0xff]
    %v8050 = vld [vmem:[#allocation19 + $0x280] sm:$0xff]
    %v8051 = vld [vmem:[#allocation19 + $0x288] sm:$0xff]
    %v8052 = vld [vmem:[#allocation19 + $0x290] sm:$0xff]
    %v8053 = vld [vmem:[#allocation19 + $0x298] sm:$0xff]
    %v8054 = vld [vmem:[#allocation19 + $0x2a0] sm:$0xff]
    %v8055 = vld [vmem:[#allocation19 + $0x2a8] sm:$0xff]
    %v8056 = vld [vmem:[#allocation19 + $0x2b0] sm:$0xff]
    %v8057 = vld [vmem:[#allocation19 + $0x2b8] sm:$0xff]
    %v8058 = vld [vmem:[#allocation19 + $0x2c0] sm:$0xff]
    %v8059 = vld [vmem:[#allocation19 + $0x2c8] sm:$0xff]
    %v8060 = vld [vmem:[#allocation19 + $0x2d0] sm:$0xff]
    %v8061 = vld [vmem:[#allocation19 + $0x2d8] sm:$0xff]
    %v8062 = vld [vmem:[#allocation19 + $0x2e0] sm:$0xff]
    %v8063 = vld [vmem:[#allocation19 + $0x2e8] sm:$0xff]
    %v8064 = vld [vmem:[#allocation19 + $0x2f0] sm:$0xff]
    %v8065 = vld [vmem:[#allocation19 + $0x2f8] sm:$0xff]
    %v8066 = vld [vmem:[#allocation19 + $0x300] sm:$0xff]
    %v8067 = vld [vmem:[#allocation19 + $0x308] sm:$0xff]
    %v8068 = vld [vmem:[#allocation19 + $0x310] sm:$0xff]
    %v8069 = vld [vmem:[#allocation19 + $0x318] sm:$0xff]
    %v8070 = vld [vmem:[#allocation19 + $0x320] sm:$0xff]
    %v8071 = vld [vmem:[#allocation19 + $0x328] sm:$0xff]
    %v8072 = vld [vmem:[#allocation19 + $0x330] sm:$0xff]
    %v8073 = vld [vmem:[#allocation19 + $0x338] sm:$0xff]
    %v8074 = vld [vmem:[#allocation19 + $0x340] sm:$0xff]
    %v8075 = vld [vmem:[#allocation19 + $0x348] sm:$0xff]
    %v8076 = vld [vmem:[#allocation19 + $0x350] sm:$0xff]
    %v8077 = vld [vmem:[#allocation19 + $0x358] sm:$0xff]
    %v8078 = vld [vmem:[#allocation19 + $0x360] sm:$0xff]
    %v8079 = vld [vmem:[#allocation19 + $0x368] sm:$0xff]
    %v8080 = vld [vmem:[#allocation19 + $0x370] sm:$0xff]
    %v8081 = vld [vmem:[#allocation19 + $0x378] sm:$0xff]
    %v8082 = vld [vmem:[#allocation19 + $0x380] sm:$0xff]
    %v8083 = vld [vmem:[#allocation19 + $0x388] sm:$0xff]
    %v8084 = vld [vmem:[#allocation19 + $0x390] sm:$0xff]
    %v8085 = vld [vmem:[#allocation19 + $0x398] sm:$0xff]
    %v8086 = vld [vmem:[#allocation19 + $0x3a0] sm:$0xff]
    %v8087 = vld [vmem:[#allocation19 + $0x3a8] sm:$0xff]
    %v8088 = vld [vmem:[#allocation19 + $0x3b0] sm:$0xff]
    %v8089 = vld [vmem:[#allocation19 + $0x3b8] sm:$0xff]
    %v8090 = vld [vmem:[#allocation19 + $0x3c0] sm:$0xff]
    %v8091 = vld [vmem:[#allocation19 + $0x3c8] sm:$0xff]
    %v8092 = vld [vmem:[#allocation19 + $0x3d0] sm:$0xff]
    %v8093 = vld [vmem:[#allocation19 + $0x3d8] sm:$0xff]
    %v8094 = vld [vmem:[#allocation19 + $0x3e0] sm:$0xff]
    %v8095 = vld [vmem:[#allocation19 + $0x3e8] sm:$0xff]
    %v8096 = vld [vmem:[#allocation19 + $0x3f0] sm:$0xff]
    %v8097 = vld [vmem:[#allocation19 + $0x3f8] sm:$0xff]
    %v8098 = vld [vmem:[#allocation19 + $0x400] sm:$0xff]
    %v8099 = vld [vmem:[#allocation19 + $0x408] sm:$0xff]
    %v8100 = vld [vmem:[#allocation19 + $0x410] sm:$0xff]
    %v8101 = vld [vmem:[#allocation19 + $0x418] sm:$0xff]
    %v8102 = vld [vmem:[#allocation19 + $0x420] sm:$0xff]
    %v8103 = vld [vmem:[#allocation19 + $0x428] sm:$0xff]
    %v8104 = vld [vmem:[#allocation19 + $0x430] sm:$0xff]
    %v8105 = vld [vmem:[#allocation19 + $0x438] sm:$0xff]
    %v8106 = vld [vmem:[#allocation19 + $0x440] sm:$0xff]
    %v8107 = vld [vmem:[#allocation19 + $0x448] sm:$0xff]
    %v8108 = vld [vmem:[#allocation19 + $0x450] sm:$0xff]
    %v8109 = vld [vmem:[#allocation19 + $0x458] sm:$0xff]
    %v8110 = vld [vmem:[#allocation19 + $0x460] sm:$0xff]
    %v8111 = vld [vmem:[#allocation19 + $0x468] sm:$0xff]
    %v8112 = vld [vmem:[#allocation19 + $0x470] sm:$0xff]
    %v8113 = vld [vmem:[#allocation19 + $0x478] sm:$0xff]
    %v8114 = vld [vmem:[#allocation19 + $0x480] sm:$0xff]
    %v8115 = vld [vmem:[#allocation19 + $0x488] sm:$0xff]
    %v8116 = vld [vmem:[#allocation19 + $0x490] sm:$0xff]
    %v8117 = vld [vmem:[#allocation19 + $0x498] sm:$0xff]
    %v8118 = vld [vmem:[#allocation19 + $0x4a0] sm:$0xff]
    %v8119 = vld [vmem:[#allocation19 + $0x4a8] sm:$0xff]
    %v8120 = vld [vmem:[#allocation19 + $0x4b0] sm:$0xff]
    %v8121 = vld [vmem:[#allocation19 + $0x4b8] sm:$0xff]
    %v8122 = vld [vmem:[#allocation19 + $0x4c0] sm:$0xff]
    %v8123 = vld [vmem:[#allocation19 + $0x4c8] sm:$0xff]
    %v8124 = vld [vmem:[#allocation19 + $0x4d0] sm:$0xff]
    %v8125 = vld [vmem:[#allocation19 + $0x4d8] sm:$0xff]
    %v8126 = vld [vmem:[#allocation19 + $0x4e0] sm:$0xff]
    %v8127 = vld [vmem:[#allocation19 + $0x4e8] sm:$0xff]
    %v8128 = vld [vmem:[#allocation19 + $0x4f0] sm:$0xff]
    %v8129 = vld [vmem:[#allocation19 + $0x4f8] sm:$0xff]
    %v8130 = vld [vmem:[#allocation19 + $0x500] sm:$0xff]
    %v8131 = vld [vmem:[#allocation19 + $0x508] sm:$0xff]
    %v8132 = vld [vmem:[#allocation19 + $0x510] sm:$0xff]
    %v8133 = vld [vmem:[#allocation19 + $0x518] sm:$0xff]
    %v8134 = vld [vmem:[#allocation19 + $0x520] sm:$0xff]
    %v8135 = vld [vmem:[#allocation19 + $0x528] sm:$0xff]
    %v8136 = vld [vmem:[#allocation19 + $0x530] sm:$0xff]
    %v8137 = vld [vmem:[#allocation19 + $0x538] sm:$0xff]
    %v8138 = vld [vmem:[#allocation19 + $0x540] sm:$0xff]
    %v8139 = vld [vmem:[#allocation19 + $0x548] sm:$0xff]
    %v8140 = vld [vmem:[#allocation19 + $0x550] sm:$0xff]
    %v8141 = vld [vmem:[#allocation19 + $0x558] sm:$0xff]
    %v8142 = vld [vmem:[#allocation19 + $0x560] sm:$0xff]
    %v8143 = vld [vmem:[#allocation19 + $0x568] sm:$0xff]
    %v8144 = vld [vmem:[#allocation19 + $0x570] sm:$0xff]
    %v8145 = vld [vmem:[#allocation19 + $0x578] sm:$0xff]
    %v8146 = vld [vmem:[#allocation19 + $0x580] sm:$0xff]
    %v8147 = vld [vmem:[#allocation19 + $0x588] sm:$0xff]
    %v8148 = vld [vmem:[#allocation19 + $0x590] sm:$0xff]
    %v8149 = vld [vmem:[#allocation19 + $0x598] sm:$0xff]
    %v8150 = vld [vmem:[#allocation19 + $0x5a0] sm:$0xff]
    %v8151 = vld [vmem:[#allocation19 + $0x5a8] sm:$0xff]
    %v8152 = vld [vmem:[#allocation19 + $0x5b0] sm:$0xff]
    %v8153 = vld [vmem:[#allocation19 + $0x5b8] sm:$0xff]
    %v8154 = vld [vmem:[#allocation19 + $0x5c0] sm:$0xff]
    %v8155 = vld [vmem:[#allocation19 + $0x5c8] sm:$0xff]
    %v8156 = vld [vmem:[#allocation19 + $0x5d0] sm:$0xff]
    %v8157 = vld [vmem:[#allocation19 + $0x5d8] sm:$0xff]
    %v8158 = vld [vmem:[#allocation19 + $0x5e0] sm:$0xff]
    %v8159 = vld [vmem:[#allocation19 + $0x5e8] sm:$0xff]
    %v8160 = vld [vmem:[#allocation19 + $0x5f0] sm:$0xff]
    %v8161 = vld [vmem:[#allocation19 + $0x5f8] sm:$0xff]
    %v8162 = vld [vmem:[#allocation19 + $0x600] sm:$0xff]
    %v8163 = vld [vmem:[#allocation19 + $0x608] sm:$0xff]
    %v8164 = vld [vmem:[#allocation19 + $0x610] sm:$0xff]
    %v8165 = vld [vmem:[#allocation19 + $0x618] sm:$0xff]
    %v8166 = vld [vmem:[#allocation19 + $0x620] sm:$0xff]
    %v8167 = vld [vmem:[#allocation19 + $0x628] sm:$0xff]
    %v8168 = vld [vmem:[#allocation19 + $0x630] sm:$0xff]
    %v8169 = vld [vmem:[#allocation19 + $0x638] sm:$0xff]
    %v8170 = vld [vmem:[#allocation19 + $0x640] sm:$0xff]
    %v8171 = vld [vmem:[#allocation19 + $0x648] sm:$0xff]
    %v8172 = vld [vmem:[#allocation19 + $0x650] sm:$0xff]
    %v8173 = vld [vmem:[#allocation19 + $0x658] sm:$0xff]
    %v8174 = vld [vmem:[#allocation19 + $0x660] sm:$0xff]
    %v8175 = vld [vmem:[#allocation19 + $0x668] sm:$0xff]
    %v8176 = vld [vmem:[#allocation19 + $0x670] sm:$0xff]
    %v8177 = vld [vmem:[#allocation19 + $0x678] sm:$0xff]
    %v8178 = vld [vmem:[#allocation19 + $0x680] sm:$0xff]
    %v8179 = vld [vmem:[#allocation19 + $0x688] sm:$0xff]
    %v8180 = vld [vmem:[#allocation19 + $0x690] sm:$0xff]
    %v8181 = vld [vmem:[#allocation19 + $0x698] sm:$0xff]
    %v8182 = vld [vmem:[#allocation19 + $0x6a0] sm:$0xff]
    %v8183 = vld [vmem:[#allocation19 + $0x6a8] sm:$0xff]
    %v8184 = vld [vmem:[#allocation19 + $0x6b0] sm:$0xff]
    %v8185 = vld [vmem:[#allocation19 + $0x6b8] sm:$0xff]
    %v8186 = vld [vmem:[#allocation19 + $0x6c0] sm:$0xff]
    %v8187 = vld [vmem:[#allocation19 + $0x6c8] sm:$0xff]
    %v8188 = vld [vmem:[#allocation19 + $0x6d0] sm:$0xff]
    %v8189 = vld [vmem:[#allocation19 + $0x6d8] sm:$0xff]
    %v8190 = vld [vmem:[#allocation19 + $0x6e0] sm:$0xff]
    %v8191 = vld [vmem:[#allocation19 + $0x6e8] sm:$0xff]
    %v8192 = vld [vmem:[#allocation19 + $0x6f0] sm:$0xff]
    %v8193 = vld [vmem:[#allocation19 + $0x6f8] sm:$0xff]
    %v8194 = vld [vmem:[#allocation19 + $0x700] sm:$0xff]
    %v8195 = vld [vmem:[#allocation19 + $0x708] sm:$0xff]
    %v8196 = vld [vmem:[#allocation19 + $0x710] sm:$0xff]
    %v8197 = vld [vmem:[#allocation19 + $0x718] sm:$0xff]
    %v8198 = vld [vmem:[#allocation19 + $0x720] sm:$0xff]
    %v8199 = vld [vmem:[#allocation19 + $0x728] sm:$0xff]
    %v8200 = vld [vmem:[#allocation19 + $0x730] sm:$0xff]
    %v8201 = vld [vmem:[#allocation19 + $0x738] sm:$0xff]
    %v8202 = vld [vmem:[#allocation19 + $0x740] sm:$0xff]
    %v8203 = vld [vmem:[#allocation19 + $0x748] sm:$0xff]
    %v8204 = vld [vmem:[#allocation19 + $0x750] sm:$0xff]
    %v8205 = vld [vmem:[#allocation19 + $0x758] sm:$0xff]
    %v8206 = vld [vmem:[#allocation19 + $0x760] sm:$0xff]
    %v8207 = vld [vmem:[#allocation19 + $0x768] sm:$0xff]
    %v8208 = vld [vmem:[#allocation19 + $0x770] sm:$0xff]
    %v8209 = vld [vmem:[#allocation19 + $0x778] sm:$0xff]
    %v8210 = vld [vmem:[#allocation19 + $0x780] sm:$0xff]
    %v8211 = vld [vmem:[#allocation19 + $0x788] sm:$0xff]
    %v8212 = vld [vmem:[#allocation19 + $0x790] sm:$0xff]
    %v8213 = vld [vmem:[#allocation19 + $0x798] sm:$0xff]
    %v8214 = vld [vmem:[#allocation19 + $0x7a0] sm:$0xff]
    %v8215 = vld [vmem:[#allocation19 + $0x7a8] sm:$0xff]
    %v8216 = vld [vmem:[#allocation19 + $0x7b0] sm:$0xff]
    %v8217 = vld [vmem:[#allocation19 + $0x7b8] sm:$0xff]
    %v8218 = vld [vmem:[#allocation19 + $0x7c0] sm:$0xff]
    %v8219 = vld [vmem:[#allocation19 + $0x7c8] sm:$0xff]
    %v8220 = vld [vmem:[#allocation19 + $0x7d0] sm:$0xff]
    %v8221 = vld [vmem:[#allocation19 + $0x7d8] sm:$0xff]
    %v8222 = vld [vmem:[#allocation19 + $0x7e0] sm:$0xff]
    %v8223 = vld [vmem:[#allocation19 + $0x7e8] sm:$0xff]
    %v8224 = vld [vmem:[#allocation19 + $0x7f0] sm:$0xff]
    %v8225 = vld [vmem:[#allocation19 + $0x7f8] sm:$0xff]
    %v8226 = vld [vmem:[#allocation19 + $0x800] sm:$0xff]
    %v8227 = vld [vmem:[#allocation19 + $0x808] sm:$0xff]
    %v8228 = vld [vmem:[#allocation19 + $0x810] sm:$0xff]
    %v8229 = vld [vmem:[#allocation19 + $0x818] sm:$0xff]
    %v8230 = vld [vmem:[#allocation19 + $0x820] sm:$0xff]
    %v8231 = vld [vmem:[#allocation19 + $0x828] sm:$0xff]
    %v8232 = vld [vmem:[#allocation19 + $0x830] sm:$0xff]
    %v8233 = vld [vmem:[#allocation19 + $0x838] sm:$0xff]
    %v8234 = vld [vmem:[#allocation19 + $0x840] sm:$0xff]
    %v8235 = vld [vmem:[#allocation19 + $0x848] sm:$0xff]
    %v8236 = vld [vmem:[#allocation19 + $0x850] sm:$0xff]
    %v8237 = vld [vmem:[#allocation19 + $0x858] sm:$0xff]
    %v8238 = vld [vmem:[#allocation19 + $0x860] sm:$0xff]
    %v8239 = vld [vmem:[#allocation19 + $0x868] sm:$0xff]
    %v8240 = vld [vmem:[#allocation19 + $0x870] sm:$0xff]
    %v8241 = vld [vmem:[#allocation19 + $0x878] sm:$0xff]
    %v8242 = vld [vmem:[#allocation19 + $0x880] sm:$0xff]
    %v8243 = vld [vmem:[#allocation19 + $0x888] sm:$0xff]
    %v8244 = vld [vmem:[#allocation19 + $0x890] sm:$0xff]
    %v8245 = vld [vmem:[#allocation19 + $0x898] sm:$0xff]
    %v8246 = vld [vmem:[#allocation19 + $0x8a0] sm:$0xff]
    %v8247 = vld [vmem:[#allocation19 + $0x8a8] sm:$0xff]
    %v8248 = vld [vmem:[#allocation19 + $0x8b0] sm:$0xff]
    %v8249 = vld [vmem:[#allocation19 + $0x8b8] sm:$0xff]
    %v8250 = vld [vmem:[#allocation19 + $0x8c0] sm:$0xff]
    %v8251 = vld [vmem:[#allocation19 + $0x8c8] sm:$0xff]
    %v8252 = vld [vmem:[#allocation19 + $0x8d0] sm:$0xff]
    %v8253 = vld [vmem:[#allocation19 + $0x8d8] sm:$0xff]
    %v8254 = vld [vmem:[#allocation19 + $0x8e0] sm:$0xff]
    %v8255 = vld [vmem:[#allocation19 + $0x8e8] sm:$0xff]
    %v8256 = vld [vmem:[#allocation19 + $0x8f0] sm:$0xff]
    %v8257 = vld [vmem:[#allocation19 + $0x8f8] sm:$0xff]
    %v8258 = vld [vmem:[#allocation19 + $0x900] sm:$0xff]
    %v8259 = vld [vmem:[#allocation19 + $0x908] sm:$0xff]
    %v8260 = vld [vmem:[#allocation19 + $0x910] sm:$0xff]
    %v8261 = vld [vmem:[#allocation19 + $0x918] sm:$0xff]
    %v8262 = vld [vmem:[#allocation19 + $0x920] sm:$0xff]
    %v8263 = vld [vmem:[#allocation19 + $0x928] sm:$0xff]
    %v8264 = vld [vmem:[#allocation19 + $0x930] sm:$0xff]
    %v8265 = vld [vmem:[#allocation19 + $0x938] sm:$0xff]
    %v8266 = vld [vmem:[#allocation19 + $0x940] sm:$0xff]
    %v8267 = vld [vmem:[#allocation19 + $0x948] sm:$0xff]
    %v8268 = vld [vmem:[#allocation19 + $0x950] sm:$0xff]
    %v8269 = vld [vmem:[#allocation19 + $0x958] sm:$0xff]
    %v8270 = vld [vmem:[#allocation19 + $0x960] sm:$0xff]
    %v8271 = vld [vmem:[#allocation19 + $0x968] sm:$0xff]
    %v8272 = vld [vmem:[#allocation19 + $0x970] sm:$0xff]
    %v8273 = vld [vmem:[#allocation19 + $0x978] sm:$0xff]
    %v8274 = vld [vmem:[#allocation19 + $0x980] sm:$0xff]
    %v8275 = vld [vmem:[#allocation19 + $0x988] sm:$0xff]
    %v8276 = vld [vmem:[#allocation19 + $0x990] sm:$0xff]
    %v8277 = vld [vmem:[#allocation19 + $0x998] sm:$0xff]
    %v8278 = vld [vmem:[#allocation19 + $0x9a0] sm:$0xff]
    %v8279 = vld [vmem:[#allocation19 + $0x9a8] sm:$0xff]
    %v8280 = vld [vmem:[#allocation19 + $0x9b0] sm:$0xff]
    %v8281 = vld [vmem:[#allocation19 + $0x9b8] sm:$0xff]
    %v8282 = vld [vmem:[#allocation19 + $0x9c0] sm:$0xff]
    %v8283 = vld [vmem:[#allocation19 + $0x9c8] sm:$0xff]
    %v8284 = vld [vmem:[#allocation19 + $0x9d0] sm:$0xff]
    %v8285 = vld [vmem:[#allocation19 + $0x9d8] sm:$0xff]
    %v8286 = vld [vmem:[#allocation19 + $0x9e0] sm:$0xff]
    %v8287 = vld [vmem:[#allocation19 + $0x9e8] sm:$0xff]
    %v8288 = vld [vmem:[#allocation19 + $0x9f0] sm:$0xff]
    %v8289 = vld [vmem:[#allocation19 + $0x9f8] sm:$0xff]
    %v8290 = vld [vmem:[#allocation19 + $0xa00] sm:$0xff]
    %v8291 = vld [vmem:[#allocation19 + $0xa08] sm:$0xff]
    %v8292 = vld [vmem:[#allocation19 + $0xa10] sm:$0xff]
    %v8293 = vld [vmem:[#allocation19 + $0xa18] sm:$0xff]
    %v8294 = vld [vmem:[#allocation19 + $0xa20] sm:$0xff]
    %v8295 = vld [vmem:[#allocation19 + $0xa28] sm:$0xff]
    %v8296 = vld [vmem:[#allocation19 + $0xa30] sm:$0xff]
    %v8297 = vld [vmem:[#allocation19 + $0xa38] sm:$0xff]
    %v8298 = vld [vmem:[#allocation19 + $0xa40] sm:$0xff]
    %v8299 = vld [vmem:[#allocation19 + $0xa48] sm:$0xff]
    %v8300 = vld [vmem:[#allocation19 + $0xa50] sm:$0xff]
    %v8301 = vld [vmem:[#allocation19 + $0xa58] sm:$0xff]
    %v8302 = vld [vmem:[#allocation19 + $0xa60] sm:$0xff]
    %v8303 = vld [vmem:[#allocation19 + $0xa68] sm:$0xff]
    %v8304 = vld [vmem:[#allocation19 + $0xa70] sm:$0xff]
    %v8305 = vld [vmem:[#allocation19 + $0xa78] sm:$0xff]
    %v8306 = vld [vmem:[#allocation19 + $0xa80] sm:$0xff]
    %v8307 = vld [vmem:[#allocation19 + $0xa88] sm:$0xff]
    %v8308 = vld [vmem:[#allocation19 + $0xa90] sm:$0xff]
    %v8309 = vld [vmem:[#allocation19 + $0xa98] sm:$0xff]
    %v8310 = vld [vmem:[#allocation19 + $0xaa0] sm:$0xff]
    %v8311 = vld [vmem:[#allocation19 + $0xaa8] sm:$0xff]
    %v8312 = vld [vmem:[#allocation19 + $0xab0] sm:$0xff]
    %v8313 = vld [vmem:[#allocation19 + $0xab8] sm:$0xff]
    %v8314 = vld [vmem:[#allocation19 + $0xac0] sm:$0xff]
    %v8315 = vld [vmem:[#allocation19 + $0xac8] sm:$0xff]
    %v8316 = vld [vmem:[#allocation19 + $0xad0] sm:$0xff]
    %v8317 = vld [vmem:[#allocation19 + $0xad8] sm:$0xff]
    %v8318 = vld [vmem:[#allocation19 + $0xae0] sm:$0xff]
    %v8319 = vld [vmem:[#allocation19 + $0xae8] sm:$0xff]
    %v8320 = vld [vmem:[#allocation19 + $0xaf0] sm:$0xff]
    %v8321 = vld [vmem:[#allocation19 + $0xaf8] sm:$0xff]
    %v8322 = vld [vmem:[#allocation19 + $0xb00] sm:$0xff]
    %v8323 = vld [vmem:[#allocation19 + $0xb08] sm:$0xff]
    %v8324 = vld [vmem:[#allocation19 + $0xb10] sm:$0xff]
    %v8325 = vld [vmem:[#allocation19 + $0xb18] sm:$0xff]
    %v8326 = vld [vmem:[#allocation19 + $0xb20] sm:$0xff]
    %v8327 = vld [vmem:[#allocation19 + $0xb28] sm:$0xff]
    %v8328 = vld [vmem:[#allocation19 + $0xb30] sm:$0xff]
    %v8329 = vld [vmem:[#allocation19 + $0xb38] sm:$0xff]
    %v8330 = vld [vmem:[#allocation19 + $0xb40] sm:$0xff]
    %v8331 = vld [vmem:[#allocation19 + $0xb48] sm:$0xff]
    %v8332 = vld [vmem:[#allocation19 + $0xb50] sm:$0xff]
    %v8333 = vld [vmem:[#allocation19 + $0xb58] sm:$0xff]
    %v8334 = vld [vmem:[#allocation19 + $0xb60] sm:$0xff]
    %v8335 = vld [vmem:[#allocation19 + $0xb68] sm:$0xff]
    %v8336 = vld [vmem:[#allocation19 + $0xb70] sm:$0xff]
    %v8337 = vld [vmem:[#allocation19 + $0xb78] sm:$0xff]
    %v8338 = vld [vmem:[#allocation19 + $0xb80] sm:$0xff]
    %v8339 = vld [vmem:[#allocation19 + $0xb88] sm:$0xff]
    %v8340 = vld [vmem:[#allocation19 + $0xb90] sm:$0xff]
    %v8341 = vld [vmem:[#allocation19 + $0xb98] sm:$0xff]
    %v8342 = vld [vmem:[#allocation19 + $0xba0] sm:$0xff]
    %v8343 = vld [vmem:[#allocation19 + $0xba8] sm:$0xff]
    %v8344 = vld [vmem:[#allocation19 + $0xbb0] sm:$0xff]
    %v8345 = vld [vmem:[#allocation19 + $0xbb8] sm:$0xff]
    %v8346 = vld [vmem:[#allocation19 + $0xbc0] sm:$0xff]
    %v8347 = vld [vmem:[#allocation19 + $0xbc8] sm:$0xff]
    %v8348 = vld [vmem:[#allocation19 + $0xbd0] sm:$0xff]
    %v8349 = vld [vmem:[#allocation19 + $0xbd8] sm:$0xff]
    %v8350 = vld [vmem:[#allocation19 + $0xbe0] sm:$0xff]
    %v8351 = vld [vmem:[#allocation19 + $0xbe8] sm:$0xff]
    %v8352 = vld [vmem:[#allocation19 + $0xbf0] sm:$0xff]
    %v8353 = vld [vmem:[#allocation19 + $0xbf8] sm:$0xff]
    %v8354 = vld [vmem:[#allocation19 + $0xc00] sm:$0xff]
    %v8355 = vld [vmem:[#allocation19 + $0xc08] sm:$0xff]
    %v8356 = vld [vmem:[#allocation19 + $0xc10] sm:$0xff]
    %v8357 = vld [vmem:[#allocation19 + $0xc18] sm:$0xff]
    %v8358 = vld [vmem:[#allocation19 + $0xc20] sm:$0xff]
    %v8359 = vld [vmem:[#allocation19 + $0xc28] sm:$0xff]
    %v8360 = vld [vmem:[#allocation19 + $0xc30] sm:$0xff]
    %v8361 = vld [vmem:[#allocation19 + $0xc38] sm:$0xff]
    %v8362 = vld [vmem:[#allocation19 + $0xc40] sm:$0xff]
    %v8363 = vld [vmem:[#allocation19 + $0xc48] sm:$0xff]
    %v8364 = vld [vmem:[#allocation19 + $0xc50] sm:$0xff]
    %v8365 = vld [vmem:[#allocation19 + $0xc58] sm:$0xff]
    %v8366 = vld [vmem:[#allocation19 + $0xc60] sm:$0xff]
    %v8367 = vld [vmem:[#allocation19 + $0xc68] sm:$0xff]
    %v8368 = vld [vmem:[#allocation19 + $0xc70] sm:$0xff]
    %v8369 = vld [vmem:[#allocation19 + $0xc78] sm:$0xff]
    %v8370 = vld [vmem:[#allocation19 + $0xc80] sm:$0xff]
    %v8371 = vld [vmem:[#allocation19 + $0xc88] sm:$0xff]
    %v8372 = vld [vmem:[#allocation19 + $0xc90] sm:$0xff]
    %v8373 = vld [vmem:[#allocation19 + $0xc98] sm:$0xff]
    %v8374 = vld [vmem:[#allocation19 + $0xca0] sm:$0xff]
    %v8375 = vld [vmem:[#allocation19 + $0xca8] sm:$0xff]
    %v8376 = vld [vmem:[#allocation19 + $0xcb0] sm:$0xff]
    %v8377 = vld [vmem:[#allocation19 + $0xcb8] sm:$0xff]
    %v8378 = vld [vmem:[#allocation19 + $0xcc0] sm:$0xff]
    %v8379 = vld [vmem:[#allocation19 + $0xcc8] sm:$0xff]
    %v8380 = vld [vmem:[#allocation19 + $0xcd0] sm:$0xff]
    %v8381 = vld [vmem:[#allocation19 + $0xcd8] sm:$0xff]
    %v8382 = vld [vmem:[#allocation19 + $0xce0] sm:$0xff]
    %v8383 = vld [vmem:[#allocation19 + $0xce8] sm:$0xff]
    %v8384 = vld [vmem:[#allocation19 + $0xcf0] sm:$0xff]
    %v8385 = vld [vmem:[#allocation19 + $0xcf8] sm:$0xff]
    %v8386 = vld [vmem:[#allocation19 + $0xd00] sm:$0xff]
    %v8387 = vld [vmem:[#allocation19 + $0xd08] sm:$0xff]
    %v8388 = vld [vmem:[#allocation19 + $0xd10] sm:$0xff]
    %v8389 = vld [vmem:[#allocation19 + $0xd18] sm:$0xff]
    %v8390 = vld [vmem:[#allocation19 + $0xd20] sm:$0xff]
    %v8391 = vld [vmem:[#allocation19 + $0xd28] sm:$0xff]
    %v8392 = vld [vmem:[#allocation19 + $0xd30] sm:$0xff]
    %v8393 = vld [vmem:[#allocation19 + $0xd38] sm:$0xff]
    %v8394 = vld [vmem:[#allocation19 + $0xd40] sm:$0xff]
    %v8395 = vld [vmem:[#allocation19 + $0xd48] sm:$0xff]
    %v8396 = vld [vmem:[#allocation19 + $0xd50] sm:$0xff]
    %v8397 = vld [vmem:[#allocation19 + $0xd58] sm:$0xff]
    %v8398 = vld [vmem:[#allocation19 + $0xd60] sm:$0xff]
    %v8399 = vld [vmem:[#allocation19 + $0xd68] sm:$0xff]
    %v8400 = vld [vmem:[#allocation19 + $0xd70] sm:$0xff]
    %v8401 = vld [vmem:[#allocation19 + $0xd78] sm:$0xff]
    %v8402 = vld [vmem:[#allocation19 + $0xd80] sm:$0xff]
    %v8403 = vld [vmem:[#allocation19 + $0xd88] sm:$0xff]
    %v8404 = vld [vmem:[#allocation19 + $0xd90] sm:$0xff]
    %v8405 = vld [vmem:[#allocation19 + $0xd98] sm:$0xff]
    %v8406 = vld [vmem:[#allocation19 + $0xda0] sm:$0xff]
    %v8407 = vld [vmem:[#allocation19 + $0xda8] sm:$0xff]
    %v8408 = vld [vmem:[#allocation19 + $0xdb0] sm:$0xff]
    %v8409 = vld [vmem:[#allocation19 + $0xdb8] sm:$0xff]
    %v8410 = vld [vmem:[#allocation19 + $0xdc0] sm:$0xff]
    %v8411 = vld [vmem:[#allocation19 + $0xdc8] sm:$0xff]
    %v8412 = vld [vmem:[#allocation19 + $0xdd0] sm:$0xff]
    %v8413 = vld [vmem:[#allocation19 + $0xdd8] sm:$0xff]
    %v8414 = vld [vmem:[#allocation19 + $0xde0] sm:$0xff]
    %v8415 = vld [vmem:[#allocation19 + $0xde8] sm:$0xff]
    %v8416 = vld [vmem:[#allocation19 + $0xdf0] sm:$0xff]
    %v8417 = vld [vmem:[#allocation19 + $0xdf8] sm:$0xff]
    %v8418 = vld [vmem:[#allocation19 + $0xe00] sm:$0xff]
    %v8419 = vld [vmem:[#allocation19 + $0xe08] sm:$0xff]
    %v8420 = vld [vmem:[#allocation19 + $0xe10] sm:$0xff]
    %v8421 = vld [vmem:[#allocation19 + $0xe18] sm:$0xff]
    %v8422 = vld [vmem:[#allocation19 + $0xe20] sm:$0xff]
    %v8423 = vld [vmem:[#allocation19 + $0xe28] sm:$0xff]
    %v8424 = vld [vmem:[#allocation19 + $0xe30] sm:$0xff]
    %v8425 = vld [vmem:[#allocation19 + $0xe38] sm:$0xff]
    %v8426 = vld [vmem:[#allocation19 + $0xe40] sm:$0xff]
    %v8427 = vld [vmem:[#allocation19 + $0xe48] sm:$0xff]
    %v8428 = vld [vmem:[#allocation19 + $0xe50] sm:$0xff]
    %v8429 = vld [vmem:[#allocation19 + $0xe58] sm:$0xff]
    %v8430 = vld [vmem:[#allocation19 + $0xe60] sm:$0xff]
    %v8431 = vld [vmem:[#allocation19 + $0xe68] sm:$0xff]
    %v8432 = vld [vmem:[#allocation19 + $0xe70] sm:$0xff]
    %v8433 = vld [vmem:[#allocation19 + $0xe78] sm:$0xff]
    %v8434 = vld [vmem:[#allocation19 + $0xe80] sm:$0xff]
    %v8435 = vld [vmem:[#allocation19 + $0xe88] sm:$0xff]
    %v8436 = vld [vmem:[#allocation19 + $0xe90] sm:$0xff]
    %v8437 = vld [vmem:[#allocation19 + $0xe98] sm:$0xff]
    %v8438 = vld [vmem:[#allocation19 + $0xea0] sm:$0xff]
    %v8439 = vld [vmem:[#allocation19 + $0xea8] sm:$0xff]
    %v8440 = vld [vmem:[#allocation19 + $0xeb0] sm:$0xff]
    %v8441 = vld [vmem:[#allocation19 + $0xeb8] sm:$0xff]
    %v8442 = vld [vmem:[#allocation19 + $0xec0] sm:$0xff]
    %v8443 = vld [vmem:[#allocation19 + $0xec8] sm:$0xff]
    %v8444 = vld [vmem:[#allocation19 + $0xed0] sm:$0xff]
    %v8445 = vld [vmem:[#allocation19 + $0xed8] sm:$0xff]
    %v8446 = vld [vmem:[#allocation19 + $0xee0] sm:$0xff]
    %v8447 = vld [vmem:[#allocation19 + $0xee8] sm:$0xff]
    %v8448 = vld [vmem:[#allocation19 + $0xef0] sm:$0xff]
    %v8449 = vld [vmem:[#allocation19 + $0xef8] sm:$0xff]
    %v8450 = vld [vmem:[#allocation19 + $0xf00] sm:$0xff]
    %v8451 = vld [vmem:[#allocation19 + $0xf08] sm:$0xff]
    %v8452 = vld [vmem:[#allocation19 + $0xf10] sm:$0xff]
    %v8453 = vld [vmem:[#allocation19 + $0xf18] sm:$0xff]
    %v8454 = vld [vmem:[#allocation19 + $0xf20] sm:$0xff]
    %v8455 = vld [vmem:[#allocation19 + $0xf28] sm:$0xff]
    %v8456 = vld [vmem:[#allocation19 + $0xf30] sm:$0xff]
    %v8457 = vld [vmem:[#allocation19 + $0xf38] sm:$0xff]
    %v8458 = vld [vmem:[#allocation19 + $0xf40] sm:$0xff]
    %v8459 = vld [vmem:[#allocation19 + $0xf48] sm:$0xff]
    %v8460 = vld [vmem:[#allocation19 + $0xf50] sm:$0xff]
    %v8461 = vld [vmem:[#allocation19 + $0xf58] sm:$0xff]
    %v8462 = vld [vmem:[#allocation19 + $0xf60] sm:$0xff]
    %v8463 = vld [vmem:[#allocation19 + $0xf68] sm:$0xff]
    %v8464 = vld [vmem:[#allocation19 + $0xf70] sm:$0xff]
    %v8465 = vld [vmem:[#allocation19 + $0xf78] sm:$0xff]
    %v8466 = vld [vmem:[#allocation19 + $0xf80] sm:$0xff]
    %v8467 = vld [vmem:[#allocation19 + $0xf88] sm:$0xff]
    %v8468 = vld [vmem:[#allocation19 + $0xf90] sm:$0xff]
    %v8469 = vld [vmem:[#allocation19 + $0xf98] sm:$0xff]
    %v8470 = vld [vmem:[#allocation19 + $0xfa0] sm:$0xff]
    %v8471 = vld [vmem:[#allocation19 + $0xfa8] sm:$0xff]
    %v8472 = vld [vmem:[#allocation19 + $0xfb0] sm:$0xff]
    %v8473 = vld [vmem:[#allocation19 + $0xfb8] sm:$0xff]
    %v8474 = vld [vmem:[#allocation19 + $0xfc0] sm:$0xff]
    %v8475 = vld [vmem:[#allocation19 + $0xfc8] sm:$0xff]
    %v8476 = vld [vmem:[#allocation19 + $0xfd0] sm:$0xff]
    %v8477 = vld [vmem:[#allocation19 + $0xfd8] sm:$0xff]
    %v8478 = vld [vmem:[#allocation19 + $0xfe0] sm:$0xff]
    %v8479 = vld [vmem:[#allocation19 + $0xfe8] sm:$0xff]
    %v8480 = vld [vmem:[#allocation19 + $0xff0] sm:$0xff]
    %v8481 = vld [vmem:[#allocation19 + $0xff8] sm:$0xff]
    %v8482 = vld [vmem:[#allocation19 + $0x1000] sm:$0xff]
    %v8483 = vld [vmem:[#allocation19 + $0x1008] sm:$0xff]
    %v8484 = vld [vmem:[#allocation19 + $0x1010] sm:$0xff]
    %v8485 = vld [vmem:[#allocation19 + $0x1018] sm:$0xff]
    %v8486 = vld [vmem:[#allocation19 + $0x1020] sm:$0xff]
    %v8487 = vld [vmem:[#allocation19 + $0x1028] sm:$0xff]
    %v8488 = vld [vmem:[#allocation19 + $0x1030] sm:$0xff]
    %v8489 = vld [vmem:[#allocation19 + $0x1038] sm:$0xff]
    %v8490 = vld [vmem:[#allocation19 + $0x1040] sm:$0xff]
    %v8491 = vld [vmem:[#allocation19 + $0x1048] sm:$0xff]
    %v8492 = vld [vmem:[#allocation19 + $0x1050] sm:$0xff]
    %v8493 = vld [vmem:[#allocation19 + $0x1058] sm:$0xff]
    %v8494 = vld [vmem:[#allocation19 + $0x1060] sm:$0xff]
    %v8495 = vld [vmem:[#allocation19 + $0x1068] sm:$0xff]
    %v8496 = vld [vmem:[#allocation19 + $0x1070] sm:$0xff]
    %v8497 = vld [vmem:[#allocation19 + $0x1078] sm:$0xff]
    %v8498 = vld [vmem:[#allocation19 + $0x1080] sm:$0xff]
    %v8499 = vld [vmem:[#allocation19 + $0x1088] sm:$0xff]
    %v8500 = vld [vmem:[#allocation19 + $0x1090] sm:$0xff]
    %v8501 = vld [vmem:[#allocation19 + $0x1098] sm:$0xff]
    %v8502 = vld [vmem:[#allocation19 + $0x10a0] sm:$0xff]
    %v8503 = vld [vmem:[#allocation19 + $0x10a8] sm:$0xff]
    %v8504 = vld [vmem:[#allocation19 + $0x10b0] sm:$0xff]
    %v8505 = vld [vmem:[#allocation19 + $0x10b8] sm:$0xff]
    %v8506 = vld [vmem:[#allocation19 + $0x10c0] sm:$0xff]
    %v8507 = vld [vmem:[#allocation19 + $0x10c8] sm:$0xff]
    %v8508 = vld [vmem:[#allocation19 + $0x10d0] sm:$0xff]
    %v8509 = vld [vmem:[#allocation19 + $0x10d8] sm:$0xff]
    %v8510 = vld [vmem:[#allocation19 + $0x10e0] sm:$0xff]
    %v8511 = vld [vmem:[#allocation19 + $0x10e8] sm:$0xff]
    %v8512 = vld [vmem:[#allocation19 + $0x10f0] sm:$0xff]
    %v8513 = vld [vmem:[#allocation19 + $0x10f8] sm:$0xff]
    %v8514 = vld [vmem:[#allocation19 + $0x1100] sm:$0xff]
    %v8515 = vld [vmem:[#allocation19 + $0x1108] sm:$0xff]
    %v8516 = vld [vmem:[#allocation19 + $0x1110] sm:$0xff]
    %v8517 = vld [vmem:[#allocation19 + $0x1118] sm:$0xff]
    %v8518 = vld [vmem:[#allocation19 + $0x1120] sm:$0xff]
    %v8519 = vld [vmem:[#allocation19 + $0x1128] sm:$0xff]
    %v8520 = vld [vmem:[#allocation19 + $0x1130] sm:$0xff]
    %v8521 = vld [vmem:[#allocation19 + $0x1138] sm:$0xff]
    %v8522 = vld [vmem:[#allocation19 + $0x1140] sm:$0xff]
    %v8523 = vld [vmem:[#allocation19 + $0x1148] sm:$0xff]
    %v8524 = vld [vmem:[#allocation19 + $0x1150] sm:$0xff]
    %v8525 = vld [vmem:[#allocation19 + $0x1158] sm:$0xff]
    %v8526 = vld [vmem:[#allocation19 + $0x1160] sm:$0xff]
    %v8527 = vld [vmem:[#allocation19 + $0x1168] sm:$0xff]
    %v8528 = vld [vmem:[#allocation19 + $0x1170] sm:$0xff]
    %v8529 = vld [vmem:[#allocation19 + $0x1178] sm:$0xff]
    %v8530 = vld [vmem:[#allocation19 + $0x1180] sm:$0xff]
    %v8531 = vld [vmem:[#allocation19 + $0x1188] sm:$0xff]
    %v8532 = vld [vmem:[#allocation19 + $0x1190] sm:$0xff]
    %v8533 = vld [vmem:[#allocation19 + $0x1198] sm:$0xff]
    %v8534 = vld [vmem:[#allocation19 + $0x11a0] sm:$0xff]
    %v8535 = vld [vmem:[#allocation19 + $0x11a8] sm:$0xff]
    %v8536 = vld [vmem:[#allocation19 + $0x11b0] sm:$0xff]
    %v8537 = vld [vmem:[#allocation19 + $0x11b8] sm:$0xff]
    %v8538 = vld [vmem:[#allocation19 + $0x11c0] sm:$0xff]
    %v8539 = vld [vmem:[#allocation19 + $0x11c8] sm:$0xff]
    %v8540 = vld [vmem:[#allocation19 + $0x11d0] sm:$0xff]
    %v8541 = vld [vmem:[#allocation19 + $0x11d8] sm:$0xff]
    %v8542 = vld [vmem:[#allocation19 + $0x11e0] sm:$0xff]
    %v8543 = vld [vmem:[#allocation19 + $0x11e8] sm:$0xff]
    %v8544 = vld [vmem:[#allocation19 + $0x11f0] sm:$0xff]
    %v8545 = vld [vmem:[#allocation19 + $0x11f8] sm:$0xff]
    %v8546 = vld [vmem:[#allocation20] sm:$0xf]
    %v8548 = vperm.slane %v8546, 0
    %v8549 = vperm.slane %v8546, 1
    %v8550 = vperm.slane %v8546, 2
    %v8551 = vperm.slane %v8546, 3
    %v8565 = vunpack.c.l.b16 %v7961
    %v8566 = vunpack.c.h.b16 %v7961
    %v8567 = vunpack.c.l.b16 %v7962
    %v8568 = vunpack.c.h.b16 %v7962
    %v8569 = vunpack.c.l.b16 %v7963
    %v8570 = vunpack.c.h.b16 %v7963
    %v8571 = vunpack.c.l.b16 %v7964
    %v8572 = vunpack.c.h.b16 %v7964
    %v8573 = vunpack.c.l.b16 %v7965
    %v8574 = vunpack.c.h.b16 %v7965
    %v8575 = vunpack.c.l.b16 %v7966
    %v8576 = vunpack.c.h.b16 %v7966
    %v8577 = vunpack.c.l.b16 %v7967
    %v8578 = vunpack.c.h.b16 %v7967
    %v8579 = vunpack.c.l.b16 %v7968
    %v8580 = vunpack.c.h.b16 %v7968
    %v8581 = vunpack.c.l.b16 %v7969
    %v8582 = vunpack.c.h.b16 %v7969
    %v8583 = vpack.c.b16 %v8565, %v8565
    %v8584 = vpack.c.b16 %v8566, %v8566
    %v8585 = vpack.c.b16 %v8567, %v8567
    %v8586 = vpack.c.b16 %v8568, %v8568
    %v8587 = vpack.c.b16 %v8569, %v8569
    %v8588 = vpack.c.b16 %v8570, %v8570
    %v8589 = vpack.c.b16 %v8571, %v8571
    %v8590 = vpack.c.b16 %v8572, %v8572
    %v8591 = vpack.c.b16 %v8573, %v8573
    %v8592 = vpack.c.b16 %v8574, %v8574
    %v8593 = vpack.c.b16 %v8575, %v8575
    %v8594 = vpack.c.b16 %v8576, %v8576
    %v8595 = vpack.c.b16 %v8577, %v8577
    %v8596 = vpack.c.b16 %v8578, %v8578
    %v8597 = vpack.c.b16 %v8579, %v8579
    %v8598 = vpack.c.b16 %v8580, %v8580
    %v8599 = vpack.c.b16 %v8581, %v8581
    %v8600 = vpack.c.b16 %v8582, %v8582
    %v9195 = vunpack.c.l.b16 %v7970
    %v9196 = vunpack.c.h.b16 %v7970
    %v9197 = vunpack.c.l.b16 %v7971
    %v9198 = vunpack.c.h.b16 %v7971
    %v9199 = vunpack.c.l.b16 %v7972
    %v9200 = vunpack.c.h.b16 %v7972
    %v9201 = vunpack.c.l.b16 %v7973
    %v9202 = vunpack.c.h.b16 %v7973
    %v9203 = vunpack.c.l.b16 %v7974
    %v9204 = vunpack.c.h.b16 %v7974
    %v9205 = vunpack.c.l.b16 %v7975
    %v9206 = vunpack.c.h.b16 %v7975
    %v9207 = vunpack.c.l.b16 %v7976
    %v9208 = vunpack.c.h.b16 %v7976
    %v9209 = vunpack.c.l.b16 %v7977
    %v9210 = vunpack.c.h.b16 %v7977
    %v9211 = vunpack.c.l.b16 %v7978
    %v9212 = vunpack.c.h.b16 %v7978
    %v9213 = vunpack.c.l.b16 %v7979
    %v9214 = vunpack.c.h.b16 %v7979
    %v9215 = vunpack.c.l.b16 %v7980
    %v9216 = vunpack.c.h.b16 %v7980
    %v9217 = vunpack.c.l.b16 %v7981
    %v9218 = vunpack.c.h.b16 %v7981
    %v9219 = vunpack.c.l.b16 %v7982
    %v9220 = vunpack.c.h.b16 %v7982
    %v9221 = vunpack.c.l.b16 %v7983
    %v9222 = vunpack.c.h.b16 %v7983
    %v9223 = vunpack.c.l.b16 %v7984
    %v9224 = vunpack.c.h.b16 %v7984
    %v9225 = vunpack.c.l.b16 %v7985
    %v9226 = vunpack.c.h.b16 %v7985
    %v9227 = vunpack.c.l.b16 %v7986
    %v9228 = vunpack.c.h.b16 %v7986
    %v9229 = vunpack.c.l.b16 %v7987
    %v9230 = vunpack.c.h.b16 %v7987
    %v9231 = vunpack.c.l.b16 %v7988
    %v9232 = vunpack.c.h.b16 %v7988
    %v9233 = vunpack.c.l.b16 %v7989
    %v9234 = vunpack.c.h.b16 %v7989
    %v9235 = vunpack.c.l.b16 %v7990
    %v9236 = vunpack.c.h.b16 %v7990
    %v9237 = vunpack.c.l.b16 %v7991
    %v9238 = vunpack.c.h.b16 %v7991
    %v9239 = vunpack.c.l.b16 %v7992
    %v9240 = vunpack.c.h.b16 %v7992
    %v9241 = vunpack.c.l.b16 %v7993
    %v9242 = vunpack.c.h.b16 %v7993
    %v9243 = vunpack.c.l.b16 %v7994
    %v9244 = vunpack.c.h.b16 %v7994
    %v9245 = vunpack.c.l.b16 %v7995
    %v9246 = vunpack.c.h.b16 %v7995
    %v9247 = vunpack.c.l.b16 %v7996
    %v9248 = vunpack.c.h.b16 %v7996
    %v9249 = vunpack.c.l.b16 %v7997
    %v9250 = vunpack.c.h.b16 %v7997
    %v9251 = vunpack.c.l.b16 %v7998
    %v9252 = vunpack.c.h.b16 %v7998
    %v9253 = vunpack.c.l.b16 %v7999
    %v9254 = vunpack.c.h.b16 %v7999
    %v9255 = vunpack.c.l.b16 %v8000
    %v9256 = vunpack.c.h.b16 %v8000
    %v9257 = vunpack.c.l.b16 %v8001
    %v9258 = vunpack.c.h.b16 %v8001
    %v9259 = vunpack.c.l.b16 %v8002
    %v9260 = vunpack.c.h.b16 %v8002
    %v9261 = vunpack.c.l.b16 %v8003
    %v9262 = vunpack.c.h.b16 %v8003
    %v9263 = vunpack.c.l.b16 %v8004
    %v9264 = vunpack.c.h.b16 %v8004
    %v9265 = vunpack.c.l.b16 %v8005
    %v9266 = vunpack.c.h.b16 %v8005
    %v9267 = vunpack.c.l.b16 %v8006
    %v9268 = vunpack.c.h.b16 %v8006
    %v9269 = vunpack.c.l.b16 %v8007
    %v9270 = vunpack.c.h.b16 %v8007
    %v9271 = vunpack.c.l.b16 %v8008
    %v9272 = vunpack.c.h.b16 %v8008
    %v9273 = vunpack.c.l.b16 %v8009
    %v9274 = vunpack.c.h.b16 %v8009
    %v9275 = vunpack.c.l.b16 %v8010
    %v9276 = vunpack.c.h.b16 %v8010
    %v9277 = vunpack.c.l.b16 %v8011
    %v9278 = vunpack.c.h.b16 %v8011
    %v9279 = vunpack.c.l.b16 %v8012
    %v9280 = vunpack.c.h.b16 %v8012
    %v9281 = vunpack.c.l.b16 %v8013
    %v9282 = vunpack.c.h.b16 %v8013
    %v9283 = vunpack.c.l.b16 %v8014
    %v9284 = vunpack.c.h.b16 %v8014
    %v9285 = vunpack.c.l.b16 %v8015
    %v9286 = vunpack.c.h.b16 %v8015
    %v9287 = vunpack.c.l.b16 %v8016
    %v9288 = vunpack.c.h.b16 %v8016
    %v9289 = vunpack.c.l.b16 %v8017
    %v9290 = vunpack.c.h.b16 %v8017
    %v9291 = vunpack.c.l.b16 %v8018
    %v9292 = vunpack.c.h.b16 %v8018
    %v9293 = vunpack.c.l.b16 %v8019
    %v9294 = vunpack.c.h.b16 %v8019
    %v9295 = vunpack.c.l.b16 %v8020
    %v9296 = vunpack.c.h.b16 %v8020
    %v9297 = vunpack.c.l.b16 %v8021
    %v9298 = vunpack.c.h.b16 %v8021
    %v9299 = vunpack.c.l.b16 %v8022
    %v9300 = vunpack.c.h.b16 %v8022
    %v9301 = vunpack.c.l.b16 %v8023
    %v9302 = vunpack.c.h.b16 %v8023
    %v9303 = vunpack.c.l.b16 %v8024
    %v9304 = vunpack.c.h.b16 %v8024
    %v9305 = vunpack.c.l.b16 %v8025
    %v9306 = vunpack.c.h.b16 %v8025
    %v9307 = vunpack.c.l.b16 %v8026
    %v9308 = vunpack.c.h.b16 %v8026
    %v9309 = vunpack.c.l.b16 %v8027
    %v9310 = vunpack.c.h.b16 %v8027
    %v9311 = vunpack.c.l.b16 %v8028
    %v9312 = vunpack.c.h.b16 %v8028
    %v9313 = vunpack.c.l.b16 %v8029
    %v9314 = vunpack.c.h.b16 %v8029
    %v9315 = vunpack.c.l.b16 %v8030
    %v9316 = vunpack.c.h.b16 %v8030
    %v9317 = vunpack.c.l.b16 %v8031
    %v9318 = vunpack.c.h.b16 %v8031
    %v9319 = vunpack.c.l.b16 %v8032
    %v9320 = vunpack.c.h.b16 %v8032
    %v9321 = vunpack.c.l.b16 %v8033
    %v9322 = vunpack.c.h.b16 %v8033
    %v9323 = vunpack.c.l.b16 %v8034
    %v9324 = vunpack.c.h.b16 %v8034
    %v9325 = vunpack.c.l.b16 %v8035
    %v9326 = vunpack.c.h.b16 %v8035
    %v9327 = vunpack.c.l.b16 %v8036
    %v9328 = vunpack.c.h.b16 %v8036
    %v9329 = vunpack.c.l.b16 %v8037
    %v9330 = vunpack.c.h.b16 %v8037
    %v9331 = vunpack.c.l.b16 %v8038
    %v9332 = vunpack.c.h.b16 %v8038
    %v9333 = vunpack.c.l.b16 %v8039
    %v9334 = vunpack.c.h.b16 %v8039
    %v9335 = vunpack.c.l.b16 %v8040
    %v9336 = vunpack.c.h.b16 %v8040
    %v9337 = vunpack.c.l.b16 %v8041
    %v9338 = vunpack.c.h.b16 %v8041
    %v9339 = vunpack.c.l.b16 %v8042
    %v9340 = vunpack.c.h.b16 %v8042
    %v9341 = vunpack.c.l.b16 %v8043
    %v9342 = vunpack.c.h.b16 %v8043
    %v9343 = vunpack.c.l.b16 %v8044
    %v9344 = vunpack.c.h.b16 %v8044
    %v9345 = vunpack.c.l.b16 %v8045
    %v9346 = vunpack.c.h.b16 %v8045
    %v9347 = vunpack.c.l.b16 %v8046
    %v9348 = vunpack.c.h.b16 %v8046
    %v9349 = vunpack.c.l.b16 %v8047
    %v9350 = vunpack.c.h.b16 %v8047
    %v9351 = vunpack.c.l.b16 %v8048
    %v9352 = vunpack.c.h.b16 %v8048
    %v9353 = vunpack.c.l.b16 %v8049
    %v9354 = vunpack.c.h.b16 %v8049
    %v9355 = vunpack.c.l.b16 %v8050
    %v9356 = vunpack.c.h.b16 %v8050
    %v9357 = vunpack.c.l.b16 %v8051
    %v9358 = vunpack.c.h.b16 %v8051
    %v9359 = vunpack.c.l.b16 %v8052
    %v9360 = vunpack.c.h.b16 %v8052
    %v9361 = vunpack.c.l.b16 %v8053
    %v9362 = vunpack.c.h.b16 %v8053
    %v9363 = vunpack.c.l.b16 %v8054
    %v9364 = vunpack.c.h.b16 %v8054
    %v9365 = vunpack.c.l.b16 %v8055
    %v9366 = vunpack.c.h.b16 %v8055
    %v9367 = vunpack.c.l.b16 %v8056
    %v9368 = vunpack.c.h.b16 %v8056
    %v9369 = vunpack.c.l.b16 %v8057
    %v9370 = vunpack.c.h.b16 %v8057
    %v9371 = vunpack.c.l.b16 %v8058
    %v9372 = vunpack.c.h.b16 %v8058
    %v9373 = vunpack.c.l.b16 %v8059
    %v9374 = vunpack.c.h.b16 %v8059
    %v9375 = vunpack.c.l.b16 %v8060
    %v9376 = vunpack.c.h.b16 %v8060
    %v9377 = vunpack.c.l.b16 %v8061
    %v9378 = vunpack.c.h.b16 %v8061
    %v9379 = vunpack.c.l.b16 %v8062
    %v9380 = vunpack.c.h.b16 %v8062
    %v9381 = vunpack.c.l.b16 %v8063
    %v9382 = vunpack.c.h.b16 %v8063
    %v9383 = vunpack.c.l.b16 %v8064
    %v9384 = vunpack.c.h.b16 %v8064
    %v9385 = vunpack.c.l.b16 %v8065
    %v9386 = vunpack.c.h.b16 %v8065
    %v9387 = vunpack.c.l.b16 %v8066
    %v9388 = vunpack.c.h.b16 %v8066
    %v9389 = vunpack.c.l.b16 %v8067
    %v9390 = vunpack.c.h.b16 %v8067
    %v9391 = vunpack.c.l.b16 %v8068
    %v9392 = vunpack.c.h.b16 %v8068
    %v9393 = vunpack.c.l.b16 %v8069
    %v9394 = vunpack.c.h.b16 %v8069
    %v9395 = vunpack.c.l.b16 %v8070
    %v9396 = vunpack.c.h.b16 %v8070
    %v9397 = vunpack.c.l.b16 %v8071
    %v9398 = vunpack.c.h.b16 %v8071
    %v9399 = vunpack.c.l.b16 %v8072
    %v9400 = vunpack.c.h.b16 %v8072
    %v9401 = vunpack.c.l.b16 %v8073
    %v9402 = vunpack.c.h.b16 %v8073
    %v9403 = vunpack.c.l.b16 %v8074
    %v9404 = vunpack.c.h.b16 %v8074
    %v9405 = vunpack.c.l.b16 %v8075
    %v9406 = vunpack.c.h.b16 %v8075
    %v9407 = vunpack.c.l.b16 %v8076
    %v9408 = vunpack.c.h.b16 %v8076
    %v9409 = vunpack.c.l.b16 %v8077
    %v9410 = vunpack.c.h.b16 %v8077
    %v9411 = vunpack.c.l.b16 %v8078
    %v9412 = vunpack.c.h.b16 %v8078
    %v9413 = vunpack.c.l.b16 %v8079
    %v9414 = vunpack.c.h.b16 %v8079
    %v9415 = vunpack.c.l.b16 %v8080
    %v9416 = vunpack.c.h.b16 %v8080
    %v9417 = vunpack.c.l.b16 %v8081
    %v9418 = vunpack.c.h.b16 %v8081
    %v9419 = vunpack.c.l.b16 %v8082
    %v9420 = vunpack.c.h.b16 %v8082
    %v9421 = vunpack.c.l.b16 %v8083
    %v9422 = vunpack.c.h.b16 %v8083
    %v9423 = vunpack.c.l.b16 %v8084
    %v9424 = vunpack.c.h.b16 %v8084
    %v9425 = vunpack.c.l.b16 %v8085
    %v9426 = vunpack.c.h.b16 %v8085
    %v9427 = vunpack.c.l.b16 %v8086
    %v9428 = vunpack.c.h.b16 %v8086
    %v9429 = vunpack.c.l.b16 %v8087
    %v9430 = vunpack.c.h.b16 %v8087
    %v9431 = vunpack.c.l.b16 %v8088
    %v9432 = vunpack.c.h.b16 %v8088
    %v9433 = vunpack.c.l.b16 %v8089
    %v9434 = vunpack.c.h.b16 %v8089
    %v9435 = vunpack.c.l.b16 %v8090
    %v9436 = vunpack.c.h.b16 %v8090
    %v9437 = vunpack.c.l.b16 %v8091
    %v9438 = vunpack.c.h.b16 %v8091
    %v9439 = vunpack.c.l.b16 %v8092
    %v9440 = vunpack.c.h.b16 %v8092
    %v9441 = vunpack.c.l.b16 %v8093
    %v9442 = vunpack.c.h.b16 %v8093
    %v9443 = vunpack.c.l.b16 %v8094
    %v9444 = vunpack.c.h.b16 %v8094
    %v9445 = vunpack.c.l.b16 %v8095
    %v9446 = vunpack.c.h.b16 %v8095
    %v9447 = vunpack.c.l.b16 %v8096
    %v9448 = vunpack.c.h.b16 %v8096
    %v9449 = vunpack.c.l.b16 %v8097
    %v9450 = vunpack.c.h.b16 %v8097
    %v9451 = vunpack.c.l.b16 %v8098
    %v9452 = vunpack.c.h.b16 %v8098
    %v9453 = vunpack.c.l.b16 %v8099
    %v9454 = vunpack.c.h.b16 %v8099
    %v9455 = vunpack.c.l.b16 %v8100
    %v9456 = vunpack.c.h.b16 %v8100
    %v9457 = vunpack.c.l.b16 %v8101
    %v9458 = vunpack.c.h.b16 %v8101
    %v9459 = vunpack.c.l.b16 %v8102
    %v9460 = vunpack.c.h.b16 %v8102
    %v9461 = vunpack.c.l.b16 %v8103
    %v9462 = vunpack.c.h.b16 %v8103
    %v9463 = vunpack.c.l.b16 %v8104
    %v9464 = vunpack.c.h.b16 %v8104
    %v9465 = vunpack.c.l.b16 %v8105
    %v9466 = vunpack.c.h.b16 %v8105
    %v9467 = vunpack.c.l.b16 %v8106
    %v9468 = vunpack.c.h.b16 %v8106
    %v9469 = vunpack.c.l.b16 %v8107
    %v9470 = vunpack.c.h.b16 %v8107
    %v9471 = vunpack.c.l.b16 %v8108
    %v9472 = vunpack.c.h.b16 %v8108
    %v9473 = vunpack.c.l.b16 %v8109
    %v9474 = vunpack.c.h.b16 %v8109
    %v9475 = vunpack.c.l.b16 %v8110
    %v9476 = vunpack.c.h.b16 %v8110
    %v9477 = vunpack.c.l.b16 %v8111
    %v9478 = vunpack.c.h.b16 %v8111
    %v9479 = vunpack.c.l.b16 %v8112
    %v9480 = vunpack.c.h.b16 %v8112
    %v9481 = vunpack.c.l.b16 %v8113
    %v9482 = vunpack.c.h.b16 %v8113
    %v9483 = vunpack.c.l.b16 %v8114
    %v9484 = vunpack.c.h.b16 %v8114
    %v9485 = vunpack.c.l.b16 %v8115
    %v9486 = vunpack.c.h.b16 %v8115
    %v9487 = vunpack.c.l.b16 %v8116
    %v9488 = vunpack.c.h.b16 %v8116
    %v9489 = vunpack.c.l.b16 %v8117
    %v9490 = vunpack.c.h.b16 %v8117
    %v9491 = vunpack.c.l.b16 %v8118
    %v9492 = vunpack.c.h.b16 %v8118
    %v9493 = vunpack.c.l.b16 %v8119
    %v9494 = vunpack.c.h.b16 %v8119
    %v9495 = vunpack.c.l.b16 %v8120
    %v9496 = vunpack.c.h.b16 %v8120
    %v9497 = vunpack.c.l.b16 %v8121
    %v9498 = vunpack.c.h.b16 %v8121
    %v9499 = vunpack.c.l.b16 %v8122
    %v9500 = vunpack.c.h.b16 %v8122
    %v9501 = vunpack.c.l.b16 %v8123
    %v9502 = vunpack.c.h.b16 %v8123
    %v9503 = vunpack.c.l.b16 %v8124
    %v9504 = vunpack.c.h.b16 %v8124
    %v9505 = vunpack.c.l.b16 %v8125
    %v9506 = vunpack.c.h.b16 %v8125
    %v9507 = vunpack.c.l.b16 %v8126
    %v9508 = vunpack.c.h.b16 %v8126
    %v9509 = vunpack.c.l.b16 %v8127
    %v9510 = vunpack.c.h.b16 %v8127
    %v9511 = vunpack.c.l.b16 %v8128
    %v9512 = vunpack.c.h.b16 %v8128
    %v9513 = vunpack.c.l.b16 %v8129
    %v9514 = vunpack.c.h.b16 %v8129
    %v9515 = vunpack.c.l.b16 %v8130
    %v9516 = vunpack.c.h.b16 %v8130
    %v9517 = vunpack.c.l.b16 %v8131
    %v9518 = vunpack.c.h.b16 %v8131
    %v9519 = vunpack.c.l.b16 %v8132
    %v9520 = vunpack.c.h.b16 %v8132
    %v9521 = vunpack.c.l.b16 %v8133
    %v9522 = vunpack.c.h.b16 %v8133
    %v9523 = vunpack.c.l.b16 %v8134
    %v9524 = vunpack.c.h.b16 %v8134
    %v9525 = vunpack.c.l.b16 %v8135
    %v9526 = vunpack.c.h.b16 %v8135
    %v9527 = vunpack.c.l.b16 %v8136
    %v9528 = vunpack.c.h.b16 %v8136
    %v9529 = vunpack.c.l.b16 %v8137
    %v9530 = vunpack.c.h.b16 %v8137
    %v9531 = vunpack.c.l.b16 %v8138
    %v9532 = vunpack.c.h.b16 %v8138
    %v9533 = vunpack.c.l.b16 %v8139
    %v9534 = vunpack.c.h.b16 %v8139
    %v9535 = vunpack.c.l.b16 %v8140
    %v9536 = vunpack.c.h.b16 %v8140
    %v9537 = vunpack.c.l.b16 %v8141
    %v9538 = vunpack.c.h.b16 %v8141
    %v9539 = vunpack.c.l.b16 %v8142
    %v9540 = vunpack.c.h.b16 %v8142
    %v9541 = vunpack.c.l.b16 %v8143
    %v9542 = vunpack.c.h.b16 %v8143
    %v9543 = vunpack.c.l.b16 %v8144
    %v9544 = vunpack.c.h.b16 %v8144
    %v9545 = vunpack.c.l.b16 %v8145
    %v9546 = vunpack.c.h.b16 %v8145
    %v9547 = vunpack.c.l.b16 %v8146
    %v9548 = vunpack.c.h.b16 %v8146
    %v9549 = vunpack.c.l.b16 %v8147
    %v9550 = vunpack.c.h.b16 %v8147
    %v9551 = vunpack.c.l.b16 %v8148
    %v9552 = vunpack.c.h.b16 %v8148
    %v9553 = vunpack.c.l.b16 %v8149
    %v9554 = vunpack.c.h.b16 %v8149
    %v9555 = vunpack.c.l.b16 %v8150
    %v9556 = vunpack.c.h.b16 %v8150
    %v9557 = vunpack.c.l.b16 %v8151
    %v9558 = vunpack.c.h.b16 %v8151
    %v9559 = vunpack.c.l.b16 %v8152
    %v9560 = vunpack.c.h.b16 %v8152
    %v9561 = vunpack.c.l.b16 %v8153
    %v9562 = vunpack.c.h.b16 %v8153
    %v9563 = vunpack.c.l.b16 %v8154
    %v9564 = vunpack.c.h.b16 %v8154
    %v9565 = vunpack.c.l.b16 %v8155
    %v9566 = vunpack.c.h.b16 %v8155
    %v9567 = vunpack.c.l.b16 %v8156
    %v9568 = vunpack.c.h.b16 %v8156
    %v9569 = vunpack.c.l.b16 %v8157
    %v9570 = vunpack.c.h.b16 %v8157
    %v9571 = vunpack.c.l.b16 %v8158
    %v9572 = vunpack.c.h.b16 %v8158
    %v9573 = vunpack.c.l.b16 %v8159
    %v9574 = vunpack.c.h.b16 %v8159
    %v9575 = vunpack.c.l.b16 %v8160
    %v9576 = vunpack.c.h.b16 %v8160
    %v9577 = vunpack.c.l.b16 %v8161
    %v9578 = vunpack.c.h.b16 %v8161
    %v9579 = vunpack.c.l.b16 %v8162
    %v9580 = vunpack.c.h.b16 %v8162
    %v9581 = vunpack.c.l.b16 %v8163
    %v9582 = vunpack.c.h.b16 %v8163
    %v9583 = vunpack.c.l.b16 %v8164
    %v9584 = vunpack.c.h.b16 %v8164
    %v9585 = vunpack.c.l.b16 %v8165
    %v9586 = vunpack.c.h.b16 %v8165
    %v9587 = vunpack.c.l.b16 %v8166
    %v9588 = vunpack.c.h.b16 %v8166
    %v9589 = vunpack.c.l.b16 %v8167
    %v9590 = vunpack.c.h.b16 %v8167
    %v9591 = vunpack.c.l.b16 %v8168
    %v9592 = vunpack.c.h.b16 %v8168
    %v9593 = vunpack.c.l.b16 %v8169
    %v9594 = vunpack.c.h.b16 %v8169
    %v9595 = vunpack.c.l.b16 %v8170
    %v9596 = vunpack.c.h.b16 %v8170
    %v9597 = vunpack.c.l.b16 %v8171
    %v9598 = vunpack.c.h.b16 %v8171
    %v9599 = vunpack.c.l.b16 %v8172
    %v9600 = vunpack.c.h.b16 %v8172
    %v9601 = vunpack.c.l.b16 %v8173
    %v9602 = vunpack.c.h.b16 %v8173
    %v9603 = vunpack.c.l.b16 %v8174
    %v9604 = vunpack.c.h.b16 %v8174
    %v9605 = vunpack.c.l.b16 %v8175
    %v9606 = vunpack.c.h.b16 %v8175
    %v9607 = vunpack.c.l.b16 %v8176
    %v9608 = vunpack.c.h.b16 %v8176
    %v9609 = vunpack.c.l.b16 %v8177
    %v9610 = vunpack.c.h.b16 %v8177
    %v9611 = vunpack.c.l.b16 %v8178
    %v9612 = vunpack.c.h.b16 %v8178
    %v9613 = vunpack.c.l.b16 %v8179
    %v9614 = vunpack.c.h.b16 %v8179
    %v9615 = vunpack.c.l.b16 %v8180
    %v9616 = vunpack.c.h.b16 %v8180
    %v9617 = vunpack.c.l.b16 %v8181
    %v9618 = vunpack.c.h.b16 %v8181
    %v9619 = vunpack.c.l.b16 %v8182
    %v9620 = vunpack.c.h.b16 %v8182
    %v9621 = vunpack.c.l.b16 %v8183
    %v9622 = vunpack.c.h.b16 %v8183
    %v9623 = vunpack.c.l.b16 %v8184
    %v9624 = vunpack.c.h.b16 %v8184
    %v9625 = vunpack.c.l.b16 %v8185
    %v9626 = vunpack.c.h.b16 %v8185
    %v9627 = vunpack.c.l.b16 %v8186
    %v9628 = vunpack.c.h.b16 %v8186
    %v9629 = vunpack.c.l.b16 %v8187
    %v9630 = vunpack.c.h.b16 %v8187
    %v9631 = vunpack.c.l.b16 %v8188
    %v9632 = vunpack.c.h.b16 %v8188
    %v9633 = vunpack.c.l.b16 %v8189
    %v9634 = vunpack.c.h.b16 %v8189
    %v9635 = vunpack.c.l.b16 %v8190
    %v9636 = vunpack.c.h.b16 %v8190
    %v9637 = vunpack.c.l.b16 %v8191
    %v9638 = vunpack.c.h.b16 %v8191
    %v9639 = vunpack.c.l.b16 %v8192
    %v9640 = vunpack.c.h.b16 %v8192
    %v9641 = vunpack.c.l.b16 %v8193
    %v9642 = vunpack.c.h.b16 %v8193
    %v9643 = vunpack.c.l.b16 %v8194
    %v9644 = vunpack.c.h.b16 %v8194
    %v9645 = vunpack.c.l.b16 %v8195
    %v9646 = vunpack.c.h.b16 %v8195
    %v9647 = vunpack.c.l.b16 %v8196
    %v9648 = vunpack.c.h.b16 %v8196
    %v9649 = vunpack.c.l.b16 %v8197
    %v9650 = vunpack.c.h.b16 %v8197
    %v9651 = vunpack.c.l.b16 %v8198
    %v9652 = vunpack.c.h.b16 %v8198
    %v9653 = vunpack.c.l.b16 %v8199
    %v9654 = vunpack.c.h.b16 %v8199
    %v9655 = vunpack.c.l.b16 %v8200
    %v9656 = vunpack.c.h.b16 %v8200
    %v9657 = vunpack.c.l.b16 %v8201
    %v9658 = vunpack.c.h.b16 %v8201
    %v9659 = vunpack.c.l.b16 %v8202
    %v9660 = vunpack.c.h.b16 %v8202
    %v9661 = vunpack.c.l.b16 %v8203
    %v9662 = vunpack.c.h.b16 %v8203
    %v9663 = vunpack.c.l.b16 %v8204
    %v9664 = vunpack.c.h.b16 %v8204
    %v9665 = vunpack.c.l.b16 %v8205
    %v9666 = vunpack.c.h.b16 %v8205
    %v9667 = vunpack.c.l.b16 %v8206
    %v9668 = vunpack.c.h.b16 %v8206
    %v9669 = vunpack.c.l.b16 %v8207
    %v9670 = vunpack.c.h.b16 %v8207
    %v9671 = vunpack.c.l.b16 %v8208
    %v9672 = vunpack.c.h.b16 %v8208
    %v9673 = vunpack.c.l.b16 %v8209
    %v9674 = vunpack.c.h.b16 %v8209
    %v9675 = vunpack.c.l.b16 %v8210
    %v9676 = vunpack.c.h.b16 %v8210
    %v9677 = vunpack.c.l.b16 %v8211
    %v9678 = vunpack.c.h.b16 %v8211
    %v9679 = vunpack.c.l.b16 %v8212
    %v9680 = vunpack.c.h.b16 %v8212
    %v9681 = vunpack.c.l.b16 %v8213
    %v9682 = vunpack.c.h.b16 %v8213
    %v9683 = vunpack.c.l.b16 %v8214
    %v9684 = vunpack.c.h.b16 %v8214
    %v9685 = vunpack.c.l.b16 %v8215
    %v9686 = vunpack.c.h.b16 %v8215
    %v9687 = vunpack.c.l.b16 %v8216
    %v9688 = vunpack.c.h.b16 %v8216
    %v9689 = vunpack.c.l.b16 %v8217
    %v9690 = vunpack.c.h.b16 %v8217
    %v9691 = vunpack.c.l.b16 %v8218
    %v9692 = vunpack.c.h.b16 %v8218
    %v9693 = vunpack.c.l.b16 %v8219
    %v9694 = vunpack.c.h.b16 %v8219
    %v9695 = vunpack.c.l.b16 %v8220
    %v9696 = vunpack.c.h.b16 %v8220
    %v9697 = vunpack.c.l.b16 %v8221
    %v9698 = vunpack.c.h.b16 %v8221
    %v9699 = vunpack.c.l.b16 %v8222
    %v9700 = vunpack.c.h.b16 %v8222
    %v9701 = vunpack.c.l.b16 %v8223
    %v9702 = vunpack.c.h.b16 %v8223
    %v9703 = vunpack.c.l.b16 %v8224
    %v9704 = vunpack.c.h.b16 %v8224
    %v9705 = vunpack.c.l.b16 %v8225
    %v9706 = vunpack.c.h.b16 %v8225
    %v9707 = vunpack.c.l.b16 %v8226
    %v9708 = vunpack.c.h.b16 %v8226
    %v9709 = vunpack.c.l.b16 %v8227
    %v9710 = vunpack.c.h.b16 %v8227
    %v9711 = vunpack.c.l.b16 %v8228
    %v9712 = vunpack.c.h.b16 %v8228
    %v9713 = vunpack.c.l.b16 %v8229
    %v9714 = vunpack.c.h.b16 %v8229
    %v9715 = vunpack.c.l.b16 %v8230
    %v9716 = vunpack.c.h.b16 %v8230
    %v9717 = vunpack.c.l.b16 %v8231
    %v9718 = vunpack.c.h.b16 %v8231
    %v9719 = vunpack.c.l.b16 %v8232
    %v9720 = vunpack.c.h.b16 %v8232
    %v9721 = vunpack.c.l.b16 %v8233
    %v9722 = vunpack.c.h.b16 %v8233
    %v9723 = vunpack.c.l.b16 %v8234
    %v9724 = vunpack.c.h.b16 %v8234
    %v9725 = vunpack.c.l.b16 %v8235
    %v9726 = vunpack.c.h.b16 %v8235
    %v9727 = vunpack.c.l.b16 %v8236
    %v9728 = vunpack.c.h.b16 %v8236
    %v9729 = vunpack.c.l.b16 %v8237
    %v9730 = vunpack.c.h.b16 %v8237
    %v9731 = vunpack.c.l.b16 %v8238
    %v9732 = vunpack.c.h.b16 %v8238
    %v9733 = vunpack.c.l.b16 %v8239
    %v9734 = vunpack.c.h.b16 %v8239
    %v9735 = vunpack.c.l.b16 %v8240
    %v9736 = vunpack.c.h.b16 %v8240
    %v9737 = vunpack.c.l.b16 %v8241
    %v9738 = vunpack.c.h.b16 %v8241
    %v9739 = vunpack.c.l.b16 %v8242
    %v9740 = vunpack.c.h.b16 %v8242
    %v9741 = vunpack.c.l.b16 %v8243
    %v9742 = vunpack.c.h.b16 %v8243
    %v9743 = vunpack.c.l.b16 %v8244
    %v9744 = vunpack.c.h.b16 %v8244
    %v9745 = vunpack.c.l.b16 %v8245
    %v9746 = vunpack.c.h.b16 %v8245
    %v9747 = vunpack.c.l.b16 %v8246
    %v9748 = vunpack.c.h.b16 %v8246
    %v9749 = vunpack.c.l.b16 %v8247
    %v9750 = vunpack.c.h.b16 %v8247
    %v9751 = vunpack.c.l.b16 %v8248
    %v9752 = vunpack.c.h.b16 %v8248
    %v9753 = vunpack.c.l.b16 %v8249
    %v9754 = vunpack.c.h.b16 %v8249
    %v9755 = vunpack.c.l.b16 %v8250
    %v9756 = vunpack.c.h.b16 %v8250
    %v9757 = vunpack.c.l.b16 %v8251
    %v9758 = vunpack.c.h.b16 %v8251
    %v9759 = vunpack.c.l.b16 %v8252
    %v9760 = vunpack.c.h.b16 %v8252
    %v9761 = vunpack.c.l.b16 %v8253
    %v9762 = vunpack.c.h.b16 %v8253
    %v9763 = vunpack.c.l.b16 %v8254
    %v9764 = vunpack.c.h.b16 %v8254
    %v9765 = vunpack.c.l.b16 %v8255
    %v9766 = vunpack.c.h.b16 %v8255
    %v9767 = vunpack.c.l.b16 %v8256
    %v9768 = vunpack.c.h.b16 %v8256
    %v9769 = vunpack.c.l.b16 %v8257
    %v9770 = vunpack.c.h.b16 %v8257
    %v9771 = vunpack.c.l.b16 %v8258
    %v9772 = vunpack.c.h.b16 %v8258
    %v9773 = vunpack.c.l.b16 %v8259
    %v9774 = vunpack.c.h.b16 %v8259
    %v9775 = vunpack.c.l.b16 %v8260
    %v9776 = vunpack.c.h.b16 %v8260
    %v9777 = vunpack.c.l.b16 %v8261
    %v9778 = vunpack.c.h.b16 %v8261
    %v9779 = vunpack.c.l.b16 %v8262
    %v9780 = vunpack.c.h.b16 %v8262
    %v9781 = vunpack.c.l.b16 %v8263
    %v9782 = vunpack.c.h.b16 %v8263
    %v9783 = vunpack.c.l.b16 %v8264
    %v9784 = vunpack.c.h.b16 %v8264
    %v9785 = vunpack.c.l.b16 %v8265
    %v9786 = vunpack.c.h.b16 %v8265
    %v9787 = vunpack.c.l.b16 %v8266
    %v9788 = vunpack.c.h.b16 %v8266
    %v9789 = vunpack.c.l.b16 %v8267
    %v9790 = vunpack.c.h.b16 %v8267
    %v9791 = vunpack.c.l.b16 %v8268
    %v9792 = vunpack.c.h.b16 %v8268
    %v9793 = vunpack.c.l.b16 %v8269
    %v9794 = vunpack.c.h.b16 %v8269
    %v9795 = vunpack.c.l.b16 %v8270
    %v9796 = vunpack.c.h.b16 %v8270
    %v9797 = vunpack.c.l.b16 %v8271
    %v9798 = vunpack.c.h.b16 %v8271
    %v9799 = vunpack.c.l.b16 %v8272
    %v9800 = vunpack.c.h.b16 %v8272
    %v9801 = vunpack.c.l.b16 %v8273
    %v9802 = vunpack.c.h.b16 %v8273
    %v9803 = vunpack.c.l.b16 %v8274
    %v9804 = vunpack.c.h.b16 %v8274
    %v9805 = vunpack.c.l.b16 %v8275
    %v9806 = vunpack.c.h.b16 %v8275
    %v9807 = vunpack.c.l.b16 %v8276
    %v9808 = vunpack.c.h.b16 %v8276
    %v9809 = vunpack.c.l.b16 %v8277
    %v9810 = vunpack.c.h.b16 %v8277
    %v9811 = vunpack.c.l.b16 %v8278
    %v9812 = vunpack.c.h.b16 %v8278
    %v9813 = vunpack.c.l.b16 %v8279
    %v9814 = vunpack.c.h.b16 %v8279
    %v9815 = vunpack.c.l.b16 %v8280
    %v9816 = vunpack.c.h.b16 %v8280
    %v9817 = vunpack.c.l.b16 %v8281
    %v9818 = vunpack.c.h.b16 %v8281
    %v9819 = vunpack.c.l.b16 %v8282
    %v9820 = vunpack.c.h.b16 %v8282
    %v9821 = vunpack.c.l.b16 %v8283
    %v9822 = vunpack.c.h.b16 %v8283
    %v9823 = vunpack.c.l.b16 %v8284
    %v9824 = vunpack.c.h.b16 %v8284
    %v9825 = vunpack.c.l.b16 %v8285
    %v9826 = vunpack.c.h.b16 %v8285
    %v9827 = vunpack.c.l.b16 %v8286
    %v9828 = vunpack.c.h.b16 %v8286
    %v9829 = vunpack.c.l.b16 %v8287
    %v9830 = vunpack.c.h.b16 %v8287
    %v9831 = vunpack.c.l.b16 %v8288
    %v9832 = vunpack.c.h.b16 %v8288
    %v9833 = vunpack.c.l.b16 %v8289
    %v9834 = vunpack.c.h.b16 %v8289
    %v9835 = vunpack.c.l.b16 %v8290
    %v9836 = vunpack.c.h.b16 %v8290
    %v9837 = vunpack.c.l.b16 %v8291
    %v9838 = vunpack.c.h.b16 %v8291
    %v9839 = vunpack.c.l.b16 %v8292
    %v9840 = vunpack.c.h.b16 %v8292
    %v9841 = vunpack.c.l.b16 %v8293
    %v9842 = vunpack.c.h.b16 %v8293
    %v9843 = vunpack.c.l.b16 %v8294
    %v9844 = vunpack.c.h.b16 %v8294
    %v9845 = vunpack.c.l.b16 %v8295
    %v9846 = vunpack.c.h.b16 %v8295
    %v9847 = vunpack.c.l.b16 %v8296
    %v9848 = vunpack.c.h.b16 %v8296
    %v9849 = vunpack.c.l.b16 %v8297
    %v9850 = vunpack.c.h.b16 %v8297
    %v9851 = vunpack.c.l.b16 %v8298
    %v9852 = vunpack.c.h.b16 %v8298
    %v9853 = vunpack.c.l.b16 %v8299
    %v9854 = vunpack.c.h.b16 %v8299
    %v9855 = vunpack.c.l.b16 %v8300
    %v9856 = vunpack.c.h.b16 %v8300
    %v9857 = vunpack.c.l.b16 %v8301
    %v9858 = vunpack.c.h.b16 %v8301
    %v9859 = vunpack.c.l.b16 %v8302
    %v9860 = vunpack.c.h.b16 %v8302
    %v9861 = vunpack.c.l.b16 %v8303
    %v9862 = vunpack.c.h.b16 %v8303
    %v9863 = vunpack.c.l.b16 %v8304
    %v9864 = vunpack.c.h.b16 %v8304
    %v9865 = vunpack.c.l.b16 %v8305
    %v9866 = vunpack.c.h.b16 %v8305
    %v9867 = vunpack.c.l.b16 %v8306
    %v9868 = vunpack.c.h.b16 %v8306
    %v9869 = vunpack.c.l.b16 %v8307
    %v9870 = vunpack.c.h.b16 %v8307
    %v9871 = vunpack.c.l.b16 %v8308
    %v9872 = vunpack.c.h.b16 %v8308
    %v9873 = vunpack.c.l.b16 %v8309
    %v9874 = vunpack.c.h.b16 %v8309
    %v9875 = vunpack.c.l.b16 %v8310
    %v9876 = vunpack.c.h.b16 %v8310
    %v9877 = vunpack.c.l.b16 %v8311
    %v9878 = vunpack.c.h.b16 %v8311
    %v9879 = vunpack.c.l.b16 %v8312
    %v9880 = vunpack.c.h.b16 %v8312
    %v9881 = vunpack.c.l.b16 %v8313
    %v9882 = vunpack.c.h.b16 %v8313
    %v9883 = vunpack.c.l.b16 %v8314
    %v9884 = vunpack.c.h.b16 %v8314
    %v9885 = vunpack.c.l.b16 %v8315
    %v9886 = vunpack.c.h.b16 %v8315
    %v9887 = vunpack.c.l.b16 %v8316
    %v9888 = vunpack.c.h.b16 %v8316
    %v9889 = vunpack.c.l.b16 %v8317
    %v9890 = vunpack.c.h.b16 %v8317
    %v9891 = vunpack.c.l.b16 %v8318
    %v9892 = vunpack.c.h.b16 %v8318
    %v9893 = vunpack.c.l.b16 %v8319
    %v9894 = vunpack.c.h.b16 %v8319
    %v9895 = vunpack.c.l.b16 %v8320
    %v9896 = vunpack.c.h.b16 %v8320
    %v9897 = vunpack.c.l.b16 %v8321
    %v9898 = vunpack.c.h.b16 %v8321
    %v9899 = vunpack.c.l.b16 %v8322
    %v9900 = vunpack.c.h.b16 %v8322
    %v9901 = vunpack.c.l.b16 %v8323
    %v9902 = vunpack.c.h.b16 %v8323
    %v9903 = vunpack.c.l.b16 %v8324
    %v9904 = vunpack.c.h.b16 %v8324
    %v9905 = vunpack.c.l.b16 %v8325
    %v9906 = vunpack.c.h.b16 %v8325
    %v9907 = vunpack.c.l.b16 %v8326
    %v9908 = vunpack.c.h.b16 %v8326
    %v9909 = vunpack.c.l.b16 %v8327
    %v9910 = vunpack.c.h.b16 %v8327
    %v9911 = vunpack.c.l.b16 %v8328
    %v9912 = vunpack.c.h.b16 %v8328
    %v9913 = vunpack.c.l.b16 %v8329
    %v9914 = vunpack.c.h.b16 %v8329
    %v9915 = vunpack.c.l.b16 %v8330
    %v9916 = vunpack.c.h.b16 %v8330
    %v9917 = vunpack.c.l.b16 %v8331
    %v9918 = vunpack.c.h.b16 %v8331
    %v9919 = vunpack.c.l.b16 %v8332
    %v9920 = vunpack.c.h.b16 %v8332
    %v9921 = vunpack.c.l.b16 %v8333
    %v9922 = vunpack.c.h.b16 %v8333
    %v9923 = vunpack.c.l.b16 %v8334
    %v9924 = vunpack.c.h.b16 %v8334
    %v9925 = vunpack.c.l.b16 %v8335
    %v9926 = vunpack.c.h.b16 %v8335
    %v9927 = vunpack.c.l.b16 %v8336
    %v9928 = vunpack.c.h.b16 %v8336
    %v9929 = vunpack.c.l.b16 %v8337
    %v9930 = vunpack.c.h.b16 %v8337
    %v9931 = vunpack.c.l.b16 %v8338
    %v9932 = vunpack.c.h.b16 %v8338
    %v9933 = vunpack.c.l.b16 %v8339
    %v9934 = vunpack.c.h.b16 %v8339
    %v9935 = vunpack.c.l.b16 %v8340
    %v9936 = vunpack.c.h.b16 %v8340
    %v9937 = vunpack.c.l.b16 %v8341
    %v9938 = vunpack.c.h.b16 %v8341
    %v9939 = vunpack.c.l.b16 %v8342
    %v9940 = vunpack.c.h.b16 %v8342
    %v9941 = vunpack.c.l.b16 %v8343
    %v9942 = vunpack.c.h.b16 %v8343
    %v9943 = vunpack.c.l.b16 %v8344
    %v9944 = vunpack.c.h.b16 %v8344
    %v9945 = vunpack.c.l.b16 %v8345
    %v9946 = vunpack.c.h.b16 %v8345
    %v9947 = vunpack.c.l.b16 %v8346
    %v9948 = vunpack.c.h.b16 %v8346
    %v9949 = vunpack.c.l.b16 %v8347
    %v9950 = vunpack.c.h.b16 %v8347
    %v9951 = vunpack.c.l.b16 %v8348
    %v9952 = vunpack.c.h.b16 %v8348
    %v9953 = vunpack.c.l.b16 %v8349
    %v9954 = vunpack.c.h.b16 %v8349
    %v9955 = vunpack.c.l.b16 %v8350
    %v9956 = vunpack.c.h.b16 %v8350
    %v9957 = vunpack.c.l.b16 %v8351
    %v9958 = vunpack.c.h.b16 %v8351
    %v9959 = vunpack.c.l.b16 %v8352
    %v9960 = vunpack.c.h.b16 %v8352
    %v9961 = vunpack.c.l.b16 %v8353
    %v9962 = vunpack.c.h.b16 %v8353
    %v9963 = vunpack.c.l.b16 %v8354
    %v9964 = vunpack.c.h.b16 %v8354
    %v9965 = vunpack.c.l.b16 %v8355
    %v9966 = vunpack.c.h.b16 %v8355
    %v9967 = vunpack.c.l.b16 %v8356
    %v9968 = vunpack.c.h.b16 %v8356
    %v9969 = vunpack.c.l.b16 %v8357
    %v9970 = vunpack.c.h.b16 %v8357
    %v9971 = vunpack.c.l.b16 %v8358
    %v9972 = vunpack.c.h.b16 %v8358
    %v9973 = vunpack.c.l.b16 %v8359
    %v9974 = vunpack.c.h.b16 %v8359
    %v9975 = vunpack.c.l.b16 %v8360
    %v9976 = vunpack.c.h.b16 %v8360
    %v9977 = vunpack.c.l.b16 %v8361
    %v9978 = vunpack.c.h.b16 %v8361
    %v9979 = vunpack.c.l.b16 %v8362
    %v9980 = vunpack.c.h.b16 %v8362
    %v9981 = vunpack.c.l.b16 %v8363
    %v9982 = vunpack.c.h.b16 %v8363
    %v9983 = vunpack.c.l.b16 %v8364
    %v9984 = vunpack.c.h.b16 %v8364
    %v9985 = vunpack.c.l.b16 %v8365
    %v9986 = vunpack.c.h.b16 %v8365
    %v9987 = vunpack.c.l.b16 %v8366
    %v9988 = vunpack.c.h.b16 %v8366
    %v9989 = vunpack.c.l.b16 %v8367
    %v9990 = vunpack.c.h.b16 %v8367
    %v9991 = vunpack.c.l.b16 %v8368
    %v9992 = vunpack.c.h.b16 %v8368
    %v9993 = vunpack.c.l.b16 %v8369
    %v9994 = vunpack.c.h.b16 %v8369
    %v9995 = vunpack.c.l.b16 %v8370
    %v9996 = vunpack.c.h.b16 %v8370
    %v9997 = vunpack.c.l.b16 %v8371
    %v9998 = vunpack.c.h.b16 %v8371
    %v9999 = vunpack.c.l.b16 %v8372
    %v10000 = vunpack.c.h.b16 %v8372
    %v10001 = vunpack.c.l.b16 %v8373
    %v10002 = vunpack.c.h.b16 %v8373
    %v10003 = vunpack.c.l.b16 %v8374
    %v10004 = vunpack.c.h.b16 %v8374
    %v10005 = vunpack.c.l.b16 %v8375
    %v10006 = vunpack.c.h.b16 %v8375
    %v10007 = vunpack.c.l.b16 %v8376
    %v10008 = vunpack.c.h.b16 %v8376
    %v10009 = vunpack.c.l.b16 %v8377
    %v10010 = vunpack.c.h.b16 %v8377
    %v10011 = vunpack.c.l.b16 %v8378
    %v10012 = vunpack.c.h.b16 %v8378
    %v10013 = vunpack.c.l.b16 %v8379
    %v10014 = vunpack.c.h.b16 %v8379
    %v10015 = vunpack.c.l.b16 %v8380
    %v10016 = vunpack.c.h.b16 %v8380
    %v10017 = vunpack.c.l.b16 %v8381
    %v10018 = vunpack.c.h.b16 %v8381
    %v10019 = vunpack.c.l.b16 %v8382
    %v10020 = vunpack.c.h.b16 %v8382
    %v10021 = vunpack.c.l.b16 %v8383
    %v10022 = vunpack.c.h.b16 %v8383
    %v10023 = vunpack.c.l.b16 %v8384
    %v10024 = vunpack.c.h.b16 %v8384
    %v10025 = vunpack.c.l.b16 %v8385
    %v10026 = vunpack.c.h.b16 %v8385
    %v10027 = vunpack.c.l.b16 %v8386
    %v10028 = vunpack.c.h.b16 %v8386
    %v10029 = vunpack.c.l.b16 %v8387
    %v10030 = vunpack.c.h.b16 %v8387
    %v10031 = vunpack.c.l.b16 %v8388
    %v10032 = vunpack.c.h.b16 %v8388
    %v10033 = vunpack.c.l.b16 %v8389
    %v10034 = vunpack.c.h.b16 %v8389
    %v10035 = vunpack.c.l.b16 %v8390
    %v10036 = vunpack.c.h.b16 %v8390
    %v10037 = vunpack.c.l.b16 %v8391
    %v10038 = vunpack.c.h.b16 %v8391
    %v10039 = vunpack.c.l.b16 %v8392
    %v10040 = vunpack.c.h.b16 %v8392
    %v10041 = vunpack.c.l.b16 %v8393
    %v10042 = vunpack.c.h.b16 %v8393
    %v10043 = vunpack.c.l.b16 %v8394
    %v10044 = vunpack.c.h.b16 %v8394
    %v10045 = vunpack.c.l.b16 %v8395
    %v10046 = vunpack.c.h.b16 %v8395
    %v10047 = vunpack.c.l.b16 %v8396
    %v10048 = vunpack.c.h.b16 %v8396
    %v10049 = vunpack.c.l.b16 %v8397
    %v10050 = vunpack.c.h.b16 %v8397
    %v10051 = vunpack.c.l.b16 %v8398
    %v10052 = vunpack.c.h.b16 %v8398
    %v10053 = vunpack.c.l.b16 %v8399
    %v10054 = vunpack.c.h.b16 %v8399
    %v10055 = vunpack.c.l.b16 %v8400
    %v10056 = vunpack.c.h.b16 %v8400
    %v10057 = vunpack.c.l.b16 %v8401
    %v10058 = vunpack.c.h.b16 %v8401
    %v10059 = vunpack.c.l.b16 %v8402
    %v10060 = vunpack.c.h.b16 %v8402
    %v10061 = vunpack.c.l.b16 %v8403
    %v10062 = vunpack.c.h.b16 %v8403
    %v10063 = vunpack.c.l.b16 %v8404
    %v10064 = vunpack.c.h.b16 %v8404
    %v10065 = vunpack.c.l.b16 %v8405
    %v10066 = vunpack.c.h.b16 %v8405
    %v10067 = vunpack.c.l.b16 %v8406
    %v10068 = vunpack.c.h.b16 %v8406
    %v10069 = vunpack.c.l.b16 %v8407
    %v10070 = vunpack.c.h.b16 %v8407
    %v10071 = vunpack.c.l.b16 %v8408
    %v10072 = vunpack.c.h.b16 %v8408
    %v10073 = vunpack.c.l.b16 %v8409
    %v10074 = vunpack.c.h.b16 %v8409
    %v10075 = vunpack.c.l.b16 %v8410
    %v10076 = vunpack.c.h.b16 %v8410
    %v10077 = vunpack.c.l.b16 %v8411
    %v10078 = vunpack.c.h.b16 %v8411
    %v10079 = vunpack.c.l.b16 %v8412
    %v10080 = vunpack.c.h.b16 %v8412
    %v10081 = vunpack.c.l.b16 %v8413
    %v10082 = vunpack.c.h.b16 %v8413
    %v10083 = vunpack.c.l.b16 %v8414
    %v10084 = vunpack.c.h.b16 %v8414
    %v10085 = vunpack.c.l.b16 %v8415
    %v10086 = vunpack.c.h.b16 %v8415
    %v10087 = vunpack.c.l.b16 %v8416
    %v10088 = vunpack.c.h.b16 %v8416
    %v10089 = vunpack.c.l.b16 %v8417
    %v10090 = vunpack.c.h.b16 %v8417
    %v10091 = vunpack.c.l.b16 %v8418
    %v10092 = vunpack.c.h.b16 %v8418
    %v10093 = vunpack.c.l.b16 %v8419
    %v10094 = vunpack.c.h.b16 %v8419
    %v10095 = vunpack.c.l.b16 %v8420
    %v10096 = vunpack.c.h.b16 %v8420
    %v10097 = vunpack.c.l.b16 %v8421
    %v10098 = vunpack.c.h.b16 %v8421
    %v10099 = vunpack.c.l.b16 %v8422
    %v10100 = vunpack.c.h.b16 %v8422
    %v10101 = vunpack.c.l.b16 %v8423
    %v10102 = vunpack.c.h.b16 %v8423
    %v10103 = vunpack.c.l.b16 %v8424
    %v10104 = vunpack.c.h.b16 %v8424
    %v10105 = vunpack.c.l.b16 %v8425
    %v10106 = vunpack.c.h.b16 %v8425
    %v10107 = vunpack.c.l.b16 %v8426
    %v10108 = vunpack.c.h.b16 %v8426
    %v10109 = vunpack.c.l.b16 %v8427
    %v10110 = vunpack.c.h.b16 %v8427
    %v10111 = vunpack.c.l.b16 %v8428
    %v10112 = vunpack.c.h.b16 %v8428
    %v10113 = vunpack.c.l.b16 %v8429
    %v10114 = vunpack.c.h.b16 %v8429
    %v10115 = vunpack.c.l.b16 %v8430
    %v10116 = vunpack.c.h.b16 %v8430
    %v10117 = vunpack.c.l.b16 %v8431
    %v10118 = vunpack.c.h.b16 %v8431
    %v10119 = vunpack.c.l.b16 %v8432
    %v10120 = vunpack.c.h.b16 %v8432
    %v10121 = vunpack.c.l.b16 %v8433
    %v10122 = vunpack.c.h.b16 %v8433
    %v10123 = vunpack.c.l.b16 %v8434
    %v10124 = vunpack.c.h.b16 %v8434
    %v10125 = vunpack.c.l.b16 %v8435
    %v10126 = vunpack.c.h.b16 %v8435
    %v10127 = vunpack.c.l.b16 %v8436
    %v10128 = vunpack.c.h.b16 %v8436
    %v10129 = vunpack.c.l.b16 %v8437
    %v10130 = vunpack.c.h.b16 %v8437
    %v10131 = vunpack.c.l.b16 %v8438
    %v10132 = vunpack.c.h.b16 %v8438
    %v10133 = vunpack.c.l.b16 %v8439
    %v10134 = vunpack.c.h.b16 %v8439
    %v10135 = vunpack.c.l.b16 %v8440
    %v10136 = vunpack.c.h.b16 %v8440
    %v10137 = vunpack.c.l.b16 %v8441
    %v10138 = vunpack.c.h.b16 %v8441
    %v10139 = vunpack.c.l.b16 %v8442
    %v10140 = vunpack.c.h.b16 %v8442
    %v10141 = vunpack.c.l.b16 %v8443
    %v10142 = vunpack.c.h.b16 %v8443
    %v10143 = vunpack.c.l.b16 %v8444
    %v10144 = vunpack.c.h.b16 %v8444
    %v10145 = vunpack.c.l.b16 %v8445
    %v10146 = vunpack.c.h.b16 %v8445
    %v10147 = vunpack.c.l.b16 %v8446
    %v10148 = vunpack.c.h.b16 %v8446
    %v10149 = vunpack.c.l.b16 %v8447
    %v10150 = vunpack.c.h.b16 %v8447
    %v10151 = vunpack.c.l.b16 %v8448
    %v10152 = vunpack.c.h.b16 %v8448
    %v10153 = vunpack.c.l.b16 %v8449
    %v10154 = vunpack.c.h.b16 %v8449
    %v10155 = vunpack.c.l.b16 %v8450
    %v10156 = vunpack.c.h.b16 %v8450
    %v10157 = vunpack.c.l.b16 %v8451
    %v10158 = vunpack.c.h.b16 %v8451
    %v10159 = vunpack.c.l.b16 %v8452
    %v10160 = vunpack.c.h.b16 %v8452
    %v10161 = vunpack.c.l.b16 %v8453
    %v10162 = vunpack.c.h.b16 %v8453
    %v10163 = vunpack.c.l.b16 %v8454
    %v10164 = vunpack.c.h.b16 %v8454
    %v10165 = vunpack.c.l.b16 %v8455
    %v10166 = vunpack.c.h.b16 %v8455
    %v10167 = vunpack.c.l.b16 %v8456
    %v10168 = vunpack.c.h.b16 %v8456
    %v10169 = vunpack.c.l.b16 %v8457
    %v10170 = vunpack.c.h.b16 %v8457
    %v10171 = vunpack.c.l.b16 %v8458
    %v10172 = vunpack.c.h.b16 %v8458
    %v10173 = vunpack.c.l.b16 %v8459
    %v10174 = vunpack.c.h.b16 %v8459
    %v10175 = vunpack.c.l.b16 %v8460
    %v10176 = vunpack.c.h.b16 %v8460
    %v10177 = vunpack.c.l.b16 %v8461
    %v10178 = vunpack.c.h.b16 %v8461
    %v10179 = vunpack.c.l.b16 %v8462
    %v10180 = vunpack.c.h.b16 %v8462
    %v10181 = vunpack.c.l.b16 %v8463
    %v10182 = vunpack.c.h.b16 %v8463
    %v10183 = vunpack.c.l.b16 %v8464
    %v10184 = vunpack.c.h.b16 %v8464
    %v10185 = vunpack.c.l.b16 %v8465
    %v10186 = vunpack.c.h.b16 %v8465
    %v10187 = vunpack.c.l.b16 %v8466
    %v10188 = vunpack.c.h.b16 %v8466
    %v10189 = vunpack.c.l.b16 %v8467
    %v10190 = vunpack.c.h.b16 %v8467
    %v10191 = vunpack.c.l.b16 %v8468
    %v10192 = vunpack.c.h.b16 %v8468
    %v10193 = vunpack.c.l.b16 %v8469
    %v10194 = vunpack.c.h.b16 %v8469
    %v10195 = vunpack.c.l.b16 %v8470
    %v10196 = vunpack.c.h.b16 %v8470
    %v10197 = vunpack.c.l.b16 %v8471
    %v10198 = vunpack.c.h.b16 %v8471
    %v10199 = vunpack.c.l.b16 %v8472
    %v10200 = vunpack.c.h.b16 %v8472
    %v10201 = vunpack.c.l.b16 %v8473
    %v10202 = vunpack.c.h.b16 %v8473
    %v10203 = vunpack.c.l.b16 %v8474
    %v10204 = vunpack.c.h.b16 %v8474
    %v10205 = vunpack.c.l.b16 %v8475
    %v10206 = vunpack.c.h.b16 %v8475
    %v10207 = vunpack.c.l.b16 %v8476
    %v10208 = vunpack.c.h.b16 %v8476
    %v10209 = vunpack.c.l.b16 %v8477
    %v10210 = vunpack.c.h.b16 %v8477
    %v10211 = vunpack.c.l.b16 %v8478
    %v10212 = vunpack.c.h.b16 %v8478
    %v10213 = vunpack.c.l.b16 %v8479
    %v10214 = vunpack.c.h.b16 %v8479
    %v10215 = vunpack.c.l.b16 %v8480
    %v10216 = vunpack.c.h.b16 %v8480
    %v10217 = vunpack.c.l.b16 %v8481
    %v10218 = vunpack.c.h.b16 %v8481
    %v10219 = vunpack.c.l.b16 %v8482
    %v10220 = vunpack.c.h.b16 %v8482
    %v10221 = vunpack.c.l.b16 %v8483
    %v10222 = vunpack.c.h.b16 %v8483
    %v10223 = vunpack.c.l.b16 %v8484
    %v10224 = vunpack.c.h.b16 %v8484
    %v10225 = vunpack.c.l.b16 %v8485
    %v10226 = vunpack.c.h.b16 %v8485
    %v10227 = vunpack.c.l.b16 %v8486
    %v10228 = vunpack.c.h.b16 %v8486
    %v10229 = vunpack.c.l.b16 %v8487
    %v10230 = vunpack.c.h.b16 %v8487
    %v10231 = vunpack.c.l.b16 %v8488
    %v10232 = vunpack.c.h.b16 %v8488
    %v10233 = vunpack.c.l.b16 %v8489
    %v10234 = vunpack.c.h.b16 %v8489
    %v10235 = vunpack.c.l.b16 %v8490
    %v10236 = vunpack.c.h.b16 %v8490
    %v10237 = vunpack.c.l.b16 %v8491
    %v10238 = vunpack.c.h.b16 %v8491
    %v10239 = vunpack.c.l.b16 %v8492
    %v10240 = vunpack.c.h.b16 %v8492
    %v10241 = vunpack.c.l.b16 %v8493
    %v10242 = vunpack.c.h.b16 %v8493
    %v10243 = vunpack.c.l.b16 %v8494
    %v10244 = vunpack.c.h.b16 %v8494
    %v10245 = vunpack.c.l.b16 %v8495
    %v10246 = vunpack.c.h.b16 %v8495
    %v10247 = vunpack.c.l.b16 %v8496
    %v10248 = vunpack.c.h.b16 %v8496
    %v10249 = vunpack.c.l.b16 %v8497
    %v10250 = vunpack.c.h.b16 %v8497
    %v10251 = vunpack.c.l.b16 %v8498
    %v10252 = vunpack.c.h.b16 %v8498
    %v10253 = vunpack.c.l.b16 %v8499
    %v10254 = vunpack.c.h.b16 %v8499
    %v10255 = vunpack.c.l.b16 %v8500
    %v10256 = vunpack.c.h.b16 %v8500
    %v10257 = vunpack.c.l.b16 %v8501
    %v10258 = vunpack.c.h.b16 %v8501
    %v10259 = vunpack.c.l.b16 %v8502
    %v10260 = vunpack.c.h.b16 %v8502
    %v10261 = vunpack.c.l.b16 %v8503
    %v10262 = vunpack.c.h.b16 %v8503
    %v10263 = vunpack.c.l.b16 %v8504
    %v10264 = vunpack.c.h.b16 %v8504
    %v10265 = vunpack.c.l.b16 %v8505
    %v10266 = vunpack.c.h.b16 %v8505
    %v10267 = vunpack.c.l.b16 %v8506
    %v10268 = vunpack.c.h.b16 %v8506
    %v10269 = vunpack.c.l.b16 %v8507
    %v10270 = vunpack.c.h.b16 %v8507
    %v10271 = vunpack.c.l.b16 %v8508
    %v10272 = vunpack.c.h.b16 %v8508
    %v10273 = vunpack.c.l.b16 %v8509
    %v10274 = vunpack.c.h.b16 %v8509
    %v10275 = vunpack.c.l.b16 %v8510
    %v10276 = vunpack.c.h.b16 %v8510
    %v10277 = vunpack.c.l.b16 %v8511
    %v10278 = vunpack.c.h.b16 %v8511
    %v10279 = vunpack.c.l.b16 %v8512
    %v10280 = vunpack.c.h.b16 %v8512
    %v10281 = vunpack.c.l.b16 %v8513
    %v10282 = vunpack.c.h.b16 %v8513
    %v10283 = vunpack.c.l.b16 %v8514
    %v10284 = vunpack.c.h.b16 %v8514
    %v10285 = vunpack.c.l.b16 %v8515
    %v10286 = vunpack.c.h.b16 %v8515
    %v10287 = vunpack.c.l.b16 %v8516
    %v10288 = vunpack.c.h.b16 %v8516
    %v10289 = vunpack.c.l.b16 %v8517
    %v10290 = vunpack.c.h.b16 %v8517
    %v10291 = vunpack.c.l.b16 %v8518
    %v10292 = vunpack.c.h.b16 %v8518
    %v10293 = vunpack.c.l.b16 %v8519
    %v10294 = vunpack.c.h.b16 %v8519
    %v10295 = vunpack.c.l.b16 %v8520
    %v10296 = vunpack.c.h.b16 %v8520
    %v10297 = vunpack.c.l.b16 %v8521
    %v10298 = vunpack.c.h.b16 %v8521
    %v10299 = vunpack.c.l.b16 %v8522
    %v10300 = vunpack.c.h.b16 %v8522
    %v10301 = vunpack.c.l.b16 %v8523
    %v10302 = vunpack.c.h.b16 %v8523
    %v10303 = vunpack.c.l.b16 %v8524
    %v10304 = vunpack.c.h.b16 %v8524
    %v10305 = vunpack.c.l.b16 %v8525
    %v10306 = vunpack.c.h.b16 %v8525
    %v10307 = vunpack.c.l.b16 %v8526
    %v10308 = vunpack.c.h.b16 %v8526
    %v10309 = vunpack.c.l.b16 %v8527
    %v10310 = vunpack.c.h.b16 %v8527
    %v10311 = vunpack.c.l.b16 %v8528
    %v10312 = vunpack.c.h.b16 %v8528
    %v10313 = vunpack.c.l.b16 %v8529
    %v10314 = vunpack.c.h.b16 %v8529
    %v10315 = vunpack.c.l.b16 %v8530
    %v10316 = vunpack.c.h.b16 %v8530
    %v10317 = vunpack.c.l.b16 %v8531
    %v10318 = vunpack.c.h.b16 %v8531
    %v10319 = vunpack.c.l.b16 %v8532
    %v10320 = vunpack.c.h.b16 %v8532
    %v10321 = vunpack.c.l.b16 %v8533
    %v10322 = vunpack.c.h.b16 %v8533
    %v10323 = vunpack.c.l.b16 %v8534
    %v10324 = vunpack.c.h.b16 %v8534
    %v10325 = vunpack.c.l.b16 %v8535
    %v10326 = vunpack.c.h.b16 %v8535
    %v10327 = vunpack.c.l.b16 %v8536
    %v10328 = vunpack.c.h.b16 %v8536
    %v10329 = vunpack.c.l.b16 %v8537
    %v10330 = vunpack.c.h.b16 %v8537
    %v10331 = vunpack.c.l.b16 %v8538
    %v10332 = vunpack.c.h.b16 %v8538
    %v10333 = vunpack.c.l.b16 %v8539
    %v10334 = vunpack.c.h.b16 %v8539
    %v10335 = vunpack.c.l.b16 %v8540
    %v10336 = vunpack.c.h.b16 %v8540
    %v10337 = vunpack.c.l.b16 %v8541
    %v10338 = vunpack.c.h.b16 %v8541
    %v10339 = vunpack.c.l.b16 %v8542
    %v10340 = vunpack.c.h.b16 %v8542
    %v10341 = vunpack.c.l.b16 %v8543
    %v10342 = vunpack.c.h.b16 %v8543
    %v10343 = vunpack.c.l.b16 %v8544
    %v10344 = vunpack.c.h.b16 %v8544
    %v10345 = vunpack.c.l.b16 %v8545
    %v10346 = vunpack.c.h.b16 %v8545
    %v10347 = vpack.c.b16 %v9199, %v9195
    %v10348 = vpack.c.b16 %v9200, %v9196
    %v10349 = vpack.c.b16 %v9201, %v9197
    %v10350 = vpack.c.b16 %v9202, %v9198
    %v10351 = vpack.c.b16 %v9207, %v9203
    %v10352 = vpack.c.b16 %v9208, %v9204
    %v10353 = vpack.c.b16 %v9209, %v9205
    %v10354 = vpack.c.b16 %v9210, %v9206
    %v10355 = vpack.c.b16 %v9215, %v9211
    %v10356 = vpack.c.b16 %v9216, %v9212
    %v10357 = vpack.c.b16 %v9217, %v9213
    %v10358 = vpack.c.b16 %v9218, %v9214
    %v10359 = vpack.c.b16 %v9223, %v9219
    %v10360 = vpack.c.b16 %v9224, %v9220
    %v10361 = vpack.c.b16 %v9225, %v9221
    %v10362 = vpack.c.b16 %v9226, %v9222
    %v10363 = vpack.c.b16 %v9231, %v9227
    %v10364 = vpack.c.b16 %v9232, %v9228
    %v10365 = vpack.c.b16 %v9233, %v9229
    %v10366 = vpack.c.b16 %v9234, %v9230
    %v10367 = vpack.c.b16 %v9239, %v9235
    %v10368 = vpack.c.b16 %v9240, %v9236
    %v10369 = vpack.c.b16 %v9241, %v9237
    %v10370 = vpack.c.b16 %v9242, %v9238
    %v10371 = vpack.c.b16 %v9247, %v9243
    %v10372 = vpack.c.b16 %v9248, %v9244
    %v10373 = vpack.c.b16 %v9249, %v9245
    %v10374 = vpack.c.b16 %v9250, %v9246
    %v10375 = vpack.c.b16 %v9255, %v9251
    %v10376 = vpack.c.b16 %v9256, %v9252
    %v10377 = vpack.c.b16 %v9257, %v9253
    %v10378 = vpack.c.b16 %v9258, %v9254
    %v10379 = vpack.c.b16 %v9263, %v9259
    %v10380 = vpack.c.b16 %v9264, %v9260
    %v10381 = vpack.c.b16 %v9265, %v9261
    %v10382 = vpack.c.b16 %v9266, %v9262
    %v10383 = vpack.c.b16 %v9271, %v9267
    %v10384 = vpack.c.b16 %v9272, %v9268
    %v10385 = vpack.c.b16 %v9273, %v9269
    %v10386 = vpack.c.b16 %v9274, %v9270
    %v10387 = vpack.c.b16 %v9279, %v9275
    %v10388 = vpack.c.b16 %v9280, %v9276
    %v10389 = vpack.c.b16 %v9281, %v9277
    %v10390 = vpack.c.b16 %v9282, %v9278
    %v10391 = vpack.c.b16 %v9287, %v9283
    %v10392 = vpack.c.b16 %v9288, %v9284
    %v10393 = vpack.c.b16 %v9289, %v9285
    %v10394 = vpack.c.b16 %v9290, %v9286
    %v10395 = vpack.c.b16 %v9295, %v9291
    %v10396 = vpack.c.b16 %v9296, %v9292
    %v10397 = vpack.c.b16 %v9297, %v9293
    %v10398 = vpack.c.b16 %v9298, %v9294
    %v10399 = vpack.c.b16 %v9303, %v9299
    %v10400 = vpack.c.b16 %v9304, %v9300
    %v10401 = vpack.c.b16 %v9305, %v9301
    %v10402 = vpack.c.b16 %v9306, %v9302
    %v10403 = vpack.c.b16 %v9311, %v9307
    %v10404 = vpack.c.b16 %v9312, %v9308
    %v10405 = vpack.c.b16 %v9313, %v9309
    %v10406 = vpack.c.b16 %v9314, %v9310
    %v10407 = vpack.c.b16 %v9319, %v9315
    %v10408 = vpack.c.b16 %v9320, %v9316
    %v10409 = vpack.c.b16 %v9321, %v9317
    %v10410 = vpack.c.b16 %v9322, %v9318
    %v10411 = vpack.c.b16 %v9327, %v9323
    %v10412 = vpack.c.b16 %v9328, %v9324
    %v10413 = vpack.c.b16 %v9329, %v9325
    %v10414 = vpack.c.b16 %v9330, %v9326
    %v10415 = vpack.c.b16 %v9335, %v9331
    %v10416 = vpack.c.b16 %v9336, %v9332
    %v10417 = vpack.c.b16 %v9337, %v9333
    %v10418 = vpack.c.b16 %v9338, %v9334
    %v10419 = vpack.c.b16 %v9343, %v9339
    %v10420 = vpack.c.b16 %v9344, %v9340
    %v10421 = vpack.c.b16 %v9345, %v9341
    %v10422 = vpack.c.b16 %v9346, %v9342
    %v10423 = vpack.c.b16 %v9351, %v9347
    %v10424 = vpack.c.b16 %v9352, %v9348
    %v10425 = vpack.c.b16 %v9353, %v9349
    %v10426 = vpack.c.b16 %v9354, %v9350
    %v10427 = vpack.c.b16 %v9359, %v9355
    %v10428 = vpack.c.b16 %v9360, %v9356
    %v10429 = vpack.c.b16 %v9361, %v9357
    %v10430 = vpack.c.b16 %v9362, %v9358
    %v10431 = vpack.c.b16 %v9367, %v9363
    %v10432 = vpack.c.b16 %v9368, %v9364
    %v10433 = vpack.c.b16 %v9369, %v9365
    %v10434 = vpack.c.b16 %v9370, %v9366
    %v10435 = vpack.c.b16 %v9375, %v9371
    %v10436 = vpack.c.b16 %v9376, %v9372
    %v10437 = vpack.c.b16 %v9377, %v9373
    %v10438 = vpack.c.b16 %v9378, %v9374
    %v10439 = vpack.c.b16 %v9383, %v9379
    %v10440 = vpack.c.b16 %v9384, %v9380
    %v10441 = vpack.c.b16 %v9385, %v9381
    %v10442 = vpack.c.b16 %v9386, %v9382
    %v10443 = vpack.c.b16 %v9391, %v9387
    %v10444 = vpack.c.b16 %v9392, %v9388
    %v10445 = vpack.c.b16 %v9393, %v9389
    %v10446 = vpack.c.b16 %v9394, %v9390
    %v10447 = vpack.c.b16 %v9399, %v9395
    %v10448 = vpack.c.b16 %v9400, %v9396
    %v10449 = vpack.c.b16 %v9401, %v9397
    %v10450 = vpack.c.b16 %v9402, %v9398
    %v10451 = vpack.c.b16 %v9407, %v9403
    %v10452 = vpack.c.b16 %v9408, %v9404
    %v10453 = vpack.c.b16 %v9409, %v9405
    %v10454 = vpack.c.b16 %v9410, %v9406
    %v10455 = vpack.c.b16 %v9415, %v9411
    %v10456 = vpack.c.b16 %v9416, %v9412
    %v10457 = vpack.c.b16 %v9417, %v9413
    %v10458 = vpack.c.b16 %v9418, %v9414
    %v10459 = vpack.c.b16 %v9423, %v9419
    %v10460 = vpack.c.b16 %v9424, %v9420
    %v10461 = vpack.c.b16 %v9425, %v9421
    %v10462 = vpack.c.b16 %v9426, %v9422
    %v10463 = vpack.c.b16 %v9431, %v9427
    %v10464 = vpack.c.b16 %v9432, %v9428
    %v10465 = vpack.c.b16 %v9433, %v9429
    %v10466 = vpack.c.b16 %v9434, %v9430
    %v10467 = vpack.c.b16 %v9439, %v9435
    %v10468 = vpack.c.b16 %v9440, %v9436
    %v10469 = vpack.c.b16 %v9441, %v9437
    %v10470 = vpack.c.b16 %v9442, %v9438
    %v10471 = vpack.c.b16 %v9447, %v9443
    %v10472 = vpack.c.b16 %v9448, %v9444
    %v10473 = vpack.c.b16 %v9449, %v9445
    %v10474 = vpack.c.b16 %v9450, %v9446
    %v10475 = vpack.c.b16 %v9455, %v9451
    %v10476 = vpack.c.b16 %v9456, %v9452
    %v10477 = vpack.c.b16 %v9457, %v9453
    %v10478 = vpack.c.b16 %v9458, %v9454
    %v10479 = vpack.c.b16 %v9463, %v9459
    %v10480 = vpack.c.b16 %v9464, %v9460
    %v10481 = vpack.c.b16 %v9465, %v9461
    %v10482 = vpack.c.b16 %v9466, %v9462
    %v10483 = vpack.c.b16 %v9471, %v9467
    %v10484 = vpack.c.b16 %v9472, %v9468
    %v10485 = vpack.c.b16 %v9473, %v9469
    %v10486 = vpack.c.b16 %v9474, %v9470
    %v10487 = vpack.c.b16 %v9479, %v9475
    %v10488 = vpack.c.b16 %v9480, %v9476
    %v10489 = vpack.c.b16 %v9481, %v9477
    %v10490 = vpack.c.b16 %v9482, %v9478
    %v10491 = vpack.c.b16 %v9487, %v9483
    %v10492 = vpack.c.b16 %v9488, %v9484
    %v10493 = vpack.c.b16 %v9489, %v9485
    %v10494 = vpack.c.b16 %v9490, %v9486
    %v10495 = vpack.c.b16 %v9495, %v9491
    %v10496 = vpack.c.b16 %v9496, %v9492
    %v10497 = vpack.c.b16 %v9497, %v9493
    %v10498 = vpack.c.b16 %v9498, %v9494
    %v10499 = vpack.c.b16 %v9503, %v9499
    %v10500 = vpack.c.b16 %v9504, %v9500
    %v10501 = vpack.c.b16 %v9505, %v9501
    %v10502 = vpack.c.b16 %v9506, %v9502
    %v10503 = vpack.c.b16 %v9511, %v9507
    %v10504 = vpack.c.b16 %v9512, %v9508
    %v10505 = vpack.c.b16 %v9513, %v9509
    %v10506 = vpack.c.b16 %v9514, %v9510
    %v10507 = vpack.c.b16 %v9519, %v9515
    %v10508 = vpack.c.b16 %v9520, %v9516
    %v10509 = vpack.c.b16 %v9521, %v9517
    %v10510 = vpack.c.b16 %v9522, %v9518
    %v10511 = vpack.c.b16 %v9527, %v9523
    %v10512 = vpack.c.b16 %v9528, %v9524
    %v10513 = vpack.c.b16 %v9529, %v9525
    %v10514 = vpack.c.b16 %v9530, %v9526
    %v10515 = vpack.c.b16 %v9535, %v9531
    %v10516 = vpack.c.b16 %v9536, %v9532
    %v10517 = vpack.c.b16 %v9537, %v9533
    %v10518 = vpack.c.b16 %v9538, %v9534
    %v10519 = vpack.c.b16 %v9543, %v9539
    %v10520 = vpack.c.b16 %v9544, %v9540
    %v10521 = vpack.c.b16 %v9545, %v9541
    %v10522 = vpack.c.b16 %v9546, %v9542
    %v10523 = vpack.c.b16 %v9551, %v9547
    %v10524 = vpack.c.b16 %v9552, %v9548
    %v10525 = vpack.c.b16 %v9553, %v9549
    %v10526 = vpack.c.b16 %v9554, %v9550
    %v10527 = vpack.c.b16 %v9559, %v9555
    %v10528 = vpack.c.b16 %v9560, %v9556
    %v10529 = vpack.c.b16 %v9561, %v9557
    %v10530 = vpack.c.b16 %v9562, %v9558
    %v10531 = vpack.c.b16 %v9567, %v9563
    %v10532 = vpack.c.b16 %v9568, %v9564
    %v10533 = vpack.c.b16 %v9569, %v9565
    %v10534 = vpack.c.b16 %v9570, %v9566
    %v10535 = vpack.c.b16 %v9575, %v9571
    %v10536 = vpack.c.b16 %v9576, %v9572
    %v10537 = vpack.c.b16 %v9577, %v9573
    %v10538 = vpack.c.b16 %v9578, %v9574
    %v10539 = vpack.c.b16 %v9583, %v9579
    %v10540 = vpack.c.b16 %v9584, %v9580
    %v10541 = vpack.c.b16 %v9585, %v9581
    %v10542 = vpack.c.b16 %v9586, %v9582
    %v10543 = vpack.c.b16 %v9591, %v9587
    %v10544 = vpack.c.b16 %v9592, %v9588
    %v10545 = vpack.c.b16 %v9593, %v9589
    %v10546 = vpack.c.b16 %v9594, %v9590
    %v10547 = vpack.c.b16 %v9599, %v9595
    %v10548 = vpack.c.b16 %v9600, %v9596
    %v10549 = vpack.c.b16 %v9601, %v9597
    %v10550 = vpack.c.b16 %v9602, %v9598
    %v10551 = vpack.c.b16 %v9607, %v9603
    %v10552 = vpack.c.b16 %v9608, %v9604
    %v10553 = vpack.c.b16 %v9609, %v9605
    %v10554 = vpack.c.b16 %v9610, %v9606
    %v10555 = vpack.c.b16 %v9615, %v9611
    %v10556 = vpack.c.b16 %v9616, %v9612
    %v10557 = vpack.c.b16 %v9617, %v9613
    %v10558 = vpack.c.b16 %v9618, %v9614
    %v10559 = vpack.c.b16 %v9623, %v9619
    %v10560 = vpack.c.b16 %v9624, %v9620
    %v10561 = vpack.c.b16 %v9625, %v9621
    %v10562 = vpack.c.b16 %v9626, %v9622
    %v10563 = vpack.c.b16 %v9631, %v9627
    %v10564 = vpack.c.b16 %v9632, %v9628
    %v10565 = vpack.c.b16 %v9633, %v9629
    %v10566 = vpack.c.b16 %v9634, %v9630
    %v10567 = vpack.c.b16 %v9639, %v9635
    %v10568 = vpack.c.b16 %v9640, %v9636
    %v10569 = vpack.c.b16 %v9641, %v9637
    %v10570 = vpack.c.b16 %v9642, %v9638
    %v10571 = vpack.c.b16 %v9647, %v9643
    %v10572 = vpack.c.b16 %v9648, %v9644
    %v10573 = vpack.c.b16 %v9649, %v9645
    %v10574 = vpack.c.b16 %v9650, %v9646
    %v10575 = vpack.c.b16 %v9655, %v9651
    %v10576 = vpack.c.b16 %v9656, %v9652
    %v10577 = vpack.c.b16 %v9657, %v9653
    %v10578 = vpack.c.b16 %v9658, %v9654
    %v10579 = vpack.c.b16 %v9663, %v9659
    %v10580 = vpack.c.b16 %v9664, %v9660
    %v10581 = vpack.c.b16 %v9665, %v9661
    %v10582 = vpack.c.b16 %v9666, %v9662
    %v10583 = vpack.c.b16 %v9671, %v9667
    %v10584 = vpack.c.b16 %v9672, %v9668
    %v10585 = vpack.c.b16 %v9673, %v9669
    %v10586 = vpack.c.b16 %v9674, %v9670
    %v10587 = vpack.c.b16 %v9679, %v9675
    %v10588 = vpack.c.b16 %v9680, %v9676
    %v10589 = vpack.c.b16 %v9681, %v9677
    %v10590 = vpack.c.b16 %v9682, %v9678
    %v10591 = vpack.c.b16 %v9687, %v9683
    %v10592 = vpack.c.b16 %v9688, %v9684
    %v10593 = vpack.c.b16 %v9689, %v9685
    %v10594 = vpack.c.b16 %v9690, %v9686
    %v10595 = vpack.c.b16 %v9695, %v9691
    %v10596 = vpack.c.b16 %v9696, %v9692
    %v10597 = vpack.c.b16 %v9697, %v9693
    %v10598 = vpack.c.b16 %v9698, %v9694
    %v10599 = vpack.c.b16 %v9703, %v9699
    %v10600 = vpack.c.b16 %v9704, %v9700
    %v10601 = vpack.c.b16 %v9705, %v9701
    %v10602 = vpack.c.b16 %v9706, %v9702
    %v10603 = vpack.c.b16 %v9711, %v9707
    %v10604 = vpack.c.b16 %v9712, %v9708
    %v10605 = vpack.c.b16 %v9713, %v9709
    %v10606 = vpack.c.b16 %v9714, %v9710
    %v10607 = vpack.c.b16 %v9719, %v9715
    %v10608 = vpack.c.b16 %v9720, %v9716
    %v10609 = vpack.c.b16 %v9721, %v9717
    %v10610 = vpack.c.b16 %v9722, %v9718
    %v10611 = vpack.c.b16 %v9727, %v9723
    %v10612 = vpack.c.b16 %v9728, %v9724
    %v10613 = vpack.c.b16 %v9729, %v9725
    %v10614 = vpack.c.b16 %v9730, %v9726
    %v10615 = vpack.c.b16 %v9735, %v9731
    %v10616 = vpack.c.b16 %v9736, %v9732
    %v10617 = vpack.c.b16 %v9737, %v9733
    %v10618 = vpack.c.b16 %v9738, %v9734
    %v10619 = vpack.c.b16 %v9743, %v9739
    %v10620 = vpack.c.b16 %v9744, %v9740
    %v10621 = vpack.c.b16 %v9745, %v9741
    %v10622 = vpack.c.b16 %v9746, %v9742
    %v10623 = vpack.c.b16 %v9751, %v9747
    %v10624 = vpack.c.b16 %v9752, %v9748
    %v10625 = vpack.c.b16 %v9753, %v9749
    %v10626 = vpack.c.b16 %v9754, %v9750
    %v10627 = vpack.c.b16 %v9759, %v9755
    %v10628 = vpack.c.b16 %v9760, %v9756
    %v10629 = vpack.c.b16 %v9761, %v9757
    %v10630 = vpack.c.b16 %v9762, %v9758
    %v10631 = vpack.c.b16 %v9767, %v9763
    %v10632 = vpack.c.b16 %v9768, %v9764
    %v10633 = vpack.c.b16 %v9769, %v9765
    %v10634 = vpack.c.b16 %v9770, %v9766
    %v10635 = vpack.c.b16 %v9775, %v9771
    %v10636 = vpack.c.b16 %v9776, %v9772
    %v10637 = vpack.c.b16 %v9777, %v9773
    %v10638 = vpack.c.b16 %v9778, %v9774
    %v10639 = vpack.c.b16 %v9783, %v9779
    %v10640 = vpack.c.b16 %v9784, %v9780
    %v10641 = vpack.c.b16 %v9785, %v9781
    %v10642 = vpack.c.b16 %v9786, %v9782
    %v10643 = vpack.c.b16 %v9791, %v9787
    %v10644 = vpack.c.b16 %v9792, %v9788
    %v10645 = vpack.c.b16 %v9793, %v9789
    %v10646 = vpack.c.b16 %v9794, %v9790
    %v10647 = vpack.c.b16 %v9799, %v9795
    %v10648 = vpack.c.b16 %v9800, %v9796
    %v10649 = vpack.c.b16 %v9801, %v9797
    %v10650 = vpack.c.b16 %v9802, %v9798
    %v10651 = vpack.c.b16 %v9807, %v9803
    %v10652 = vpack.c.b16 %v9808, %v9804
    %v10653 = vpack.c.b16 %v9809, %v9805
    %v10654 = vpack.c.b16 %v9810, %v9806
    %v10655 = vpack.c.b16 %v9815, %v9811
    %v10656 = vpack.c.b16 %v9816, %v9812
    %v10657 = vpack.c.b16 %v9817, %v9813
    %v10658 = vpack.c.b16 %v9818, %v9814
    %v10659 = vpack.c.b16 %v9823, %v9819
    %v10660 = vpack.c.b16 %v9824, %v9820
    %v10661 = vpack.c.b16 %v9825, %v9821
    %v10662 = vpack.c.b16 %v9826, %v9822
    %v10663 = vpack.c.b16 %v9831, %v9827
    %v10664 = vpack.c.b16 %v9832, %v9828
    %v10665 = vpack.c.b16 %v9833, %v9829
    %v10666 = vpack.c.b16 %v9834, %v9830
    %v10667 = vpack.c.b16 %v9839, %v9835
    %v10668 = vpack.c.b16 %v9840, %v9836
    %v10669 = vpack.c.b16 %v9841, %v9837
    %v10670 = vpack.c.b16 %v9842, %v9838
    %v10671 = vpack.c.b16 %v9847, %v9843
    %v10672 = vpack.c.b16 %v9848, %v9844
    %v10673 = vpack.c.b16 %v9849, %v9845
    %v10674 = vpack.c.b16 %v9850, %v9846
    %v10675 = vpack.c.b16 %v9855, %v9851
    %v10676 = vpack.c.b16 %v9856, %v9852
    %v10677 = vpack.c.b16 %v9857, %v9853
    %v10678 = vpack.c.b16 %v9858, %v9854
    %v10679 = vpack.c.b16 %v9863, %v9859
    %v10680 = vpack.c.b16 %v9864, %v9860
    %v10681 = vpack.c.b16 %v9865, %v9861
    %v10682 = vpack.c.b16 %v9866, %v9862
    %v10683 = vpack.c.b16 %v9871, %v9867
    %v10684 = vpack.c.b16 %v9872, %v9868
    %v10685 = vpack.c.b16 %v9873, %v9869
    %v10686 = vpack.c.b16 %v9874, %v9870
    %v10687 = vpack.c.b16 %v9879, %v9875
    %v10688 = vpack.c.b16 %v9880, %v9876
    %v10689 = vpack.c.b16 %v9881, %v9877
    %v10690 = vpack.c.b16 %v9882, %v9878
    %v10691 = vpack.c.b16 %v9887, %v9883
    %v10692 = vpack.c.b16 %v9888, %v9884
    %v10693 = vpack.c.b16 %v9889, %v9885
    %v10694 = vpack.c.b16 %v9890, %v9886
    %v10695 = vpack.c.b16 %v9895, %v9891
    %v10696 = vpack.c.b16 %v9896, %v9892
    %v10697 = vpack.c.b16 %v9897, %v9893
    %v10698 = vpack.c.b16 %v9898, %v9894
    %v10699 = vpack.c.b16 %v9903, %v9899
    %v10700 = vpack.c.b16 %v9904, %v9900
    %v10701 = vpack.c.b16 %v9905, %v9901
    %v10702 = vpack.c.b16 %v9906, %v9902
    %v10703 = vpack.c.b16 %v9911, %v9907
    %v10704 = vpack.c.b16 %v9912, %v9908
    %v10705 = vpack.c.b16 %v9913, %v9909
    %v10706 = vpack.c.b16 %v9914, %v9910
    %v10707 = vpack.c.b16 %v9919, %v9915
    %v10708 = vpack.c.b16 %v9920, %v9916
    %v10709 = vpack.c.b16 %v9921, %v9917
    %v10710 = vpack.c.b16 %v9922, %v9918
    %v10711 = vpack.c.b16 %v9927, %v9923
    %v10712 = vpack.c.b16 %v9928, %v9924
    %v10713 = vpack.c.b16 %v9929, %v9925
    %v10714 = vpack.c.b16 %v9930, %v9926
    %v10715 = vpack.c.b16 %v9935, %v9931
    %v10716 = vpack.c.b16 %v9936, %v9932
    %v10717 = vpack.c.b16 %v9937, %v9933
    %v10718 = vpack.c.b16 %v9938, %v9934
    %v10719 = vpack.c.b16 %v9943, %v9939
    %v10720 = vpack.c.b16 %v9944, %v9940
    %v10721 = vpack.c.b16 %v9945, %v9941
    %v10722 = vpack.c.b16 %v9946, %v9942
    %v10723 = vpack.c.b16 %v9951, %v9947
    %v10724 = vpack.c.b16 %v9952, %v9948
    %v10725 = vpack.c.b16 %v9953, %v9949
    %v10726 = vpack.c.b16 %v9954, %v9950
    %v10727 = vpack.c.b16 %v9959, %v9955
    %v10728 = vpack.c.b16 %v9960, %v9956
    %v10729 = vpack.c.b16 %v9961, %v9957
    %v10730 = vpack.c.b16 %v9962, %v9958
    %v10731 = vpack.c.b16 %v9967, %v9963
    %v10732 = vpack.c.b16 %v9968, %v9964
    %v10733 = vpack.c.b16 %v9969, %v9965
    %v10734 = vpack.c.b16 %v9970, %v9966
    %v10735 = vpack.c.b16 %v9975, %v9971
    %v10736 = vpack.c.b16 %v9976, %v9972
    %v10737 = vpack.c.b16 %v9977, %v9973
    %v10738 = vpack.c.b16 %v9978, %v9974
    %v10739 = vpack.c.b16 %v9983, %v9979
    %v10740 = vpack.c.b16 %v9984, %v9980
    %v10741 = vpack.c.b16 %v9985, %v9981
    %v10742 = vpack.c.b16 %v9986, %v9982
    %v10743 = vpack.c.b16 %v9991, %v9987
    %v10744 = vpack.c.b16 %v9992, %v9988
    %v10745 = vpack.c.b16 %v9993, %v9989
    %v10746 = vpack.c.b16 %v9994, %v9990
    %v10747 = vpack.c.b16 %v9999, %v9995
    %v10748 = vpack.c.b16 %v10000, %v9996
    %v10749 = vpack.c.b16 %v10001, %v9997
    %v10750 = vpack.c.b16 %v10002, %v9998
    %v10751 = vpack.c.b16 %v10007, %v10003
    %v10752 = vpack.c.b16 %v10008, %v10004
    %v10753 = vpack.c.b16 %v10009, %v10005
    %v10754 = vpack.c.b16 %v10010, %v10006
    %v10755 = vpack.c.b16 %v10015, %v10011
    %v10756 = vpack.c.b16 %v10016, %v10012
    %v10757 = vpack.c.b16 %v10017, %v10013
    %v10758 = vpack.c.b16 %v10018, %v10014
    %v10759 = vpack.c.b16 %v10023, %v10019
    %v10760 = vpack.c.b16 %v10024, %v10020
    %v10761 = vpack.c.b16 %v10025, %v10021
    %v10762 = vpack.c.b16 %v10026, %v10022
    %v10763 = vpack.c.b16 %v10031, %v10027
    %v10764 = vpack.c.b16 %v10032, %v10028
    %v10765 = vpack.c.b16 %v10033, %v10029
    %v10766 = vpack.c.b16 %v10034, %v10030
    %v10767 = vpack.c.b16 %v10039, %v10035
    %v10768 = vpack.c.b16 %v10040, %v10036
    %v10769 = vpack.c.b16 %v10041, %v10037
    %v10770 = vpack.c.b16 %v10042, %v10038
    %v10771 = vpack.c.b16 %v10047, %v10043
    %v10772 = vpack.c.b16 %v10048, %v10044
    %v10773 = vpack.c.b16 %v10049, %v10045
    %v10774 = vpack.c.b16 %v10050, %v10046
    %v10775 = vpack.c.b16 %v10055, %v10051
    %v10776 = vpack.c.b16 %v10056, %v10052
    %v10777 = vpack.c.b16 %v10057, %v10053
    %v10778 = vpack.c.b16 %v10058, %v10054
    %v10779 = vpack.c.b16 %v10063, %v10059
    %v10780 = vpack.c.b16 %v10064, %v10060
    %v10781 = vpack.c.b16 %v10065, %v10061
    %v10782 = vpack.c.b16 %v10066, %v10062
    %v10783 = vpack.c.b16 %v10071, %v10067
    %v10784 = vpack.c.b16 %v10072, %v10068
    %v10785 = vpack.c.b16 %v10073, %v10069
    %v10786 = vpack.c.b16 %v10074, %v10070
    %v10787 = vpack.c.b16 %v10079, %v10075
    %v10788 = vpack.c.b16 %v10080, %v10076
    %v10789 = vpack.c.b16 %v10081, %v10077
    %v10790 = vpack.c.b16 %v10082, %v10078
    %v10791 = vpack.c.b16 %v10087, %v10083
    %v10792 = vpack.c.b16 %v10088, %v10084
    %v10793 = vpack.c.b16 %v10089, %v10085
    %v10794 = vpack.c.b16 %v10090, %v10086
    %v10795 = vpack.c.b16 %v10095, %v10091
    %v10796 = vpack.c.b16 %v10096, %v10092
    %v10797 = vpack.c.b16 %v10097, %v10093
    %v10798 = vpack.c.b16 %v10098, %v10094
    %v10799 = vpack.c.b16 %v10103, %v10099
    %v10800 = vpack.c.b16 %v10104, %v10100
    %v10801 = vpack.c.b16 %v10105, %v10101
    %v10802 = vpack.c.b16 %v10106, %v10102
    %v10803 = vpack.c.b16 %v10111, %v10107
    %v10804 = vpack.c.b16 %v10112, %v10108
    %v10805 = vpack.c.b16 %v10113, %v10109
    %v10806 = vpack.c.b16 %v10114, %v10110
    %v10807 = vpack.c.b16 %v10119, %v10115
    %v10808 = vpack.c.b16 %v10120, %v10116
    %v10809 = vpack.c.b16 %v10121, %v10117
    %v10810 = vpack.c.b16 %v10122, %v10118
    %v10811 = vpack.c.b16 %v10127, %v10123
    %v10812 = vpack.c.b16 %v10128, %v10124
    %v10813 = vpack.c.b16 %v10129, %v10125
    %v10814 = vpack.c.b16 %v10130, %v10126
    %v10815 = vpack.c.b16 %v10135, %v10131
    %v10816 = vpack.c.b16 %v10136, %v10132
    %v10817 = vpack.c.b16 %v10137, %v10133
    %v10818 = vpack.c.b16 %v10138, %v10134
    %v10819 = vpack.c.b16 %v10143, %v10139
    %v10820 = vpack.c.b16 %v10144, %v10140
    %v10821 = vpack.c.b16 %v10145, %v10141
    %v10822 = vpack.c.b16 %v10146, %v10142
    %v10823 = vpack.c.b16 %v10151, %v10147
    %v10824 = vpack.c.b16 %v10152, %v10148
    %v10825 = vpack.c.b16 %v10153, %v10149
    %v10826 = vpack.c.b16 %v10154, %v10150
    %v10827 = vpack.c.b16 %v10159, %v10155
    %v10828 = vpack.c.b16 %v10160, %v10156
    %v10829 = vpack.c.b16 %v10161, %v10157
    %v10830 = vpack.c.b16 %v10162, %v10158
    %v10831 = vpack.c.b16 %v10167, %v10163
    %v10832 = vpack.c.b16 %v10168, %v10164
    %v10833 = vpack.c.b16 %v10169, %v10165
    %v10834 = vpack.c.b16 %v10170, %v10166
    %v10835 = vpack.c.b16 %v10175, %v10171
    %v10836 = vpack.c.b16 %v10176, %v10172
    %v10837 = vpack.c.b16 %v10177, %v10173
    %v10838 = vpack.c.b16 %v10178, %v10174
    %v10839 = vpack.c.b16 %v10183, %v10179
    %v10840 = vpack.c.b16 %v10184, %v10180
    %v10841 = vpack.c.b16 %v10185, %v10181
    %v10842 = vpack.c.b16 %v10186, %v10182
    %v10843 = vpack.c.b16 %v10191, %v10187
    %v10844 = vpack.c.b16 %v10192, %v10188
    %v10845 = vpack.c.b16 %v10193, %v10189
    %v10846 = vpack.c.b16 %v10194, %v10190
    %v10847 = vpack.c.b16 %v10199, %v10195
    %v10848 = vpack.c.b16 %v10200, %v10196
    %v10849 = vpack.c.b16 %v10201, %v10197
    %v10850 = vpack.c.b16 %v10202, %v10198
    %v10851 = vpack.c.b16 %v10207, %v10203
    %v10852 = vpack.c.b16 %v10208, %v10204
    %v10853 = vpack.c.b16 %v10209, %v10205
    %v10854 = vpack.c.b16 %v10210, %v10206
    %v10855 = vpack.c.b16 %v10215, %v10211
    %v10856 = vpack.c.b16 %v10216, %v10212
    %v10857 = vpack.c.b16 %v10217, %v10213
    %v10858 = vpack.c.b16 %v10218, %v10214
    %v10859 = vpack.c.b16 %v10223, %v10219
    %v10860 = vpack.c.b16 %v10224, %v10220
    %v10861 = vpack.c.b16 %v10225, %v10221
    %v10862 = vpack.c.b16 %v10226, %v10222
    %v10863 = vpack.c.b16 %v10231, %v10227
    %v10864 = vpack.c.b16 %v10232, %v10228
    %v10865 = vpack.c.b16 %v10233, %v10229
    %v10866 = vpack.c.b16 %v10234, %v10230
    %v10867 = vpack.c.b16 %v10239, %v10235
    %v10868 = vpack.c.b16 %v10240, %v10236
    %v10869 = vpack.c.b16 %v10241, %v10237
    %v10870 = vpack.c.b16 %v10242, %v10238
    %v10871 = vpack.c.b16 %v10247, %v10243
    %v10872 = vpack.c.b16 %v10248, %v10244
    %v10873 = vpack.c.b16 %v10249, %v10245
    %v10874 = vpack.c.b16 %v10250, %v10246
    %v10875 = vpack.c.b16 %v10255, %v10251
    %v10876 = vpack.c.b16 %v10256, %v10252
    %v10877 = vpack.c.b16 %v10257, %v10253
    %v10878 = vpack.c.b16 %v10258, %v10254
    %v10879 = vpack.c.b16 %v10263, %v10259
    %v10880 = vpack.c.b16 %v10264, %v10260
    %v10881 = vpack.c.b16 %v10265, %v10261
    %v10882 = vpack.c.b16 %v10266, %v10262
    %v10883 = vpack.c.b16 %v10271, %v10267
    %v10884 = vpack.c.b16 %v10272, %v10268
    %v10885 = vpack.c.b16 %v10273, %v10269
    %v10886 = vpack.c.b16 %v10274, %v10270
    %v10887 = vpack.c.b16 %v10279, %v10275
    %v10888 = vpack.c.b16 %v10280, %v10276
    %v10889 = vpack.c.b16 %v10281, %v10277
    %v10890 = vpack.c.b16 %v10282, %v10278
    %v10891 = vpack.c.b16 %v10287, %v10283
    %v10892 = vpack.c.b16 %v10288, %v10284
    %v10893 = vpack.c.b16 %v10289, %v10285
    %v10894 = vpack.c.b16 %v10290, %v10286
    %v10895 = vpack.c.b16 %v10295, %v10291
    %v10896 = vpack.c.b16 %v10296, %v10292
    %v10897 = vpack.c.b16 %v10297, %v10293
    %v10898 = vpack.c.b16 %v10298, %v10294
    %v10899 = vpack.c.b16 %v10303, %v10299
    %v10900 = vpack.c.b16 %v10304, %v10300
    %v10901 = vpack.c.b16 %v10305, %v10301
    %v10902 = vpack.c.b16 %v10306, %v10302
    %v10903 = vpack.c.b16 %v10311, %v10307
    %v10904 = vpack.c.b16 %v10312, %v10308
    %v10905 = vpack.c.b16 %v10313, %v10309
    %v10906 = vpack.c.b16 %v10314, %v10310
    %v10907 = vpack.c.b16 %v10319, %v10315
    %v10908 = vpack.c.b16 %v10320, %v10316
    %v10909 = vpack.c.b16 %v10321, %v10317
    %v10910 = vpack.c.b16 %v10322, %v10318
    %v10911 = vpack.c.b16 %v10327, %v10323
    %v10912 = vpack.c.b16 %v10328, %v10324
    %v10913 = vpack.c.b16 %v10329, %v10325
    %v10914 = vpack.c.b16 %v10330, %v10326
    %v10915 = vpack.c.b16 %v10335, %v10331
    %v10916 = vpack.c.b16 %v10336, %v10332
    %v10917 = vpack.c.b16 %v10337, %v10333
    %v10918 = vpack.c.b16 %v10338, %v10334
    %v10919 = vpack.c.b16 %v10343, %v10339
    %v10920 = vpack.c.b16 %v10344, %v10340
    %v10921 = vpack.c.b16 %v10345, %v10341
    %v10922 = vpack.c.b16 %v10346, %v10342
    %11499 = vmatpush.bf16.msra.mxu0 %v10375
    %11500 = vmatpush.bf16.msra.mxu0 %v10371
    %11501 = vmatpush.bf16.msra.mxu0 %v10367
    %11502 = vmatpush.bf16.msra.mxu0 %v10363
    %11503 = vmatpush.bf16.msra.mxu0 %v10359
    %11504 = vmatpush.bf16.msra.mxu0 %v10355
    %11505 = vmatpush.bf16.msra.mxu0 %v10351
    %11506 = vmatpush.bf16.msra.mxu0 %v10347
    %11507 = vmatmul.bf16.gmra.mxu0 %v8583
    %v11508 = vpop.f32.mrf.mxu0
    %v11509 = vadd.f32 %v8548, %v11508
    %v11510 = vpop.f32.mrf.mxu0
    %11511 = vdwg.mxu0
    %11512 = vmatpush.bf16.msra.mxu0 %v10407
    %11513 = vmatpush.bf16.msra.mxu0 %v10403
    %11514 = vmatpush.bf16.msra.mxu0 %v10399
    %11515 = vmatpush.bf16.msra.mxu0 %v10395
    %11516 = vmatpush.bf16.msra.mxu0 %v10391
    %11517 = vmatpush.bf16.msra.mxu0 %v10387
    %11518 = vmatpush.bf16.msra.mxu0 %v10383
    %11519 = vmatpush.bf16.msra.mxu0 %v10379
    %11520 = vmatmul.bf16.gmra.mxu0 %v8584
    %v11521 = vpop.f32.mrf.mxu0
    %v11522 = vadd.f32 %v11509, %v11521
    %v11523 = vpop.f32.mrf.mxu0
    %11524 = vdwg.mxu0
    %11525 = vmatpush.bf16.msra.mxu0 %v10439
    %11526 = vmatpush.bf16.msra.mxu0 %v10435
    %11527 = vmatpush.bf16.msra.mxu0 %v10431
    %11528 = vmatpush.bf16.msra.mxu0 %v10427
    %11529 = vmatpush.bf16.msra.mxu0 %v10423
    %11530 = vmatpush.bf16.msra.mxu0 %v10419
    %11531 = vmatpush.bf16.msra.mxu0 %v10415
    %11532 = vmatpush.bf16.msra.mxu0 %v10411
    %11533 = vmatmul.bf16.gmra.mxu0 %v8585
    %v11534 = vpop.f32.mrf.mxu0
    %v11535 = vadd.f32 %v11522, %v11534
    %v11536 = vpop.f32.mrf.mxu0
    %11537 = vdwg.mxu0
    %11538 = vmatpush.bf16.msra.mxu0 %v10471
    %11539 = vmatpush.bf16.msra.mxu0 %v10467
    %11540 = vmatpush.bf16.msra.mxu0 %v10463
    %11541 = vmatpush.bf16.msra.mxu0 %v10459
    %11542 = vmatpush.bf16.msra.mxu0 %v10455
    %11543 = vmatpush.bf16.msra.mxu0 %v10451
    %11544 = vmatpush.bf16.msra.mxu0 %v10447
    %11545 = vmatpush.bf16.msra.mxu0 %v10443
    %11546 = vmatmul.bf16.gmra.mxu0 %v8586
    %v11547 = vpop.f32.mrf.mxu0
    %v11548 = vadd.f32 %v11535, %v11547
    %v11549 = vpop.f32.mrf.mxu0
    %11550 = vdwg.mxu0
    %11551 = vmatpush.bf16.msra.mxu0 %v10503
    %11552 = vmatpush.bf16.msra.mxu0 %v10499
    %11553 = vmatpush.bf16.msra.mxu0 %v10495
    %11554 = vmatpush.bf16.msra.mxu0 %v10491
    %11555 = vmatpush.bf16.msra.mxu0 %v10487
    %11556 = vmatpush.bf16.msra.mxu0 %v10483
    %11557 = vmatpush.bf16.msra.mxu0 %v10479
    %11558 = vmatpush.bf16.msra.mxu0 %v10475
    %11559 = vmatmul.bf16.gmra.mxu0 %v8587
    %v11560 = vpop.f32.mrf.mxu0
    %v11561 = vadd.f32 %v11548, %v11560
    %v11562 = vpop.f32.mrf.mxu0
    %11563 = vdwg.mxu0
    %11564 = vmatpush.bf16.msra.mxu0 %v10535
    %11565 = vmatpush.bf16.msra.mxu0 %v10531
    %11566 = vmatpush.bf16.msra.mxu0 %v10527
    %11567 = vmatpush.bf16.msra.mxu0 %v10523
    %11568 = vmatpush.bf16.msra.mxu0 %v10519
    %11569 = vmatpush.bf16.msra.mxu0 %v10515
    %11570 = vmatpush.bf16.msra.mxu0 %v10511
    %11571 = vmatpush.bf16.msra.mxu0 %v10507
    %11572 = vmatmul.bf16.gmra.mxu0 %v8588
    %v11573 = vpop.f32.mrf.mxu0
    %v11574 = vadd.f32 %v11561, %v11573
    %v11575 = vpop.f32.mrf.mxu0
    %11576 = vdwg.mxu0
    %11577 = vmatpush.bf16.msra.mxu0 %v10567
    %11578 = vmatpush.bf16.msra.mxu0 %v10563
    %11579 = vmatpush.bf16.msra.mxu0 %v10559
    %11580 = vmatpush.bf16.msra.mxu0 %v10555
    %11581 = vmatpush.bf16.msra.mxu0 %v10551
    %11582 = vmatpush.bf16.msra.mxu0 %v10547
    %11583 = vmatpush.bf16.msra.mxu0 %v10543
    %11584 = vmatpush.bf16.msra.mxu0 %v10539
    %11585 = vmatmul.bf16.gmra.mxu0 %v8589
    %v11586 = vpop.f32.mrf.mxu0
    %v11587 = vadd.f32 %v11574, %v11586
    %v11588 = vpop.f32.mrf.mxu0
    %11589 = vdwg.mxu0
    %11590 = vmatpush.bf16.msra.mxu0 %v10599
    %11591 = vmatpush.bf16.msra.mxu0 %v10595
    %11592 = vmatpush.bf16.msra.mxu0 %v10591
    %11593 = vmatpush.bf16.msra.mxu0 %v10587
    %11594 = vmatpush.bf16.msra.mxu0 %v10583
    %11595 = vmatpush.bf16.msra.mxu0 %v10579
    %11596 = vmatpush.bf16.msra.mxu0 %v10575
    %11597 = vmatpush.bf16.msra.mxu0 %v10571
    %11598 = vmatmul.bf16.gmra.mxu0 %v8590
    %v11599 = vpop.f32.mrf.mxu0
    %v11600 = vadd.f32 %v11587, %v11599
    %v11601 = vpop.f32.mrf.mxu0
    %11602 = vdwg.mxu0
    %11603 = vmatpush.bf16.msra.mxu0 %v10631
    %11604 = vmatpush.bf16.msra.mxu0 %v10627
    %11605 = vmatpush.bf16.msra.mxu0 %v10623
    %11606 = vmatpush.bf16.msra.mxu0 %v10619
    %11607 = vmatpush.bf16.msra.mxu0 %v10615
    %11608 = vmatpush.bf16.msra.mxu0 %v10611
    %11609 = vmatpush.bf16.msra.mxu0 %v10607
    %11610 = vmatpush.bf16.msra.mxu0 %v10603
    %11611 = vmatmul.bf16.gmra.mxu0 %v8591
    %v11612 = vpop.f32.mrf.mxu0
    %v11613 = vadd.f32 %v11600, %v11612
    %v11614 = vpop.f32.mrf.mxu0
    %11615 = vdwg.mxu0
    %11616 = vmatpush.bf16.msra.mxu0 %v10663
    %11617 = vmatpush.bf16.msra.mxu0 %v10659
    %11618 = vmatpush.bf16.msra.mxu0 %v10655
    %11619 = vmatpush.bf16.msra.mxu0 %v10651
    %11620 = vmatpush.bf16.msra.mxu0 %v10647
    %11621 = vmatpush.bf16.msra.mxu0 %v10643
    %11622 = vmatpush.bf16.msra.mxu0 %v10639
    %11623 = vmatpush.bf16.msra.mxu0 %v10635
    %11624 = vmatmul.bf16.gmra.mxu0 %v8592
    %v11625 = vpop.f32.mrf.mxu0
    %v11626 = vadd.f32 %v11613, %v11625
    %v11627 = vpop.f32.mrf.mxu0
    %11628 = vdwg.mxu0
    %11629 = vmatpush.bf16.msra.mxu0 %v10695
    %11630 = vmatpush.bf16.msra.mxu0 %v10691
    %11631 = vmatpush.bf16.msra.mxu0 %v10687
    %11632 = vmatpush.bf16.msra.mxu0 %v10683
    %11633 = vmatpush.bf16.msra.mxu0 %v10679
    %11634 = vmatpush.bf16.msra.mxu0 %v10675
    %11635 = vmatpush.bf16.msra.mxu0 %v10671
    %11636 = vmatpush.bf16.msra.mxu0 %v10667
    %11637 = vmatmul.bf16.gmra.mxu0 %v8593
    %v11638 = vpop.f32.mrf.mxu0
    %v11639 = vadd.f32 %v11626, %v11638
    %v11640 = vpop.f32.mrf.mxu0
    %11641 = vdwg.mxu0
    %11642 = vmatpush.bf16.msra.mxu0 %v10727
    %11643 = vmatpush.bf16.msra.mxu0 %v10723
    %11644 = vmatpush.bf16.msra.mxu0 %v10719
    %11645 = vmatpush.bf16.msra.mxu0 %v10715
    %11646 = vmatpush.bf16.msra.mxu0 %v10711
    %11647 = vmatpush.bf16.msra.mxu0 %v10707
    %11648 = vmatpush.bf16.msra.mxu0 %v10703
    %11649 = vmatpush.bf16.msra.mxu0 %v10699
    %11650 = vmatmul.bf16.gmra.mxu0 %v8594
    %v11651 = vpop.f32.mrf.mxu0
    %v11652 = vadd.f32 %v11639, %v11651
    %v11653 = vpop.f32.mrf.mxu0
    %11654 = vdwg.mxu0
    %11655 = vmatpush.bf16.msra.mxu0 %v10759
    %11656 = vmatpush.bf16.msra.mxu0 %v10755
    %11657 = vmatpush.bf16.msra.mxu0 %v10751
    %11658 = vmatpush.bf16.msra.mxu0 %v10747
    %11659 = vmatpush.bf16.msra.mxu0 %v10743
    %11660 = vmatpush.bf16.msra.mxu0 %v10739
    %11661 = vmatpush.bf16.msra.mxu0 %v10735
    %11662 = vmatpush.bf16.msra.mxu0 %v10731
    %11663 = vmatmul.bf16.gmra.mxu0 %v8595
    %v11664 = vpop.f32.mrf.mxu0
    %v11665 = vadd.f32 %v11652, %v11664
    %v11666 = vpop.f32.mrf.mxu0
    %11667 = vdwg.mxu0
    %11668 = vmatpush.bf16.msra.mxu0 %v10791
    %11669 = vmatpush.bf16.msra.mxu0 %v10787
    %11670 = vmatpush.bf16.msra.mxu0 %v10783
    %11671 = vmatpush.bf16.msra.mxu0 %v10779
    %11672 = vmatpush.bf16.msra.mxu0 %v10775
    %11673 = vmatpush.bf16.msra.mxu0 %v10771
    %11674 = vmatpush.bf16.msra.mxu0 %v10767
    %11675 = vmatpush.bf16.msra.mxu0 %v10763
    %11676 = vmatmul.bf16.gmra.mxu0 %v8596
    %v11677 = vpop.f32.mrf.mxu0
    %v11678 = vadd.f32 %v11665, %v11677
    %v11679 = vpop.f32.mrf.mxu0
    %11680 = vdwg.mxu0
    %11681 = vmatpush.bf16.msra.mxu0 %v10823
    %11682 = vmatpush.bf16.msra.mxu0 %v10819
    %11683 = vmatpush.bf16.msra.mxu0 %v10815
    %11684 = vmatpush.bf16.msra.mxu0 %v10811
    %11685 = vmatpush.bf16.msra.mxu0 %v10807
    %11686 = vmatpush.bf16.msra.mxu0 %v10803
    %11687 = vmatpush.bf16.msra.mxu0 %v10799
    %11688 = vmatpush.bf16.msra.mxu0 %v10795
    %11689 = vmatmul.bf16.gmra.mxu0 %v8597
    %v11690 = vpop.f32.mrf.mxu0
    %v11691 = vadd.f32 %v11678, %v11690
    %v11692 = vpop.f32.mrf.mxu0
    %11693 = vdwg.mxu0
    %11694 = vmatpush.bf16.msra.mxu0 %v10855
    %11695 = vmatpush.bf16.msra.mxu0 %v10851
    %11696 = vmatpush.bf16.msra.mxu0 %v10847
    %11697 = vmatpush.bf16.msra.mxu0 %v10843
    %11698 = vmatpush.bf16.msra.mxu0 %v10839
    %11699 = vmatpush.bf16.msra.mxu0 %v10835
    %11700 = vmatpush.bf16.msra.mxu0 %v10831
    %11701 = vmatpush.bf16.msra.mxu0 %v10827
    %11702 = vmatmul.bf16.gmra.mxu0 %v8598
    %v11703 = vpop.f32.mrf.mxu0
    %v11704 = vadd.f32 %v11691, %v11703
    %v11705 = vpop.f32.mrf.mxu0
    %11706 = vdwg.mxu0
    %11707 = vmatpush.bf16.msra.mxu0 %v10887
    %11708 = vmatpush.bf16.msra.mxu0 %v10883
    %11709 = vmatpush.bf16.msra.mxu0 %v10879
    %11710 = vmatpush.bf16.msra.mxu0 %v10875
    %11711 = vmatpush.bf16.msra.mxu0 %v10871
    %11712 = vmatpush.bf16.msra.mxu0 %v10867
    %11713 = vmatpush.bf16.msra.mxu0 %v10863
    %11714 = vmatpush.bf16.msra.mxu0 %v10859
    %11715 = vmatmul.bf16.gmra.mxu0 %v8599
    %v11716 = vpop.f32.mrf.mxu0
    %v11717 = vadd.f32 %v11704, %v11716
    %v11718 = vpop.f32.mrf.mxu0
    %11719 = vdwg.mxu0
    %11720 = vmatpush.bf16.msra.mxu0 %v10919
    %11721 = vmatpush.bf16.msra.mxu0 %v10915
    %11722 = vmatpush.bf16.msra.mxu0 %v10911
    %11723 = vmatpush.bf16.msra.mxu0 %v10907
    %11724 = vmatpush.bf16.msra.mxu0 %v10903
    %11725 = vmatpush.bf16.msra.mxu0 %v10899
    %11726 = vmatpush.bf16.msra.mxu0 %v10895
    %11727 = vmatpush.bf16.msra.mxu0 %v10891
    %11728 = vmatmul.bf16.gmra.mxu0 %v8600
    %v11729 = vpop.f32.mrf.mxu0
    %v11730 = vadd.f32 %v11717, %v11729
    %v11731 = vpop.f32.mrf.mxu0
    %11732 = vdwg.mxu0
    %11733 = vmatpush.bf16.msra.mxu0 %v10376
    %11734 = vmatpush.bf16.msra.mxu0 %v10372
    %11735 = vmatpush.bf16.msra.mxu0 %v10368
    %11736 = vmatpush.bf16.msra.mxu0 %v10364
    %11737 = vmatpush.bf16.msra.mxu0 %v10360
    %11738 = vmatpush.bf16.msra.mxu0 %v10356
    %11739 = vmatpush.bf16.msra.mxu0 %v10352
    %11740 = vmatpush.bf16.msra.mxu0 %v10348
    %11741 = vmatmul.bf16.gmra.mxu0 %v8583
    %v11742 = vpop.f32.mrf.mxu0
    %v11743 = vadd.f32 %v8549, %v11742
    %v11744 = vpop.f32.mrf.mxu0
    %11745 = vdwg.mxu0
    %11746 = vmatpush.bf16.msra.mxu0 %v10408
    %11747 = vmatpush.bf16.msra.mxu0 %v10404
    %11748 = vmatpush.bf16.msra.mxu0 %v10400
    %11749 = vmatpush.bf16.msra.mxu0 %v10396
    %11750 = vmatpush.bf16.msra.mxu0 %v10392
    %11751 = vmatpush.bf16.msra.mxu0 %v10388
    %11752 = vmatpush.bf16.msra.mxu0 %v10384
    %11753 = vmatpush.bf16.msra.mxu0 %v10380
    %11754 = vmatmul.bf16.gmra.mxu0 %v8584
    %v11755 = vpop.f32.mrf.mxu0
    %v11756 = vadd.f32 %v11743, %v11755
    %v11757 = vpop.f32.mrf.mxu0
    %11758 = vdwg.mxu0
    %11759 = vmatpush.bf16.msra.mxu0 %v10440
    %11760 = vmatpush.bf16.msra.mxu0 %v10436
    %11761 = vmatpush.bf16.msra.mxu0 %v10432
    %11762 = vmatpush.bf16.msra.mxu0 %v10428
    %11763 = vmatpush.bf16.msra.mxu0 %v10424
    %11764 = vmatpush.bf16.msra.mxu0 %v10420
    %11765 = vmatpush.bf16.msra.mxu0 %v10416
    %11766 = vmatpush.bf16.msra.mxu0 %v10412
    %11767 = vmatmul.bf16.gmra.mxu0 %v8585
    %v11768 = vpop.f32.mrf.mxu0
    %v11769 = vadd.f32 %v11756, %v11768
    %v11770 = vpop.f32.mrf.mxu0
    %11771 = vdwg.mxu0
    %11772 = vmatpush.bf16.msra.mxu0 %v10472
    %11773 = vmatpush.bf16.msra.mxu0 %v10468
    %11774 = vmatpush.bf16.msra.mxu0 %v10464
    %11775 = vmatpush.bf16.msra.mxu0 %v10460
    %11776 = vmatpush.bf16.msra.mxu0 %v10456
    %11777 = vmatpush.bf16.msra.mxu0 %v10452
    %11778 = vmatpush.bf16.msra.mxu0 %v10448
    %11779 = vmatpush.bf16.msra.mxu0 %v10444
    %11780 = vmatmul.bf16.gmra.mxu0 %v8586
    %v11781 = vpop.f32.mrf.mxu0
    %v11782 = vadd.f32 %v11769, %v11781
    %v11783 = vpop.f32.mrf.mxu0
    %11784 = vdwg.mxu0
    %11785 = vmatpush.bf16.msra.mxu0 %v10504
    %11786 = vmatpush.bf16.msra.mxu0 %v10500
    %11787 = vmatpush.bf16.msra.mxu0 %v10496
    %11788 = vmatpush.bf16.msra.mxu0 %v10492
    %11789 = vmatpush.bf16.msra.mxu0 %v10488
    %11790 = vmatpush.bf16.msra.mxu0 %v10484
    %11791 = vmatpush.bf16.msra.mxu0 %v10480
    %11792 = vmatpush.bf16.msra.mxu0 %v10476
    %11793 = vmatmul.bf16.gmra.mxu0 %v8587
    %v11794 = vpop.f32.mrf.mxu0
    %v11795 = vadd.f32 %v11782, %v11794
    %v11796 = vpop.f32.mrf.mxu0
    %11797 = vdwg.mxu0
    %11798 = vmatpush.bf16.msra.mxu0 %v10536
    %11799 = vmatpush.bf16.msra.mxu0 %v10532
    %11800 = vmatpush.bf16.msra.mxu0 %v10528
    %11801 = vmatpush.bf16.msra.mxu0 %v10524
    %11802 = vmatpush.bf16.msra.mxu0 %v10520
    %11803 = vmatpush.bf16.msra.mxu0 %v10516
    %11804 = vmatpush.bf16.msra.mxu0 %v10512
    %11805 = vmatpush.bf16.msra.mxu0 %v10508
    %11806 = vmatmul.bf16.gmra.mxu0 %v8588
    %v11807 = vpop.f32.mrf.mxu0
    %v11808 = vadd.f32 %v11795, %v11807
    %v11809 = vpop.f32.mrf.mxu0
    %11810 = vdwg.mxu0
    %11811 = vmatpush.bf16.msra.mxu0 %v10568
    %11812 = vmatpush.bf16.msra.mxu0 %v10564
    %11813 = vmatpush.bf16.msra.mxu0 %v10560
    %11814 = vmatpush.bf16.msra.mxu0 %v10556
    %11815 = vmatpush.bf16.msra.mxu0 %v10552
    %11816 = vmatpush.bf16.msra.mxu0 %v10548
    %11817 = vmatpush.bf16.msra.mxu0 %v10544
    %11818 = vmatpush.bf16.msra.mxu0 %v10540
    %11819 = vmatmul.bf16.gmra.mxu0 %v8589
    %v11820 = vpop.f32.mrf.mxu0
    %v11821 = vadd.f32 %v11808, %v11820
    %v11822 = vpop.f32.mrf.mxu0
    %11823 = vdwg.mxu0
    %11824 = vmatpush.bf16.msra.mxu0 %v10600
    %11825 = vmatpush.bf16.msra.mxu0 %v10596
    %11826 = vmatpush.bf16.msra.mxu0 %v10592
    %11827 = vmatpush.bf16.msra.mxu0 %v10588
    %11828 = vmatpush.bf16.msra.mxu0 %v10584
    %11829 = vmatpush.bf16.msra.mxu0 %v10580
    %11830 = vmatpush.bf16.msra.mxu0 %v10576
    %11831 = vmatpush.bf16.msra.mxu0 %v10572
    %11832 = vmatmul.bf16.gmra.mxu0 %v8590
    %v11833 = vpop.f32.mrf.mxu0
    %v11834 = vadd.f32 %v11821, %v11833
    %v11835 = vpop.f32.mrf.mxu0
    %11836 = vdwg.mxu0
    %11837 = vmatpush.bf16.msra.mxu0 %v10632
    %11838 = vmatpush.bf16.msra.mxu0 %v10628
    %11839 = vmatpush.bf16.msra.mxu0 %v10624
    %11840 = vmatpush.bf16.msra.mxu0 %v10620
    %11841 = vmatpush.bf16.msra.mxu0 %v10616
    %11842 = vmatpush.bf16.msra.mxu0 %v10612
    %11843 = vmatpush.bf16.msra.mxu0 %v10608
    %11844 = vmatpush.bf16.msra.mxu0 %v10604
    %11845 = vmatmul.bf16.gmra.mxu0 %v8591
    %v11846 = vpop.f32.mrf.mxu0
    %v11847 = vadd.f32 %v11834, %v11846
    %v11848 = vpop.f32.mrf.mxu0
    %11849 = vdwg.mxu0
    %11850 = vmatpush.bf16.msra.mxu0 %v10664
    %11851 = vmatpush.bf16.msra.mxu0 %v10660
    %11852 = vmatpush.bf16.msra.mxu0 %v10656
    %11853 = vmatpush.bf16.msra.mxu0 %v10652
    %11854 = vmatpush.bf16.msra.mxu0 %v10648
    %11855 = vmatpush.bf16.msra.mxu0 %v10644
    %11856 = vmatpush.bf16.msra.mxu0 %v10640
    %11857 = vmatpush.bf16.msra.mxu0 %v10636
    %11858 = vmatmul.bf16.gmra.mxu0 %v8592
    %v11859 = vpop.f32.mrf.mxu0
    %v11860 = vadd.f32 %v11847, %v11859
    %v11861 = vpop.f32.mrf.mxu0
    %11862 = vdwg.mxu0
    %11863 = vmatpush.bf16.msra.mxu0 %v10696
    %11864 = vmatpush.bf16.msra.mxu0 %v10692
    %11865 = vmatpush.bf16.msra.mxu0 %v10688
    %11866 = vmatpush.bf16.msra.mxu0 %v10684
    %11867 = vmatpush.bf16.msra.mxu0 %v10680
    %11868 = vmatpush.bf16.msra.mxu0 %v10676
    %11869 = vmatpush.bf16.msra.mxu0 %v10672
    %11870 = vmatpush.bf16.msra.mxu0 %v10668
    %11871 = vmatmul.bf16.gmra.mxu0 %v8593
    %v11872 = vpop.f32.mrf.mxu0
    %v11873 = vadd.f32 %v11860, %v11872
    %v11874 = vpop.f32.mrf.mxu0
    %11875 = vdwg.mxu0
    %11876 = vmatpush.bf16.msra.mxu0 %v10728
    %11877 = vmatpush.bf16.msra.mxu0 %v10724
    %11878 = vmatpush.bf16.msra.mxu0 %v10720
    %11879 = vmatpush.bf16.msra.mxu0 %v10716
    %11880 = vmatpush.bf16.msra.mxu0 %v10712
    %11881 = vmatpush.bf16.msra.mxu0 %v10708
    %11882 = vmatpush.bf16.msra.mxu0 %v10704
    %11883 = vmatpush.bf16.msra.mxu0 %v10700
    %11884 = vmatmul.bf16.gmra.mxu0 %v8594
    %v11885 = vpop.f32.mrf.mxu0
    %v11886 = vadd.f32 %v11873, %v11885
    %v11887 = vpop.f32.mrf.mxu0
    %11888 = vdwg.mxu0
    %11889 = vmatpush.bf16.msra.mxu0 %v10760
    %11890 = vmatpush.bf16.msra.mxu0 %v10756
    %11891 = vmatpush.bf16.msra.mxu0 %v10752
    %11892 = vmatpush.bf16.msra.mxu0 %v10748
    %11893 = vmatpush.bf16.msra.mxu0 %v10744
    %11894 = vmatpush.bf16.msra.mxu0 %v10740
    %11895 = vmatpush.bf16.msra.mxu0 %v10736
    %11896 = vmatpush.bf16.msra.mxu0 %v10732
    %11897 = vmatmul.bf16.gmra.mxu0 %v8595
    %v11898 = vpop.f32.mrf.mxu0
    %v11899 = vadd.f32 %v11886, %v11898
    %v11900 = vpop.f32.mrf.mxu0
    %11901 = vdwg.mxu0
    %11902 = vmatpush.bf16.msra.mxu0 %v10792
    %11903 = vmatpush.bf16.msra.mxu0 %v10788
    %11904 = vmatpush.bf16.msra.mxu0 %v10784
    %11905 = vmatpush.bf16.msra.mxu0 %v10780
    %11906 = vmatpush.bf16.msra.mxu0 %v10776
    %11907 = vmatpush.bf16.msra.mxu0 %v10772
    %11908 = vmatpush.bf16.msra.mxu0 %v10768
    %11909 = vmatpush.bf16.msra.mxu0 %v10764
    %11910 = vmatmul.bf16.gmra.mxu0 %v8596
    %v11911 = vpop.f32.mrf.mxu0
    %v11912 = vadd.f32 %v11899, %v11911
    %v11913 = vpop.f32.mrf.mxu0
    %11914 = vdwg.mxu0
    %11915 = vmatpush.bf16.msra.mxu0 %v10824
    %11916 = vmatpush.bf16.msra.mxu0 %v10820
    %11917 = vmatpush.bf16.msra.mxu0 %v10816
    %11918 = vmatpush.bf16.msra.mxu0 %v10812
    %11919 = vmatpush.bf16.msra.mxu0 %v10808
    %11920 = vmatpush.bf16.msra.mxu0 %v10804
    %11921 = vmatpush.bf16.msra.mxu0 %v10800
    %11922 = vmatpush.bf16.msra.mxu0 %v10796
    %11923 = vmatmul.bf16.gmra.mxu0 %v8597
    %v11924 = vpop.f32.mrf.mxu0
    %v11925 = vadd.f32 %v11912, %v11924
    %v11926 = vpop.f32.mrf.mxu0
    %11927 = vdwg.mxu0
    %11928 = vmatpush.bf16.msra.mxu0 %v10856
    %11929 = vmatpush.bf16.msra.mxu0 %v10852
    %11930 = vmatpush.bf16.msra.mxu0 %v10848
    %11931 = vmatpush.bf16.msra.mxu0 %v10844
    %11932 = vmatpush.bf16.msra.mxu0 %v10840
    %11933 = vmatpush.bf16.msra.mxu0 %v10836
    %11934 = vmatpush.bf16.msra.mxu0 %v10832
    %11935 = vmatpush.bf16.msra.mxu0 %v10828
    %11936 = vmatmul.bf16.gmra.mxu0 %v8598
    %v11937 = vpop.f32.mrf.mxu0
    %v11938 = vadd.f32 %v11925, %v11937
    %v11939 = vpop.f32.mrf.mxu0
    %11940 = vdwg.mxu0
    %11941 = vmatpush.bf16.msra.mxu0 %v10888
    %11942 = vmatpush.bf16.msra.mxu0 %v10884
    %11943 = vmatpush.bf16.msra.mxu0 %v10880
    %11944 = vmatpush.bf16.msra.mxu0 %v10876
    %11945 = vmatpush.bf16.msra.mxu0 %v10872
    %11946 = vmatpush.bf16.msra.mxu0 %v10868
    %11947 = vmatpush.bf16.msra.mxu0 %v10864
    %11948 = vmatpush.bf16.msra.mxu0 %v10860
    %11949 = vmatmul.bf16.gmra.mxu0 %v8599
    %v11950 = vpop.f32.mrf.mxu0
    %v11951 = vadd.f32 %v11938, %v11950
    %v11952 = vpop.f32.mrf.mxu0
    %11953 = vdwg.mxu0
    %11954 = vmatpush.bf16.msra.mxu0 %v10920
    %11955 = vmatpush.bf16.msra.mxu0 %v10916
    %11956 = vmatpush.bf16.msra.mxu0 %v10912
    %11957 = vmatpush.bf16.msra.mxu0 %v10908
    %11958 = vmatpush.bf16.msra.mxu0 %v10904
    %11959 = vmatpush.bf16.msra.mxu0 %v10900
    %11960 = vmatpush.bf16.msra.mxu0 %v10896
    %11961 = vmatpush.bf16.msra.mxu0 %v10892
    %11962 = vmatmul.bf16.gmra.mxu0 %v8600
    %v11963 = vpop.f32.mrf.mxu0
    %v11964 = vadd.f32 %v11951, %v11963
    %v11965 = vpop.f32.mrf.mxu0
    %11966 = vdwg.mxu0
    %11967 = vmatpush.bf16.msra.mxu0 %v10377
    %11968 = vmatpush.bf16.msra.mxu0 %v10373
    %11969 = vmatpush.bf16.msra.mxu0 %v10369
    %11970 = vmatpush.bf16.msra.mxu0 %v10365
    %11971 = vmatpush.bf16.msra.mxu0 %v10361
    %11972 = vmatpush.bf16.msra.mxu0 %v10357
    %11973 = vmatpush.bf16.msra.mxu0 %v10353
    %11974 = vmatpush.bf16.msra.mxu0 %v10349
    %11975 = vmatmul.bf16.gmra.mxu0 %v8583
    %v11976 = vpop.f32.mrf.mxu0
    %v11977 = vadd.f32 %v8550, %v11976
    %v11978 = vpop.f32.mrf.mxu0
    %11979 = vdwg.mxu0
    %11980 = vmatpush.bf16.msra.mxu0 %v10409
    %11981 = vmatpush.bf16.msra.mxu0 %v10405
    %11982 = vmatpush.bf16.msra.mxu0 %v10401
    %11983 = vmatpush.bf16.msra.mxu0 %v10397
    %11984 = vmatpush.bf16.msra.mxu0 %v10393
    %11985 = vmatpush.bf16.msra.mxu0 %v10389
    %11986 = vmatpush.bf16.msra.mxu0 %v10385
    %11987 = vmatpush.bf16.msra.mxu0 %v10381
    %11988 = vmatmul.bf16.gmra.mxu0 %v8584
    %v11989 = vpop.f32.mrf.mxu0
    %v11990 = vadd.f32 %v11977, %v11989
    %v11991 = vpop.f32.mrf.mxu0
    %11992 = vdwg.mxu0
    %11993 = vmatpush.bf16.msra.mxu0 %v10441
    %11994 = vmatpush.bf16.msra.mxu0 %v10437
    %11995 = vmatpush.bf16.msra.mxu0 %v10433
    %11996 = vmatpush.bf16.msra.mxu0 %v10429
    %11997 = vmatpush.bf16.msra.mxu0 %v10425
    %11998 = vmatpush.bf16.msra.mxu0 %v10421
    %11999 = vmatpush.bf16.msra.mxu0 %v10417
    %12000 = vmatpush.bf16.msra.mxu0 %v10413
    %12001 = vmatmul.bf16.gmra.mxu0 %v8585
    %v12002 = vpop.f32.mrf.mxu0
    %v12003 = vadd.f32 %v11990, %v12002
    %v12004 = vpop.f32.mrf.mxu0
    %12005 = vdwg.mxu0
    %12006 = vmatpush.bf16.msra.mxu0 %v10473
    %12007 = vmatpush.bf16.msra.mxu0 %v10469
    %12008 = vmatpush.bf16.msra.mxu0 %v10465
    %12009 = vmatpush.bf16.msra.mxu0 %v10461
    %12010 = vmatpush.bf16.msra.mxu0 %v10457
    %12011 = vmatpush.bf16.msra.mxu0 %v10453
    %12012 = vmatpush.bf16.msra.mxu0 %v10449
    %12013 = vmatpush.bf16.msra.mxu0 %v10445
    %12014 = vmatmul.bf16.gmra.mxu0 %v8586
    %v12015 = vpop.f32.mrf.mxu0
    %v12016 = vadd.f32 %v12003, %v12015
    %v12017 = vpop.f32.mrf.mxu0
    %12018 = vdwg.mxu0
    %12019 = vmatpush.bf16.msra.mxu0 %v10505
    %12020 = vmatpush.bf16.msra.mxu0 %v10501
    %12021 = vmatpush.bf16.msra.mxu0 %v10497
    %12022 = vmatpush.bf16.msra.mxu0 %v10493
    %12023 = vmatpush.bf16.msra.mxu0 %v10489
    %12024 = vmatpush.bf16.msra.mxu0 %v10485
    %12025 = vmatpush.bf16.msra.mxu0 %v10481
    %12026 = vmatpush.bf16.msra.mxu0 %v10477
    %12027 = vmatmul.bf16.gmra.mxu0 %v8587
    %v12028 = vpop.f32.mrf.mxu0
    %v12029 = vadd.f32 %v12016, %v12028
    %v12030 = vpop.f32.mrf.mxu0
    %12031 = vdwg.mxu0
    %12032 = vmatpush.bf16.msra.mxu0 %v10537
    %12033 = vmatpush.bf16.msra.mxu0 %v10533
    %12034 = vmatpush.bf16.msra.mxu0 %v10529
    %12035 = vmatpush.bf16.msra.mxu0 %v10525
    %12036 = vmatpush.bf16.msra.mxu0 %v10521
    %12037 = vmatpush.bf16.msra.mxu0 %v10517
    %12038 = vmatpush.bf16.msra.mxu0 %v10513
    %12039 = vmatpush.bf16.msra.mxu0 %v10509
    %12040 = vmatmul.bf16.gmra.mxu0 %v8588
    %v12041 = vpop.f32.mrf.mxu0
    %v12042 = vadd.f32 %v12029, %v12041
    %v12043 = vpop.f32.mrf.mxu0
    %12044 = vdwg.mxu0
    %12045 = vmatpush.bf16.msra.mxu0 %v10569
    %12046 = vmatpush.bf16.msra.mxu0 %v10565
    %12047 = vmatpush.bf16.msra.mxu0 %v10561
    %12048 = vmatpush.bf16.msra.mxu0 %v10557
    %12049 = vmatpush.bf16.msra.mxu0 %v10553
    %12050 = vmatpush.bf16.msra.mxu0 %v10549
    %12051 = vmatpush.bf16.msra.mxu0 %v10545
    %12052 = vmatpush.bf16.msra.mxu0 %v10541
    %12053 = vmatmul.bf16.gmra.mxu0 %v8589
    %v12054 = vpop.f32.mrf.mxu0
    %v12055 = vadd.f32 %v12042, %v12054
    %v12056 = vpop.f32.mrf.mxu0
    %12057 = vdwg.mxu0
    %12058 = vmatpush.bf16.msra.mxu0 %v10601
    %12059 = vmatpush.bf16.msra.mxu0 %v10597
    %12060 = vmatpush.bf16.msra.mxu0 %v10593
    %12061 = vmatpush.bf16.msra.mxu0 %v10589
    %12062 = vmatpush.bf16.msra.mxu0 %v10585
    %12063 = vmatpush.bf16.msra.mxu0 %v10581
    %12064 = vmatpush.bf16.msra.mxu0 %v10577
    %12065 = vmatpush.bf16.msra.mxu0 %v10573
    %12066 = vmatmul.bf16.gmra.mxu0 %v8590
    %v12067 = vpop.f32.mrf.mxu0
    %v12068 = vadd.f32 %v12055, %v12067
    %v12069 = vpop.f32.mrf.mxu0
    %12070 = vdwg.mxu0
    %12071 = vmatpush.bf16.msra.mxu0 %v10633
    %12072 = vmatpush.bf16.msra.mxu0 %v10629
    %12073 = vmatpush.bf16.msra.mxu0 %v10625
    %12074 = vmatpush.bf16.msra.mxu0 %v10621
    %12075 = vmatpush.bf16.msra.mxu0 %v10617
    %12076 = vmatpush.bf16.msra.mxu0 %v10613
    %12077 = vmatpush.bf16.msra.mxu0 %v10609
    %12078 = vmatpush.bf16.msra.mxu0 %v10605
    %12079 = vmatmul.bf16.gmra.mxu0 %v8591
    %v12080 = vpop.f32.mrf.mxu0
    %v12081 = vadd.f32 %v12068, %v12080
    %v12082 = vpop.f32.mrf.mxu0
    %12083 = vdwg.mxu0
    %12084 = vmatpush.bf16.msra.mxu0 %v10665
    %12085 = vmatpush.bf16.msra.mxu0 %v10661
    %12086 = vmatpush.bf16.msra.mxu0 %v10657
    %12087 = vmatpush.bf16.msra.mxu0 %v10653
    %12088 = vmatpush.bf16.msra.mxu0 %v10649
    %12089 = vmatpush.bf16.msra.mxu0 %v10645
    %12090 = vmatpush.bf16.msra.mxu0 %v10641
    %12091 = vmatpush.bf16.msra.mxu0 %v10637
    %12092 = vmatmul.bf16.gmra.mxu0 %v8592
    %v12093 = vpop.f32.mrf.mxu0
    %v12094 = vadd.f32 %v12081, %v12093
    %v12095 = vpop.f32.mrf.mxu0
    %12096 = vdwg.mxu0
    %12097 = vmatpush.bf16.msra.mxu0 %v10697
    %12098 = vmatpush.bf16.msra.mxu0 %v10693
    %12099 = vmatpush.bf16.msra.mxu0 %v10689
    %12100 = vmatpush.bf16.msra.mxu0 %v10685
    %12101 = vmatpush.bf16.msra.mxu0 %v10681
    %12102 = vmatpush.bf16.msra.mxu0 %v10677
    %12103 = vmatpush.bf16.msra.mxu0 %v10673
    %12104 = vmatpush.bf16.msra.mxu0 %v10669
    %12105 = vmatmul.bf16.gmra.mxu0 %v8593
    %v12106 = vpop.f32.mrf.mxu0
    %v12107 = vadd.f32 %v12094, %v12106
    %v12108 = vpop.f32.mrf.mxu0
    %12109 = vdwg.mxu0
    %12110 = vmatpush.bf16.msra.mxu0 %v10729
    %12111 = vmatpush.bf16.msra.mxu0 %v10725
    %12112 = vmatpush.bf16.msra.mxu0 %v10721
    %12113 = vmatpush.bf16.msra.mxu0 %v10717
    %12114 = vmatpush.bf16.msra.mxu0 %v10713
    %12115 = vmatpush.bf16.msra.mxu0 %v10709
    %12116 = vmatpush.bf16.msra.mxu0 %v10705
    %12117 = vmatpush.bf16.msra.mxu0 %v10701
    %12118 = vmatmul.bf16.gmra.mxu0 %v8594
    %v12119 = vpop.f32.mrf.mxu0
    %v12120 = vadd.f32 %v12107, %v12119
    %v12121 = vpop.f32.mrf.mxu0
    %12122 = vdwg.mxu0
    %12123 = vmatpush.bf16.msra.mxu0 %v10761
    %12124 = vmatpush.bf16.msra.mxu0 %v10757
    %12125 = vmatpush.bf16.msra.mxu0 %v10753
    %12126 = vmatpush.bf16.msra.mxu0 %v10749
    %12127 = vmatpush.bf16.msra.mxu0 %v10745
    %12128 = vmatpush.bf16.msra.mxu0 %v10741
    %12129 = vmatpush.bf16.msra.mxu0 %v10737
    %12130 = vmatpush.bf16.msra.mxu0 %v10733
    %12131 = vmatmul.bf16.gmra.mxu0 %v8595
    %v12132 = vpop.f32.mrf.mxu0
    %v12133 = vadd.f32 %v12120, %v12132
    %v12134 = vpop.f32.mrf.mxu0
    %12135 = vdwg.mxu0
    %12136 = vmatpush.bf16.msra.mxu0 %v10793
    %12137 = vmatpush.bf16.msra.mxu0 %v10789
    %12138 = vmatpush.bf16.msra.mxu0 %v10785
    %12139 = vmatpush.bf16.msra.mxu0 %v10781
    %12140 = vmatpush.bf16.msra.mxu0 %v10777
    %12141 = vmatpush.bf16.msra.mxu0 %v10773
    %12142 = vmatpush.bf16.msra.mxu0 %v10769
    %12143 = vmatpush.bf16.msra.mxu0 %v10765
    %12144 = vmatmul.bf16.gmra.mxu0 %v8596
    %v12145 = vpop.f32.mrf.mxu0
    %v12146 = vadd.f32 %v12133, %v12145
    %v12147 = vpop.f32.mrf.mxu0
    %12148 = vdwg.mxu0
    %12149 = vmatpush.bf16.msra.mxu0 %v10825
    %12150 = vmatpush.bf16.msra.mxu0 %v10821
    %12151 = vmatpush.bf16.msra.mxu0 %v10817
    %12152 = vmatpush.bf16.msra.mxu0 %v10813
    %12153 = vmatpush.bf16.msra.mxu0 %v10809
    %12154 = vmatpush.bf16.msra.mxu0 %v10805
    %12155 = vmatpush.bf16.msra.mxu0 %v10801
    %12156 = vmatpush.bf16.msra.mxu0 %v10797
    %12157 = vmatmul.bf16.gmra.mxu0 %v8597
    %v12158 = vpop.f32.mrf.mxu0
    %v12159 = vadd.f32 %v12146, %v12158
    %v12160 = vpop.f32.mrf.mxu0
    %12161 = vdwg.mxu0
    %12162 = vmatpush.bf16.msra.mxu0 %v10857
    %12163 = vmatpush.bf16.msra.mxu0 %v10853
    %12164 = vmatpush.bf16.msra.mxu0 %v10849
    %12165 = vmatpush.bf16.msra.mxu0 %v10845
    %12166 = vmatpush.bf16.msra.mxu0 %v10841
    %12167 = vmatpush.bf16.msra.mxu0 %v10837
    %12168 = vmatpush.bf16.msra.mxu0 %v10833
    %12169 = vmatpush.bf16.msra.mxu0 %v10829
    %12170 = vmatmul.bf16.gmra.mxu0 %v8598
    %v12171 = vpop.f32.mrf.mxu0
    %v12172 = vadd.f32 %v12159, %v12171
    %v12173 = vpop.f32.mrf.mxu0
    %12174 = vdwg.mxu0
    %12175 = vmatpush.bf16.msra.mxu0 %v10889
    %12176 = vmatpush.bf16.msra.mxu0 %v10885
    %12177 = vmatpush.bf16.msra.mxu0 %v10881
    %12178 = vmatpush.bf16.msra.mxu0 %v10877
    %12179 = vmatpush.bf16.msra.mxu0 %v10873
    %12180 = vmatpush.bf16.msra.mxu0 %v10869
    %12181 = vmatpush.bf16.msra.mxu0 %v10865
    %12182 = vmatpush.bf16.msra.mxu0 %v10861
    %12183 = vmatmul.bf16.gmra.mxu0 %v8599
    %v12184 = vpop.f32.mrf.mxu0
    %v12185 = vadd.f32 %v12172, %v12184
    %v12186 = vpop.f32.mrf.mxu0
    %12187 = vdwg.mxu0
    %12188 = vmatpush.bf16.msra.mxu0 %v10921
    %12189 = vmatpush.bf16.msra.mxu0 %v10917
    %12190 = vmatpush.bf16.msra.mxu0 %v10913
    %12191 = vmatpush.bf16.msra.mxu0 %v10909
    %12192 = vmatpush.bf16.msra.mxu0 %v10905
    %12193 = vmatpush.bf16.msra.mxu0 %v10901
    %12194 = vmatpush.bf16.msra.mxu0 %v10897
    %12195 = vmatpush.bf16.msra.mxu0 %v10893
    %12196 = vmatmul.bf16.gmra.mxu0 %v8600
    %v12197 = vpop.f32.mrf.mxu0
    %v12198 = vadd.f32 %v12185, %v12197
    %v12199 = vpop.f32.mrf.mxu0
    %12200 = vdwg.mxu0
    %12201 = vmatpush.bf16.msra.mxu0 %v10378
    %12202 = vmatpush.bf16.msra.mxu0 %v10374
    %12203 = vmatpush.bf16.msra.mxu0 %v10370
    %12204 = vmatpush.bf16.msra.mxu0 %v10366
    %12205 = vmatpush.bf16.msra.mxu0 %v10362
    %12206 = vmatpush.bf16.msra.mxu0 %v10358
    %12207 = vmatpush.bf16.msra.mxu0 %v10354
    %12208 = vmatpush.bf16.msra.mxu0 %v10350
    %12209 = vmatmul.bf16.gmra.mxu0 %v8583
    %v12210 = vpop.f32.mrf.mxu0
    %v12211 = vadd.f32 %v8551, %v12210
    %v12212 = vpop.f32.mrf.mxu0
    %12213 = vdwg.mxu0
    %12214 = vmatpush.bf16.msra.mxu0 %v10410
    %12215 = vmatpush.bf16.msra.mxu0 %v10406
    %12216 = vmatpush.bf16.msra.mxu0 %v10402
    %12217 = vmatpush.bf16.msra.mxu0 %v10398
    %12218 = vmatpush.bf16.msra.mxu0 %v10394
    %12219 = vmatpush.bf16.msra.mxu0 %v10390
    %12220 = vmatpush.bf16.msra.mxu0 %v10386
    %12221 = vmatpush.bf16.msra.mxu0 %v10382
    %12222 = vmatmul.bf16.gmra.mxu0 %v8584
    %v12223 = vpop.f32.mrf.mxu0
    %v12224 = vadd.f32 %v12211, %v12223
    %v12225 = vpop.f32.mrf.mxu0
    %12226 = vdwg.mxu0
    %12227 = vmatpush.bf16.msra.mxu0 %v10442
    %12228 = vmatpush.bf16.msra.mxu0 %v10438
    %12229 = vmatpush.bf16.msra.mxu0 %v10434
    %12230 = vmatpush.bf16.msra.mxu0 %v10430
    %12231 = vmatpush.bf16.msra.mxu0 %v10426
    %12232 = vmatpush.bf16.msra.mxu0 %v10422
    %12233 = vmatpush.bf16.msra.mxu0 %v10418
    %12234 = vmatpush.bf16.msra.mxu0 %v10414
    %12235 = vmatmul.bf16.gmra.mxu0 %v8585
    %v12236 = vpop.f32.mrf.mxu0
    %v12237 = vadd.f32 %v12224, %v12236
    %v12238 = vpop.f32.mrf.mxu0
    %12239 = vdwg.mxu0
    %12240 = vmatpush.bf16.msra.mxu0 %v10474
    %12241 = vmatpush.bf16.msra.mxu0 %v10470
    %12242 = vmatpush.bf16.msra.mxu0 %v10466
    %12243 = vmatpush.bf16.msra.mxu0 %v10462
    %12244 = vmatpush.bf16.msra.mxu0 %v10458
    %12245 = vmatpush.bf16.msra.mxu0 %v10454
    %12246 = vmatpush.bf16.msra.mxu0 %v10450
    %12247 = vmatpush.bf16.msra.mxu0 %v10446
    %12248 = vmatmul.bf16.gmra.mxu0 %v8586
    %v12249 = vpop.f32.mrf.mxu0
    %v12250 = vadd.f32 %v12237, %v12249
    %v12251 = vpop.f32.mrf.mxu0
    %12252 = vdwg.mxu0
    %12253 = vmatpush.bf16.msra.mxu0 %v10506
    %12254 = vmatpush.bf16.msra.mxu0 %v10502
    %12255 = vmatpush.bf16.msra.mxu0 %v10498
    %12256 = vmatpush.bf16.msra.mxu0 %v10494
    %12257 = vmatpush.bf16.msra.mxu0 %v10490
    %12258 = vmatpush.bf16.msra.mxu0 %v10486
    %12259 = vmatpush.bf16.msra.mxu0 %v10482
    %12260 = vmatpush.bf16.msra.mxu0 %v10478
    %12261 = vmatmul.bf16.gmra.mxu0 %v8587
    %v12262 = vpop.f32.mrf.mxu0
    %v12263 = vadd.f32 %v12250, %v12262
    %v12264 = vpop.f32.mrf.mxu0
    %12265 = vdwg.mxu0
    %12266 = vmatpush.bf16.msra.mxu0 %v10538
    %12267 = vmatpush.bf16.msra.mxu0 %v10534
    %12268 = vmatpush.bf16.msra.mxu0 %v10530
    %12269 = vmatpush.bf16.msra.mxu0 %v10526
    %12270 = vmatpush.bf16.msra.mxu0 %v10522
    %12271 = vmatpush.bf16.msra.mxu0 %v10518
    %12272 = vmatpush.bf16.msra.mxu0 %v10514
    %12273 = vmatpush.bf16.msra.mxu0 %v10510
    %12274 = vmatmul.bf16.gmra.mxu0 %v8588
    %v12275 = vpop.f32.mrf.mxu0
    %v12276 = vadd.f32 %v12263, %v12275
    %v12277 = vpop.f32.mrf.mxu0
    %12278 = vdwg.mxu0
    %12279 = vmatpush.bf16.msra.mxu0 %v10570
    %12280 = vmatpush.bf16.msra.mxu0 %v10566
    %12281 = vmatpush.bf16.msra.mxu0 %v10562
    %12282 = vmatpush.bf16.msra.mxu0 %v10558
    %12283 = vmatpush.bf16.msra.mxu0 %v10554
    %12284 = vmatpush.bf16.msra.mxu0 %v10550
    %12285 = vmatpush.bf16.msra.mxu0 %v10546
    %12286 = vmatpush.bf16.msra.mxu0 %v10542
    %12287 = vmatmul.bf16.gmra.mxu0 %v8589
    %v12288 = vpop.f32.mrf.mxu0
    %v12289 = vadd.f32 %v12276, %v12288
    %v12290 = vpop.f32.mrf.mxu0
    %12291 = vdwg.mxu0
    %12292 = vmatpush.bf16.msra.mxu0 %v10602
    %12293 = vmatpush.bf16.msra.mxu0 %v10598
    %12294 = vmatpush.bf16.msra.mxu0 %v10594
    %12295 = vmatpush.bf16.msra.mxu0 %v10590
    %12296 = vmatpush.bf16.msra.mxu0 %v10586
    %12297 = vmatpush.bf16.msra.mxu0 %v10582
    %12298 = vmatpush.bf16.msra.mxu0 %v10578
    %12299 = vmatpush.bf16.msra.mxu0 %v10574
    %12300 = vmatmul.bf16.gmra.mxu0 %v8590
    %v12301 = vpop.f32.mrf.mxu0
    %v12302 = vadd.f32 %v12289, %v12301
    %v12303 = vpop.f32.mrf.mxu0
    %12304 = vdwg.mxu0
    %12305 = vmatpush.bf16.msra.mxu0 %v10634
    %12306 = vmatpush.bf16.msra.mxu0 %v10630
    %12307 = vmatpush.bf16.msra.mxu0 %v10626
    %12308 = vmatpush.bf16.msra.mxu0 %v10622
    %12309 = vmatpush.bf16.msra.mxu0 %v10618
    %12310 = vmatpush.bf16.msra.mxu0 %v10614
    %12311 = vmatpush.bf16.msra.mxu0 %v10610
    %12312 = vmatpush.bf16.msra.mxu0 %v10606
    %12313 = vmatmul.bf16.gmra.mxu0 %v8591
    %v12314 = vpop.f32.mrf.mxu0
    %v12315 = vadd.f32 %v12302, %v12314
    %v12316 = vpop.f32.mrf.mxu0
    %12317 = vdwg.mxu0
    %12318 = vmatpush.bf16.msra.mxu0 %v10666
    %12319 = vmatpush.bf16.msra.mxu0 %v10662
    %12320 = vmatpush.bf16.msra.mxu0 %v10658
    %12321 = vmatpush.bf16.msra.mxu0 %v10654
    %12322 = vmatpush.bf16.msra.mxu0 %v10650
    %12323 = vmatpush.bf16.msra.mxu0 %v10646
    %12324 = vmatpush.bf16.msra.mxu0 %v10642
    %12325 = vmatpush.bf16.msra.mxu0 %v10638
    %12326 = vmatmul.bf16.gmra.mxu0 %v8592
    %v12327 = vpop.f32.mrf.mxu0
    %v12328 = vadd.f32 %v12315, %v12327
    %v12329 = vpop.f32.mrf.mxu0
    %12330 = vdwg.mxu0
    %12331 = vmatpush.bf16.msra.mxu0 %v10698
    %12332 = vmatpush.bf16.msra.mxu0 %v10694
    %12333 = vmatpush.bf16.msra.mxu0 %v10690
    %12334 = vmatpush.bf16.msra.mxu0 %v10686
    %12335 = vmatpush.bf16.msra.mxu0 %v10682
    %12336 = vmatpush.bf16.msra.mxu0 %v10678
    %12337 = vmatpush.bf16.msra.mxu0 %v10674
    %12338 = vmatpush.bf16.msra.mxu0 %v10670
    %12339 = vmatmul.bf16.gmra.mxu0 %v8593
    %v12340 = vpop.f32.mrf.mxu0
    %v12341 = vadd.f32 %v12328, %v12340
    %v12342 = vpop.f32.mrf.mxu0
    %12343 = vdwg.mxu0
    %12344 = vmatpush.bf16.msra.mxu0 %v10730
    %12345 = vmatpush.bf16.msra.mxu0 %v10726
    %12346 = vmatpush.bf16.msra.mxu0 %v10722
    %12347 = vmatpush.bf16.msra.mxu0 %v10718
    %12348 = vmatpush.bf16.msra.mxu0 %v10714
    %12349 = vmatpush.bf16.msra.mxu0 %v10710
    %12350 = vmatpush.bf16.msra.mxu0 %v10706
    %12351 = vmatpush.bf16.msra.mxu0 %v10702
    %12352 = vmatmul.bf16.gmra.mxu0 %v8594
    %v12353 = vpop.f32.mrf.mxu0
    %v12354 = vadd.f32 %v12341, %v12353
    %v12355 = vpop.f32.mrf.mxu0
    %12356 = vdwg.mxu0
    %12357 = vmatpush.bf16.msra.mxu0 %v10762
    %12358 = vmatpush.bf16.msra.mxu0 %v10758
    %12359 = vmatpush.bf16.msra.mxu0 %v10754
    %12360 = vmatpush.bf16.msra.mxu0 %v10750
    %12361 = vmatpush.bf16.msra.mxu0 %v10746
    %12362 = vmatpush.bf16.msra.mxu0 %v10742
    %12363 = vmatpush.bf16.msra.mxu0 %v10738
    %12364 = vmatpush.bf16.msra.mxu0 %v10734
    %12365 = vmatmul.bf16.gmra.mxu0 %v8595
    %v12366 = vpop.f32.mrf.mxu0
    %v12367 = vadd.f32 %v12354, %v12366
    %v12368 = vpop.f32.mrf.mxu0
    %12369 = vdwg.mxu0
    %12370 = vmatpush.bf16.msra.mxu0 %v10794
    %12371 = vmatpush.bf16.msra.mxu0 %v10790
    %12372 = vmatpush.bf16.msra.mxu0 %v10786
    %12373 = vmatpush.bf16.msra.mxu0 %v10782
    %12374 = vmatpush.bf16.msra.mxu0 %v10778
    %12375 = vmatpush.bf16.msra.mxu0 %v10774
    %12376 = vmatpush.bf16.msra.mxu0 %v10770
    %12377 = vmatpush.bf16.msra.mxu0 %v10766
    %12378 = vmatmul.bf16.gmra.mxu0 %v8596
    %v12379 = vpop.f32.mrf.mxu0
    %v12380 = vadd.f32 %v12367, %v12379
    %v12381 = vpop.f32.mrf.mxu0
    %12382 = vdwg.mxu0
    %12383 = vmatpush.bf16.msra.mxu0 %v10826
    %12384 = vmatpush.bf16.msra.mxu0 %v10822
    %12385 = vmatpush.bf16.msra.mxu0 %v10818
    %12386 = vmatpush.bf16.msra.mxu0 %v10814
    %12387 = vmatpush.bf16.msra.mxu0 %v10810
    %12388 = vmatpush.bf16.msra.mxu0 %v10806
    %12389 = vmatpush.bf16.msra.mxu0 %v10802
    %12390 = vmatpush.bf16.msra.mxu0 %v10798
    %12391 = vmatmul.bf16.gmra.mxu0 %v8597
    %v12392 = vpop.f32.mrf.mxu0
    %v12393 = vadd.f32 %v12380, %v12392
    %v12394 = vpop.f32.mrf.mxu0
    %12395 = vdwg.mxu0
    %12396 = vmatpush.bf16.msra.mxu0 %v10858
    %12397 = vmatpush.bf16.msra.mxu0 %v10854
    %12398 = vmatpush.bf16.msra.mxu0 %v10850
    %12399 = vmatpush.bf16.msra.mxu0 %v10846
    %12400 = vmatpush.bf16.msra.mxu0 %v10842
    %12401 = vmatpush.bf16.msra.mxu0 %v10838
    %12402 = vmatpush.bf16.msra.mxu0 %v10834
    %12403 = vmatpush.bf16.msra.mxu0 %v10830
    %12404 = vmatmul.bf16.gmra.mxu0 %v8598
    %v12405 = vpop.f32.mrf.mxu0
    %v12406 = vadd.f32 %v12393, %v12405
    %v12407 = vpop.f32.mrf.mxu0
    %12408 = vdwg.mxu0
    %12409 = vmatpush.bf16.msra.mxu0 %v10890
    %12410 = vmatpush.bf16.msra.mxu0 %v10886
    %12411 = vmatpush.bf16.msra.mxu0 %v10882
    %12412 = vmatpush.bf16.msra.mxu0 %v10878
    %12413 = vmatpush.bf16.msra.mxu0 %v10874
    %12414 = vmatpush.bf16.msra.mxu0 %v10870
    %12415 = vmatpush.bf16.msra.mxu0 %v10866
    %12416 = vmatpush.bf16.msra.mxu0 %v10862
    %12417 = vmatmul.bf16.gmra.mxu0 %v8599
    %v12418 = vpop.f32.mrf.mxu0
    %v12419 = vadd.f32 %v12406, %v12418
    %v12420 = vpop.f32.mrf.mxu0
    %12421 = vdwg.mxu0
    %12422 = vmatpush.bf16.msra.mxu0 %v10922
    %12423 = vmatpush.bf16.msra.mxu0 %v10918
    %12424 = vmatpush.bf16.msra.mxu0 %v10914
    %12425 = vmatpush.bf16.msra.mxu0 %v10910
    %12426 = vmatpush.bf16.msra.mxu0 %v10906
    %12427 = vmatpush.bf16.msra.mxu0 %v10902
    %12428 = vmatpush.bf16.msra.mxu0 %v10898
    %12429 = vmatpush.bf16.msra.mxu0 %v10894
    %12430 = vmatmul.bf16.gmra.mxu0 %v8600
    %v12431 = vpop.f32.mrf.mxu0
    %v12432 = vadd.f32 %v12419, %v12431
    %v12433 = vpop.f32.mrf.mxu0
    %12434 = vdwg.mxu0
    %v12435 = vmax.f32 %v11730, 0.0
    %v12436 = vmax.f32 %v11964, 0.0
    %v12437 = vmax.f32 %v12198, 0.0
    %v12438 = vmax.f32 %v12432, 0.0
    %v12443 = vrot.slane %v12436, 6
    %v12444 = vrot.slane %v12437, 4
    %v12445 = vrot.slane %v12438, 2
    %v12446 = vsel %vm3522, %v12435, %v12443
    %v12447 = vsel %vm6791, %v12444, %v12445
    %vm12448 = vcmask 1043456
    %v12449 = vsel %vm12448, %v12446, %v12447
    %v12450 = vsel %vm4297, %v12435, %v12443
    %v12451 = vsel %vm6794, %v12445, %v12444
    %vm12452 = vcmask 1045506
    %v12453 = vsel %vm12452, %v12450, %v12451
    %v12454 = vrot.slane %v12453, 2
    %v12455 = vsel %vm6791, %v12435, %v12443
    %v12456 = vsel %vm3522, %v12444, %v12445
    %v12457 = vsel %vm12448, %v12456, %v12455
    %v12458 = vrot.slane %v12457, 4
    %v12459 = vsel %vm6794, %v12443, %v12435
    %v12460 = vsel %vm4297, %v12444, %v12445
    %v12461 = vsel %vm12452, %v12460, %v12459
    %v12462 = vrot.slane %v12461, 6
    %12463 = vst [vmem:[#allocation1] ss:$4 sm:$0xff] %v12449
    %v12464 = vld.sshfl [vmem:[#allocation1] sm:$0xff pattern:$0x73625140]
    %v12465 = vld.sshfl [vmem:[#allocation1 + $0x8] sm:$0xff pattern:$0x73625140]
    %v12466 = vld.sshfl [vmem:[#allocation1 + $0x10] sm:$0xff pattern:$0x73625140]
    %v12467 = vld.sshfl [vmem:[#allocation1 + $0x18] sm:$0xff pattern:$0x73625140]
    %s12468 = scalar_lea.vmem [#allocation1], 32
    %12469 = vst [vmem:[%s12468] ss:$4 sm:$0xff] %v12454
    %v12470 = vld.sshfl [vmem:[#allocation1 + $0x20] sm:$0xff pattern:$0x73625140]
    %v12471 = vld.sshfl [vmem:[#allocation1 + $0x28] sm:$0xff pattern:$0x73625140]
    %v12472 = vld.sshfl [vmem:[#allocation1 + $0x30] sm:$0xff pattern:$0x73625140]
    %v12473 = vld.sshfl [vmem:[#allocation1 + $0x38] sm:$0xff pattern:$0x73625140]
    %12474 = vst [vmem:[#allocation1] ss:$4 sm:$0xff] %v12458
    %v12475 = vld.sshfl [vmem:[#allocation1] sm:$0xff pattern:$0x73625140]
    %v12476 = vld.sshfl [vmem:[#allocation1 + $0x8] sm:$0xff pattern:$0x73625140]
    %v12477 = vld.sshfl [vmem:[#allocation1 + $0x10] sm:$0xff pattern:$0x73625140]
    %v12478 = vld.sshfl [vmem:[#allocation1 + $0x18] sm:$0xff pattern:$0x73625140]
    %12479 = vst [vmem:[%s12468] ss:$4 sm:$0xff] %v12462
    %v12480 = vld.sshfl [vmem:[#allocation1 + $0x20] sm:$0xff pattern:$0x73625140]
    %v12481 = vld.sshfl [vmem:[#allocation1 + $0x28] sm:$0xff pattern:$0x73625140]
    %v12482 = vld.sshfl [vmem:[#allocation1 + $0x30] sm:$0xff pattern:$0x73625140]
    %v12483 = vld.sshfl [vmem:[#allocation1 + $0x38] sm:$0xff pattern:$0x73625140]
    %v12500 = vsel %vm3522, %v12464, -inf
    %v12501 = vrot.slane %v12500, 4
    %v12502 = vmax.f32 %v12500, %v12501
    %v12503 = vrot.slane %v12502, 2
    %v12504 = vmax.f32 %v12502, %v12503
    %v12505 = vrot.slane %v12504, 1
    %v12506 = vmax.f32 %v12504, %v12505
    %v12507 = vsel %vm3522, %v12465, -inf
    %v12508 = vrot.slane %v12507, 4
    %v12509 = vmax.f32 %v12507, %v12508
    %v12510 = vrot.slane %v12509, 2
    %v12511 = vmax.f32 %v12509, %v12510
    %v12512 = vrot.slane %v12511, 1
    %v12513 = vmax.f32 %v12511, %v12512
    %v12514 = vsel %vm3522, %v12466, -inf
    %v12515 = vrot.slane %v12514, 4
    %v12516 = vmax.f32 %v12514, %v12515
    %v12517 = vrot.slane %v12516, 2
    %v12518 = vmax.f32 %v12516, %v12517
    %v12519 = vrot.slane %v12518, 1
    %v12520 = vmax.f32 %v12518, %v12519
    %v12521 = vsel %vm3522, %v12467, -inf
    %v12522 = vrot.slane %v12521, 4
    %v12523 = vmax.f32 %v12521, %v12522
    %v12524 = vrot.slane %v12523, 2
    %v12525 = vmax.f32 %v12523, %v12524
    %v12526 = vrot.slane %v12525, 1
    %v12527 = vmax.f32 %v12525, %v12526
    %v12528 = vsel %vm3522, %v12470, -inf
    %v12529 = vrot.slane %v12528, 4
    %v12530 = vmax.f32 %v12528, %v12529
    %v12531 = vrot.slane %v12530, 2
    %v12532 = vmax.f32 %v12530, %v12531
    %v12533 = vrot.slane %v12532, 1
    %v12534 = vmax.f32 %v12532, %v12533
    %v12535 = vsel %vm3522, %v12471, -inf
    %v12536 = vrot.slane %v12535, 4
    %v12537 = vmax.f32 %v12535, %v12536
    %v12538 = vrot.slane %v12537, 2
    %v12539 = vmax.f32 %v12537, %v12538
    %v12540 = vrot.slane %v12539, 1
    %v12541 = vmax.f32 %v12539, %v12540
    %v12542 = vsel %vm3522, %v12472, -inf
    %v12543 = vrot.slane %v12542, 4
    %v12544 = vmax.f32 %v12542, %v12543
    %v12545 = vrot.slane %v12544, 2
    %v12546 = vmax.f32 %v12544, %v12545
    %v12547 = vrot.slane %v12546, 1
    %v12548 = vmax.f32 %v12546, %v12547
    %v12549 = vsel %vm3522, %v12473, -inf
    %v12550 = vrot.slane %v12549, 4
    %v12551 = vmax.f32 %v12549, %v12550
    %v12552 = vrot.slane %v12551, 2
    %v12553 = vmax.f32 %v12551, %v12552
    %v12554 = vrot.slane %v12553, 1
    %v12555 = vmax.f32 %v12553, %v12554
    %v12556 = vsel %vm3522, %v12475, -inf
    %v12557 = vrot.slane %v12556, 4
    %v12558 = vmax.f32 %v12556, %v12557
    %v12559 = vrot.slane %v12558, 2
    %v12560 = vmax.f32 %v12558, %v12559
    %v12561 = vrot.slane %v12560, 1
    %v12562 = vmax.f32 %v12560, %v12561
    %v12563 = vsel %vm3522, %v12476, -inf
    %v12564 = vrot.slane %v12563, 4
    %v12565 = vmax.f32 %v12563, %v12564
    %v12566 = vrot.slane %v12565, 2
    %v12567 = vmax.f32 %v12565, %v12566
    %v12568 = vrot.slane %v12567, 1
    %v12569 = vmax.f32 %v12567, %v12568
    %v12570 = vsel %vm3522, %v12477, -inf
    %v12571 = vrot.slane %v12570, 4
    %v12572 = vmax.f32 %v12570, %v12571
    %v12573 = vrot.slane %v12572, 2
    %v12574 = vmax.f32 %v12572, %v12573
    %v12575 = vrot.slane %v12574, 1
    %v12576 = vmax.f32 %v12574, %v12575
    %v12577 = vsel %vm3522, %v12478, -inf
    %v12578 = vrot.slane %v12577, 4
    %v12579 = vmax.f32 %v12577, %v12578
    %v12580 = vrot.slane %v12579, 2
    %v12581 = vmax.f32 %v12579, %v12580
    %v12582 = vrot.slane %v12581, 1
    %v12583 = vmax.f32 %v12581, %v12582
    %v12584 = vsel %vm3522, %v12480, -inf
    %v12585 = vrot.slane %v12584, 4
    %v12586 = vmax.f32 %v12584, %v12585
    %v12587 = vrot.slane %v12586, 2
    %v12588 = vmax.f32 %v12586, %v12587
    %v12589 = vrot.slane %v12588, 1
    %v12590 = vmax.f32 %v12588, %v12589
    %v12591 = vsel %vm3522, %v12481, -inf
    %v12592 = vrot.slane %v12591, 4
    %v12593 = vmax.f32 %v12591, %v12592
    %v12594 = vrot.slane %v12593, 2
    %v12595 = vmax.f32 %v12593, %v12594
    %v12596 = vrot.slane %v12595, 1
    %v12597 = vmax.f32 %v12595, %v12596
    %v12598 = vsel %vm3522, %v12482, -inf
    %v12599 = vrot.slane %v12598, 4
    %v12600 = vmax.f32 %v12598, %v12599
    %v12601 = vrot.slane %v12600, 2
    %v12602 = vmax.f32 %v12600, %v12601
    %v12603 = vrot.slane %v12602, 1
    %v12604 = vmax.f32 %v12602, %v12603
    %v12605 = vsel %vm3522, %v12483, -inf
    %v12606 = vrot.slane %v12605, 4
    %v12607 = vmax.f32 %v12605, %v12606
    %v12608 = vrot.slane %v12607, 2
    %v12609 = vmax.f32 %v12607, %v12608
    %v12610 = vrot.slane %v12609, 1
    %v12611 = vmax.f32 %v12609, %v12610
    %v12612 = vmax.f32 %v12506, %v12534
    %v12613 = vmax.f32 %v12513, %v12541
    %v12614 = vmax.f32 %v12520, %v12548
    %v12615 = vmax.f32 %v12527, %v12555
    %v12616 = vmax.f32 %v12562, %v12590
    %v12617 = vmax.f32 %v12569, %v12597
    %v12618 = vmax.f32 %v12576, %v12604
    %v12619 = vmax.f32 %v12583, %v12611
    %v12620 = vpack.c.bf16 %v12612, %v12612
    %v12621 = vpack.c.bf16 %v12613, %v12613
    %v12622 = vpack.c.bf16 %v12614, %v12614
    %v12623 = vpack.c.bf16 %v12615, %v12615
    %v12624 = vpack.c.bf16 %v12616, %v12616
    %v12625 = vpack.c.bf16 %v12617, %v12617
    %v12626 = vpack.c.bf16 %v12618, %v12618
    %v12627 = vpack.c.bf16 %v12619, %v12619
    %v12628 = vld [vmem:[#allocation22] sm:$0xf]
    %v12629 = vld [vmem:[#allocation22 + $0x4] sm:$0xf]
    %v12630 = vld [vmem:[#allocation22 + $0x8] sm:$0xf]
    %v12631 = vld [vmem:[#allocation22 + $0xc] sm:$0xf]
    %v12632 = vld [vmem:[#allocation22 + $0x10] sm:$0xf]
    %v12633 = vld [vmem:[#allocation22 + $0x14] sm:$0xf]
    %v12634 = vld [vmem:[#allocation22 + $0x18] sm:$0xf]
    %v12635 = vld [vmem:[#allocation22 + $0x1c] sm:$0xf]
    %v12636 = vld [vmem:[#allocation22 + $0x20] sm:$0xf]
    %v12637 = vld [vmem:[#allocation22 + $0x24] sm:$0xf]
    %v12638 = vld [vmem:[#allocation22 + $0x28] sm:$0xf]
    %v12639 = vld [vmem:[#allocation22 + $0x2c] sm:$0xf]
    %v12640 = vld [vmem:[#allocation22 + $0x30] sm:$0xf]
    %v12641 = vld [vmem:[#allocation22 + $0x34] sm:$0xf]
    %v12642 = vld [vmem:[#allocation22 + $0x38] sm:$0xf]
    %v12643 = vld [vmem:[#allocation22 + $0x3c] sm:$0xf]
    %v12644 = vld [vmem:[#allocation22 + $0x40] sm:$0xf]
    %v12645 = vld [vmem:[#allocation22 + $0x44] sm:$0xf]
    %v12646 = vld [vmem:[#allocation22 + $0x48] sm:$0xf]
    %v12647 = vld [vmem:[#allocation22 + $0x4c] sm:$0xf]
    %v12648 = vld [vmem:[#allocation22 + $0x50] sm:$0xf]
    %v12649 = vld [vmem:[#allocation22 + $0x54] sm:$0xf]
    %v12650 = vld [vmem:[#allocation22 + $0x58] sm:$0xf]
    %v12651 = vld [vmem:[#allocation22 + $0x5c] sm:$0xf]
    %v12652 = vld [vmem:[#allocation22 + $0x60] sm:$0xf]
    %v12653 = vld [vmem:[#allocation22 + $0x64] sm:$0xf]
    %v12654 = vld [vmem:[#allocation22 + $0x68] sm:$0xf]
    %v12655 = vld [vmem:[#allocation22 + $0x6c] sm:$0xf]
    %v12656 = vld [vmem:[#allocation22 + $0x70] sm:$0xf]
    %v12657 = vld [vmem:[#allocation22 + $0x74] sm:$0xf]
    %v12658 = vld [vmem:[#allocation22 + $0x78] sm:$0xf]
    %v12659 = vld [vmem:[#allocation22 + $0x7c] sm:$0xf]
    %v12660 = vld [vmem:[#allocation22 + $0x80] sm:$0xf]
    %v12661 = vld [vmem:[#allocation22 + $0x84] sm:$0xf]
    %v12662 = vld [vmem:[#allocation22 + $0x88] sm:$0xf]
    %v12663 = vld [vmem:[#allocation22 + $0x8c] sm:$0xf]
    %v12664 = vld [vmem:[#allocation22 + $0x90] sm:$0xf]
    %v12665 = vld [vmem:[#allocation22 + $0x94] sm:$0xf]
    %v12666 = vld [vmem:[#allocation22 + $0x98] sm:$0xf]
    %v12667 = vld [vmem:[#allocation22 + $0x9c] sm:$0xf]
    %v12668 = vld [vmem:[#allocation22 + $0xa0] sm:$0xf]
    %v12669 = vld [vmem:[#allocation22 + $0xa4] sm:$0xf]
    %v12670 = vld [vmem:[#allocation22 + $0xa8] sm:$0xf]
    %v12671 = vld [vmem:[#allocation22 + $0xac] sm:$0xf]
    %v12672 = vld [vmem:[#allocation22 + $0xb0] sm:$0xf]
    %v12673 = vld [vmem:[#allocation22 + $0xb4] sm:$0xf]
    %v12674 = vld [vmem:[#allocation22 + $0xb8] sm:$0xf]
    %v12675 = vld [vmem:[#allocation22 + $0xbc] sm:$0xf]
    %v12676 = vld [vmem:[#allocation22 + $0xc0] sm:$0xf]
    %v12677 = vld [vmem:[#allocation22 + $0xc4] sm:$0xf]
    %v12678 = vld [vmem:[#allocation22 + $0xc8] sm:$0xf]
    %v12679 = vld [vmem:[#allocation22 + $0xcc] sm:$0xf]
    %v12680 = vld [vmem:[#allocation22 + $0xd0] sm:$0xf]
    %v12681 = vld [vmem:[#allocation22 + $0xd4] sm:$0xf]
    %v12682 = vld [vmem:[#allocation22 + $0xd8] sm:$0xf]
    %v12683 = vld [vmem:[#allocation22 + $0xdc] sm:$0xf]
    %v12684 = vld [vmem:[#allocation22 + $0xe0] sm:$0xf]
    %v12685 = vld [vmem:[#allocation22 + $0xe4] sm:$0xf]
    %v12686 = vld [vmem:[#allocation22 + $0xe8] sm:$0xf]
    %v12687 = vld [vmem:[#allocation22 + $0xec] sm:$0xf]
    %v12688 = vld [vmem:[#allocation22 + $0xf0] sm:$0xf]
    %v12689 = vld [vmem:[#allocation22 + $0xf4] sm:$0xf]
    %v12690 = vld [vmem:[#allocation22 + $0xf8] sm:$0xf]
    %v12691 = vld [vmem:[#allocation22 + $0xfc] sm:$0xf]
    %v12692 = vld [vmem:[#allocation23] sm:$0x1]
    %v12694 = vperm.slane %v12692, 0
    %v12704 = vunpack.c.l.b16 %v12620
    %v12705 = vunpack.c.l.b16 %v12621
    %v12706 = vunpack.c.l.b16 %v12622
    %v12707 = vunpack.c.l.b16 %v12623
    %v12708 = vunpack.c.l.b16 %v12624
    %v12709 = vunpack.c.l.b16 %v12625
    %v12710 = vunpack.c.l.b16 %v12626
    %v12711 = vunpack.c.l.b16 %v12627
    %v12712 = vsel %vm7423, %v12708, %v12704
    %v12713 = vsel %vm7423, %v12709, %v12705
    %v12714 = vsel %vm7423, %v12710, %v12706
    %v12715 = vsel %vm7423, %v12711, %v12707
    %v12716 = vpack.c.b16 %v12712, %v12712
    %v12717 = vpack.c.b16 %v12713, %v12713
    %v12718 = vpack.c.b16 %v12714, %v12714
    %v12719 = vpack.c.b16 %v12715, %v12715
    %v12788 = vunpack.c.l.b16 %v12628
    %v12789 = vunpack.c.l.b16 %v12629
    %v12790 = vunpack.c.l.b16 %v12630
    %v12791 = vunpack.c.l.b16 %v12631
    %v12792 = vunpack.c.l.b16 %v12632
    %v12793 = vunpack.c.l.b16 %v12633
    %v12794 = vunpack.c.l.b16 %v12634
    %v12795 = vunpack.c.l.b16 %v12635
    %v12796 = vunpack.c.l.b16 %v12636
    %v12797 = vunpack.c.l.b16 %v12637
    %v12798 = vunpack.c.l.b16 %v12638
    %v12799 = vunpack.c.l.b16 %v12639
    %v12800 = vunpack.c.l.b16 %v12640
    %v12801 = vunpack.c.l.b16 %v12641
    %v12802 = vunpack.c.l.b16 %v12642
    %v12803 = vunpack.c.l.b16 %v12643
    %v12804 = vunpack.c.l.b16 %v12644
    %v12805 = vunpack.c.l.b16 %v12645
    %v12806 = vunpack.c.l.b16 %v12646
    %v12807 = vunpack.c.l.b16 %v12647
    %v12808 = vunpack.c.l.b16 %v12648
    %v12809 = vunpack.c.l.b16 %v12649
    %v12810 = vunpack.c.l.b16 %v12650
    %v12811 = vunpack.c.l.b16 %v12651
    %v12812 = vunpack.c.l.b16 %v12652
    %v12813 = vunpack.c.l.b16 %v12653
    %v12814 = vunpack.c.l.b16 %v12654
    %v12815 = vunpack.c.l.b16 %v12655
    %v12816 = vunpack.c.l.b16 %v12656
    %v12817 = vunpack.c.l.b16 %v12657
    %v12818 = vunpack.c.l.b16 %v12658
    %v12819 = vunpack.c.l.b16 %v12659
    %v12820 = vunpack.c.l.b16 %v12660
    %v12821 = vunpack.c.l.b16 %v12661
    %v12822 = vunpack.c.l.b16 %v12662
    %v12823 = vunpack.c.l.b16 %v12663
    %v12824 = vunpack.c.l.b16 %v12664
    %v12825 = vunpack.c.l.b16 %v12665
    %v12826 = vunpack.c.l.b16 %v12666
    %v12827 = vunpack.c.l.b16 %v12667
    %v12828 = vunpack.c.l.b16 %v12668
    %v12829 = vunpack.c.l.b16 %v12669
    %v12830 = vunpack.c.l.b16 %v12670
    %v12831 = vunpack.c.l.b16 %v12671
    %v12832 = vunpack.c.l.b16 %v12672
    %v12833 = vunpack.c.l.b16 %v12673
    %v12834 = vunpack.c.l.b16 %v12674
    %v12835 = vunpack.c.l.b16 %v12675
    %v12836 = vunpack.c.l.b16 %v12676
    %v12837 = vunpack.c.l.b16 %v12677
    %v12838 = vunpack.c.l.b16 %v12678
    %v12839 = vunpack.c.l.b16 %v12679
    %v12840 = vunpack.c.l.b16 %v12680
    %v12841 = vunpack.c.l.b16 %v12681
    %v12842 = vunpack.c.l.b16 %v12682
    %v12843 = vunpack.c.l.b16 %v12683
    %v12844 = vunpack.c.l.b16 %v12684
    %v12845 = vunpack.c.l.b16 %v12685
    %v12846 = vunpack.c.l.b16 %v12686
    %v12847 = vunpack.c.l.b16 %v12687
    %v12848 = vunpack.c.l.b16 %v12688
    %v12849 = vunpack.c.l.b16 %v12689
    %v12850 = vunpack.c.l.b16 %v12690
    %v12851 = vunpack.c.l.b16 %v12691
    %v12852 = vpack.c.b16 %v12789, %v12788
    %v12853 = vpack.c.b16 %v12791, %v12790
    %v12854 = vpack.c.b16 %v12793, %v12792
    %v12855 = vpack.c.b16 %v12795, %v12794
    %v12856 = vpack.c.b16 %v12797, %v12796
    %v12857 = vpack.c.b16 %v12799, %v12798
    %v12858 = vpack.c.b16 %v12801, %v12800
    %v12859 = vpack.c.b16 %v12803, %v12802
    %v12860 = vpack.c.b16 %v12805, %v12804
    %v12861 = vpack.c.b16 %v12807, %v12806
    %v12862 = vpack.c.b16 %v12809, %v12808
    %v12863 = vpack.c.b16 %v12811, %v12810
    %v12864 = vpack.c.b16 %v12813, %v12812
    %v12865 = vpack.c.b16 %v12815, %v12814
    %v12866 = vpack.c.b16 %v12817, %v12816
    %v12867 = vpack.c.b16 %v12819, %v12818
    %v12868 = vpack.c.b16 %v12821, %v12820
    %v12869 = vpack.c.b16 %v12823, %v12822
    %v12870 = vpack.c.b16 %v12825, %v12824
    %v12871 = vpack.c.b16 %v12827, %v12826
    %v12872 = vpack.c.b16 %v12829, %v12828
    %v12873 = vpack.c.b16 %v12831, %v12830
    %v12874 = vpack.c.b16 %v12833, %v12832
    %v12875 = vpack.c.b16 %v12835, %v12834
    %v12876 = vpack.c.b16 %v12837, %v12836
    %v12877 = vpack.c.b16 %v12839, %v12838
    %v12878 = vpack.c.b16 %v12841, %v12840
    %v12879 = vpack.c.b16 %v12843, %v12842
    %v12880 = vpack.c.b16 %v12845, %v12844
    %v12881 = vpack.c.b16 %v12847, %v12846
    %v12882 = vpack.c.b16 %v12849, %v12848
    %v12883 = vpack.c.b16 %v12851, %v12850
    %12916 = vmatpush.bf16.msra.mxu0 %v12859
    %12917 = vmatpush.bf16.msra.mxu0 %v12858
    %12918 = vmatpush.bf16.msra.mxu0 %v12857
    %12919 = vmatpush.bf16.msra.mxu0 %v12856
    %12920 = vmatpush.bf16.msra.mxu0 %v12855
    %12921 = vmatpush.bf16.msra.mxu0 %v12854
    %12922 = vmatpush.bf16.msra.mxu0 %v12853
    %12923 = vmatpush.bf16.msra.mxu0 %v12852
    %12924 = vmatmul.bf16.gmra.mxu0 %v12716
    %v12925 = vpop.f32.mrf.mxu0
    %v12926 = vadd.f32 %v12694, %v12925
    %v12927 = vpop.f32.mrf.mxu0
    %12928 = vdwg.mxu0
    %12929 = vmatpush.bf16.msra.mxu0 %v12867
    %12930 = vmatpush.bf16.msra.mxu0 %v12866
    %12931 = vmatpush.bf16.msra.mxu0 %v12865
    %12932 = vmatpush.bf16.msra.mxu0 %v12864
    %12933 = vmatpush.bf16.msra.mxu0 %v12863
    %12934 = vmatpush.bf16.msra.mxu0 %v12862
    %12935 = vmatpush.bf16.msra.mxu0 %v12861
    %12936 = vmatpush.bf16.msra.mxu0 %v12860
    %12937 = vmatmul.bf16.gmra.mxu0 %v12717
    %v12938 = vpop.f32.mrf.mxu0
    %v12939 = vadd.f32 %v12926, %v12938
    %v12940 = vpop.f32.mrf.mxu0
    %12941 = vdwg.mxu0
    %12942 = vmatpush.bf16.msra.mxu0 %v12875
    %12943 = vmatpush.bf16.msra.mxu0 %v12874
    %12944 = vmatpush.bf16.msra.mxu0 %v12873
    %12945 = vmatpush.bf16.msra.mxu0 %v12872
    %12946 = vmatpush.bf16.msra.mxu0 %v12871
    %12947 = vmatpush.bf16.msra.mxu0 %v12870
    %12948 = vmatpush.bf16.msra.mxu0 %v12869
    %12949 = vmatpush.bf16.msra.mxu0 %v12868
    %12950 = vmatmul.bf16.gmra.mxu0 %v12718
    %v12951 = vpop.f32.mrf.mxu0
    %v12952 = vadd.f32 %v12939, %v12951
    %v12953 = vpop.f32.mrf.mxu0
    %12954 = vdwg.mxu0
    %12955 = vmatpush.bf16.msra.mxu0 %v12883
    %12956 = vmatpush.bf16.msra.mxu0 %v12882
    %12957 = vmatpush.bf16.msra.mxu0 %v12881
    %12958 = vmatpush.bf16.msra.mxu0 %v12880
    %12959 = vmatpush.bf16.msra.mxu0 %v12879
    %12960 = vmatpush.bf16.msra.mxu0 %v12878
    %12961 = vmatpush.bf16.msra.mxu0 %v12877
    %12962 = vmatpush.bf16.msra.mxu0 %v12876
    %12963 = vmatmul.bf16.gmra.mxu0 %v12719
    %v12964 = vpop.f32.mrf.mxu0
    %v12965 = vadd.f32 %v12952, %v12964
    %v12966 = vpop.f32.mrf.mxu0
    %12967 = vdwg.mxu0
    %12968 = vst [vmem:[#allocation25] sm:$0x3] %v12965
    // Predicated region
    $region86: #{cnn_forward.1} parent=1 // pred_check
      _
    $region87: #{cnn_forward.1} parent=1 // pred_check_branch
      %12970 = sbr.rel (0) target = $region89
    $region88: #{cnn_forward.1} parent=1 // pred_region
      %12972 = vsyncadd [#allocation10], 0
      %s12974 = sshll.u32 [#allocation25], 4
      %s12975 = int_to_ptr.vmem [resolvable:$true] %s12974
      %s12976 = sshll.u32 %s11, 4
      %s12977 = int_to_ptr.hbm [resolvable:$true] %s12976
      %12979 = dma.vmem_to_hbm [thread:$0]  %s12975, 32, %s12977, [#allocation10]
    $region89: #{cnn_forward.1} parent=1 // pred_fallthru
      _
    // Predicated region
    $region90: #{cnn_forward.1} parent=1 // pred_check
      _
    $region91: #{cnn_forward.1} parent=1 // pred_check_branch
      %12981 = sbr.rel (0) target = $region93
    $region92: #{cnn_forward.1} parent=1 // pred_region
      %12983 = dma.done [#allocation10], 32
    $region93: #{cnn_forward.1} parent=1 // pred_fallthru
      _
    %12984 = vsyncpa [#allocation9], 1
    %12985 = vsyncpa [#allocation12], 1
    %12986 = vsyncpa [#allocation15], 1
    %12987 = vsyncpa [#allocation18], 1
    %12988 = vsyncpa [#allocation21], 1
    %12989 = vsyncpa [#allocation24], 1
    %12990 = vsyncpa [#allocation10], 1

</llo_original>
